<compile_context>
chip_gen: v6e
topology: v6e:2x2x1
jax: 0.10.0
libtpu: 0.0.40
codegen_flags: <defaults>
</compile_context>

<pallas_src>
import functools

import jax
import jax.numpy as jnp
from jax.experimental import pallas as pl
from jax.experimental.pallas import tpu as pltpu


def _round_up(x: int, m: int) -> int:
    return (x + m - 1) // m * m


def _is_two_tensorcore_chip() -> bool:
    """True on chips with 2 TensorCores per device (v7x)."""
    try:
        kind = jax.devices()[0].device_kind.lower()
    except Exception:
        return False
    return "v7" in kind or "tpu7" in kind


def roi_head_kernel(x_ref, w1_ref, b1_ref, w2_ref, b2_ref, wh_ref, bh_ref,
                    out_ref, h1_ref, acc_ref):
    j = pl.program_id(1)

    @pl.when(j == 0)
    def _():
        # classifier layer 1: Linear -> ReLU (computed once per R tile)
        h1 = jnp.dot(x_ref[...], w1_ref[...],
                     preferred_element_type=jnp.float32) + b1_ref[...]
        h1_ref[...] = jnp.maximum(h1, 0.0).astype(jnp.bfloat16)
        acc_ref[...] = jnp.zeros_like(acc_ref)

    # classifier layer 2: one tf-wide slice of the feat_dim hidden features
    h2 = jnp.dot(h1_ref[...], w2_ref[...],
                 preferred_element_type=jnp.float32) + b2_ref[...]
    h2 = jnp.maximum(h2, 0.0).astype(jnp.bfloat16)

    # fused loc|score head, accumulated in f32 over the feat_dim-wide K dim
    acc_ref[...] += jnp.dot(h2, wh_ref[...],
                            preferred_element_type=jnp.float32)

    @pl.when(j == pl.num_programs(1) - 1)
    def _():
        out_ref[...] = (acc_ref[...] + bh_ref[...]).astype(out_ref.dtype)


def prepare_params(params, n_class, *, dtype=jnp.bfloat16):
    """One-time weight repack (hoisted out of the per-call forward).

    Pads the input feature dim to a lane multiple, casts weights to bf16, and
    fuses loc|score weights/biases into one lane-dense (128-wide) head.
    """
    w1, b1, w2, b2, wl, bl, ws, bs = params
    in_dim, hidden = w1.shape
    feat_dim = w2.shape[1]
    n_loc, n_cls = wl.shape[1], ws.shape[1]
    assert n_loc == n_class * 4 and n_cls == n_class
    assert hidden % 128 == 0 and feat_dim % 128 == 0

    in_p = _round_up(in_dim, 128)
    n_out = n_loc + n_cls
    n_out_p = _round_up(n_out, 128)

    w1_p = jnp.zeros((in_p, hidden), dtype).at[:in_dim, :].set(w1.astype(dtype))
    w2_p = w2.astype(dtype)

    wh = jnp.zeros((feat_dim, n_out_p), dtype)
    wh = wh.at[:, :n_loc].set(wl.astype(dtype))
    wh = wh.at[:, n_loc:n_out].set(ws.astype(dtype))
    bh = jnp.zeros((1, n_out_p), jnp.float32)
    bh = bh.at[:, :n_loc].set(bl.reshape(1, -1).astype(jnp.float32))
    bh = bh.at[:, n_loc:n_out].set(bs.reshape(1, -1).astype(jnp.float32))

    b1_r = b1.reshape(1, hidden).astype(jnp.float32)
    b2_r = b2.reshape(1, feat_dim).astype(jnp.float32)

    return (w1_p, b1_r, w2_p, b2_r, wh, bh)


@functools.partial(
    jax.jit, static_argnames=("n_loc", "n_cls", "tr", "tf", "core_parallel"))
def _roi_head_call(pooled_regions, packed, *, n_loc, n_cls, tr, tf,
                   core_parallel):
    w1_p, b1_r, w2_p, b2_r, wh, bh = packed
    R = pooled_regions.shape[0]
    x = pooled_regions.reshape(R, -1)            # torch .view(R, -1)

    in_dim = x.shape[1]
    in_p, hidden = w1_p.shape
    feat_dim = w2_p.shape[1]
    n_out_p = wh.shape[1]
    n_out = n_loc + n_cls
    assert in_dim <= in_p and feat_dim % tf == 0

    r_p = _round_up(R, tr)
    n_i, n_j = r_p // tr, feat_dim // tf

    # Per-call work on the activation only (weights are pre-packed).
    x_p = jnp.zeros((r_p, in_p), jnp.bfloat16).at[:R, :in_dim].set(
        x.astype(jnp.bfloat16))

    # Deeper weight buffering only pays when the reduction has >= 3 steps; at
    # the default tf=2048 (2 steps) default double-buffering already covers it.
    if n_j >= 3:
        w2_spec = pl.BlockSpec((hidden, tf), lambda i, j: (0, j),
                               pipeline_mode=pl.Buffered(3))
        wh_spec = pl.BlockSpec((tf, n_out_p), lambda i, j: (j, 0),
                               pipeline_mode=pl.Buffered(3))
    else:
        w2_spec = pl.BlockSpec((hidden, tf), lambda i, j: (0, j))
        wh_spec = pl.BlockSpec((tf, n_out_p), lambda i, j: (j, 0))

    flops = 2 * r_p * (in_p * hidden + hidden * feat_dim + feat_dim * n_out_p)
    weight_bytes = ((w1_p.size + w2_p.size + wh.size) * 2
                    + (b1_r.size + b2_r.size + bh.size) * 4)
    bytes_accessed = x_p.size * 2 + n_i * weight_bytes + r_p * n_out_p * 2

    dims = ((pltpu.CORE_PARALLEL if core_parallel else pltpu.PARALLEL),
            pltpu.ARBITRARY)

    out = pl.pallas_call(
        roi_head_kernel,
        out_shape=jax.ShapeDtypeStruct((r_p, n_out_p), jnp.bfloat16),
        grid=(n_i, n_j),
        in_specs=[
            pl.BlockSpec((tr, in_p), lambda i, j: (i, 0)),       # x (R-tiled)
            pl.BlockSpec((in_p, hidden), lambda i, j: (0, 0)),   # w1
            pl.BlockSpec((1, hidden), lambda i, j: (0, 0)),      # b1
            w2_spec,                                             # w2 (N-tiled)
            pl.BlockSpec((1, tf), lambda i, j: (0, j)),          # b2
            wh_spec,                                             # fused head (K-tiled)
            pl.BlockSpec((1, n_out_p), lambda i, j: (0, 0)),     # fused bias
        ],
        out_specs=pl.BlockSpec((tr, n_out_p), lambda i, j: (i, 0)),
        scratch_shapes=[
            pltpu.VMEM((tr, hidden), jnp.bfloat16),   # h1, reused across j
            pltpu.VMEM((tr, n_out_p), jnp.float32),   # head accumulator
        ],
        compiler_params=pltpu.CompilerParams(dimension_semantics=dims),
        cost_estimate=pl.CostEstimate(flops=flops, transcendentals=0,
                                      bytes_accessed=bytes_accessed),
    )(x_p, w1_p, b1_r, w2_p, b2_r, wh, bh)

    locs = out[:R, :n_loc].astype(jnp.float32)
    scores = out[:R, n_loc:n_out].astype(jnp.float32)
    return locs, scores


def roi_head_forward(pooled_regions, packed_params, n_class, *,
                     tr=None, tf=2048):
    """pooled_regions: (R, C, roi, roi) -> (locs (R, n_class*4), scores (R, n_class))."""
    R = pooled_regions.shape[0]
    core_parallel = False
    if tr is None:
        r_p = _round_up(R, 128)
        if _is_two_tensorcore_chip() and r_p % 256 == 0:
            # v7x: tr=128 R tiles, sharded across the 2 TensorCores.
            tr, core_parallel = 128, True
        else:
            # v5e / v6e: single TC -> one R tile, weights streamed once.
            tr = r_p
    return _roi_head_call(pooled_regions, packed_params,
                          n_loc=n_class * 4, n_cls=n_class,
                          tr=tr, tf=tf, core_parallel=core_parallel)


def make_params(key, in_dim, hidden, feat_dim, n_class):
    """Parameter init matching ROIHead._weights_init semantics.

    classifier = Linear(in_dim, hidden) -> ReLU -> Linear(hidden, 4096) -> ReLU
    loc.weight ~ N(0, 0.001), loc.bias = 0; score.weight ~ N(0, 0.01), bias = 0.
    Weights are stored pre-transposed as (in, out); master copies are f32.
    """
    k1, k2, k3, k4 = jax.random.split(key, 4)
    w1 = jax.random.normal(k1, (in_dim, hidden), jnp.float32) * 0.02
    b1 = jnp.zeros((hidden,), jnp.float32)
    w2 = jax.random.normal(k2, (hidden, feat_dim), jnp.float32) * 0.02
    b2 = jnp.zeros((feat_dim,), jnp.float32)
    wl = jax.random.normal(k3, (feat_dim, n_class * 4), jnp.float32) * 0.001
    bl = jnp.zeros((n_class * 4,), jnp.float32)
    ws = jax.random.normal(k4, (feat_dim, n_class), jnp.float32) * 0.01
    bs = jnp.zeros((n_class,), jnp.float32)
    return (w1, b1, w2, b2, wl, bl, ws, bs)


def roi_head_reference(pooled_regions, params):
    """Pure-JAX reference with the same bf16-in / f32-accumulate / bf16-out precision."""
    w1, b1, w2, b2, wl, bl, ws, bs = params
    x = pooled_regions.reshape(pooled_regions.shape[0], -1).astype(jnp.bfloat16)
    h1 = jnp.dot(x, w1.astype(jnp.bfloat16),
                 preferred_element_type=jnp.float32) + b1.reshape(1, -1)
    h1 = jnp.maximum(h1, 0.0).astype(jnp.bfloat16)
    h2 = jnp.dot(h1, w2.astype(jnp.bfloat16),
                 preferred_element_type=jnp.float32) + b2.reshape(1, -1)
    h2 = jnp.maximum(h2, 0.0).astype(jnp.bfloat16)
    locs = jnp.dot(h2, wl.astype(jnp.bfloat16),
                   preferred_element_type=jnp.float32) + bl.reshape(1, -1)
    scores = jnp.dot(h2, ws.astype(jnp.bfloat16),
                     preferred_element_type=jnp.float32) + bs.reshape(1, -1)
    # Kernel emits bf16 and the wrapper casts back to f32; match that here.
    return (locs.astype(jnp.bfloat16).astype(jnp.float32),
            scores.astype(jnp.bfloat16).astype(jnp.float32))


if __name__ == "__main__":
    # Realistic Faster R-CNN proposal count; per-ROI shapes stay small:
    # (C, roi, roi) = (4, 7, 7).
    R, C, roi_size = 256, 4, 7
    n_class = 8                    # -> locs (R, 32), scores (R, 8)
    hidden = 256                   # pluggable classifier hidden width
    feat_dim = 4096                # ROIHead hardcodes loc/score input = 4096
    # spatial_scale / roi_size are stored in __init__ but unused by forward
    # (ROI pooling happens upstream of this module).

    key = jax.random.PRNGKey(0)
    k_in, k_p = jax.random.split(key)
    pooled = jax.random.normal(k_in, (R, C, roi_size, roi_size), jnp.float32)
    params = make_params(k_p, C * roi_size * roi_size, hidden, feat_dim, n_class)

    # One-time weight repack, hoisted out of the per-call forward path.
    packed = prepare_params(params, n_class)
    packed = jax.block_until_ready(packed)

    locs, scores = roi_head_forward(pooled, packed, n_class)
    locs = jax.block_until_ready(locs)
    scores = jax.block_until_ready(scores)

    ref_locs, ref_scores = roi_head_reference(pooled, params)
    assert locs.shape == (R, n_class * 4) and scores.shape == (R, n_class)
    assert jnp.allclose(locs, ref_locs, atol=1e-3, rtol=2e-2), \
        float(jnp.max(jnp.abs(locs - ref_locs)))
    assert jnp.allclose(scores, ref_scores, atol=1e-3, rtol=2e-2), \
        float(jnp.max(jnp.abs(scores - ref_scores)))
    print("KERNEL_OK")
</pallas_src>

<mosaic_0001>
module attributes {stable_mosaic.version = 11 : i64} {
  func.func @roi_head_kernel(%arg0: i32, %arg1: i32, %arg2: memref<256x256xbf16, #tpu.memory_space<vmem>>, %arg3: memref<256x256xbf16, #tpu.memory_space<vmem>>, %arg4: memref<1x256xf32, #tpu.memory_space<vmem>>, %arg5: memref<256x2048xbf16, #tpu.memory_space<vmem>>, %arg6: memref<1x2048xf32, #tpu.memory_space<vmem>>, %arg7: memref<2048x128xbf16, #tpu.memory_space<vmem>>, %arg8: memref<1x128xf32, #tpu.memory_space<vmem>>, %arg9: memref<256x128xbf16, #tpu.memory_space<vmem>>, %arg10: memref<256x256xbf16, #tpu.memory_space<vmem>>, %arg11: memref<256x128xf32, #tpu.memory_space<vmem>>) attributes {dimension_semantics = [#tpu.dimension_semantics<parallel>, #tpu.dimension_semantics<arbitrary>], iteration_bounds = array<i64: 1, 2>, scalar_prefetch = 0 : i64, scratch_operands = 2 : i64, tpu.core_type = #tpu.core_type<tc>, window_params = [{transform_indices = @transform_0, window_bounds = array<i64: 256, 256>}, {pipeline_mode = #tpu.pipeline_mode<synchronous>, transform_indices = @transform_1, window_bounds = array<i64: 256, 256>}, {pipeline_mode = #tpu.pipeline_mode<synchronous>, transform_indices = @transform_2, window_bounds = array<i64: 1, 256>}, {transform_indices = @transform_3, window_bounds = array<i64: 256, 2048>}, {transform_indices = @transform_4, window_bounds = array<i64: 1, 2048>}, {transform_indices = @transform_5, window_bounds = array<i64: 2048, 128>}, {pipeline_mode = #tpu.pipeline_mode<synchronous>, transform_indices = @transform_6, window_bounds = array<i64: 1, 128>}, {transform_indices = @transform_7, window_bounds = array<i64: 256, 128>}]} {
    %c0_i32 = arith.constant 0 : i32
    %0 = arith.cmpi eq, %arg1, %c0_i32 : i32
    %1 = arith.extui %0 : i1 to i32
    %c0_i32_0 = arith.constant 0 : i32
    %2 = arith.cmpi ne, %1, %c0_i32_0 : i32
    scf.if %2 {
      %c0_15 = arith.constant 0 : index
      %c0_16 = arith.constant 0 : index
      %20 = vector.load %arg2[%c0_15, %c0_16] : memref<256x256xbf16, #tpu.memory_space<vmem>>, vector<256x256xbf16>
      %c0_17 = arith.constant 0 : index
      %c0_18 = arith.constant 0 : index
      %21 = vector.load %arg3[%c0_17, %c0_18] : memref<256x256xbf16, #tpu.memory_space<vmem>>, vector<256x256xbf16>
      %cst_19 = arith.constant dense<0.000000e+00> : vector<256x256xf32>
      %22 = tpu.matmul %20, %21, %cst_19 {dimension_numbers = #tpu.dot_dimension_numbers<[1], [0], [0], [1], [0, 0, 1, 1], [], []>} : vector<256x256xbf16>, vector<256x256xbf16>, vector<256x256xf32> -> vector<256x256xf32>
      %c0_20 = arith.constant 0 : index
      %c0_21 = arith.constant 0 : index
      %23 = vector.load %arg4[%c0_20, %c0_21] : memref<1x256xf32, #tpu.memory_space<vmem>>, vector<1x256xf32>
      %24 = vector.broadcast %23 : vector<1x256xf32> to vector<256x256xf32>
      %25 = arith.addf %22, %24 : vector<256x256xf32>
      %cst_22 = arith.constant 0.000000e+00 : f32
      %26 = vector.broadcast %cst_22 : f32 to vector<256x256xf32>
      %27 = arith.maximumf %25, %26 : vector<256x256xf32>
      %28 = arith.truncf %27 : vector<256x256xf32> to vector<256x256xbf16>
      %c0_23 = arith.constant 0 : index
      %c0_24 = arith.constant 0 : index
      %29 = vector.load %arg10[%c0_23, %c0_24] : memref<256x256xbf16, #tpu.memory_space<vmem>>, vector<256x256xbf16>
      tpu.vector_store %arg10[%c0_23, %c0_24], %28 {strides = array<i32>} : memref<256x256xbf16, #tpu.memory_space<vmem>>, vector<256x256xbf16>,
      %cst_25 = arith.constant 0.000000e+00 : f32
      %30 = vector.broadcast %cst_25 : f32 to vector<256x128xf32>
      %c0_26 = arith.constant 0 : index
      %c0_27 = arith.constant 0 : index
      %31 = vector.load %arg11[%c0_26, %c0_27] : memref<256x128xf32, #tpu.memory_space<vmem>>, vector<256x128xf32>
      tpu.vector_store %arg11[%c0_26, %c0_27], %30 {strides = array<i32>} : memref<256x128xf32, #tpu.memory_space<vmem>>, vector<256x128xf32>,
    } else {
    }
    %c0 = arith.constant 0 : index
    %c0_1 = arith.constant 0 : index
    %3 = vector.load %arg10[%c0, %c0_1] : memref<256x256xbf16, #tpu.memory_space<vmem>>, vector<256x256xbf16>
    %c0_2 = arith.constant 0 : index
    %c0_3 = arith.constant 0 : index
    %4 = vector.load %arg5[%c0_2, %c0_3] : memref<256x2048xbf16, #tpu.memory_space<vmem>>, vector<256x2048xbf16>
    %cst = arith.constant dense<0.000000e+00> : vector<256x2048xf32>
    %5 = tpu.matmul %3, %4, %cst {dimension_numbers = #tpu.dot_dimension_numbers<[1], [0], [0], [1], [0, 0, 1, 1], [], []>} : vector<256x256xbf16>, vector<256x2048xbf16>, vector<256x2048xf32> -> vector<256x2048xf32>
    %c0_4 = arith.constant 0 : index
    %c0_5 = arith.constant 0 : index
    %6 = vector.load %arg6[%c0_4, %c0_5] : memref<1x2048xf32, #tpu.memory_space<vmem>>, vector<1x2048xf32>
    %7 = vector.broadcast %6 : vector<1x2048xf32> to vector<256x2048xf32>
    %8 = arith.addf %5, %7 : vector<256x2048xf32>
    %cst_6 = arith.constant 0.000000e+00 : f32
    %9 = vector.broadcast %cst_6 : f32 to vector<256x2048xf32>
    %10 = arith.maximumf %8, %9 : vector<256x2048xf32>
    %11 = arith.truncf %10 : vector<256x2048xf32> to vector<256x2048xbf16>
    %c0_7 = arith.constant 0 : index
    %c0_8 = arith.constant 0 : index
    %12 = vector.load %arg11[%c0_7, %c0_8] : memref<256x128xf32, #tpu.memory_space<vmem>>, vector<256x128xf32>
    %c0_9 = arith.constant 0 : index
    %c0_10 = arith.constant 0 : index
    %13 = vector.load %arg7[%c0_9, %c0_10] : memref<2048x128xbf16, #tpu.memory_space<vmem>>, vector<2048x128xbf16>
    %cst_11 = arith.constant dense<0.000000e+00> : vector<256x128xf32>
    %14 = tpu.matmul %11, %13, %cst_11 {dimension_numbers = #tpu.dot_dimension_numbers<[1], [0], [0], [1], [0, 0, 1, 1], [], []>} : vector<256x2048xbf16>, vector<2048x128xbf16>, vector<256x128xf32> -> vector<256x128xf32>
    %15 = arith.addf %12, %14 : vector<256x128xf32>
    %c0_12 = arith.constant 0 : index
    %c0_13 = arith.constant 0 : index
    %16 = vector.load %arg11[%c0_12, %c0_13] : memref<256x128xf32, #tpu.memory_space<vmem>>, vector<256x128xf32>
    tpu.vector_store %arg11[%c0_12, %c0_13], %15 {strides = array<i32>} : memref<256x128xf32, #tpu.memory_space<vmem>>, vector<256x128xf32>,
    %c1_i32 = arith.constant 1 : i32
    %17 = arith.cmpi eq, %arg1, %c1_i32 : i32
    %18 = arith.extui %17 : i1 to i32
    %c0_i32_14 = arith.constant 0 : i32
    %19 = arith.cmpi ne, %18, %c0_i32_14 : i32
    scf.if %19 {
      %c0_15 = arith.constant 0 : index
      %c0_16 = arith.constant 0 : index
      %20 = vector.load %arg11[%c0_15, %c0_16] : memref<256x128xf32, #tpu.memory_space<vmem>>, vector<256x128xf32>
      %c0_17 = arith.constant 0 : index
      %c0_18 = arith.constant 0 : index
      %21 = vector.load %arg8[%c0_17, %c0_18] : memref<1x128xf32, #tpu.memory_space<vmem>>, vector<1x128xf32>
      %22 = vector.broadcast %21 : vector<1x128xf32> to vector<256x128xf32>
      %23 = arith.addf %20, %22 : vector<256x128xf32>
      %24 = arith.truncf %23 : vector<256x128xf32> to vector<256x128xbf16>
      %c0_19 = arith.constant 0 : index
      %c0_20 = arith.constant 0 : index
      %25 = vector.load %arg9[%c0_19, %c0_20] : memref<256x128xbf16, #tpu.memory_space<vmem>>, vector<256x128xbf16>
      tpu.vector_store %arg9[%c0_19, %c0_20], %24 {strides = array<i32>} : memref<256x128xbf16, #tpu.memory_space<vmem>>, vector<256x128xbf16>,
    } else {
    }
    return
  }
  func.func @transform_0(%arg0: i32, %arg1: i32) -> (i32, i32) {
    %c0_i32 = arith.constant 0 : i32
    %c0_i32_0 = arith.constant 0 : i32
    return %arg0, %c0_i32 : i32, i32
  }
  func.func @transform_1(%arg0: i32, %arg1: i32) -> (i32, i32) {
    %c0_i32 = arith.constant 0 : i32
    %c0_i32_0 = arith.constant 0 : i32
    %c0_i32_1 = arith.constant 0 : i32
    return %c0_i32, %c0_i32_0 : i32, i32
  }
  func.func @transform_2(%arg0: i32, %arg1: i32) -> (i32, i32) {
    %c0_i32 = arith.constant 0 : i32
    %c0_i32_0 = arith.constant 0 : i32
    %c0_i32_1 = arith.constant 0 : i32
    return %c0_i32, %c0_i32_0 : i32, i32
  }
  func.func @transform_3(%arg0: i32, %arg1: i32) -> (i32, i32) {
    %c0_i32 = arith.constant 0 : i32
    %c0_i32_0 = arith.constant 0 : i32
    return %c0_i32, %arg1 : i32, i32
  }
  func.func @transform_4(%arg0: i32, %arg1: i32) -> (i32, i32) {
    %c0_i32 = arith.constant 0 : i32
    %c0_i32_0 = arith.constant 0 : i32
    return %c0_i32, %arg1 : i32, i32
  }
  func.func @transform_5(%arg0: i32, %arg1: i32) -> (i32, i32) {
    %c0_i32 = arith.constant 0 : i32
    %c0_i32_0 = arith.constant 0 : i32
    return %arg1, %c0_i32 : i32, i32
  }
  func.func @transform_6(%arg0: i32, %arg1: i32) -> (i32, i32) {
    %c0_i32 = arith.constant 0 : i32
    %c0_i32_0 = arith.constant 0 : i32
    %c0_i32_1 = arith.constant 0 : i32
    return %c0_i32, %c0_i32_0 : i32, i32
  }
  func.func @transform_7(%arg0: i32, %arg1: i32) -> (i32, i32) {
    %c0_i32 = arith.constant 0 : i32
    %c0_i32_0 = arith.constant 0 : i32
    return %arg0, %c0_i32 : i32, i32
  }
}

</mosaic_0001>

<llo_original>
// kernel: _roi_head_call.1
$region0: #{_roi_head_call.1}
  #allocation0 [shape = 'u32[]', space=smem, size = 0x4, offset = 0x4, fixed_abs, tag = 'smem constant byte address 0x4 - core index']
  #allocation1 [shape = 'u32[144,128]{1,0:T(1,128)}', space=vmem, size = 0x12000, scoped, tag = 'internal scratch']
  #allocation2 [shape = 'bf16[256,256]{1,0:T(8,128)(2,1)}', space=vmem, size = 0x20000, scoped, tag = 'scratch operand']
  #allocation3 [shape = 'f32[256,128]{1,0:T(8,128)}', space=vmem, size = 0x20000, scoped, tag = 'scratch operand']
  %s0 = inlined_call_operand.vmem [shape: bf16[256,256], index: 0, kind: input, shape index: {}]
  %s1 = inlined_call_operand.hbm [shape: bf16[256,256], index: 1, kind: input, shape index: {}]
  %s2 = inlined_call_operand.hbm [shape: f32[1,256], index: 2, kind: input, shape index: {}]
  %s3 = inlined_call_operand.hbm [shape: bf16[256,4096], index: 3, kind: input, shape index: {}]
  %s4 = inlined_call_operand.hbm [shape: f32[1,4096], index: 4, kind: input, shape index: {}]
  %s5 = inlined_call_operand.vmem [shape: bf16[4096,128], index: 5, kind: input, shape index: {}]
  %s6 = inlined_call_operand.hbm [shape: f32[1,128], index: 6, kind: input, shape index: {}]
  %s7 = inlined_call_operand.vmem [shape: bf16[256,128], index: 7, kind: output, shape index: {}]
  %s8 = sld [smem:[#allocation0]]
  $region89: #{_roi_head_call.1} parent=0
    _
  %s10 = ssub.s32 1, %s8
  %s11 = scalar_select 0, %s10, %s8
  $region1: #{_roi_head_call.1} parent=0
    #allocation4 [shape = 'u8[131072]{0}', space=vmem, size = 0x20000, scoped, tag = 'input window, operand 1, single buffered']
    #allocation5 [shape = 's32[2]{0}', space=sflag, size = 0x8, scoped, tag = 'scoped memory for _roi_head_call.1']
    #allocation6 [shape = 'u8[1024]{0}', space=vmem, size = 0x400, scoped, tag = 'input window, operand 2, single buffered']
    #allocation7 [shape = 's32[1]{0}', space=sflag, size = 0x4, scoped, tag = 'scoped memory for _roi_head_call.1']
    #allocation8 [shape = 'u8[2097152]{0}', space=vmem, size = 0x200000, scoped, tag = 'input window, operand 3']
    #allocation9 [shape = 'u8[16384]{0}', space=vmem, size = 0x4000, scoped, tag = 'input window, operand 4']
    #allocation10 [shape = 'u8[512]{0}', space=vmem, size = 0x400, scoped, tag = 'input window, operand 6, single buffered']
    %12 = vsyncpa [#allocation5], 0
    %13 = vsyncpa [#allocation7], 0
    loop: start=0, step=1, limit=4
    $region2: #{_roi_head_call.1} parent=1 // loop_pre_header
      _
    $region3: #{_roi_head_call.1} parent=1 // loop_header
      %s15 = sphi 0, %s19
      %p16 = scmp.ge.s32.totalorder %s15, 4
      %s22 = sphi 0, %s34
      %s23 = sphi 0, %s30
      %s24 = sphi 0, %s22
      %s25 = sphi 0, %s23
      %s26 = sphi 0, %s24
      %s27 = sphi 0, %s25
      %s37 = sphi 0, %s39
      %s40 = sphi 0, %s37
      %s41 = sphi 0, %s40
      %s57 = sphi 0, %s41
      %s61 = sphi 0, %s61
      %s63 = sphi 0, %s61
      %s64 = sphi 0, %s63
      %s78 = sphi 0, %s64
      %s82 = sphi 0, %s82
      %s84 = sphi 0, %s82
      %s85 = sphi 0, %s84
      %s99 = sphi 0, %s85
      %s105 = sphi 0, %s107
      %s108 = sphi 0, %s105
      %s109 = sphi 0, %s108
      %s125 = sphi 0, %s109
      %s131 = sphi 0, %s133
      %s134 = sphi 0, %s131
      %s135 = sphi 0, %s134
      %s151 = sphi 0, %s135
      %s157 = sphi 0, %s159
      %s160 = sphi 0, %s157
      %s161 = sphi 0, %s160
      %s177 = sphi 0, %s161
      %s181 = sphi 0, %s181
      %s183 = sphi 0, %s181
      %s184 = sphi 0, %s183
      %s198 = sphi 0, %s184
      %s204 = sphi 0, %s206
      %s207 = sphi 0, %s204
      %s208 = sphi 0, %s207
      %s224 = sphi 0, %s208
    $region4: #{_roi_head_call.1} parent=1 // loop_header_branch
      %18 = sbr.rel (%p16) target = $region8
    $region5: #{_roi_head_call.1} parent=1 // loop_body
      %s20 = ssub.s32 %s15, 1
      %s21 = ssub.s32 %s15, 2
      %s28 = sadd.s32 1, %s23
      %p29 = scmp.ge.s32.totalorder %s28, 2
      %s30 = scalar_select %p29, 0, %s28
      %s31 = sadd.s32 1, %s22
      %s32 = scalar_select %p29, %s31, %s22
      %p33 = scmp.ge.s32.totalorder %s32, 1
      %s34 = scalar_select %p33, 0, %s32
      %s35 = ssub.s32 %s22, %s34
      %p36 = scmp.eq.s32.totalorder %s35, 0
      %s38 = sadd.s32 %s37, 1
      %s39 = scalar_select %p36, %s37, %s38
      %p42 = pneg %p36
      %p43 = scmp.eq.s32.totalorder %s15, 1
      %p44 = por %p42, %p43
      %p45 = scmp.ne.s32.totalorder %s37, %s40
      %p46 = scmp.eq.s32.totalorder %s15, 0
      %p47 = por %p45, %p46
      %p48 = scmp.ne.s32.totalorder %s37, %s40
      %p49 = scmp.eq.s32.totalorder %s20, 1
      %p50 = por %p48, %p49
      %p51 = scmp.ne.s32.totalorder %s40, %s41
      %p52 = scmp.eq.s32.totalorder %s20, 0
      %p53 = por %p51, %p52
      %p54 = scmp.ne.s32.totalorder %s40, %s41
      %p55 = scmp.eq.s32.totalorder %s21, 1
      %p56 = por %p54, %p55
      %p58 = scmp.ne.s32.totalorder %s41, %s57
      %p59 = scmp.eq.s32.totalorder %s21, 0
      %p60 = por %p58, %p59
      %s62 = sadd.s32 %s61, 1
      %p65 = scmp.eq.s32.totalorder %s15, 1
      %p66 = scmp.ne.s32.totalorder %s61, %s63
      %p67 = scmp.eq.s32.totalorder %s15, 0
      %p68 = por %p66, %p67
      %p69 = scmp.ne.s32.totalorder %s61, %s63
      %p70 = scmp.eq.s32.totalorder %s20, 1
      %p71 = por %p69, %p70
      %p72 = scmp.ne.s32.totalorder %s63, %s64
      %p73 = scmp.eq.s32.totalorder %s20, 0
      %p74 = por %p72, %p73
      %p75 = scmp.ne.s32.totalorder %s63, %s64
      %p76 = scmp.eq.s32.totalorder %s21, 1
      %p77 = por %p75, %p76
      %p79 = scmp.ne.s32.totalorder %s64, %s78
      %p80 = scmp.eq.s32.totalorder %s21, 0
      %p81 = por %p79, %p80
      %s83 = sadd.s32 %s82, 1
      %p86 = scmp.eq.s32.totalorder %s15, 1
      %p87 = scmp.ne.s32.totalorder %s82, %s84
      %p88 = scmp.eq.s32.totalorder %s15, 0
      %p89 = por %p87, %p88
      %p90 = scmp.ne.s32.totalorder %s82, %s84
      %p91 = scmp.eq.s32.totalorder %s20, 1
      %p92 = por %p90, %p91
      %p93 = scmp.ne.s32.totalorder %s84, %s85
      %p94 = scmp.eq.s32.totalorder %s20, 0
      %p95 = por %p93, %p94
      %p96 = scmp.ne.s32.totalorder %s84, %s85
      %p97 = scmp.eq.s32.totalorder %s21, 1
      %p98 = por %p96, %p97
      %p100 = scmp.ne.s32.totalorder %s85, %s99
      %p101 = scmp.eq.s32.totalorder %s21, 0
      %p102 = por %p100, %p101
      %s103 = ssub.s32 %s23, %s30
      %p104 = scmp.eq.s32.totalorder %s103, 0
      %s106 = sadd.s32 %s105, 1
      %s107 = scalar_select %p104, %s105, %s106
      %p110 = pneg %p104
      %p111 = scmp.eq.s32.totalorder %s15, 1
      %p112 = por %p110, %p111
      %p113 = scmp.ne.s32.totalorder %s105, %s108
      %p114 = scmp.eq.s32.totalorder %s15, 0
      %p115 = por %p113, %p114
      %p116 = scmp.ne.s32.totalorder %s105, %s108
      %p117 = scmp.eq.s32.totalorder %s20, 1
      %p118 = por %p116, %p117
      %p119 = scmp.ne.s32.totalorder %s108, %s109
      %p120 = scmp.eq.s32.totalorder %s20, 0
      %p121 = por %p119, %p120
      %p122 = scmp.ne.s32.totalorder %s108, %s109
      %p123 = scmp.eq.s32.totalorder %s21, 1
      %p124 = por %p122, %p123
      %p126 = scmp.ne.s32.totalorder %s109, %s125
      %p127 = scmp.eq.s32.totalorder %s21, 0
      %p128 = por %p126, %p127
      %s129 = ssub.s32 %s23, %s30
      %p130 = scmp.eq.s32.totalorder %s129, 0
      %s132 = sadd.s32 %s131, 1
      %s133 = scalar_select %p130, %s131, %s132
      %p136 = pneg %p130
      %p137 = scmp.eq.s32.totalorder %s15, 1
      %p138 = por %p136, %p137
      %p139 = scmp.ne.s32.totalorder %s131, %s134
      %p140 = scmp.eq.s32.totalorder %s15, 0
      %p141 = por %p139, %p140
      %p142 = scmp.ne.s32.totalorder %s131, %s134
      %p143 = scmp.eq.s32.totalorder %s20, 1
      %p144 = por %p142, %p143
      %p145 = scmp.ne.s32.totalorder %s134, %s135
      %p146 = scmp.eq.s32.totalorder %s20, 0
      %p147 = por %p145, %p146
      %p148 = scmp.ne.s32.totalorder %s134, %s135
      %p149 = scmp.eq.s32.totalorder %s21, 1
      %p150 = por %p148, %p149
      %p152 = scmp.ne.s32.totalorder %s135, %s151
      %p153 = scmp.eq.s32.totalorder %s21, 0
      %p154 = por %p152, %p153
      %s155 = ssub.s32 %s23, %s30
      %p156 = scmp.eq.s32.totalorder %s155, 0
      %s158 = sadd.s32 %s157, 1
      %s159 = scalar_select %p156, %s157, %s158
      %p162 = pneg %p156
      %p163 = scmp.eq.s32.totalorder %s15, 1
      %p164 = por %p162, %p163
      %p165 = scmp.ne.s32.totalorder %s157, %s160
      %p166 = scmp.eq.s32.totalorder %s15, 0
      %p167 = por %p165, %p166
      %p168 = scmp.ne.s32.totalorder %s157, %s160
      %p169 = scmp.eq.s32.totalorder %s20, 1
      %p170 = por %p168, %p169
      %p171 = scmp.ne.s32.totalorder %s160, %s161
      %p172 = scmp.eq.s32.totalorder %s20, 0
      %p173 = por %p171, %p172
      %p174 = scmp.ne.s32.totalorder %s160, %s161
      %p175 = scmp.eq.s32.totalorder %s21, 1
      %p176 = por %p174, %p175
      %p178 = scmp.ne.s32.totalorder %s161, %s177
      %p179 = scmp.eq.s32.totalorder %s21, 0
      %p180 = por %p178, %p179
      %s182 = sadd.s32 %s181, 1
      %p185 = scmp.eq.s32.totalorder %s15, 1
      %p186 = scmp.ne.s32.totalorder %s181, %s183
      %p187 = scmp.eq.s32.totalorder %s15, 0
      %p188 = por %p186, %p187
      %p189 = scmp.ne.s32.totalorder %s181, %s183
      %p190 = scmp.eq.s32.totalorder %s20, 1
      %p191 = por %p189, %p190
      %p192 = scmp.ne.s32.totalorder %s183, %s184
      %p193 = scmp.eq.s32.totalorder %s20, 0
      %p194 = por %p192, %p193
      %p195 = scmp.ne.s32.totalorder %s183, %s184
      %p196 = scmp.eq.s32.totalorder %s21, 1
      %p197 = por %p195, %p196
      %p199 = scmp.ne.s32.totalorder %s184, %s198
      %p200 = scmp.eq.s32.totalorder %s21, 0
      %p201 = por %p199, %p200
      %s202 = ssub.s32 %s22, %s34
      %p203 = scmp.eq.s32.totalorder %s202, 0
      %s205 = sadd.s32 %s204, 1
      %s206 = scalar_select %p203, %s204, %s205
      %p209 = pneg %p203
      %p210 = scmp.eq.s32.totalorder %s15, 1
      %p211 = por %p209, %p210
      %p212 = scmp.ne.s32.totalorder %s204, %s207
      %p213 = scmp.eq.s32.totalorder %s15, 0
      %p214 = por %p212, %p213
      %p215 = scmp.ne.s32.totalorder %s204, %s207
      %p216 = scmp.eq.s32.totalorder %s20, 1
      %p217 = por %p215, %p216
      %p218 = scmp.ne.s32.totalorder %s207, %s208
      %p219 = scmp.eq.s32.totalorder %s20, 0
      %p220 = por %p218, %p219
      %p221 = scmp.ne.s32.totalorder %s207, %s208
      %p222 = scmp.eq.s32.totalorder %s21, 1
      %p223 = por %p221, %p222
      %p225 = scmp.ne.s32.totalorder %s208, %s224
      %p226 = scmp.eq.s32.totalorder %s21, 0
      %p227 = por %p225, %p226
      %p228 = scmp.le.s32.totalorder 1, %s15
      %p229 = scmp.lt.s32.totalorder %s15, 3
      %p230 = pnand %p228, %p229
      %p231 = pneg %p230
      // Predicated region
      $region9: #{_roi_head_call.1} parent=5 // pred_check
        _
      $region10: #{_roi_head_call.1} parent=5 // pred_check_branch
        %233 = sbr.rel (%p230) target = $region12
      $region11: #{_roi_head_call.1} parent=5 // pred_region
        %s234 = ssub.s32 %s15, 1
        // Predicated region
        $region13: #{_roi_head_call.1} parent=11 // pred_check
          %p235 = pneg %p53
        $region14: #{_roi_head_call.1} parent=11 // pred_check_branch
          %237 = sbr.rel (%p235) target = $region16
        $region15: #{_roi_head_call.1} parent=11 // pred_region
          %s238 = smul.u32 32, %s24
          %p239 = scmp.lt.s32.totalorder %s238, 31
          %s240 = scalar_select %p239, %s238, 31
          %s241 = smul.addr %s240, 2
          %s242 = smul.addr %s241, 4
          %s243 = scalar_lea.vmem %s0, %s242
          %s244 = smul.u32 32, %s24
        $region16: #{_roi_head_call.1} parent=11 // pred_fallthru
          _
        // Predicated region
        $region17: #{_roi_head_call.1} parent=11 // pred_check
          %p245 = pneg %p74
        $region18: #{_roi_head_call.1} parent=11 // pred_check_branch
          %247 = sbr.rel (%p245) target = $region20
        $region19: #{_roi_head_call.1} parent=11 // pred_region
          %s249 = ssub.s32 4096, 4096
          %250 = vsyncadd [#allocation5], %s249
          %s251 = sshll.u32 [#allocation4], 4
          %s252 = int_to_ptr.vmem [resolvable:$true] %s251
          %257 = dma.hbm_to_vmem [thread:$0]  %s1, 4096, %s252, [#allocation5], 128, 128, 8
        $region20: #{_roi_head_call.1} parent=11 // pred_fallthru
          _
        // Predicated region
        $region21: #{_roi_head_call.1} parent=11 // pred_check
          %p258 = pneg %p95
        $region22: #{_roi_head_call.1} parent=11 // pred_check_branch
          %260 = sbr.rel (%p258) target = $region24
        $region23: #{_roi_head_call.1} parent=11 // pred_region
          %s262 = ssub.s32 32, 32
          %263 = vsyncadd [#allocation7], %s262
          %s265 = sshll.u32 [#allocation6], 4
          %s266 = int_to_ptr.vmem [resolvable:$true] %s265
          %268 = dma.hbm_to_vmem [thread:$0]  %s2, 32, %s266, [#allocation7]
        $region24: #{_roi_head_call.1} parent=11 // pred_fallthru
          _
        // Predicated region
        $region25: #{_roi_head_call.1} parent=11 // pred_check
          %p269 = pneg %p194
        $region26: #{_roi_head_call.1} parent=11 // pred_check_branch
          %271 = sbr.rel (%p269) target = $region28
        $region27: #{_roi_head_call.1} parent=11 // pred_region
          %s273 = ssub.s32 16, 16
          %274 = vsyncadd [#allocation7], %s273
          %s276 = sshll.u32 [#allocation10], 4
          %s277 = int_to_ptr.vmem [resolvable:$true] %s276
          %279 = dma.hbm_to_vmem [thread:$0]  %s6, 16, %s277, [#allocation7]
        $region28: #{_roi_head_call.1} parent=11 // pred_fallthru
          _
      $region12: #{_roi_head_call.1} parent=5 // pred_fallthru
        _
      %p280 = scmp.lt.s32.totalorder %s15, 2
      // Predicated region
      $region29: #{_roi_head_call.1} parent=5 // pred_check
        %p281 = pneg %p280
      $region30: #{_roi_head_call.1} parent=5 // pred_check_branch
        %283 = sbr.rel (%p281) target = $region32
      $region31: #{_roi_head_call.1} parent=5 // pred_region
        // Predicated region
        $region33: #{_roi_head_call.1} parent=31 // pred_check
          %p284 = pneg %p115
        $region34: #{_roi_head_call.1} parent=31 // pred_check_branch
          %286 = sbr.rel (%p284) target = $region36
        $region35: #{_roi_head_call.1} parent=31 // pred_region
          %s287 = sand.u32 %s15, 1
          %s288 = scalar_lea.sflag [#allocation5], %s287
          %s289 = sand.u32 %s105, 1
          %s290 = smul.addr %s289, 2048
          %s291 = scalar_lea.vmem [#allocation8], %s290
          %s292 = smul.u32 16, %s23
          %s294 = ssub.s32 32768, 32768
          %295 = vsyncadd %s288, %s294
          %s296 = smul.addr %s292, 64
          %s297 = scalar_lea.hbm %s3, %s296
          %s298 = sshll.u32 %s291, 4
          %s299 = int_to_ptr.vmem [resolvable:$true] %s298
          %304 = dma.hbm_to_vmem [thread:$0]  %s297, 32768, %s299, %s288, 2048, 1024, 64
        $region36: #{_roi_head_call.1} parent=31 // pred_fallthru
          _
        // Predicated region
        $region37: #{_roi_head_call.1} parent=31 // pred_check
          %p305 = pneg %p141
        $region38: #{_roi_head_call.1} parent=31 // pred_check_branch
          %307 = sbr.rel (%p305) target = $region40
        $region39: #{_roi_head_call.1} parent=31 // pred_region
          %s308 = sand.u32 %s15, 1
          %s309 = scalar_lea.sflag [#allocation5], %s308
          %s310 = sand.u32 %s131, 1
          %s311 = smul.addr %s310, 16
          %s312 = scalar_lea.vmem [#allocation9], %s311
          %s313 = smul.u32 16, %s23
          %s315 = ssub.s32 256, 256
          %316 = vsyncadd %s309, %s315
          %s317 = smul.addr %s313, 16
          %s318 = scalar_lea.hbm %s4, %s317
          %s320 = sshll.u32 %s312, 4
          %s321 = int_to_ptr.vmem [resolvable:$true] %s320
          %323 = dma.hbm_to_vmem [thread:$0]  %s318, 256, %s321, %s309
        $region40: #{_roi_head_call.1} parent=31 // pred_fallthru
          _
        // Predicated region
        $region41: #{_roi_head_call.1} parent=31 // pred_check
          %p324 = pneg %p167
        $region42: #{_roi_head_call.1} parent=31 // pred_check_branch
          %326 = sbr.rel (%p324) target = $region44
        $region43: #{_roi_head_call.1} parent=31 // pred_region
          %s327 = smul.u32 256, %s23
          %p328 = scmp.lt.s32.totalorder %s327, 511
          %s329 = scalar_select %p328, %s327, 511
          %s330 = smul.addr %s329, 4
          %s331 = scalar_lea.vmem %s5, %s330
          %s332 = smul.u32 256, %s23
        $region44: #{_roi_head_call.1} parent=31 // pred_fallthru
          _
      $region32: #{_roi_head_call.1} parent=5 // pred_fallthru
        _
      %p333 = scmp.le.s32.totalorder 1, %s15
      %p334 = scmp.lt.s32.totalorder %s15, 3
      %p335 = pnand %p333, %p334
      %p336 = pneg %p335
      // Predicated region
      $region45: #{_roi_head_call.1} parent=5 // pred_check
        _
      $region46: #{_roi_head_call.1} parent=5 // pred_check_branch
        %338 = sbr.rel (%p335) target = $region48
      $region47: #{_roi_head_call.1} parent=5 // pred_region
        %s339 = ssub.s32 %s15, 1
        // Predicated region
        $region49: #{_roi_head_call.1} parent=47 // pred_check
          %p340 = pneg %p74
        $region50: #{_roi_head_call.1} parent=47 // pred_check_branch
          %342 = sbr.rel (%p340) target = $region52
        $region51: #{_roi_head_call.1} parent=47 // pred_region
          %343 = dma.done [#allocation5], 4096
        $region52: #{_roi_head_call.1} parent=47 // pred_fallthru
          _
        // Predicated region
        $region53: #{_roi_head_call.1} parent=47 // pred_check
          %p344 = pneg %p95
        $region54: #{_roi_head_call.1} parent=47 // pred_check_branch
          %346 = sbr.rel (%p344) target = $region56
        $region55: #{_roi_head_call.1} parent=47 // pred_region
          %347 = dma.done [#allocation7], 32
        $region56: #{_roi_head_call.1} parent=47 // pred_fallthru
          _
        %s348 = sand.u32 %s20, 1
        %s349 = scalar_lea.sflag [#allocation5], %s348
        %s350 = sand.u32 %s108, 1
        %s351 = smul.addr %s350, 2048
        %s352 = scalar_lea.vmem [#allocation8], %s351
        // Predicated region
        $region57: #{_roi_head_call.1} parent=47 // pred_check
          %p353 = pneg %p121
        $region58: #{_roi_head_call.1} parent=47 // pred_check_branch
          %355 = sbr.rel (%p353) target = $region60
        $region59: #{_roi_head_call.1} parent=47 // pred_region
          %356 = dma.done %s349, 32768
        $region60: #{_roi_head_call.1} parent=47 // pred_fallthru
          _
        %s357 = sand.u32 %s20, 1
        %s358 = scalar_lea.sflag [#allocation5], %s357
        %s359 = sand.u32 %s134, 1
        %s360 = smul.addr %s359, 16
        %s361 = scalar_lea.vmem [#allocation9], %s360
        // Predicated region
        $region61: #{_roi_head_call.1} parent=47 // pred_check
          %p362 = pneg %p147
        $region62: #{_roi_head_call.1} parent=47 // pred_check_branch
          %364 = sbr.rel (%p362) target = $region64
        $region63: #{_roi_head_call.1} parent=47 // pred_region
          %365 = dma.done %s358, 256
        $region64: #{_roi_head_call.1} parent=47 // pred_fallthru
          _
        // Predicated region
        $region65: #{_roi_head_call.1} parent=47 // pred_check
          %p366 = pneg %p194
        $region66: #{_roi_head_call.1} parent=47 // pred_check_branch
          %368 = sbr.rel (%p366) target = $region68
        $region67: #{_roi_head_call.1} parent=47 // pred_region
          %369 = dma.done [#allocation7], 16
        $region68: #{_roi_head_call.1} parent=47 // pred_fallthru
          _
        %s370 = smul.u32 32, %s24
        %p371 = scmp.lt.s32.totalorder %s370, 31
        %s372 = scalar_select %p371, %s370, 31
        %s373 = smul.addr %s372, 2
        %s374 = smul.addr %s373, 4
        %s375 = scalar_lea.vmem %s0, %s374
        %p376 = pneg %p53
        %p377 = pneg %p50
        %p378 = pneg %p74
        %p379 = pneg %p71
        %p380 = pneg %p95
        %p381 = pneg %p92
        %s382 = sand.u32 %s20, 1
        %s383 = scalar_lea.sflag [#allocation5], %s382
        %s384 = sand.u32 %s108, 1
        %s385 = smul.addr %s384, 2048
        %s386 = scalar_lea.vmem [#allocation8], %s385
        %p387 = pneg %p121
        %p388 = pneg %p118
        %s389 = sand.u32 %s20, 1
        %s390 = scalar_lea.sflag [#allocation5], %s389
        %s391 = sand.u32 %s134, 1
        %s392 = smul.addr %s391, 16
        %s393 = scalar_lea.vmem [#allocation9], %s392
        %p394 = pneg %p147
        %p395 = pneg %p144
        %s396 = smul.u32 256, %s25
        %p397 = scmp.lt.s32.totalorder %s396, 511
        %s398 = scalar_select %p397, %s396, 511
        %s399 = smul.addr %s398, 4
        %s400 = scalar_lea.vmem %s5, %s399
        %p401 = pneg %p173
        %p402 = pneg %p170
        %p403 = pneg %p194
        %p404 = pneg %p191
        %p405 = pneg %p220
        %p406 = pneg %p217
        %s407 = smul.u32 32, %s24
        %p408 = scmp.lt.s32.totalorder %s407, 31
        %s409 = scalar_select %p408, %s407, 31
        %s410 = smul.addr %s409, 4
        %s411 = scalar_lea.vmem %s7, %s410
        %s412 = smul.u32 32, %s24
        %p413 = scmp.lt.s32.totalorder %s412, 31
        %s414 = scalar_select %p413, %s412, 31
        %s415 = smul.addr %s414, 2
        %s416 = smul.addr %s415, 4
        %s417 = scalar_lea.vmem %s0, %s416
        %s418 = smul.u32 32, %s24
        %s419 = smul.u32 16, %s25
        %s420 = smul.u32 16, %s25
        %s421 = smul.u32 256, %s25
        %p422 = scmp.lt.s32.totalorder %s421, 511
        %s423 = scalar_select %p422, %s421, 511
        %s424 = smul.addr %s423, 4
        %s425 = scalar_lea.vmem %s5, %s424
        %s426 = smul.u32 256, %s25
        %s427 = smul.u32 32, %s24
        %p428 = scmp.lt.s32.totalorder %s427, 31
        %s429 = scalar_select %p428, %s427, 31
        %s430 = smul.addr %s429, 4
        %s431 = scalar_lea.vmem %s7, %s430
        %s432 = smul.u32 32, %s24
        %p434 = scmp.eq.s32.totalorder %s25, 0
        // Predicated region
        $region69: #{_roi_head_call.1} parent=47 // pred_check
          %p435 = pneg %p434
        $region70: #{_roi_head_call.1} parent=47 // pred_check_branch
          %437 = sbr.rel (%p435) target = $region72
        $region71: #{_roi_head_call.1} parent=47 // pred_region
          %v438 = vld [vmem:[%s417] sm:$0xff]
          %v439 = vld [vmem:[%s417 + $0x8] sm:$0xff]
          %v440 = vld [vmem:[%s417 + $0x10] sm:$0xff]
          %v441 = vld [vmem:[%s417 + $0x18] sm:$0xff]
          %v442 = vld [vmem:[%s417 + $0x20] sm:$0xff]
          %v443 = vld [vmem:[%s417 + $0x28] sm:$0xff]
          %v444 = vld [vmem:[%s417 + $0x30] sm:$0xff]
          %v445 = vld [vmem:[%s417 + $0x38] sm:$0xff]
          %v446 = vld [vmem:[%s417 + $0x40] sm:$0xff]
          %v447 = vld [vmem:[%s417 + $0x48] sm:$0xff]
          %v448 = vld [vmem:[%s417 + $0x50] sm:$0xff]
          %v449 = vld [vmem:[%s417 + $0x58] sm:$0xff]
          %v450 = vld [vmem:[%s417 + $0x60] sm:$0xff]
          %v451 = vld [vmem:[%s417 + $0x68] sm:$0xff]
          %v452 = vld [vmem:[%s417 + $0x70] sm:$0xff]
          %v453 = vld [vmem:[%s417 + $0x78] sm:$0xff]
          %v454 = vld [vmem:[%s417 + $0x80] sm:$0xff]
          %v455 = vld [vmem:[%s417 + $0x88] sm:$0xff]
          %v456 = vld [vmem:[%s417 + $0x90] sm:$0xff]
          %v457 = vld [vmem:[%s417 + $0x98] sm:$0xff]
          %v458 = vld [vmem:[%s417 + $0xa0] sm:$0xff]
          %v459 = vld [vmem:[%s417 + $0xa8] sm:$0xff]
          %v460 = vld [vmem:[%s417 + $0xb0] sm:$0xff]
          %v461 = vld [vmem:[%s417 + $0xb8] sm:$0xff]
          %v462 = vld [vmem:[%s417 + $0xc0] sm:$0xff]
          %v463 = vld [vmem:[%s417 + $0xc8] sm:$0xff]
          %v464 = vld [vmem:[%s417 + $0xd0] sm:$0xff]
          %v465 = vld [vmem:[%s417 + $0xd8] sm:$0xff]
          %v466 = vld [vmem:[%s417 + $0xe0] sm:$0xff]
          %v467 = vld [vmem:[%s417 + $0xe8] sm:$0xff]
          %v468 = vld [vmem:[%s417 + $0xf0] sm:$0xff]
          %v469 = vld [vmem:[%s417 + $0xf8] sm:$0xff]
          %v470 = vld [vmem:[#allocation4] sm:$0xff]
          %v471 = vld [vmem:[#allocation4 + $0x8] sm:$0xff]
          %v472 = vld [vmem:[#allocation4 + $0x10] sm:$0xff]
          %v473 = vld [vmem:[#allocation4 + $0x18] sm:$0xff]
          %v474 = vld [vmem:[#allocation4 + $0x20] sm:$0xff]
          %v475 = vld [vmem:[#allocation4 + $0x28] sm:$0xff]
          %v476 = vld [vmem:[#allocation4 + $0x30] sm:$0xff]
          %v477 = vld [vmem:[#allocation4 + $0x38] sm:$0xff]
          %v478 = vld [vmem:[#allocation4 + $0x40] sm:$0xff]
          %v479 = vld [vmem:[#allocation4 + $0x48] sm:$0xff]
          %v480 = vld [vmem:[#allocation4 + $0x50] sm:$0xff]
          %v481 = vld [vmem:[#allocation4 + $0x58] sm:$0xff]
          %v482 = vld [vmem:[#allocation4 + $0x60] sm:$0xff]
          %v483 = vld [vmem:[#allocation4 + $0x68] sm:$0xff]
          %v484 = vld [vmem:[#allocation4 + $0x70] sm:$0xff]
          %v485 = vld [vmem:[#allocation4 + $0x78] sm:$0xff]
          %v486 = vld [vmem:[#allocation4 + $0x80] sm:$0xff]
          %v487 = vld [vmem:[#allocation4 + $0x88] sm:$0xff]
          %v488 = vld [vmem:[#allocation4 + $0x90] sm:$0xff]
          %v489 = vld [vmem:[#allocation4 + $0x98] sm:$0xff]
          %v490 = vld [vmem:[#allocation4 + $0xa0] sm:$0xff]
          %v491 = vld [vmem:[#allocation4 + $0xa8] sm:$0xff]
          %v492 = vld [vmem:[#allocation4 + $0xb0] sm:$0xff]
          %v493 = vld [vmem:[#allocation4 + $0xb8] sm:$0xff]
          %v494 = vld [vmem:[#allocation4 + $0xc0] sm:$0xff]
          %v495 = vld [vmem:[#allocation4 + $0xc8] sm:$0xff]
          %v496 = vld [vmem:[#allocation4 + $0xd0] sm:$0xff]
          %v497 = vld [vmem:[#allocation4 + $0xd8] sm:$0xff]
          %v498 = vld [vmem:[#allocation4 + $0xe0] sm:$0xff]
          %v499 = vld [vmem:[#allocation4 + $0xe8] sm:$0xff]
          %v500 = vld [vmem:[#allocation4 + $0xf0] sm:$0xff]
          %v501 = vld [vmem:[#allocation4 + $0xf8] sm:$0xff]
          %v502 = vld [vmem:[#allocation6] sm:$0x3]
          %v504 = vlaneseq
          %v505 = vshrl.u32 %v504, 7
          %v506 = vsub.s32 0, %v505
          %v507 = vrot.slane %v502, %v506
          %v508 = vlaneseq
          %v509 = vshrl.u32 %v508, 7
          %v510 = vsub.s32 1, %v509
          %v511 = vrot.slane %v502, %v510
          %v546 = vunpack.c.l.b16 %v438
          %v547 = vunpack.c.h.b16 %v438
          %v548 = vunpack.c.l.b16 %v439
          %v549 = vunpack.c.h.b16 %v439
          %v550 = vunpack.c.l.b16 %v440
          %v551 = vunpack.c.h.b16 %v440
          %v552 = vunpack.c.l.b16 %v441
          %v553 = vunpack.c.h.b16 %v441
          %v554 = vunpack.c.l.b16 %v442
          %v555 = vunpack.c.h.b16 %v442
          %v556 = vunpack.c.l.b16 %v443
          %v557 = vunpack.c.h.b16 %v443
          %v558 = vunpack.c.l.b16 %v444
          %v559 = vunpack.c.h.b16 %v444
          %v560 = vunpack.c.l.b16 %v445
          %v561 = vunpack.c.h.b16 %v445
          %v562 = vunpack.c.l.b16 %v446
          %v563 = vunpack.c.h.b16 %v446
          %v564 = vunpack.c.l.b16 %v447
          %v565 = vunpack.c.h.b16 %v447
          %v566 = vunpack.c.l.b16 %v448
          %v567 = vunpack.c.h.b16 %v448
          %v568 = vunpack.c.l.b16 %v449
          %v569 = vunpack.c.h.b16 %v449
          %v570 = vunpack.c.l.b16 %v450
          %v571 = vunpack.c.h.b16 %v450
          %v572 = vunpack.c.l.b16 %v451
          %v573 = vunpack.c.h.b16 %v451
          %v574 = vunpack.c.l.b16 %v452
          %v575 = vunpack.c.h.b16 %v452
          %v576 = vunpack.c.l.b16 %v453
          %v577 = vunpack.c.h.b16 %v453
          %v578 = vunpack.c.l.b16 %v454
          %v579 = vunpack.c.h.b16 %v454
          %v580 = vunpack.c.l.b16 %v455
          %v581 = vunpack.c.h.b16 %v455
          %v582 = vunpack.c.l.b16 %v456
          %v583 = vunpack.c.h.b16 %v456
          %v584 = vunpack.c.l.b16 %v457
          %v585 = vunpack.c.h.b16 %v457
          %v586 = vunpack.c.l.b16 %v458
          %v587 = vunpack.c.h.b16 %v458
          %v588 = vunpack.c.l.b16 %v459
          %v589 = vunpack.c.h.b16 %v459
          %v590 = vunpack.c.l.b16 %v460
          %v591 = vunpack.c.h.b16 %v460
          %v592 = vunpack.c.l.b16 %v461
          %v593 = vunpack.c.h.b16 %v461
          %v594 = vunpack.c.l.b16 %v462
          %v595 = vunpack.c.h.b16 %v462
          %v596 = vunpack.c.l.b16 %v463
          %v597 = vunpack.c.h.b16 %v463
          %v598 = vunpack.c.l.b16 %v464
          %v599 = vunpack.c.h.b16 %v464
          %v600 = vunpack.c.l.b16 %v465
          %v601 = vunpack.c.h.b16 %v465
          %v602 = vunpack.c.l.b16 %v466
          %v603 = vunpack.c.h.b16 %v466
          %v604 = vunpack.c.l.b16 %v467
          %v605 = vunpack.c.h.b16 %v467
          %v606 = vunpack.c.l.b16 %v468
          %v607 = vunpack.c.h.b16 %v468
          %v608 = vunpack.c.l.b16 %v469
          %v609 = vunpack.c.h.b16 %v469
          %v610 = vpack.c.b16 %v548, %v546
          %v611 = vpack.c.b16 %v549, %v547
          %v612 = vpack.c.b16 %v552, %v550
          %v613 = vpack.c.b16 %v553, %v551
          %v614 = vpack.c.b16 %v556, %v554
          %v615 = vpack.c.b16 %v557, %v555
          %v616 = vpack.c.b16 %v560, %v558
          %v617 = vpack.c.b16 %v561, %v559
          %v618 = vpack.c.b16 %v564, %v562
          %v619 = vpack.c.b16 %v565, %v563
          %v620 = vpack.c.b16 %v568, %v566
          %v621 = vpack.c.b16 %v569, %v567
          %v622 = vpack.c.b16 %v572, %v570
          %v623 = vpack.c.b16 %v573, %v571
          %v624 = vpack.c.b16 %v576, %v574
          %v625 = vpack.c.b16 %v577, %v575
          %v626 = vpack.c.b16 %v580, %v578
          %v627 = vpack.c.b16 %v581, %v579
          %v628 = vpack.c.b16 %v584, %v582
          %v629 = vpack.c.b16 %v585, %v583
          %v630 = vpack.c.b16 %v588, %v586
          %v631 = vpack.c.b16 %v589, %v587
          %v632 = vpack.c.b16 %v592, %v590
          %v633 = vpack.c.b16 %v593, %v591
          %v634 = vpack.c.b16 %v596, %v594
          %v635 = vpack.c.b16 %v597, %v595
          %v636 = vpack.c.b16 %v600, %v598
          %v637 = vpack.c.b16 %v601, %v599
          %v638 = vpack.c.b16 %v604, %v602
          %v639 = vpack.c.b16 %v605, %v603
          %v640 = vpack.c.b16 %v608, %v606
          %v641 = vpack.c.b16 %v609, %v607
          %v706 = vunpack.c.l.b16 %v470
          %v707 = vunpack.c.h.b16 %v470
          %v708 = vunpack.c.l.b16 %v471
          %v709 = vunpack.c.h.b16 %v471
          %v710 = vunpack.c.l.b16 %v472
          %v711 = vunpack.c.h.b16 %v472
          %v712 = vunpack.c.l.b16 %v473
          %v713 = vunpack.c.h.b16 %v473
          %v714 = vunpack.c.l.b16 %v474
          %v715 = vunpack.c.h.b16 %v474
          %v716 = vunpack.c.l.b16 %v475
          %v717 = vunpack.c.h.b16 %v475
          %v718 = vunpack.c.l.b16 %v476
          %v719 = vunpack.c.h.b16 %v476
          %v720 = vunpack.c.l.b16 %v477
          %v721 = vunpack.c.h.b16 %v477
          %v722 = vunpack.c.l.b16 %v478
          %v723 = vunpack.c.h.b16 %v478
          %v724 = vunpack.c.l.b16 %v479
          %v725 = vunpack.c.h.b16 %v479
          %v726 = vunpack.c.l.b16 %v480
          %v727 = vunpack.c.h.b16 %v480
          %v728 = vunpack.c.l.b16 %v481
          %v729 = vunpack.c.h.b16 %v481
          %v730 = vunpack.c.l.b16 %v482
          %v731 = vunpack.c.h.b16 %v482
          %v732 = vunpack.c.l.b16 %v483
          %v733 = vunpack.c.h.b16 %v483
          %v734 = vunpack.c.l.b16 %v484
          %v735 = vunpack.c.h.b16 %v484
          %v736 = vunpack.c.l.b16 %v485
          %v737 = vunpack.c.h.b16 %v485
          %v738 = vunpack.c.l.b16 %v486
          %v739 = vunpack.c.h.b16 %v486
          %v740 = vunpack.c.l.b16 %v487
          %v741 = vunpack.c.h.b16 %v487
          %v742 = vunpack.c.l.b16 %v488
          %v743 = vunpack.c.h.b16 %v488
          %v744 = vunpack.c.l.b16 %v489
          %v745 = vunpack.c.h.b16 %v489
          %v746 = vunpack.c.l.b16 %v490
          %v747 = vunpack.c.h.b16 %v490
          %v748 = vunpack.c.l.b16 %v491
          %v749 = vunpack.c.h.b16 %v491
          %v750 = vunpack.c.l.b16 %v492
          %v751 = vunpack.c.h.b16 %v492
          %v752 = vunpack.c.l.b16 %v493
          %v753 = vunpack.c.h.b16 %v493
          %v754 = vunpack.c.l.b16 %v494
          %v755 = vunpack.c.h.b16 %v494
          %v756 = vunpack.c.l.b16 %v495
          %v757 = vunpack.c.h.b16 %v495
          %v758 = vunpack.c.l.b16 %v496
          %v759 = vunpack.c.h.b16 %v496
          %v760 = vunpack.c.l.b16 %v497
          %v761 = vunpack.c.h.b16 %v497
          %v762 = vunpack.c.l.b16 %v498
          %v763 = vunpack.c.h.b16 %v498
          %v764 = vunpack.c.l.b16 %v499
          %v765 = vunpack.c.h.b16 %v499
          %v766 = vunpack.c.l.b16 %v500
          %v767 = vunpack.c.h.b16 %v500
          %v768 = vunpack.c.l.b16 %v501
          %v769 = vunpack.c.h.b16 %v501
          %v770 = vpack.c.b16 %v708, %v706
          %v771 = vpack.c.b16 %v709, %v707
          %v772 = vpack.c.b16 %v712, %v710
          %v773 = vpack.c.b16 %v713, %v711
          %v774 = vpack.c.b16 %v716, %v714
          %v775 = vpack.c.b16 %v717, %v715
          %v776 = vpack.c.b16 %v720, %v718
          %v777 = vpack.c.b16 %v721, %v719
          %v778 = vpack.c.b16 %v724, %v722
          %v779 = vpack.c.b16 %v725, %v723
          %v780 = vpack.c.b16 %v728, %v726
          %v781 = vpack.c.b16 %v729, %v727
          %v782 = vpack.c.b16 %v732, %v730
          %v783 = vpack.c.b16 %v733, %v731
          %v784 = vpack.c.b16 %v736, %v734
          %v785 = vpack.c.b16 %v737, %v735
          %v786 = vpack.c.b16 %v740, %v738
          %v787 = vpack.c.b16 %v741, %v739
          %v788 = vpack.c.b16 %v744, %v742
          %v789 = vpack.c.b16 %v745, %v743
          %v790 = vpack.c.b16 %v748, %v746
          %v791 = vpack.c.b16 %v749, %v747
          %v792 = vpack.c.b16 %v752, %v750
          %v793 = vpack.c.b16 %v753, %v751
          %v794 = vpack.c.b16 %v756, %v754
          %v795 = vpack.c.b16 %v757, %v755
          %v796 = vpack.c.b16 %v760, %v758
          %v797 = vpack.c.b16 %v761, %v759
          %v798 = vpack.c.b16 %v764, %v762
          %v799 = vpack.c.b16 %v765, %v763
          %v800 = vpack.c.b16 %v768, %v766
          %v801 = vpack.c.b16 %v769, %v767
          %834 = vmatprep.subr.bf16.mxu0 %v785
          %835 = vmatpush1.bf16.msra.mxu0 %v784
          %836 = vmatprep.subr.bf16.mxu0 %v783
          %837 = vmatpush1.bf16.msra.mxu0 %v782
          %838 = vmatprep.subr.bf16.mxu0 %v781
          %839 = vmatpush1.bf16.msra.mxu0 %v780
          %840 = vmatprep.subr.bf16.mxu0 %v779
          %841 = vmatpush1.bf16.msra.mxu0 %v778
          %842 = vmatprep.subr.bf16.mxu0 %v777
          %843 = vmatpush1.bf16.msra.mxu0 %v776
          %844 = vmatprep.subr.bf16.mxu0 %v775
          %845 = vmatpush1.bf16.msra.mxu0 %v774
          %846 = vmatprep.subr.bf16.mxu0 %v773
          %847 = vmatpush1.bf16.msra.mxu0 %v772
          %848 = vmatprep.subr.bf16.mxu0 %v771
          %849 = vmatpush1.bf16.msra.mxu0 %v770
          %850 = vmatprep.subr.bf16.mxu0 %v801
          %851 = vmatpush2.bf16.msra.mxu0 %v800
          %852 = vmatprep.subr.bf16.mxu0 %v799
          %853 = vmatpush2.bf16.msra.mxu0 %v798
          %854 = vmatprep.subr.bf16.mxu0 %v797
          %855 = vmatpush2.bf16.msra.mxu0 %v796
          %856 = vmatprep.subr.bf16.mxu0 %v795
          %857 = vmatpush2.bf16.msra.mxu0 %v794
          %858 = vmatprep.subr.bf16.mxu0 %v793
          %859 = vmatpush2.bf16.msra.mxu0 %v792
          %860 = vmatprep.subr.bf16.mxu0 %v791
          %861 = vmatpush2.bf16.msra.mxu0 %v790
          %862 = vmatprep.subr.bf16.mxu0 %v789
          %863 = vmatpush2.bf16.msra.mxu0 %v788
          %864 = vmatprep.subr.bf16.mxu0 %v787
          %865 = vmatpush2.bf16.msra.mxu0 %v786
          %866 = vmatprep.mubr.bf16.mxu0 %v611
          %867 = vmatmul.mubr.bf16.gmra.mxu0 %v610
          %v868 = vpop.f32.mrf.mxu0
          %v869 = vadd.f32 %v507, %v868
          %v870 = vpop.f32.mrf.mxu0
          %v871 = vadd.f32 %v511, %v870
          %v872 = vpop.f32.mrf.mxu0
          %v873 = vadd.f32 %v507, %v872
          %v874 = vpop.f32.mrf.mxu0
          %v875 = vadd.f32 %v511, %v874
          %876 = vmatprep.mubr.bf16.mxu0 %v613
          %877 = vmatmul.mubr.bf16.gmra.mxu0 %v612
          %v878 = vpop.f32.mrf.mxu0
          %v879 = vadd.f32 %v507, %v878
          %v880 = vpop.f32.mrf.mxu0
          %v881 = vadd.f32 %v511, %v880
          %v882 = vpop.f32.mrf.mxu0
          %v883 = vadd.f32 %v507, %v882
          %v884 = vpop.f32.mrf.mxu0
          %v885 = vadd.f32 %v511, %v884
          %886 = vmatprep.mubr.bf16.mxu0 %v615
          %887 = vmatmul.mubr.bf16.gmra.mxu0 %v614
          %v888 = vpop.f32.mrf.mxu0
          %v889 = vadd.f32 %v507, %v888
          %v890 = vpop.f32.mrf.mxu0
          %v891 = vadd.f32 %v511, %v890
          %v892 = vpop.f32.mrf.mxu0
          %v893 = vadd.f32 %v507, %v892
          %v894 = vpop.f32.mrf.mxu0
          %v895 = vadd.f32 %v511, %v894
          %896 = vmatprep.mubr.bf16.mxu0 %v617
          %897 = vmatmul.mubr.bf16.gmra.mxu0 %v616
          %v898 = vpop.f32.mrf.mxu0
          %v899 = vadd.f32 %v507, %v898
          %v900 = vpop.f32.mrf.mxu0
          %v901 = vadd.f32 %v511, %v900
          %v902 = vpop.f32.mrf.mxu0
          %v903 = vadd.f32 %v507, %v902
          %v904 = vpop.f32.mrf.mxu0
          %v905 = vadd.f32 %v511, %v904
          %906 = vmatprep.mubr.bf16.mxu0 %v619
          %907 = vmatmul.mubr.bf16.gmra.mxu0 %v618
          %v908 = vpop.f32.mrf.mxu0
          %v909 = vadd.f32 %v507, %v908
          %v910 = vpop.f32.mrf.mxu0
          %v911 = vadd.f32 %v511, %v910
          %v912 = vpop.f32.mrf.mxu0
          %v913 = vadd.f32 %v507, %v912
          %v914 = vpop.f32.mrf.mxu0
          %v915 = vadd.f32 %v511, %v914
          %916 = vmatprep.mubr.bf16.mxu0 %v621
          %917 = vmatmul.mubr.bf16.gmra.mxu0 %v620
          %v918 = vpop.f32.mrf.mxu0
          %v919 = vadd.f32 %v507, %v918
          %v920 = vpop.f32.mrf.mxu0
          %v921 = vadd.f32 %v511, %v920
          %v922 = vpop.f32.mrf.mxu0
          %v923 = vadd.f32 %v507, %v922
          %v924 = vpop.f32.mrf.mxu0
          %v925 = vadd.f32 %v511, %v924
          %926 = vmatprep.mubr.bf16.mxu0 %v623
          %927 = vmatmul.mubr.bf16.gmra.mxu0 %v622
          %v928 = vpop.f32.mrf.mxu0
          %v929 = vadd.f32 %v507, %v928
          %v930 = vpop.f32.mrf.mxu0
          %v931 = vadd.f32 %v511, %v930
          %v932 = vpop.f32.mrf.mxu0
          %v933 = vadd.f32 %v507, %v932
          %v934 = vpop.f32.mrf.mxu0
          %v935 = vadd.f32 %v511, %v934
          %936 = vmatprep.mubr.bf16.mxu0 %v625
          %937 = vmatmul.mubr.bf16.gmra.mxu0 %v624
          %v938 = vpop.f32.mrf.mxu0
          %v939 = vadd.f32 %v507, %v938
          %v940 = vpop.f32.mrf.mxu0
          %v941 = vadd.f32 %v511, %v940
          %v942 = vpop.f32.mrf.mxu0
          %v943 = vadd.f32 %v507, %v942
          %v944 = vpop.f32.mrf.mxu0
          %v945 = vadd.f32 %v511, %v944
          %946 = vmatprep.mubr.bf16.mxu0 %v627
          %947 = vmatmul.mubr.bf16.gmra.mxu0 %v626
          %v948 = vpop.f32.mrf.mxu0
          %v949 = vadd.f32 %v507, %v948
          %v950 = vpop.f32.mrf.mxu0
          %v951 = vadd.f32 %v511, %v950
          %v952 = vpop.f32.mrf.mxu0
          %v953 = vadd.f32 %v507, %v952
          %v954 = vpop.f32.mrf.mxu0
          %v955 = vadd.f32 %v511, %v954
          %956 = vmatprep.mubr.bf16.mxu0 %v629
          %957 = vmatmul.mubr.bf16.gmra.mxu0 %v628
          %v958 = vpop.f32.mrf.mxu0
          %v959 = vadd.f32 %v507, %v958
          %v960 = vpop.f32.mrf.mxu0
          %v961 = vadd.f32 %v511, %v960
          %v962 = vpop.f32.mrf.mxu0
          %v963 = vadd.f32 %v507, %v962
          %v964 = vpop.f32.mrf.mxu0
          %v965 = vadd.f32 %v511, %v964
          %966 = vmatprep.mubr.bf16.mxu0 %v631
          %967 = vmatmul.mubr.bf16.gmra.mxu0 %v630
          %v968 = vpop.f32.mrf.mxu0
          %v969 = vadd.f32 %v507, %v968
          %v970 = vpop.f32.mrf.mxu0
          %v971 = vadd.f32 %v511, %v970
          %v972 = vpop.f32.mrf.mxu0
          %v973 = vadd.f32 %v507, %v972
          %v974 = vpop.f32.mrf.mxu0
          %v975 = vadd.f32 %v511, %v974
          %976 = vmatprep.mubr.bf16.mxu0 %v633
          %977 = vmatmul.mubr.bf16.gmra.mxu0 %v632
          %v978 = vpop.f32.mrf.mxu0
          %v979 = vadd.f32 %v507, %v978
          %v980 = vpop.f32.mrf.mxu0
          %v981 = vadd.f32 %v511, %v980
          %v982 = vpop.f32.mrf.mxu0
          %v983 = vadd.f32 %v507, %v982
          %v984 = vpop.f32.mrf.mxu0
          %v985 = vadd.f32 %v511, %v984
          %986 = vmatprep.mubr.bf16.mxu0 %v635
          %987 = vmatmul.mubr.bf16.gmra.mxu0 %v634
          %v988 = vpop.f32.mrf.mxu0
          %v989 = vadd.f32 %v507, %v988
          %v990 = vpop.f32.mrf.mxu0
          %v991 = vadd.f32 %v511, %v990
          %v992 = vpop.f32.mrf.mxu0
          %v993 = vadd.f32 %v507, %v992
          %v994 = vpop.f32.mrf.mxu0
          %v995 = vadd.f32 %v511, %v994
          %996 = vmatprep.mubr.bf16.mxu0 %v637
          %997 = vmatmul.mubr.bf16.gmra.mxu0 %v636
          %v998 = vpop.f32.mrf.mxu0
          %v999 = vadd.f32 %v507, %v998
          %v1000 = vpop.f32.mrf.mxu0
          %v1001 = vadd.f32 %v511, %v1000
          %v1002 = vpop.f32.mrf.mxu0
          %v1003 = vadd.f32 %v507, %v1002
          %v1004 = vpop.f32.mrf.mxu0
          %v1005 = vadd.f32 %v511, %v1004
          %1006 = vmatprep.mubr.bf16.mxu0 %v639
          %1007 = vmatmul.mubr.bf16.gmra.mxu0 %v638
          %v1008 = vpop.f32.mrf.mxu0
          %v1009 = vadd.f32 %v507, %v1008
          %v1010 = vpop.f32.mrf.mxu0
          %v1011 = vadd.f32 %v511, %v1010
          %v1012 = vpop.f32.mrf.mxu0
          %v1013 = vadd.f32 %v507, %v1012
          %v1014 = vpop.f32.mrf.mxu0
          %v1015 = vadd.f32 %v511, %v1014
          %1016 = vmatprep.mubr.bf16.mxu0 %v641
          %1017 = vmatmul.mubr.bf16.gmra.mxu0 %v640
          %v1018 = vpop.f32.mrf.mxu0
          %v1019 = vadd.f32 %v507, %v1018
          %v1020 = vpop.f32.mrf.mxu0
          %v1021 = vadd.f32 %v511, %v1020
          %v1022 = vpop.f32.mrf.mxu0
          %v1023 = vadd.f32 %v507, %v1022
          %v1024 = vpop.f32.mrf.mxu0
          %v1025 = vadd.f32 %v511, %v1024
          %1026 = vdwg.mxu0
          %v1027 = vmax.f32 %v869, 0.0
          %v1028 = vmax.f32 %v871, 0.0
          %v1029 = vmax.f32 %v873, 0.0
          %v1030 = vmax.f32 %v875, 0.0
          %v1031 = vmax.f32 %v879, 0.0
          %v1032 = vmax.f32 %v881, 0.0
          %v1033 = vmax.f32 %v883, 0.0
          %v1034 = vmax.f32 %v885, 0.0
          %v1035 = vmax.f32 %v889, 0.0
          %v1036 = vmax.f32 %v891, 0.0
          %v1037 = vmax.f32 %v893, 0.0
          %v1038 = vmax.f32 %v895, 0.0
          %v1039 = vmax.f32 %v899, 0.0
          %v1040 = vmax.f32 %v901, 0.0
          %v1041 = vmax.f32 %v903, 0.0
          %v1042 = vmax.f32 %v905, 0.0
          %v1043 = vmax.f32 %v909, 0.0
          %v1044 = vmax.f32 %v911, 0.0
          %v1045 = vmax.f32 %v913, 0.0
          %v1046 = vmax.f32 %v915, 0.0
          %v1047 = vmax.f32 %v919, 0.0
          %v1048 = vmax.f32 %v921, 0.0
          %v1049 = vmax.f32 %v923, 0.0
          %v1050 = vmax.f32 %v925, 0.0
          %v1051 = vmax.f32 %v929, 0.0
          %v1052 = vmax.f32 %v931, 0.0
          %v1053 = vmax.f32 %v933, 0.0
          %v1054 = vmax.f32 %v935, 0.0
          %v1055 = vmax.f32 %v939, 0.0
          %v1056 = vmax.f32 %v941, 0.0
          %v1057 = vmax.f32 %v943, 0.0
          %v1058 = vmax.f32 %v945, 0.0
          %v1059 = vmax.f32 %v949, 0.0
          %v1060 = vmax.f32 %v951, 0.0
          %v1061 = vmax.f32 %v953, 0.0
          %v1062 = vmax.f32 %v955, 0.0
          %v1063 = vmax.f32 %v959, 0.0
          %v1064 = vmax.f32 %v961, 0.0
          %v1065 = vmax.f32 %v963, 0.0
          %v1066 = vmax.f32 %v965, 0.0
          %v1067 = vmax.f32 %v969, 0.0
          %v1068 = vmax.f32 %v971, 0.0
          %v1069 = vmax.f32 %v973, 0.0
          %v1070 = vmax.f32 %v975, 0.0
          %v1071 = vmax.f32 %v979, 0.0
          %v1072 = vmax.f32 %v981, 0.0
          %v1073 = vmax.f32 %v983, 0.0
          %v1074 = vmax.f32 %v985, 0.0
          %v1075 = vmax.f32 %v989, 0.0
          %v1076 = vmax.f32 %v991, 0.0
          %v1077 = vmax.f32 %v993, 0.0
          %v1078 = vmax.f32 %v995, 0.0
          %v1079 = vmax.f32 %v999, 0.0
          %v1080 = vmax.f32 %v1001, 0.0
          %v1081 = vmax.f32 %v1003, 0.0
          %v1082 = vmax.f32 %v1005, 0.0
          %v1083 = vmax.f32 %v1009, 0.0
          %v1084 = vmax.f32 %v1011, 0.0
          %v1085 = vmax.f32 %v1013, 0.0
          %v1086 = vmax.f32 %v1015, 0.0
          %v1087 = vmax.f32 %v1019, 0.0
          %v1088 = vmax.f32 %v1021, 0.0
          %v1089 = vmax.f32 %v1023, 0.0
          %v1090 = vmax.f32 %v1025, 0.0
          %v1091 = vpack.c.bf16 %v1029, %v1027
          %v1092 = vpack.c.bf16 %v1030, %v1028
          %v1093 = vpack.c.bf16 %v1033, %v1031
          %v1094 = vpack.c.bf16 %v1034, %v1032
          %v1095 = vpack.c.bf16 %v1037, %v1035
          %v1096 = vpack.c.bf16 %v1038, %v1036
          %v1097 = vpack.c.bf16 %v1041, %v1039
          %v1098 = vpack.c.bf16 %v1042, %v1040
          %v1099 = vpack.c.bf16 %v1045, %v1043
          %v1100 = vpack.c.bf16 %v1046, %v1044
          %v1101 = vpack.c.bf16 %v1049, %v1047
          %v1102 = vpack.c.bf16 %v1050, %v1048
          %v1103 = vpack.c.bf16 %v1053, %v1051
          %v1104 = vpack.c.bf16 %v1054, %v1052
          %v1105 = vpack.c.bf16 %v1057, %v1055
          %v1106 = vpack.c.bf16 %v1058, %v1056
          %v1107 = vpack.c.bf16 %v1061, %v1059
          %v1108 = vpack.c.bf16 %v1062, %v1060
          %v1109 = vpack.c.bf16 %v1065, %v1063
          %v1110 = vpack.c.bf16 %v1066, %v1064
          %v1111 = vpack.c.bf16 %v1069, %v1067
          %v1112 = vpack.c.bf16 %v1070, %v1068
          %v1113 = vpack.c.bf16 %v1073, %v1071
          %v1114 = vpack.c.bf16 %v1074, %v1072
          %v1115 = vpack.c.bf16 %v1077, %v1075
          %v1116 = vpack.c.bf16 %v1078, %v1076
          %v1117 = vpack.c.bf16 %v1081, %v1079
          %v1118 = vpack.c.bf16 %v1082, %v1080
          %v1119 = vpack.c.bf16 %v1085, %v1083
          %v1120 = vpack.c.bf16 %v1086, %v1084
          %v1121 = vpack.c.bf16 %v1089, %v1087
          %v1122 = vpack.c.bf16 %v1090, %v1088
          %v1155 = vunpack.c.l.b16 %v1091
          %v1156 = vunpack.c.l.b16 %v1092
          %v1157 = vunpack.c.h.b16 %v1091
          %v1158 = vunpack.c.h.b16 %v1092
          %v1159 = vunpack.c.l.b16 %v1093
          %v1160 = vunpack.c.l.b16 %v1094
          %v1161 = vunpack.c.h.b16 %v1093
          %v1162 = vunpack.c.h.b16 %v1094
          %v1163 = vunpack.c.l.b16 %v1095
          %v1164 = vunpack.c.l.b16 %v1096
          %v1165 = vunpack.c.h.b16 %v1095
          %v1166 = vunpack.c.h.b16 %v1096
          %v1167 = vunpack.c.l.b16 %v1097
          %v1168 = vunpack.c.l.b16 %v1098
          %v1169 = vunpack.c.h.b16 %v1097
          %v1170 = vunpack.c.h.b16 %v1098
          %v1171 = vunpack.c.l.b16 %v1099
          %v1172 = vunpack.c.l.b16 %v1100
          %v1173 = vunpack.c.h.b16 %v1099
          %v1174 = vunpack.c.h.b16 %v1100
          %v1175 = vunpack.c.l.b16 %v1101
          %v1176 = vunpack.c.l.b16 %v1102
          %v1177 = vunpack.c.h.b16 %v1101
          %v1178 = vunpack.c.h.b16 %v1102
          %v1179 = vunpack.c.l.b16 %v1103
          %v1180 = vunpack.c.l.b16 %v1104
          %v1181 = vunpack.c.h.b16 %v1103
          %v1182 = vunpack.c.h.b16 %v1104
          %v1183 = vunpack.c.l.b16 %v1105
          %v1184 = vunpack.c.l.b16 %v1106
          %v1185 = vunpack.c.h.b16 %v1105
          %v1186 = vunpack.c.h.b16 %v1106
          %v1187 = vunpack.c.l.b16 %v1107
          %v1188 = vunpack.c.l.b16 %v1108
          %v1189 = vunpack.c.h.b16 %v1107
          %v1190 = vunpack.c.h.b16 %v1108
          %v1191 = vunpack.c.l.b16 %v1109
          %v1192 = vunpack.c.l.b16 %v1110
          %v1193 = vunpack.c.h.b16 %v1109
          %v1194 = vunpack.c.h.b16 %v1110
          %v1195 = vunpack.c.l.b16 %v1111
          %v1196 = vunpack.c.l.b16 %v1112
          %v1197 = vunpack.c.h.b16 %v1111
          %v1198 = vunpack.c.h.b16 %v1112
          %v1199 = vunpack.c.l.b16 %v1113
          %v1200 = vunpack.c.l.b16 %v1114
          %v1201 = vunpack.c.h.b16 %v1113
          %v1202 = vunpack.c.h.b16 %v1114
          %v1203 = vunpack.c.l.b16 %v1115
          %v1204 = vunpack.c.l.b16 %v1116
          %v1205 = vunpack.c.h.b16 %v1115
          %v1206 = vunpack.c.h.b16 %v1116
          %v1207 = vunpack.c.l.b16 %v1117
          %v1208 = vunpack.c.l.b16 %v1118
          %v1209 = vunpack.c.h.b16 %v1117
          %v1210 = vunpack.c.h.b16 %v1118
          %v1211 = vunpack.c.l.b16 %v1119
          %v1212 = vunpack.c.l.b16 %v1120
          %v1213 = vunpack.c.h.b16 %v1119
          %v1214 = vunpack.c.h.b16 %v1120
          %v1215 = vunpack.c.l.b16 %v1121
          %v1216 = vunpack.c.l.b16 %v1122
          %v1217 = vunpack.c.h.b16 %v1121
          %v1218 = vunpack.c.h.b16 %v1122
          %v1219 = vpack.c.b16 %v1156, %v1155
          %v1220 = vpack.c.b16 %v1158, %v1157
          %v1221 = vpack.c.b16 %v1160, %v1159
          %v1222 = vpack.c.b16 %v1162, %v1161
          %v1223 = vpack.c.b16 %v1164, %v1163
          %v1224 = vpack.c.b16 %v1166, %v1165
          %v1225 = vpack.c.b16 %v1168, %v1167
          %v1226 = vpack.c.b16 %v1170, %v1169
          %v1227 = vpack.c.b16 %v1172, %v1171
          %v1228 = vpack.c.b16 %v1174, %v1173
          %v1229 = vpack.c.b16 %v1176, %v1175
          %v1230 = vpack.c.b16 %v1178, %v1177
          %v1231 = vpack.c.b16 %v1180, %v1179
          %v1232 = vpack.c.b16 %v1182, %v1181
          %v1233 = vpack.c.b16 %v1184, %v1183
          %v1234 = vpack.c.b16 %v1186, %v1185
          %v1235 = vpack.c.b16 %v1188, %v1187
          %v1236 = vpack.c.b16 %v1190, %v1189
          %v1237 = vpack.c.b16 %v1192, %v1191
          %v1238 = vpack.c.b16 %v1194, %v1193
          %v1239 = vpack.c.b16 %v1196, %v1195
          %v1240 = vpack.c.b16 %v1198, %v1197
          %v1241 = vpack.c.b16 %v1200, %v1199
          %v1242 = vpack.c.b16 %v1202, %v1201
          %v1243 = vpack.c.b16 %v1204, %v1203
          %v1244 = vpack.c.b16 %v1206, %v1205
          %v1245 = vpack.c.b16 %v1208, %v1207
          %v1246 = vpack.c.b16 %v1210, %v1209
          %v1247 = vpack.c.b16 %v1212, %v1211
          %v1248 = vpack.c.b16 %v1214, %v1213
          %v1249 = vpack.c.b16 %v1216, %v1215
          %v1250 = vpack.c.b16 %v1218, %v1217
          %1283 = vst [vmem:[#allocation2] sm:$0xff] %v1219
          %1284 = vst [vmem:[#allocation2 + $0x8] sm:$0xff] %v1220
          %1285 = vst [vmem:[#allocation2 + $0x10] sm:$0xff] %v1221
          %1286 = vst [vmem:[#allocation2 + $0x18] sm:$0xff] %v1222
          %1287 = vst [vmem:[#allocation2 + $0x20] sm:$0xff] %v1223
          %1288 = vst [vmem:[#allocation2 + $0x28] sm:$0xff] %v1224
          %1289 = vst [vmem:[#allocation2 + $0x30] sm:$0xff] %v1225
          %1290 = vst [vmem:[#allocation2 + $0x38] sm:$0xff] %v1226
          %1291 = vst [vmem:[#allocation2 + $0x40] sm:$0xff] %v1227
          %1292 = vst [vmem:[#allocation2 + $0x48] sm:$0xff] %v1228
          %1293 = vst [vmem:[#allocation2 + $0x50] sm:$0xff] %v1229
          %1294 = vst [vmem:[#allocation2 + $0x58] sm:$0xff] %v1230
          %1295 = vst [vmem:[#allocation2 + $0x60] sm:$0xff] %v1231
          %1296 = vst [vmem:[#allocation2 + $0x68] sm:$0xff] %v1232
          %1297 = vst [vmem:[#allocation2 + $0x70] sm:$0xff] %v1233
          %1298 = vst [vmem:[#allocation2 + $0x78] sm:$0xff] %v1234
          %1299 = vst [vmem:[#allocation2 + $0x80] sm:$0xff] %v1235
          %1300 = vst [vmem:[#allocation2 + $0x88] sm:$0xff] %v1236
          %1301 = vst [vmem:[#allocation2 + $0x90] sm:$0xff] %v1237
          %1302 = vst [vmem:[#allocation2 + $0x98] sm:$0xff] %v1238
          %1303 = vst [vmem:[#allocation2 + $0xa0] sm:$0xff] %v1239
          %1304 = vst [vmem:[#allocation2 + $0xa8] sm:$0xff] %v1240
          %1305 = vst [vmem:[#allocation2 + $0xb0] sm:$0xff] %v1241
          %1306 = vst [vmem:[#allocation2 + $0xb8] sm:$0xff] %v1242
          %1307 = vst [vmem:[#allocation2 + $0xc0] sm:$0xff] %v1243
          %1308 = vst [vmem:[#allocation2 + $0xc8] sm:$0xff] %v1244
          %1309 = vst [vmem:[#allocation2 + $0xd0] sm:$0xff] %v1245
          %1310 = vst [vmem:[#allocation2 + $0xd8] sm:$0xff] %v1246
          %1311 = vst [vmem:[#allocation2 + $0xe0] sm:$0xff] %v1247
          %1312 = vst [vmem:[#allocation2 + $0xe8] sm:$0xff] %v1248
          %1313 = vst [vmem:[#allocation2 + $0xf0] sm:$0xff] %v1249
          %1314 = vst [vmem:[#allocation2 + $0xf8] sm:$0xff] %v1250
          %1315 = vst [vmem:[#allocation3] sm:$0xff] 0.0
          %1316 = vst [vmem:[#allocation3 + $0x8] sm:$0xff] 0.0
          %1317 = vst [vmem:[#allocation3 + $0x10] sm:$0xff] 0.0
          %1318 = vst [vmem:[#allocation3 + $0x18] sm:$0xff] 0.0
          %1319 = vst [vmem:[#allocation3 + $0x20] sm:$0xff] 0.0
          %1320 = vst [vmem:[#allocation3 + $0x28] sm:$0xff] 0.0
          %1321 = vst [vmem:[#allocation3 + $0x30] sm:$0xff] 0.0
          %1322 = vst [vmem:[#allocation3 + $0x38] sm:$0xff] 0.0
          %1323 = vst [vmem:[#allocation3 + $0x40] sm:$0xff] 0.0
          %1324 = vst [vmem:[#allocation3 + $0x48] sm:$0xff] 0.0
          %1325 = vst [vmem:[#allocation3 + $0x50] sm:$0xff] 0.0
          %1326 = vst [vmem:[#allocation3 + $0x58] sm:$0xff] 0.0
          %1327 = vst [vmem:[#allocation3 + $0x60] sm:$0xff] 0.0
          %1328 = vst [vmem:[#allocation3 + $0x68] sm:$0xff] 0.0
          %1329 = vst [vmem:[#allocation3 + $0x70] sm:$0xff] 0.0
          %1330 = vst [vmem:[#allocation3 + $0x78] sm:$0xff] 0.0
          %1331 = vst [vmem:[#allocation3 + $0x80] sm:$0xff] 0.0
          %1332 = vst [vmem:[#allocation3 + $0x88] sm:$0xff] 0.0
          %1333 = vst [vmem:[#allocation3 + $0x90] sm:$0xff] 0.0
          %1334 = vst [vmem:[#allocation3 + $0x98] sm:$0xff] 0.0
          %1335 = vst [vmem:[#allocation3 + $0xa0] sm:$0xff] 0.0
          %1336 = vst [vmem:[#allocation3 + $0xa8] sm:$0xff] 0.0
          %1337 = vst [vmem:[#allocation3 + $0xb0] sm:$0xff] 0.0
          %1338 = vst [vmem:[#allocation3 + $0xb8] sm:$0xff] 0.0
          %1339 = vst [vmem:[#allocation3 + $0xc0] sm:$0xff] 0.0
          %1340 = vst [vmem:[#allocation3 + $0xc8] sm:$0xff] 0.0
          %1341 = vst [vmem:[#allocation3 + $0xd0] sm:$0xff] 0.0
          %1342 = vst [vmem:[#allocation3 + $0xd8] sm:$0xff] 0.0
          %1343 = vst [vmem:[#allocation3 + $0xe0] sm:$0xff] 0.0
          %1344 = vst [vmem:[#allocation3 + $0xe8] sm:$0xff] 0.0
          %1345 = vst [vmem:[#allocation3 + $0xf0] sm:$0xff] 0.0
          %1346 = vst [vmem:[#allocation3 + $0xf8] sm:$0xff] 0.0
        $region72: #{_roi_head_call.1} parent=47 // pred_fallthru
          _
        %v1347 = vld [vmem:[#allocation2] sm:$0xff]
        %v1348 = vld [vmem:[#allocation2 + $0x8] sm:$0xff]
        %v1349 = vld [vmem:[#allocation2 + $0x10] sm:$0xff]
        %v1350 = vld [vmem:[#allocation2 + $0x18] sm:$0xff]
        %v1351 = vld [vmem:[#allocation2 + $0x20] sm:$0xff]
        %v1352 = vld [vmem:[#allocation2 + $0x28] sm:$0xff]
        %v1353 = vld [vmem:[#allocation2 + $0x30] sm:$0xff]
        %v1354 = vld [vmem:[#allocation2 + $0x38] sm:$0xff]
        %v1355 = vld [vmem:[#allocation2 + $0x40] sm:$0xff]
        %v1356 = vld [vmem:[#allocation2 + $0x48] sm:$0xff]
        %v1357 = vld [vmem:[#allocation2 + $0x50] sm:$0xff]
        %v1358 = vld [vmem:[#allocation2 + $0x58] sm:$0xff]
        %v1359 = vld [vmem:[#allocation2 + $0x60] sm:$0xff]
        %v1360 = vld [vmem:[#allocation2 + $0x68] sm:$0xff]
        %v1361 = vld [vmem:[#allocation2 + $0x70] sm:$0xff]
        %v1362 = vld [vmem:[#allocation2 + $0x78] sm:$0xff]
        %v1363 = vld [vmem:[#allocation2 + $0x80] sm:$0xff]
        %v1364 = vld [vmem:[#allocation2 + $0x88] sm:$0xff]
        %v1365 = vld [vmem:[#allocation2 + $0x90] sm:$0xff]
        %v1366 = vld [vmem:[#allocation2 + $0x98] sm:$0xff]
        %v1367 = vld [vmem:[#allocation2 + $0xa0] sm:$0xff]
        %v1368 = vld [vmem:[#allocation2 + $0xa8] sm:$0xff]
        %v1369 = vld [vmem:[#allocation2 + $0xb0] sm:$0xff]
        %v1370 = vld [vmem:[#allocation2 + $0xb8] sm:$0xff]
        %v1371 = vld [vmem:[#allocation2 + $0xc0] sm:$0xff]
        %v1372 = vld [vmem:[#allocation2 + $0xc8] sm:$0xff]
        %v1373 = vld [vmem:[#allocation2 + $0xd0] sm:$0xff]
        %v1374 = vld [vmem:[#allocation2 + $0xd8] sm:$0xff]
        %v1375 = vld [vmem:[#allocation2 + $0xe0] sm:$0xff]
        %v1376 = vld [vmem:[#allocation2 + $0xe8] sm:$0xff]
        %v1377 = vld [vmem:[#allocation2 + $0xf0] sm:$0xff]
        %v1378 = vld [vmem:[#allocation2 + $0xf8] sm:$0xff]
        %v1379 = vld [vmem:[%s352] sm:$0xff]
        %v1380 = vld [vmem:[%s352 + $0x8] sm:$0xff]
        %v1381 = vld [vmem:[%s352 + $0x10] sm:$0xff]
        %v1382 = vld [vmem:[%s352 + $0x18] sm:$0xff]
        %v1383 = vld [vmem:[%s352 + $0x20] sm:$0xff]
        %v1384 = vld [vmem:[%s352 + $0x28] sm:$0xff]
        %v1385 = vld [vmem:[%s352 + $0x30] sm:$0xff]
        %v1386 = vld [vmem:[%s352 + $0x38] sm:$0xff]
        %v1387 = vld [vmem:[%s352 + $0x40] sm:$0xff]
        %v1388 = vld [vmem:[%s352 + $0x48] sm:$0xff]
        %v1389 = vld [vmem:[%s352 + $0x50] sm:$0xff]
        %v1390 = vld [vmem:[%s352 + $0x58] sm:$0xff]
        %v1391 = vld [vmem:[%s352 + $0x60] sm:$0xff]
        %v1392 = vld [vmem:[%s352 + $0x68] sm:$0xff]
        %v1393 = vld [vmem:[%s352 + $0x70] sm:$0xff]
        %v1394 = vld [vmem:[%s352 + $0x78] sm:$0xff]
        %v1395 = vld [vmem:[%s352 + $0x80] sm:$0xff]
        %v1396 = vld [vmem:[%s352 + $0x88] sm:$0xff]
        %v1397 = vld [vmem:[%s352 + $0x90] sm:$0xff]
        %v1398 = vld [vmem:[%s352 + $0x98] sm:$0xff]
        %v1399 = vld [vmem:[%s352 + $0xa0] sm:$0xff]
        %v1400 = vld [vmem:[%s352 + $0xa8] sm:$0xff]
        %v1401 = vld [vmem:[%s352 + $0xb0] sm:$0xff]
        %v1402 = vld [vmem:[%s352 + $0xb8] sm:$0xff]
        %v1403 = vld [vmem:[%s352 + $0xc0] sm:$0xff]
        %v1404 = vld [vmem:[%s352 + $0xc8] sm:$0xff]
        %v1405 = vld [vmem:[%s352 + $0xd0] sm:$0xff]
        %v1406 = vld [vmem:[%s352 + $0xd8] sm:$0xff]
        %v1407 = vld [vmem:[%s352 + $0xe0] sm:$0xff]
        %v1408 = vld [vmem:[%s352 + $0xe8] sm:$0xff]
        %v1409 = vld [vmem:[%s352 + $0xf0] sm:$0xff]
        %v1410 = vld [vmem:[%s352 + $0xf8] sm:$0xff]
        %v1411 = vld [vmem:[%s352 + $0x100] sm:$0xff]
        %v1412 = vld [vmem:[%s352 + $0x108] sm:$0xff]
        %v1413 = vld [vmem:[%s352 + $0x110] sm:$0xff]
        %v1414 = vld [vmem:[%s352 + $0x118] sm:$0xff]
        %v1415 = vld [vmem:[%s352 + $0x120] sm:$0xff]
        %v1416 = vld [vmem:[%s352 + $0x128] sm:$0xff]
        %v1417 = vld [vmem:[%s352 + $0x130] sm:$0xff]
        %v1418 = vld [vmem:[%s352 + $0x138] sm:$0xff]
        %v1419 = vld [vmem:[%s352 + $0x140] sm:$0xff]
        %v1420 = vld [vmem:[%s352 + $0x148] sm:$0xff]
        %v1421 = vld [vmem:[%s352 + $0x150] sm:$0xff]
        %v1422 = vld [vmem:[%s352 + $0x158] sm:$0xff]
        %v1423 = vld [vmem:[%s352 + $0x160] sm:$0xff]
        %v1424 = vld [vmem:[%s352 + $0x168] sm:$0xff]
        %v1425 = vld [vmem:[%s352 + $0x170] sm:$0xff]
        %v1426 = vld [vmem:[%s352 + $0x178] sm:$0xff]
        %v1427 = vld [vmem:[%s352 + $0x180] sm:$0xff]
        %v1428 = vld [vmem:[%s352 + $0x188] sm:$0xff]
        %v1429 = vld [vmem:[%s352 + $0x190] sm:$0xff]
        %v1430 = vld [vmem:[%s352 + $0x198] sm:$0xff]
        %v1431 = vld [vmem:[%s352 + $0x1a0] sm:$0xff]
        %v1432 = vld [vmem:[%s352 + $0x1a8] sm:$0xff]
        %v1433 = vld [vmem:[%s352 + $0x1b0] sm:$0xff]
        %v1434 = vld [vmem:[%s352 + $0x1b8] sm:$0xff]
        %v1435 = vld [vmem:[%s352 + $0x1c0] sm:$0xff]
        %v1436 = vld [vmem:[%s352 + $0x1c8] sm:$0xff]
        %v1437 = vld [vmem:[%s352 + $0x1d0] sm:$0xff]
        %v1438 = vld [vmem:[%s352 + $0x1d8] sm:$0xff]
        %v1439 = vld [vmem:[%s352 + $0x1e0] sm:$0xff]
        %v1440 = vld [vmem:[%s352 + $0x1e8] sm:$0xff]
        %v1441 = vld [vmem:[%s352 + $0x1f0] sm:$0xff]
        %v1442 = vld [vmem:[%s352 + $0x1f8] sm:$0xff]
        %v1443 = vld [vmem:[%s352 + $0x200] sm:$0xff]
        %v1444 = vld [vmem:[%s352 + $0x208] sm:$0xff]
        %v1445 = vld [vmem:[%s352 + $0x210] sm:$0xff]
        %v1446 = vld [vmem:[%s352 + $0x218] sm:$0xff]
        %v1447 = vld [vmem:[%s352 + $0x220] sm:$0xff]
        %v1448 = vld [vmem:[%s352 + $0x228] sm:$0xff]
        %v1449 = vld [vmem:[%s352 + $0x230] sm:$0xff]
        %v1450 = vld [vmem:[%s352 + $0x238] sm:$0xff]
        %v1451 = vld [vmem:[%s352 + $0x240] sm:$0xff]
        %v1452 = vld [vmem:[%s352 + $0x248] sm:$0xff]
        %v1453 = vld [vmem:[%s352 + $0x250] sm:$0xff]
        %v1454 = vld [vmem:[%s352 + $0x258] sm:$0xff]
        %v1455 = vld [vmem:[%s352 + $0x260] sm:$0xff]
        %v1456 = vld [vmem:[%s352 + $0x268] sm:$0xff]
        %v1457 = vld [vmem:[%s352 + $0x270] sm:$0xff]
        %v1458 = vld [vmem:[%s352 + $0x278] sm:$0xff]
        %v1459 = vld [vmem:[%s352 + $0x280] sm:$0xff]
        %v1460 = vld [vmem:[%s352 + $0x288] sm:$0xff]
        %v1461 = vld [vmem:[%s352 + $0x290] sm:$0xff]
        %v1462 = vld [vmem:[%s352 + $0x298] sm:$0xff]
        %v1463 = vld [vmem:[%s352 + $0x2a0] sm:$0xff]
        %v1464 = vld [vmem:[%s352 + $0x2a8] sm:$0xff]
        %v1465 = vld [vmem:[%s352 + $0x2b0] sm:$0xff]
        %v1466 = vld [vmem:[%s352 + $0x2b8] sm:$0xff]
        %v1467 = vld [vmem:[%s352 + $0x2c0] sm:$0xff]
        %v1468 = vld [vmem:[%s352 + $0x2c8] sm:$0xff]
        %v1469 = vld [vmem:[%s352 + $0x2d0] sm:$0xff]
        %v1470 = vld [vmem:[%s352 + $0x2d8] sm:$0xff]
        %v1471 = vld [vmem:[%s352 + $0x2e0] sm:$0xff]
        %v1472 = vld [vmem:[%s352 + $0x2e8] sm:$0xff]
        %v1473 = vld [vmem:[%s352 + $0x2f0] sm:$0xff]
        %v1474 = vld [vmem:[%s352 + $0x2f8] sm:$0xff]
        %v1475 = vld [vmem:[%s352 + $0x300] sm:$0xff]
        %v1476 = vld [vmem:[%s352 + $0x308] sm:$0xff]
        %v1477 = vld [vmem:[%s352 + $0x310] sm:$0xff]
        %v1478 = vld [vmem:[%s352 + $0x318] sm:$0xff]
        %v1479 = vld [vmem:[%s352 + $0x320] sm:$0xff]
        %v1480 = vld [vmem:[%s352 + $0x328] sm:$0xff]
        %v1481 = vld [vmem:[%s352 + $0x330] sm:$0xff]
        %v1482 = vld [vmem:[%s352 + $0x338] sm:$0xff]
        %v1483 = vld [vmem:[%s352 + $0x340] sm:$0xff]
        %v1484 = vld [vmem:[%s352 + $0x348] sm:$0xff]
        %v1485 = vld [vmem:[%s352 + $0x350] sm:$0xff]
        %v1486 = vld [vmem:[%s352 + $0x358] sm:$0xff]
        %v1487 = vld [vmem:[%s352 + $0x360] sm:$0xff]
        %v1488 = vld [vmem:[%s352 + $0x368] sm:$0xff]
        %v1489 = vld [vmem:[%s352 + $0x370] sm:$0xff]
        %v1490 = vld [vmem:[%s352 + $0x378] sm:$0xff]
        %v1491 = vld [vmem:[%s352 + $0x380] sm:$0xff]
        %v1492 = vld [vmem:[%s352 + $0x388] sm:$0xff]
        %v1493 = vld [vmem:[%s352 + $0x390] sm:$0xff]
        %v1494 = vld [vmem:[%s352 + $0x398] sm:$0xff]
        %v1495 = vld [vmem:[%s352 + $0x3a0] sm:$0xff]
        %v1496 = vld [vmem:[%s352 + $0x3a8] sm:$0xff]
        %v1497 = vld [vmem:[%s352 + $0x3b0] sm:$0xff]
        %v1498 = vld [vmem:[%s352 + $0x3b8] sm:$0xff]
        %v1499 = vld [vmem:[%s352 + $0x3c0] sm:$0xff]
        %v1500 = vld [vmem:[%s352 + $0x3c8] sm:$0xff]
        %v1501 = vld [vmem:[%s352 + $0x3d0] sm:$0xff]
        %v1502 = vld [vmem:[%s352 + $0x3d8] sm:$0xff]
        %v1503 = vld [vmem:[%s352 + $0x3e0] sm:$0xff]
        %v1504 = vld [vmem:[%s352 + $0x3e8] sm:$0xff]
        %v1505 = vld [vmem:[%s352 + $0x3f0] sm:$0xff]
        %v1506 = vld [vmem:[%s352 + $0x3f8] sm:$0xff]
        %v1507 = vld [vmem:[%s352 + $0x400] sm:$0xff]
        %v1508 = vld [vmem:[%s352 + $0x408] sm:$0xff]
        %v1509 = vld [vmem:[%s352 + $0x410] sm:$0xff]
        %v1510 = vld [vmem:[%s352 + $0x418] sm:$0xff]
        %v1511 = vld [vmem:[%s352 + $0x420] sm:$0xff]
        %v1512 = vld [vmem:[%s352 + $0x428] sm:$0xff]
        %v1513 = vld [vmem:[%s352 + $0x430] sm:$0xff]
        %v1514 = vld [vmem:[%s352 + $0x438] sm:$0xff]
        %v1515 = vld [vmem:[%s352 + $0x440] sm:$0xff]
        %v1516 = vld [vmem:[%s352 + $0x448] sm:$0xff]
        %v1517 = vld [vmem:[%s352 + $0x450] sm:$0xff]
        %v1518 = vld [vmem:[%s352 + $0x458] sm:$0xff]
        %v1519 = vld [vmem:[%s352 + $0x460] sm:$0xff]
        %v1520 = vld [vmem:[%s352 + $0x468] sm:$0xff]
        %v1521 = vld [vmem:[%s352 + $0x470] sm:$0xff]
        %v1522 = vld [vmem:[%s352 + $0x478] sm:$0xff]
        %v1523 = vld [vmem:[%s352 + $0x480] sm:$0xff]
        %v1524 = vld [vmem:[%s352 + $0x488] sm:$0xff]
        %v1525 = vld [vmem:[%s352 + $0x490] sm:$0xff]
        %v1526 = vld [vmem:[%s352 + $0x498] sm:$0xff]
        %v1527 = vld [vmem:[%s352 + $0x4a0] sm:$0xff]
        %v1528 = vld [vmem:[%s352 + $0x4a8] sm:$0xff]
        %v1529 = vld [vmem:[%s352 + $0x4b0] sm:$0xff]
        %v1530 = vld [vmem:[%s352 + $0x4b8] sm:$0xff]
        %v1531 = vld [vmem:[%s352 + $0x4c0] sm:$0xff]
        %v1532 = vld [vmem:[%s352 + $0x4c8] sm:$0xff]
        %v1533 = vld [vmem:[%s352 + $0x4d0] sm:$0xff]
        %v1534 = vld [vmem:[%s352 + $0x4d8] sm:$0xff]
        %v1535 = vld [vmem:[%s352 + $0x4e0] sm:$0xff]
        %v1536 = vld [vmem:[%s352 + $0x4e8] sm:$0xff]
        %v1537 = vld [vmem:[%s352 + $0x4f0] sm:$0xff]
        %v1538 = vld [vmem:[%s352 + $0x4f8] sm:$0xff]
        %v1539 = vld [vmem:[%s352 + $0x500] sm:$0xff]
        %v1540 = vld [vmem:[%s352 + $0x508] sm:$0xff]
        %v1541 = vld [vmem:[%s352 + $0x510] sm:$0xff]
        %v1542 = vld [vmem:[%s352 + $0x518] sm:$0xff]
        %v1543 = vld [vmem:[%s352 + $0x520] sm:$0xff]
        %v1544 = vld [vmem:[%s352 + $0x528] sm:$0xff]
        %v1545 = vld [vmem:[%s352 + $0x530] sm:$0xff]
        %v1546 = vld [vmem:[%s352 + $0x538] sm:$0xff]
        %v1547 = vld [vmem:[%s352 + $0x540] sm:$0xff]
        %v1548 = vld [vmem:[%s352 + $0x548] sm:$0xff]
        %v1549 = vld [vmem:[%s352 + $0x550] sm:$0xff]
        %v1550 = vld [vmem:[%s352 + $0x558] sm:$0xff]
        %v1551 = vld [vmem:[%s352 + $0x560] sm:$0xff]
        %v1552 = vld [vmem:[%s352 + $0x568] sm:$0xff]
        %v1553 = vld [vmem:[%s352 + $0x570] sm:$0xff]
        %v1554 = vld [vmem:[%s352 + $0x578] sm:$0xff]
        %v1555 = vld [vmem:[%s352 + $0x580] sm:$0xff]
        %v1556 = vld [vmem:[%s352 + $0x588] sm:$0xff]
        %v1557 = vld [vmem:[%s352 + $0x590] sm:$0xff]
        %v1558 = vld [vmem:[%s352 + $0x598] sm:$0xff]
        %v1559 = vld [vmem:[%s352 + $0x5a0] sm:$0xff]
        %v1560 = vld [vmem:[%s352 + $0x5a8] sm:$0xff]
        %v1561 = vld [vmem:[%s352 + $0x5b0] sm:$0xff]
        %v1562 = vld [vmem:[%s352 + $0x5b8] sm:$0xff]
        %v1563 = vld [vmem:[%s352 + $0x5c0] sm:$0xff]
        %v1564 = vld [vmem:[%s352 + $0x5c8] sm:$0xff]
        %v1565 = vld [vmem:[%s352 + $0x5d0] sm:$0xff]
        %v1566 = vld [vmem:[%s352 + $0x5d8] sm:$0xff]
        %v1567 = vld [vmem:[%s352 + $0x5e0] sm:$0xff]
        %v1568 = vld [vmem:[%s352 + $0x5e8] sm:$0xff]
        %v1569 = vld [vmem:[%s352 + $0x5f0] sm:$0xff]
        %v1570 = vld [vmem:[%s352 + $0x5f8] sm:$0xff]
        %v1571 = vld [vmem:[%s352 + $0x600] sm:$0xff]
        %v1572 = vld [vmem:[%s352 + $0x608] sm:$0xff]
        %v1573 = vld [vmem:[%s352 + $0x610] sm:$0xff]
        %v1574 = vld [vmem:[%s352 + $0x618] sm:$0xff]
        %v1575 = vld [vmem:[%s352 + $0x620] sm:$0xff]
        %v1576 = vld [vmem:[%s352 + $0x628] sm:$0xff]
        %v1577 = vld [vmem:[%s352 + $0x630] sm:$0xff]
        %v1578 = vld [vmem:[%s352 + $0x638] sm:$0xff]
        %v1579 = vld [vmem:[%s352 + $0x640] sm:$0xff]
        %v1580 = vld [vmem:[%s352 + $0x648] sm:$0xff]
        %v1581 = vld [vmem:[%s352 + $0x650] sm:$0xff]
        %v1582 = vld [vmem:[%s352 + $0x658] sm:$0xff]
        %v1583 = vld [vmem:[%s352 + $0x660] sm:$0xff]
        %v1584 = vld [vmem:[%s352 + $0x668] sm:$0xff]
        %v1585 = vld [vmem:[%s352 + $0x670] sm:$0xff]
        %v1586 = vld [vmem:[%s352 + $0x678] sm:$0xff]
        %v1587 = vld [vmem:[%s352 + $0x680] sm:$0xff]
        %v1588 = vld [vmem:[%s352 + $0x688] sm:$0xff]
        %v1589 = vld [vmem:[%s352 + $0x690] sm:$0xff]
        %v1590 = vld [vmem:[%s352 + $0x698] sm:$0xff]
        %v1591 = vld [vmem:[%s352 + $0x6a0] sm:$0xff]
        %v1592 = vld [vmem:[%s352 + $0x6a8] sm:$0xff]
        %v1593 = vld [vmem:[%s352 + $0x6b0] sm:$0xff]
        %v1594 = vld [vmem:[%s352 + $0x6b8] sm:$0xff]
        %v1595 = vld [vmem:[%s352 + $0x6c0] sm:$0xff]
        %v1596 = vld [vmem:[%s352 + $0x6c8] sm:$0xff]
        %v1597 = vld [vmem:[%s352 + $0x6d0] sm:$0xff]
        %v1598 = vld [vmem:[%s352 + $0x6d8] sm:$0xff]
        %v1599 = vld [vmem:[%s352 + $0x6e0] sm:$0xff]
        %v1600 = vld [vmem:[%s352 + $0x6e8] sm:$0xff]
        %v1601 = vld [vmem:[%s352 + $0x6f0] sm:$0xff]
        %v1602 = vld [vmem:[%s352 + $0x6f8] sm:$0xff]
        %v1603 = vld [vmem:[%s352 + $0x700] sm:$0xff]
        %v1604 = vld [vmem:[%s352 + $0x708] sm:$0xff]
        %v1605 = vld [vmem:[%s352 + $0x710] sm:$0xff]
        %v1606 = vld [vmem:[%s352 + $0x718] sm:$0xff]
        %v1607 = vld [vmem:[%s352 + $0x720] sm:$0xff]
        %v1608 = vld [vmem:[%s352 + $0x728] sm:$0xff]
        %v1609 = vld [vmem:[%s352 + $0x730] sm:$0xff]
        %v1610 = vld [vmem:[%s352 + $0x738] sm:$0xff]
        %v1611 = vld [vmem:[%s352 + $0x740] sm:$0xff]
        %v1612 = vld [vmem:[%s352 + $0x748] sm:$0xff]
        %v1613 = vld [vmem:[%s352 + $0x750] sm:$0xff]
        %v1614 = vld [vmem:[%s352 + $0x758] sm:$0xff]
        %v1615 = vld [vmem:[%s352 + $0x760] sm:$0xff]
        %v1616 = vld [vmem:[%s352 + $0x768] sm:$0xff]
        %v1617 = vld [vmem:[%s352 + $0x770] sm:$0xff]
        %v1618 = vld [vmem:[%s352 + $0x778] sm:$0xff]
        %v1619 = vld [vmem:[%s352 + $0x780] sm:$0xff]
        %v1620 = vld [vmem:[%s352 + $0x788] sm:$0xff]
        %v1621 = vld [vmem:[%s352 + $0x790] sm:$0xff]
        %v1622 = vld [vmem:[%s352 + $0x798] sm:$0xff]
        %v1623 = vld [vmem:[%s352 + $0x7a0] sm:$0xff]
        %v1624 = vld [vmem:[%s352 + $0x7a8] sm:$0xff]
        %v1625 = vld [vmem:[%s352 + $0x7b0] sm:$0xff]
        %v1626 = vld [vmem:[%s352 + $0x7b8] sm:$0xff]
        %v1627 = vld [vmem:[%s352 + $0x7c0] sm:$0xff]
        %v1628 = vld [vmem:[%s352 + $0x7c8] sm:$0xff]
        %v1629 = vld [vmem:[%s352 + $0x7d0] sm:$0xff]
        %v1630 = vld [vmem:[%s352 + $0x7d8] sm:$0xff]
        %v1631 = vld [vmem:[%s352 + $0x7e0] sm:$0xff]
        %v1632 = vld [vmem:[%s352 + $0x7e8] sm:$0xff]
        %v1633 = vld [vmem:[%s352 + $0x7f0] sm:$0xff]
        %v1634 = vld [vmem:[%s352 + $0x7f8] sm:$0xff]
        %v1635 = vld [vmem:[%s361] sm:$0xff]
        %v1636 = vld [vmem:[%s361 + $0x8] sm:$0xff]
        %v1639 = vlaneseq
        %v1640 = vshrl.u32 %v1639, 7
        %v1641 = vsub.s32 0, %v1640
        %v1642 = vrot.slane %v1635, %v1641
        %v1643 = vlaneseq
        %v1644 = vshrl.u32 %v1643, 7
        %v1645 = vsub.s32 1, %v1644
        %v1646 = vrot.slane %v1635, %v1645
        %v1647 = vlaneseq
        %v1648 = vshrl.u32 %v1647, 7
        %v1649 = vsub.s32 2, %v1648
        %v1650 = vrot.slane %v1635, %v1649
        %v1651 = vlaneseq
        %v1652 = vshrl.u32 %v1651, 7
        %v1653 = vsub.s32 3, %v1652
        %v1654 = vrot.slane %v1635, %v1653
        %v1655 = vlaneseq
        %v1656 = vshrl.u32 %v1655, 7
        %v1657 = vsub.s32 4, %v1656
        %v1658 = vrot.slane %v1635, %v1657
        %v1659 = vlaneseq
        %v1660 = vshrl.u32 %v1659, 7
        %v1661 = vsub.s32 5, %v1660
        %v1662 = vrot.slane %v1635, %v1661
        %v1663 = vlaneseq
        %v1664 = vshrl.u32 %v1663, 7
        %v1665 = vsub.s32 6, %v1664
        %v1666 = vrot.slane %v1635, %v1665
        %v1667 = vlaneseq
        %v1668 = vshrl.u32 %v1667, 7
        %v1669 = vsub.s32 7, %v1668
        %v1670 = vrot.slane %v1635, %v1669
        %v1671 = vlaneseq
        %v1672 = vshrl.u32 %v1671, 7
        %v1673 = vsub.s32 0, %v1672
        %v1674 = vrot.slane %v1636, %v1673
        %v1675 = vlaneseq
        %v1676 = vshrl.u32 %v1675, 7
        %v1677 = vsub.s32 1, %v1676
        %v1678 = vrot.slane %v1636, %v1677
        %v1679 = vlaneseq
        %v1680 = vshrl.u32 %v1679, 7
        %v1681 = vsub.s32 2, %v1680
        %v1682 = vrot.slane %v1636, %v1681
        %v1683 = vlaneseq
        %v1684 = vshrl.u32 %v1683, 7
        %v1685 = vsub.s32 3, %v1684
        %v1686 = vrot.slane %v1636, %v1685
        %v1687 = vlaneseq
        %v1688 = vshrl.u32 %v1687, 7
        %v1689 = vsub.s32 4, %v1688
        %v1690 = vrot.slane %v1636, %v1689
        %v1691 = vlaneseq
        %v1692 = vshrl.u32 %v1691, 7
        %v1693 = vsub.s32 5, %v1692
        %v1694 = vrot.slane %v1636, %v1693
        %v1695 = vlaneseq
        %v1696 = vshrl.u32 %v1695, 7
        %v1697 = vsub.s32 6, %v1696
        %v1698 = vrot.slane %v1636, %v1697
        %v1699 = vlaneseq
        %v1700 = vshrl.u32 %v1699, 7
        %v1701 = vsub.s32 7, %v1700
        %v1702 = vrot.slane %v1636, %v1701
        %v1751 = vunpack.c.l.b16 %v1347
        %v1752 = vunpack.c.h.b16 %v1347
        %v1753 = vunpack.c.l.b16 %v1348
        %v1754 = vunpack.c.h.b16 %v1348
        %v1755 = vunpack.c.l.b16 %v1349
        %v1756 = vunpack.c.h.b16 %v1349
        %v1757 = vunpack.c.l.b16 %v1350
        %v1758 = vunpack.c.h.b16 %v1350
        %v1759 = vunpack.c.l.b16 %v1351
        %v1760 = vunpack.c.h.b16 %v1351
        %v1761 = vunpack.c.l.b16 %v1352
        %v1762 = vunpack.c.h.b16 %v1352
        %v1763 = vunpack.c.l.b16 %v1353
        %v1764 = vunpack.c.h.b16 %v1353
        %v1765 = vunpack.c.l.b16 %v1354
        %v1766 = vunpack.c.h.b16 %v1354
        %v1767 = vunpack.c.l.b16 %v1355
        %v1768 = vunpack.c.h.b16 %v1355
        %v1769 = vunpack.c.l.b16 %v1356
        %v1770 = vunpack.c.h.b16 %v1356
        %v1771 = vunpack.c.l.b16 %v1357
        %v1772 = vunpack.c.h.b16 %v1357
        %v1773 = vunpack.c.l.b16 %v1358
        %v1774 = vunpack.c.h.b16 %v1358
        %v1775 = vunpack.c.l.b16 %v1359
        %v1776 = vunpack.c.h.b16 %v1359
        %v1777 = vunpack.c.l.b16 %v1360
        %v1778 = vunpack.c.h.b16 %v1360
        %v1779 = vunpack.c.l.b16 %v1361
        %v1780 = vunpack.c.h.b16 %v1361
        %v1781 = vunpack.c.l.b16 %v1362
        %v1782 = vunpack.c.h.b16 %v1362
        %v1783 = vunpack.c.l.b16 %v1363
        %v1784 = vunpack.c.h.b16 %v1363
        %v1785 = vunpack.c.l.b16 %v1364
        %v1786 = vunpack.c.h.b16 %v1364
        %v1787 = vunpack.c.l.b16 %v1365
        %v1788 = vunpack.c.h.b16 %v1365
        %v1789 = vunpack.c.l.b16 %v1366
        %v1790 = vunpack.c.h.b16 %v1366
        %v1791 = vunpack.c.l.b16 %v1367
        %v1792 = vunpack.c.h.b16 %v1367
        %v1793 = vunpack.c.l.b16 %v1368
        %v1794 = vunpack.c.h.b16 %v1368
        %v1795 = vunpack.c.l.b16 %v1369
        %v1796 = vunpack.c.h.b16 %v1369
        %v1797 = vunpack.c.l.b16 %v1370
        %v1798 = vunpack.c.h.b16 %v1370
        %v1799 = vunpack.c.l.b16 %v1371
        %v1800 = vunpack.c.h.b16 %v1371
        %v1801 = vunpack.c.l.b16 %v1372
        %v1802 = vunpack.c.h.b16 %v1372
        %v1803 = vunpack.c.l.b16 %v1373
        %v1804 = vunpack.c.h.b16 %v1373
        %v1805 = vunpack.c.l.b16 %v1374
        %v1806 = vunpack.c.h.b16 %v1374
        %v1807 = vunpack.c.l.b16 %v1375
        %v1808 = vunpack.c.h.b16 %v1375
        %v1809 = vunpack.c.l.b16 %v1376
        %v1810 = vunpack.c.h.b16 %v1376
        %v1811 = vunpack.c.l.b16 %v1377
        %v1812 = vunpack.c.h.b16 %v1377
        %v1813 = vunpack.c.l.b16 %v1378
        %v1814 = vunpack.c.h.b16 %v1378
        %v1815 = vpack.c.b16 %v1753, %v1751
        %v1816 = vpack.c.b16 %v1754, %v1752
        %v1817 = vpack.c.b16 %v1757, %v1755
        %v1818 = vpack.c.b16 %v1758, %v1756
        %v1819 = vpack.c.b16 %v1761, %v1759
        %v1820 = vpack.c.b16 %v1762, %v1760
        %v1821 = vpack.c.b16 %v1765, %v1763
        %v1822 = vpack.c.b16 %v1766, %v1764
        %v1823 = vpack.c.b16 %v1769, %v1767
        %v1824 = vpack.c.b16 %v1770, %v1768
        %v1825 = vpack.c.b16 %v1773, %v1771
        %v1826 = vpack.c.b16 %v1774, %v1772
        %v1827 = vpack.c.b16 %v1777, %v1775
        %v1828 = vpack.c.b16 %v1778, %v1776
        %v1829 = vpack.c.b16 %v1781, %v1779
        %v1830 = vpack.c.b16 %v1782, %v1780
        %v1831 = vpack.c.b16 %v1785, %v1783
        %v1832 = vpack.c.b16 %v1786, %v1784
        %v1833 = vpack.c.b16 %v1789, %v1787
        %v1834 = vpack.c.b16 %v1790, %v1788
        %v1835 = vpack.c.b16 %v1793, %v1791
        %v1836 = vpack.c.b16 %v1794, %v1792
        %v1837 = vpack.c.b16 %v1797, %v1795
        %v1838 = vpack.c.b16 %v1798, %v1796
        %v1839 = vpack.c.b16 %v1801, %v1799
        %v1840 = vpack.c.b16 %v1802, %v1800
        %v1841 = vpack.c.b16 %v1805, %v1803
        %v1842 = vpack.c.b16 %v1806, %v1804
        %v1843 = vpack.c.b16 %v1809, %v1807
        %v1844 = vpack.c.b16 %v1810, %v1808
        %v1845 = vpack.c.b16 %v1813, %v1811
        %v1846 = vpack.c.b16 %v1814, %v1812
        %v2135 = vunpack.c.l.b16 %v1379
        %v2136 = vunpack.c.h.b16 %v1379
        %v2137 = vunpack.c.l.b16 %v1380
        %v2138 = vunpack.c.h.b16 %v1380
        %v2139 = vunpack.c.l.b16 %v1381
        %v2140 = vunpack.c.h.b16 %v1381
        %v2141 = vunpack.c.l.b16 %v1382
        %v2142 = vunpack.c.h.b16 %v1382
        %v2143 = vunpack.c.l.b16 %v1383
        %v2144 = vunpack.c.h.b16 %v1383
        %v2145 = vunpack.c.l.b16 %v1384
        %v2146 = vunpack.c.h.b16 %v1384
        %v2147 = vunpack.c.l.b16 %v1385
        %v2148 = vunpack.c.h.b16 %v1385
        %v2149 = vunpack.c.l.b16 %v1386
        %v2150 = vunpack.c.h.b16 %v1386
        %v2151 = vunpack.c.l.b16 %v1387
        %v2152 = vunpack.c.h.b16 %v1387
        %v2153 = vunpack.c.l.b16 %v1388
        %v2154 = vunpack.c.h.b16 %v1388
        %v2155 = vunpack.c.l.b16 %v1389
        %v2156 = vunpack.c.h.b16 %v1389
        %v2157 = vunpack.c.l.b16 %v1390
        %v2158 = vunpack.c.h.b16 %v1390
        %v2159 = vunpack.c.l.b16 %v1391
        %v2160 = vunpack.c.h.b16 %v1391
        %v2161 = vunpack.c.l.b16 %v1392
        %v2162 = vunpack.c.h.b16 %v1392
        %v2163 = vunpack.c.l.b16 %v1393
        %v2164 = vunpack.c.h.b16 %v1393
        %v2165 = vunpack.c.l.b16 %v1394
        %v2166 = vunpack.c.h.b16 %v1394
        %v2167 = vunpack.c.l.b16 %v1395
        %v2168 = vunpack.c.h.b16 %v1395
        %v2169 = vunpack.c.l.b16 %v1396
        %v2170 = vunpack.c.h.b16 %v1396
        %v2171 = vunpack.c.l.b16 %v1397
        %v2172 = vunpack.c.h.b16 %v1397
        %v2173 = vunpack.c.l.b16 %v1398
        %v2174 = vunpack.c.h.b16 %v1398
        %v2175 = vunpack.c.l.b16 %v1399
        %v2176 = vunpack.c.h.b16 %v1399
        %v2177 = vunpack.c.l.b16 %v1400
        %v2178 = vunpack.c.h.b16 %v1400
        %v2179 = vunpack.c.l.b16 %v1401
        %v2180 = vunpack.c.h.b16 %v1401
        %v2181 = vunpack.c.l.b16 %v1402
        %v2182 = vunpack.c.h.b16 %v1402
        %v2183 = vunpack.c.l.b16 %v1403
        %v2184 = vunpack.c.h.b16 %v1403
        %v2185 = vunpack.c.l.b16 %v1404
        %v2186 = vunpack.c.h.b16 %v1404
        %v2187 = vunpack.c.l.b16 %v1405
        %v2188 = vunpack.c.h.b16 %v1405
        %v2189 = vunpack.c.l.b16 %v1406
        %v2190 = vunpack.c.h.b16 %v1406
        %v2191 = vunpack.c.l.b16 %v1407
        %v2192 = vunpack.c.h.b16 %v1407
        %v2193 = vunpack.c.l.b16 %v1408
        %v2194 = vunpack.c.h.b16 %v1408
        %v2195 = vunpack.c.l.b16 %v1409
        %v2196 = vunpack.c.h.b16 %v1409
        %v2197 = vunpack.c.l.b16 %v1410
        %v2198 = vunpack.c.h.b16 %v1410
        %v2199 = vunpack.c.l.b16 %v1411
        %v2200 = vunpack.c.h.b16 %v1411
        %v2201 = vunpack.c.l.b16 %v1412
        %v2202 = vunpack.c.h.b16 %v1412
        %v2203 = vunpack.c.l.b16 %v1413
        %v2204 = vunpack.c.h.b16 %v1413
        %v2205 = vunpack.c.l.b16 %v1414
        %v2206 = vunpack.c.h.b16 %v1414
        %v2207 = vunpack.c.l.b16 %v1415
        %v2208 = vunpack.c.h.b16 %v1415
        %v2209 = vunpack.c.l.b16 %v1416
        %v2210 = vunpack.c.h.b16 %v1416
        %v2211 = vunpack.c.l.b16 %v1417
        %v2212 = vunpack.c.h.b16 %v1417
        %v2213 = vunpack.c.l.b16 %v1418
        %v2214 = vunpack.c.h.b16 %v1418
        %v2215 = vunpack.c.l.b16 %v1419
        %v2216 = vunpack.c.h.b16 %v1419
        %v2217 = vunpack.c.l.b16 %v1420
        %v2218 = vunpack.c.h.b16 %v1420
        %v2219 = vunpack.c.l.b16 %v1421
        %v2220 = vunpack.c.h.b16 %v1421
        %v2221 = vunpack.c.l.b16 %v1422
        %v2222 = vunpack.c.h.b16 %v1422
        %v2223 = vunpack.c.l.b16 %v1423
        %v2224 = vunpack.c.h.b16 %v1423
        %v2225 = vunpack.c.l.b16 %v1424
        %v2226 = vunpack.c.h.b16 %v1424
        %v2227 = vunpack.c.l.b16 %v1425
        %v2228 = vunpack.c.h.b16 %v1425
        %v2229 = vunpack.c.l.b16 %v1426
        %v2230 = vunpack.c.h.b16 %v1426
        %v2231 = vunpack.c.l.b16 %v1427
        %v2232 = vunpack.c.h.b16 %v1427
        %v2233 = vunpack.c.l.b16 %v1428
        %v2234 = vunpack.c.h.b16 %v1428
        %v2235 = vunpack.c.l.b16 %v1429
        %v2236 = vunpack.c.h.b16 %v1429
        %v2237 = vunpack.c.l.b16 %v1430
        %v2238 = vunpack.c.h.b16 %v1430
        %v2239 = vunpack.c.l.b16 %v1431
        %v2240 = vunpack.c.h.b16 %v1431
        %v2241 = vunpack.c.l.b16 %v1432
        %v2242 = vunpack.c.h.b16 %v1432
        %v2243 = vunpack.c.l.b16 %v1433
        %v2244 = vunpack.c.h.b16 %v1433
        %v2245 = vunpack.c.l.b16 %v1434
        %v2246 = vunpack.c.h.b16 %v1434
        %v2247 = vunpack.c.l.b16 %v1435
        %v2248 = vunpack.c.h.b16 %v1435
        %v2249 = vunpack.c.l.b16 %v1436
        %v2250 = vunpack.c.h.b16 %v1436
        %v2251 = vunpack.c.l.b16 %v1437
        %v2252 = vunpack.c.h.b16 %v1437
        %v2253 = vunpack.c.l.b16 %v1438
        %v2254 = vunpack.c.h.b16 %v1438
        %v2255 = vunpack.c.l.b16 %v1439
        %v2256 = vunpack.c.h.b16 %v1439
        %v2257 = vunpack.c.l.b16 %v1440
        %v2258 = vunpack.c.h.b16 %v1440
        %v2259 = vunpack.c.l.b16 %v1441
        %v2260 = vunpack.c.h.b16 %v1441
        %v2261 = vunpack.c.l.b16 %v1442
        %v2262 = vunpack.c.h.b16 %v1442
        %v2263 = vunpack.c.l.b16 %v1443
        %v2264 = vunpack.c.h.b16 %v1443
        %v2265 = vunpack.c.l.b16 %v1444
        %v2266 = vunpack.c.h.b16 %v1444
        %v2267 = vunpack.c.l.b16 %v1445
        %v2268 = vunpack.c.h.b16 %v1445
        %v2269 = vunpack.c.l.b16 %v1446
        %v2270 = vunpack.c.h.b16 %v1446
        %v2271 = vunpack.c.l.b16 %v1447
        %v2272 = vunpack.c.h.b16 %v1447
        %v2273 = vunpack.c.l.b16 %v1448
        %v2274 = vunpack.c.h.b16 %v1448
        %v2275 = vunpack.c.l.b16 %v1449
        %v2276 = vunpack.c.h.b16 %v1449
        %v2277 = vunpack.c.l.b16 %v1450
        %v2278 = vunpack.c.h.b16 %v1450
        %v2279 = vunpack.c.l.b16 %v1451
        %v2280 = vunpack.c.h.b16 %v1451
        %v2281 = vunpack.c.l.b16 %v1452
        %v2282 = vunpack.c.h.b16 %v1452
        %v2283 = vunpack.c.l.b16 %v1453
        %v2284 = vunpack.c.h.b16 %v1453
        %v2285 = vunpack.c.l.b16 %v1454
        %v2286 = vunpack.c.h.b16 %v1454
        %v2287 = vunpack.c.l.b16 %v1455
        %v2288 = vunpack.c.h.b16 %v1455
        %v2289 = vunpack.c.l.b16 %v1456
        %v2290 = vunpack.c.h.b16 %v1456
        %v2291 = vunpack.c.l.b16 %v1457
        %v2292 = vunpack.c.h.b16 %v1457
        %v2293 = vunpack.c.l.b16 %v1458
        %v2294 = vunpack.c.h.b16 %v1458
        %v2295 = vunpack.c.l.b16 %v1459
        %v2296 = vunpack.c.h.b16 %v1459
        %v2297 = vunpack.c.l.b16 %v1460
        %v2298 = vunpack.c.h.b16 %v1460
        %v2299 = vunpack.c.l.b16 %v1461
        %v2300 = vunpack.c.h.b16 %v1461
        %v2301 = vunpack.c.l.b16 %v1462
        %v2302 = vunpack.c.h.b16 %v1462
        %v2303 = vunpack.c.l.b16 %v1463
        %v2304 = vunpack.c.h.b16 %v1463
        %v2305 = vunpack.c.l.b16 %v1464
        %v2306 = vunpack.c.h.b16 %v1464
        %v2307 = vunpack.c.l.b16 %v1465
        %v2308 = vunpack.c.h.b16 %v1465
        %v2309 = vunpack.c.l.b16 %v1466
        %v2310 = vunpack.c.h.b16 %v1466
        %v2311 = vunpack.c.l.b16 %v1467
        %v2312 = vunpack.c.h.b16 %v1467
        %v2313 = vunpack.c.l.b16 %v1468
        %v2314 = vunpack.c.h.b16 %v1468
        %v2315 = vunpack.c.l.b16 %v1469
        %v2316 = vunpack.c.h.b16 %v1469
        %v2317 = vunpack.c.l.b16 %v1470
        %v2318 = vunpack.c.h.b16 %v1470
        %v2319 = vunpack.c.l.b16 %v1471
        %v2320 = vunpack.c.h.b16 %v1471
        %v2321 = vunpack.c.l.b16 %v1472
        %v2322 = vunpack.c.h.b16 %v1472
        %v2323 = vunpack.c.l.b16 %v1473
        %v2324 = vunpack.c.h.b16 %v1473
        %v2325 = vunpack.c.l.b16 %v1474
        %v2326 = vunpack.c.h.b16 %v1474
        %v2327 = vunpack.c.l.b16 %v1475
        %v2328 = vunpack.c.h.b16 %v1475
        %v2329 = vunpack.c.l.b16 %v1476
        %v2330 = vunpack.c.h.b16 %v1476
        %v2331 = vunpack.c.l.b16 %v1477
        %v2332 = vunpack.c.h.b16 %v1477
        %v2333 = vunpack.c.l.b16 %v1478
        %v2334 = vunpack.c.h.b16 %v1478
        %v2335 = vunpack.c.l.b16 %v1479
        %v2336 = vunpack.c.h.b16 %v1479
        %v2337 = vunpack.c.l.b16 %v1480
        %v2338 = vunpack.c.h.b16 %v1480
        %v2339 = vunpack.c.l.b16 %v1481
        %v2340 = vunpack.c.h.b16 %v1481
        %v2341 = vunpack.c.l.b16 %v1482
        %v2342 = vunpack.c.h.b16 %v1482
        %v2343 = vunpack.c.l.b16 %v1483
        %v2344 = vunpack.c.h.b16 %v1483
        %v2345 = vunpack.c.l.b16 %v1484
        %v2346 = vunpack.c.h.b16 %v1484
        %v2347 = vunpack.c.l.b16 %v1485
        %v2348 = vunpack.c.h.b16 %v1485
        %v2349 = vunpack.c.l.b16 %v1486
        %v2350 = vunpack.c.h.b16 %v1486
        %v2351 = vunpack.c.l.b16 %v1487
        %v2352 = vunpack.c.h.b16 %v1487
        %v2353 = vunpack.c.l.b16 %v1488
        %v2354 = vunpack.c.h.b16 %v1488
        %v2355 = vunpack.c.l.b16 %v1489
        %v2356 = vunpack.c.h.b16 %v1489
        %v2357 = vunpack.c.l.b16 %v1490
        %v2358 = vunpack.c.h.b16 %v1490
        %v2359 = vunpack.c.l.b16 %v1491
        %v2360 = vunpack.c.h.b16 %v1491
        %v2361 = vunpack.c.l.b16 %v1492
        %v2362 = vunpack.c.h.b16 %v1492
        %v2363 = vunpack.c.l.b16 %v1493
        %v2364 = vunpack.c.h.b16 %v1493
        %v2365 = vunpack.c.l.b16 %v1494
        %v2366 = vunpack.c.h.b16 %v1494
        %v2367 = vunpack.c.l.b16 %v1495
        %v2368 = vunpack.c.h.b16 %v1495
        %v2369 = vunpack.c.l.b16 %v1496
        %v2370 = vunpack.c.h.b16 %v1496
        %v2371 = vunpack.c.l.b16 %v1497
        %v2372 = vunpack.c.h.b16 %v1497
        %v2373 = vunpack.c.l.b16 %v1498
        %v2374 = vunpack.c.h.b16 %v1498
        %v2375 = vunpack.c.l.b16 %v1499
        %v2376 = vunpack.c.h.b16 %v1499
        %v2377 = vunpack.c.l.b16 %v1500
        %v2378 = vunpack.c.h.b16 %v1500
        %v2379 = vunpack.c.l.b16 %v1501
        %v2380 = vunpack.c.h.b16 %v1501
        %v2381 = vunpack.c.l.b16 %v1502
        %v2382 = vunpack.c.h.b16 %v1502
        %v2383 = vunpack.c.l.b16 %v1503
        %v2384 = vunpack.c.h.b16 %v1503
        %v2385 = vunpack.c.l.b16 %v1504
        %v2386 = vunpack.c.h.b16 %v1504
        %v2387 = vunpack.c.l.b16 %v1505
        %v2388 = vunpack.c.h.b16 %v1505
        %v2389 = vunpack.c.l.b16 %v1506
        %v2390 = vunpack.c.h.b16 %v1506
        %v2391 = vunpack.c.l.b16 %v1507
        %v2392 = vunpack.c.h.b16 %v1507
        %v2393 = vunpack.c.l.b16 %v1508
        %v2394 = vunpack.c.h.b16 %v1508
        %v2395 = vunpack.c.l.b16 %v1509
        %v2396 = vunpack.c.h.b16 %v1509
        %v2397 = vunpack.c.l.b16 %v1510
        %v2398 = vunpack.c.h.b16 %v1510
        %v2399 = vunpack.c.l.b16 %v1511
        %v2400 = vunpack.c.h.b16 %v1511
        %v2401 = vunpack.c.l.b16 %v1512
        %v2402 = vunpack.c.h.b16 %v1512
        %v2403 = vunpack.c.l.b16 %v1513
        %v2404 = vunpack.c.h.b16 %v1513
        %v2405 = vunpack.c.l.b16 %v1514
        %v2406 = vunpack.c.h.b16 %v1514
        %v2407 = vunpack.c.l.b16 %v1515
        %v2408 = vunpack.c.h.b16 %v1515
        %v2409 = vunpack.c.l.b16 %v1516
        %v2410 = vunpack.c.h.b16 %v1516
        %v2411 = vunpack.c.l.b16 %v1517
        %v2412 = vunpack.c.h.b16 %v1517
        %v2413 = vunpack.c.l.b16 %v1518
        %v2414 = vunpack.c.h.b16 %v1518
        %v2415 = vunpack.c.l.b16 %v1519
        %v2416 = vunpack.c.h.b16 %v1519
        %v2417 = vunpack.c.l.b16 %v1520
        %v2418 = vunpack.c.h.b16 %v1520
        %v2419 = vunpack.c.l.b16 %v1521
        %v2420 = vunpack.c.h.b16 %v1521
        %v2421 = vunpack.c.l.b16 %v1522
        %v2422 = vunpack.c.h.b16 %v1522
        %v2423 = vunpack.c.l.b16 %v1523
        %v2424 = vunpack.c.h.b16 %v1523
        %v2425 = vunpack.c.l.b16 %v1524
        %v2426 = vunpack.c.h.b16 %v1524
        %v2427 = vunpack.c.l.b16 %v1525
        %v2428 = vunpack.c.h.b16 %v1525
        %v2429 = vunpack.c.l.b16 %v1526
        %v2430 = vunpack.c.h.b16 %v1526
        %v2431 = vunpack.c.l.b16 %v1527
        %v2432 = vunpack.c.h.b16 %v1527
        %v2433 = vunpack.c.l.b16 %v1528
        %v2434 = vunpack.c.h.b16 %v1528
        %v2435 = vunpack.c.l.b16 %v1529
        %v2436 = vunpack.c.h.b16 %v1529
        %v2437 = vunpack.c.l.b16 %v1530
        %v2438 = vunpack.c.h.b16 %v1530
        %v2439 = vunpack.c.l.b16 %v1531
        %v2440 = vunpack.c.h.b16 %v1531
        %v2441 = vunpack.c.l.b16 %v1532
        %v2442 = vunpack.c.h.b16 %v1532
        %v2443 = vunpack.c.l.b16 %v1533
        %v2444 = vunpack.c.h.b16 %v1533
        %v2445 = vunpack.c.l.b16 %v1534
        %v2446 = vunpack.c.h.b16 %v1534
        %v2447 = vunpack.c.l.b16 %v1535
        %v2448 = vunpack.c.h.b16 %v1535
        %v2449 = vunpack.c.l.b16 %v1536
        %v2450 = vunpack.c.h.b16 %v1536
        %v2451 = vunpack.c.l.b16 %v1537
        %v2452 = vunpack.c.h.b16 %v1537
        %v2453 = vunpack.c.l.b16 %v1538
        %v2454 = vunpack.c.h.b16 %v1538
        %v2455 = vunpack.c.l.b16 %v1539
        %v2456 = vunpack.c.h.b16 %v1539
        %v2457 = vunpack.c.l.b16 %v1540
        %v2458 = vunpack.c.h.b16 %v1540
        %v2459 = vunpack.c.l.b16 %v1541
        %v2460 = vunpack.c.h.b16 %v1541
        %v2461 = vunpack.c.l.b16 %v1542
        %v2462 = vunpack.c.h.b16 %v1542
        %v2463 = vunpack.c.l.b16 %v1543
        %v2464 = vunpack.c.h.b16 %v1543
        %v2465 = vunpack.c.l.b16 %v1544
        %v2466 = vunpack.c.h.b16 %v1544
        %v2467 = vunpack.c.l.b16 %v1545
        %v2468 = vunpack.c.h.b16 %v1545
        %v2469 = vunpack.c.l.b16 %v1546
        %v2470 = vunpack.c.h.b16 %v1546
        %v2471 = vunpack.c.l.b16 %v1547
        %v2472 = vunpack.c.h.b16 %v1547
        %v2473 = vunpack.c.l.b16 %v1548
        %v2474 = vunpack.c.h.b16 %v1548
        %v2475 = vunpack.c.l.b16 %v1549
        %v2476 = vunpack.c.h.b16 %v1549
        %v2477 = vunpack.c.l.b16 %v1550
        %v2478 = vunpack.c.h.b16 %v1550
        %v2479 = vunpack.c.l.b16 %v1551
        %v2480 = vunpack.c.h.b16 %v1551
        %v2481 = vunpack.c.l.b16 %v1552
        %v2482 = vunpack.c.h.b16 %v1552
        %v2483 = vunpack.c.l.b16 %v1553
        %v2484 = vunpack.c.h.b16 %v1553
        %v2485 = vunpack.c.l.b16 %v1554
        %v2486 = vunpack.c.h.b16 %v1554
        %v2487 = vunpack.c.l.b16 %v1555
        %v2488 = vunpack.c.h.b16 %v1555
        %v2489 = vunpack.c.l.b16 %v1556
        %v2490 = vunpack.c.h.b16 %v1556
        %v2491 = vunpack.c.l.b16 %v1557
        %v2492 = vunpack.c.h.b16 %v1557
        %v2493 = vunpack.c.l.b16 %v1558
        %v2494 = vunpack.c.h.b16 %v1558
        %v2495 = vunpack.c.l.b16 %v1559
        %v2496 = vunpack.c.h.b16 %v1559
        %v2497 = vunpack.c.l.b16 %v1560
        %v2498 = vunpack.c.h.b16 %v1560
        %v2499 = vunpack.c.l.b16 %v1561
        %v2500 = vunpack.c.h.b16 %v1561
        %v2501 = vunpack.c.l.b16 %v1562
        %v2502 = vunpack.c.h.b16 %v1562
        %v2503 = vunpack.c.l.b16 %v1563
        %v2504 = vunpack.c.h.b16 %v1563
        %v2505 = vunpack.c.l.b16 %v1564
        %v2506 = vunpack.c.h.b16 %v1564
        %v2507 = vunpack.c.l.b16 %v1565
        %v2508 = vunpack.c.h.b16 %v1565
        %v2509 = vunpack.c.l.b16 %v1566
        %v2510 = vunpack.c.h.b16 %v1566
        %v2511 = vunpack.c.l.b16 %v1567
        %v2512 = vunpack.c.h.b16 %v1567
        %v2513 = vunpack.c.l.b16 %v1568
        %v2514 = vunpack.c.h.b16 %v1568
        %v2515 = vunpack.c.l.b16 %v1569
        %v2516 = vunpack.c.h.b16 %v1569
        %v2517 = vunpack.c.l.b16 %v1570
        %v2518 = vunpack.c.h.b16 %v1570
        %v2519 = vunpack.c.l.b16 %v1571
        %v2520 = vunpack.c.h.b16 %v1571
        %v2521 = vunpack.c.l.b16 %v1572
        %v2522 = vunpack.c.h.b16 %v1572
        %v2523 = vunpack.c.l.b16 %v1573
        %v2524 = vunpack.c.h.b16 %v1573
        %v2525 = vunpack.c.l.b16 %v1574
        %v2526 = vunpack.c.h.b16 %v1574
        %v2527 = vunpack.c.l.b16 %v1575
        %v2528 = vunpack.c.h.b16 %v1575
        %v2529 = vunpack.c.l.b16 %v1576
        %v2530 = vunpack.c.h.b16 %v1576
        %v2531 = vunpack.c.l.b16 %v1577
        %v2532 = vunpack.c.h.b16 %v1577
        %v2533 = vunpack.c.l.b16 %v1578
        %v2534 = vunpack.c.h.b16 %v1578
        %v2535 = vunpack.c.l.b16 %v1579
        %v2536 = vunpack.c.h.b16 %v1579
        %v2537 = vunpack.c.l.b16 %v1580
        %v2538 = vunpack.c.h.b16 %v1580
        %v2539 = vunpack.c.l.b16 %v1581
        %v2540 = vunpack.c.h.b16 %v1581
        %v2541 = vunpack.c.l.b16 %v1582
        %v2542 = vunpack.c.h.b16 %v1582
        %v2543 = vunpack.c.l.b16 %v1583
        %v2544 = vunpack.c.h.b16 %v1583
        %v2545 = vunpack.c.l.b16 %v1584
        %v2546 = vunpack.c.h.b16 %v1584
        %v2547 = vunpack.c.l.b16 %v1585
        %v2548 = vunpack.c.h.b16 %v1585
        %v2549 = vunpack.c.l.b16 %v1586
        %v2550 = vunpack.c.h.b16 %v1586
        %v2551 = vunpack.c.l.b16 %v1587
        %v2552 = vunpack.c.h.b16 %v1587
        %v2553 = vunpack.c.l.b16 %v1588
        %v2554 = vunpack.c.h.b16 %v1588
        %v2555 = vunpack.c.l.b16 %v1589
        %v2556 = vunpack.c.h.b16 %v1589
        %v2557 = vunpack.c.l.b16 %v1590
        %v2558 = vunpack.c.h.b16 %v1590
        %v2559 = vunpack.c.l.b16 %v1591
        %v2560 = vunpack.c.h.b16 %v1591
        %v2561 = vunpack.c.l.b16 %v1592
        %v2562 = vunpack.c.h.b16 %v1592
        %v2563 = vunpack.c.l.b16 %v1593
        %v2564 = vunpack.c.h.b16 %v1593
        %v2565 = vunpack.c.l.b16 %v1594
        %v2566 = vunpack.c.h.b16 %v1594
        %v2567 = vunpack.c.l.b16 %v1595
        %v2568 = vunpack.c.h.b16 %v1595
        %v2569 = vunpack.c.l.b16 %v1596
        %v2570 = vunpack.c.h.b16 %v1596
        %v2571 = vunpack.c.l.b16 %v1597
        %v2572 = vunpack.c.h.b16 %v1597
        %v2573 = vunpack.c.l.b16 %v1598
        %v2574 = vunpack.c.h.b16 %v1598
        %v2575 = vunpack.c.l.b16 %v1599
        %v2576 = vunpack.c.h.b16 %v1599
        %v2577 = vunpack.c.l.b16 %v1600
        %v2578 = vunpack.c.h.b16 %v1600
        %v2579 = vunpack.c.l.b16 %v1601
        %v2580 = vunpack.c.h.b16 %v1601
        %v2581 = vunpack.c.l.b16 %v1602
        %v2582 = vunpack.c.h.b16 %v1602
        %v2583 = vunpack.c.l.b16 %v1603
        %v2584 = vunpack.c.h.b16 %v1603
        %v2585 = vunpack.c.l.b16 %v1604
        %v2586 = vunpack.c.h.b16 %v1604
        %v2587 = vunpack.c.l.b16 %v1605
        %v2588 = vunpack.c.h.b16 %v1605
        %v2589 = vunpack.c.l.b16 %v1606
        %v2590 = vunpack.c.h.b16 %v1606
        %v2591 = vunpack.c.l.b16 %v1607
        %v2592 = vunpack.c.h.b16 %v1607
        %v2593 = vunpack.c.l.b16 %v1608
        %v2594 = vunpack.c.h.b16 %v1608
        %v2595 = vunpack.c.l.b16 %v1609
        %v2596 = vunpack.c.h.b16 %v1609
        %v2597 = vunpack.c.l.b16 %v1610
        %v2598 = vunpack.c.h.b16 %v1610
        %v2599 = vunpack.c.l.b16 %v1611
        %v2600 = vunpack.c.h.b16 %v1611
        %v2601 = vunpack.c.l.b16 %v1612
        %v2602 = vunpack.c.h.b16 %v1612
        %v2603 = vunpack.c.l.b16 %v1613
        %v2604 = vunpack.c.h.b16 %v1613
        %v2605 = vunpack.c.l.b16 %v1614
        %v2606 = vunpack.c.h.b16 %v1614
        %v2607 = vunpack.c.l.b16 %v1615
        %v2608 = vunpack.c.h.b16 %v1615
        %v2609 = vunpack.c.l.b16 %v1616
        %v2610 = vunpack.c.h.b16 %v1616
        %v2611 = vunpack.c.l.b16 %v1617
        %v2612 = vunpack.c.h.b16 %v1617
        %v2613 = vunpack.c.l.b16 %v1618
        %v2614 = vunpack.c.h.b16 %v1618
        %v2615 = vunpack.c.l.b16 %v1619
        %v2616 = vunpack.c.h.b16 %v1619
        %v2617 = vunpack.c.l.b16 %v1620
        %v2618 = vunpack.c.h.b16 %v1620
        %v2619 = vunpack.c.l.b16 %v1621
        %v2620 = vunpack.c.h.b16 %v1621
        %v2621 = vunpack.c.l.b16 %v1622
        %v2622 = vunpack.c.h.b16 %v1622
        %v2623 = vunpack.c.l.b16 %v1623
        %v2624 = vunpack.c.h.b16 %v1623
        %v2625 = vunpack.c.l.b16 %v1624
        %v2626 = vunpack.c.h.b16 %v1624
        %v2627 = vunpack.c.l.b16 %v1625
        %v2628 = vunpack.c.h.b16 %v1625
        %v2629 = vunpack.c.l.b16 %v1626
        %v2630 = vunpack.c.h.b16 %v1626
        %v2631 = vunpack.c.l.b16 %v1627
        %v2632 = vunpack.c.h.b16 %v1627
        %v2633 = vunpack.c.l.b16 %v1628
        %v2634 = vunpack.c.h.b16 %v1628
        %v2635 = vunpack.c.l.b16 %v1629
        %v2636 = vunpack.c.h.b16 %v1629
        %v2637 = vunpack.c.l.b16 %v1630
        %v2638 = vunpack.c.h.b16 %v1630
        %v2639 = vunpack.c.l.b16 %v1631
        %v2640 = vunpack.c.h.b16 %v1631
        %v2641 = vunpack.c.l.b16 %v1632
        %v2642 = vunpack.c.h.b16 %v1632
        %v2643 = vunpack.c.l.b16 %v1633
        %v2644 = vunpack.c.h.b16 %v1633
        %v2645 = vunpack.c.l.b16 %v1634
        %v2646 = vunpack.c.h.b16 %v1634
        %v2647 = vpack.c.b16 %v2151, %v2135
        %v2648 = vpack.c.b16 %v2152, %v2136
        %v2649 = vpack.c.b16 %v2153, %v2137
        %v2650 = vpack.c.b16 %v2154, %v2138
        %v2651 = vpack.c.b16 %v2155, %v2139
        %v2652 = vpack.c.b16 %v2156, %v2140
        %v2653 = vpack.c.b16 %v2157, %v2141
        %v2654 = vpack.c.b16 %v2158, %v2142
        %v2655 = vpack.c.b16 %v2159, %v2143
        %v2656 = vpack.c.b16 %v2160, %v2144
        %v2657 = vpack.c.b16 %v2161, %v2145
        %v2658 = vpack.c.b16 %v2162, %v2146
        %v2659 = vpack.c.b16 %v2163, %v2147
        %v2660 = vpack.c.b16 %v2164, %v2148
        %v2661 = vpack.c.b16 %v2165, %v2149
        %v2662 = vpack.c.b16 %v2166, %v2150
        %v2663 = vpack.c.b16 %v2183, %v2167
        %v2664 = vpack.c.b16 %v2184, %v2168
        %v2665 = vpack.c.b16 %v2185, %v2169
        %v2666 = vpack.c.b16 %v2186, %v2170
        %v2667 = vpack.c.b16 %v2187, %v2171
        %v2668 = vpack.c.b16 %v2188, %v2172
        %v2669 = vpack.c.b16 %v2189, %v2173
        %v2670 = vpack.c.b16 %v2190, %v2174
        %v2671 = vpack.c.b16 %v2191, %v2175
        %v2672 = vpack.c.b16 %v2192, %v2176
        %v2673 = vpack.c.b16 %v2193, %v2177
        %v2674 = vpack.c.b16 %v2194, %v2178
        %v2675 = vpack.c.b16 %v2195, %v2179
        %v2676 = vpack.c.b16 %v2196, %v2180
        %v2677 = vpack.c.b16 %v2197, %v2181
        %v2678 = vpack.c.b16 %v2198, %v2182
        %v2679 = vpack.c.b16 %v2215, %v2199
        %v2680 = vpack.c.b16 %v2216, %v2200
        %v2681 = vpack.c.b16 %v2217, %v2201
        %v2682 = vpack.c.b16 %v2218, %v2202
        %v2683 = vpack.c.b16 %v2219, %v2203
        %v2684 = vpack.c.b16 %v2220, %v2204
        %v2685 = vpack.c.b16 %v2221, %v2205
        %v2686 = vpack.c.b16 %v2222, %v2206
        %v2687 = vpack.c.b16 %v2223, %v2207
        %v2688 = vpack.c.b16 %v2224, %v2208
        %v2689 = vpack.c.b16 %v2225, %v2209
        %v2690 = vpack.c.b16 %v2226, %v2210
        %v2691 = vpack.c.b16 %v2227, %v2211
        %v2692 = vpack.c.b16 %v2228, %v2212
        %v2693 = vpack.c.b16 %v2229, %v2213
        %v2694 = vpack.c.b16 %v2230, %v2214
        %v2695 = vpack.c.b16 %v2247, %v2231
        %v2696 = vpack.c.b16 %v2248, %v2232
        %v2697 = vpack.c.b16 %v2249, %v2233
        %v2698 = vpack.c.b16 %v2250, %v2234
        %v2699 = vpack.c.b16 %v2251, %v2235
        %v2700 = vpack.c.b16 %v2252, %v2236
        %v2701 = vpack.c.b16 %v2253, %v2237
        %v2702 = vpack.c.b16 %v2254, %v2238
        %v2703 = vpack.c.b16 %v2255, %v2239
        %v2704 = vpack.c.b16 %v2256, %v2240
        %v2705 = vpack.c.b16 %v2257, %v2241
        %v2706 = vpack.c.b16 %v2258, %v2242
        %v2707 = vpack.c.b16 %v2259, %v2243
        %v2708 = vpack.c.b16 %v2260, %v2244
        %v2709 = vpack.c.b16 %v2261, %v2245
        %v2710 = vpack.c.b16 %v2262, %v2246
        %v2711 = vpack.c.b16 %v2279, %v2263
        %v2712 = vpack.c.b16 %v2280, %v2264
        %v2713 = vpack.c.b16 %v2281, %v2265
        %v2714 = vpack.c.b16 %v2282, %v2266
        %v2715 = vpack.c.b16 %v2283, %v2267
        %v2716 = vpack.c.b16 %v2284, %v2268
        %v2717 = vpack.c.b16 %v2285, %v2269
        %v2718 = vpack.c.b16 %v2286, %v2270
        %v2719 = vpack.c.b16 %v2287, %v2271
        %v2720 = vpack.c.b16 %v2288, %v2272
        %v2721 = vpack.c.b16 %v2289, %v2273
        %v2722 = vpack.c.b16 %v2290, %v2274
        %v2723 = vpack.c.b16 %v2291, %v2275
        %v2724 = vpack.c.b16 %v2292, %v2276
        %v2725 = vpack.c.b16 %v2293, %v2277
        %v2726 = vpack.c.b16 %v2294, %v2278
        %v2727 = vpack.c.b16 %v2311, %v2295
        %v2728 = vpack.c.b16 %v2312, %v2296
        %v2729 = vpack.c.b16 %v2313, %v2297
        %v2730 = vpack.c.b16 %v2314, %v2298
        %v2731 = vpack.c.b16 %v2315, %v2299
        %v2732 = vpack.c.b16 %v2316, %v2300
        %v2733 = vpack.c.b16 %v2317, %v2301
        %v2734 = vpack.c.b16 %v2318, %v2302
        %v2735 = vpack.c.b16 %v2319, %v2303
        %v2736 = vpack.c.b16 %v2320, %v2304
        %v2737 = vpack.c.b16 %v2321, %v2305
        %v2738 = vpack.c.b16 %v2322, %v2306
        %v2739 = vpack.c.b16 %v2323, %v2307
        %v2740 = vpack.c.b16 %v2324, %v2308
        %v2741 = vpack.c.b16 %v2325, %v2309
        %v2742 = vpack.c.b16 %v2326, %v2310
        %v2743 = vpack.c.b16 %v2343, %v2327
        %v2744 = vpack.c.b16 %v2344, %v2328
        %v2745 = vpack.c.b16 %v2345, %v2329
        %v2746 = vpack.c.b16 %v2346, %v2330
        %v2747 = vpack.c.b16 %v2347, %v2331
        %v2748 = vpack.c.b16 %v2348, %v2332
        %v2749 = vpack.c.b16 %v2349, %v2333
        %v2750 = vpack.c.b16 %v2350, %v2334
        %v2751 = vpack.c.b16 %v2351, %v2335
        %v2752 = vpack.c.b16 %v2352, %v2336
        %v2753 = vpack.c.b16 %v2353, %v2337
        %v2754 = vpack.c.b16 %v2354, %v2338
        %v2755 = vpack.c.b16 %v2355, %v2339
        %v2756 = vpack.c.b16 %v2356, %v2340
        %v2757 = vpack.c.b16 %v2357, %v2341
        %v2758 = vpack.c.b16 %v2358, %v2342
        %v2759 = vpack.c.b16 %v2375, %v2359
        %v2760 = vpack.c.b16 %v2376, %v2360
        %v2761 = vpack.c.b16 %v2377, %v2361
        %v2762 = vpack.c.b16 %v2378, %v2362
        %v2763 = vpack.c.b16 %v2379, %v2363
        %v2764 = vpack.c.b16 %v2380, %v2364
        %v2765 = vpack.c.b16 %v2381, %v2365
        %v2766 = vpack.c.b16 %v2382, %v2366
        %v2767 = vpack.c.b16 %v2383, %v2367
        %v2768 = vpack.c.b16 %v2384, %v2368
        %v2769 = vpack.c.b16 %v2385, %v2369
        %v2770 = vpack.c.b16 %v2386, %v2370
        %v2771 = vpack.c.b16 %v2387, %v2371
        %v2772 = vpack.c.b16 %v2388, %v2372
        %v2773 = vpack.c.b16 %v2389, %v2373
        %v2774 = vpack.c.b16 %v2390, %v2374
        %v2775 = vpack.c.b16 %v2407, %v2391
        %v2776 = vpack.c.b16 %v2408, %v2392
        %v2777 = vpack.c.b16 %v2409, %v2393
        %v2778 = vpack.c.b16 %v2410, %v2394
        %v2779 = vpack.c.b16 %v2411, %v2395
        %v2780 = vpack.c.b16 %v2412, %v2396
        %v2781 = vpack.c.b16 %v2413, %v2397
        %v2782 = vpack.c.b16 %v2414, %v2398
        %v2783 = vpack.c.b16 %v2415, %v2399
        %v2784 = vpack.c.b16 %v2416, %v2400
        %v2785 = vpack.c.b16 %v2417, %v2401
        %v2786 = vpack.c.b16 %v2418, %v2402
        %v2787 = vpack.c.b16 %v2419, %v2403
        %v2788 = vpack.c.b16 %v2420, %v2404
        %v2789 = vpack.c.b16 %v2421, %v2405
        %v2790 = vpack.c.b16 %v2422, %v2406
        %v2791 = vpack.c.b16 %v2439, %v2423
        %v2792 = vpack.c.b16 %v2440, %v2424
        %v2793 = vpack.c.b16 %v2441, %v2425
        %v2794 = vpack.c.b16 %v2442, %v2426
        %v2795 = vpack.c.b16 %v2443, %v2427
        %v2796 = vpack.c.b16 %v2444, %v2428
        %v2797 = vpack.c.b16 %v2445, %v2429
        %v2798 = vpack.c.b16 %v2446, %v2430
        %v2799 = vpack.c.b16 %v2447, %v2431
        %v2800 = vpack.c.b16 %v2448, %v2432
        %v2801 = vpack.c.b16 %v2449, %v2433
        %v2802 = vpack.c.b16 %v2450, %v2434
        %v2803 = vpack.c.b16 %v2451, %v2435
        %v2804 = vpack.c.b16 %v2452, %v2436
        %v2805 = vpack.c.b16 %v2453, %v2437
        %v2806 = vpack.c.b16 %v2454, %v2438
        %v2807 = vpack.c.b16 %v2471, %v2455
        %v2808 = vpack.c.b16 %v2472, %v2456
        %v2809 = vpack.c.b16 %v2473, %v2457
        %v2810 = vpack.c.b16 %v2474, %v2458
        %v2811 = vpack.c.b16 %v2475, %v2459
        %v2812 = vpack.c.b16 %v2476, %v2460
        %v2813 = vpack.c.b16 %v2477, %v2461
        %v2814 = vpack.c.b16 %v2478, %v2462
        %v2815 = vpack.c.b16 %v2479, %v2463
        %v2816 = vpack.c.b16 %v2480, %v2464
        %v2817 = vpack.c.b16 %v2481, %v2465
        %v2818 = vpack.c.b16 %v2482, %v2466
        %v2819 = vpack.c.b16 %v2483, %v2467
        %v2820 = vpack.c.b16 %v2484, %v2468
        %v2821 = vpack.c.b16 %v2485, %v2469
        %v2822 = vpack.c.b16 %v2486, %v2470
        %v2823 = vpack.c.b16 %v2503, %v2487
        %v2824 = vpack.c.b16 %v2504, %v2488
        %v2825 = vpack.c.b16 %v2505, %v2489
        %v2826 = vpack.c.b16 %v2506, %v2490
        %v2827 = vpack.c.b16 %v2507, %v2491
        %v2828 = vpack.c.b16 %v2508, %v2492
        %v2829 = vpack.c.b16 %v2509, %v2493
        %v2830 = vpack.c.b16 %v2510, %v2494
        %v2831 = vpack.c.b16 %v2511, %v2495
        %v2832 = vpack.c.b16 %v2512, %v2496
        %v2833 = vpack.c.b16 %v2513, %v2497
        %v2834 = vpack.c.b16 %v2514, %v2498
        %v2835 = vpack.c.b16 %v2515, %v2499
        %v2836 = vpack.c.b16 %v2516, %v2500
        %v2837 = vpack.c.b16 %v2517, %v2501
        %v2838 = vpack.c.b16 %v2518, %v2502
        %v2839 = vpack.c.b16 %v2535, %v2519
        %v2840 = vpack.c.b16 %v2536, %v2520
        %v2841 = vpack.c.b16 %v2537, %v2521
        %v2842 = vpack.c.b16 %v2538, %v2522
        %v2843 = vpack.c.b16 %v2539, %v2523
        %v2844 = vpack.c.b16 %v2540, %v2524
        %v2845 = vpack.c.b16 %v2541, %v2525
        %v2846 = vpack.c.b16 %v2542, %v2526
        %v2847 = vpack.c.b16 %v2543, %v2527
        %v2848 = vpack.c.b16 %v2544, %v2528
        %v2849 = vpack.c.b16 %v2545, %v2529
        %v2850 = vpack.c.b16 %v2546, %v2530
        %v2851 = vpack.c.b16 %v2547, %v2531
        %v2852 = vpack.c.b16 %v2548, %v2532
        %v2853 = vpack.c.b16 %v2549, %v2533
        %v2854 = vpack.c.b16 %v2550, %v2534
        %v2855 = vpack.c.b16 %v2567, %v2551
        %v2856 = vpack.c.b16 %v2568, %v2552
        %v2857 = vpack.c.b16 %v2569, %v2553
        %v2858 = vpack.c.b16 %v2570, %v2554
        %v2859 = vpack.c.b16 %v2571, %v2555
        %v2860 = vpack.c.b16 %v2572, %v2556
        %v2861 = vpack.c.b16 %v2573, %v2557
        %v2862 = vpack.c.b16 %v2574, %v2558
        %v2863 = vpack.c.b16 %v2575, %v2559
        %v2864 = vpack.c.b16 %v2576, %v2560
        %v2865 = vpack.c.b16 %v2577, %v2561
        %v2866 = vpack.c.b16 %v2578, %v2562
        %v2867 = vpack.c.b16 %v2579, %v2563
        %v2868 = vpack.c.b16 %v2580, %v2564
        %v2869 = vpack.c.b16 %v2581, %v2565
        %v2870 = vpack.c.b16 %v2582, %v2566
        %v2871 = vpack.c.b16 %v2599, %v2583
        %v2872 = vpack.c.b16 %v2600, %v2584
        %v2873 = vpack.c.b16 %v2601, %v2585
        %v2874 = vpack.c.b16 %v2602, %v2586
        %v2875 = vpack.c.b16 %v2603, %v2587
        %v2876 = vpack.c.b16 %v2604, %v2588
        %v2877 = vpack.c.b16 %v2605, %v2589
        %v2878 = vpack.c.b16 %v2606, %v2590
        %v2879 = vpack.c.b16 %v2607, %v2591
        %v2880 = vpack.c.b16 %v2608, %v2592
        %v2881 = vpack.c.b16 %v2609, %v2593
        %v2882 = vpack.c.b16 %v2610, %v2594
        %v2883 = vpack.c.b16 %v2611, %v2595
        %v2884 = vpack.c.b16 %v2612, %v2596
        %v2885 = vpack.c.b16 %v2613, %v2597
        %v2886 = vpack.c.b16 %v2614, %v2598
        %v2887 = vpack.c.b16 %v2631, %v2615
        %v2888 = vpack.c.b16 %v2632, %v2616
        %v2889 = vpack.c.b16 %v2633, %v2617
        %v2890 = vpack.c.b16 %v2634, %v2618
        %v2891 = vpack.c.b16 %v2635, %v2619
        %v2892 = vpack.c.b16 %v2636, %v2620
        %v2893 = vpack.c.b16 %v2637, %v2621
        %v2894 = vpack.c.b16 %v2638, %v2622
        %v2895 = vpack.c.b16 %v2639, %v2623
        %v2896 = vpack.c.b16 %v2640, %v2624
        %v2897 = vpack.c.b16 %v2641, %v2625
        %v2898 = vpack.c.b16 %v2642, %v2626
        %v2899 = vpack.c.b16 %v2643, %v2627
        %v2900 = vpack.c.b16 %v2644, %v2628
        %v2901 = vpack.c.b16 %v2645, %v2629
        %v2902 = vpack.c.b16 %v2646, %v2630
        %3159 = vmatprep.subr.bf16.mxu0 %v2760
        %3160 = vmatpush1.bf16.msra.mxu0 %v2759
        %3161 = vmatprep.subr.bf16.mxu0 %v2744
        %3162 = vmatpush1.bf16.msra.mxu0 %v2743
        %3163 = vmatprep.subr.bf16.mxu0 %v2728
        %3164 = vmatpush1.bf16.msra.mxu0 %v2727
        %3165 = vmatprep.subr.bf16.mxu0 %v2712
        %3166 = vmatpush1.bf16.msra.mxu0 %v2711
        %3167 = vmatprep.subr.bf16.mxu0 %v2696
        %3168 = vmatpush1.bf16.msra.mxu0 %v2695
        %3169 = vmatprep.subr.bf16.mxu0 %v2680
        %3170 = vmatpush1.bf16.msra.mxu0 %v2679
        %3171 = vmatprep.subr.bf16.mxu0 %v2664
        %3172 = vmatpush1.bf16.msra.mxu0 %v2663
        %3173 = vmatprep.subr.bf16.mxu0 %v2648
        %3174 = vmatpush1.bf16.msra.mxu0 %v2647
        %3175 = vmatprep.subr.bf16.mxu0 %v2888
        %3176 = vmatpush2.bf16.msra.mxu0 %v2887
        %3177 = vmatprep.subr.bf16.mxu0 %v2872
        %3178 = vmatpush2.bf16.msra.mxu0 %v2871
        %3179 = vmatprep.subr.bf16.mxu0 %v2856
        %3180 = vmatpush2.bf16.msra.mxu0 %v2855
        %3181 = vmatprep.subr.bf16.mxu0 %v2840
        %3182 = vmatpush2.bf16.msra.mxu0 %v2839
        %3183 = vmatprep.subr.bf16.mxu0 %v2824
        %3184 = vmatpush2.bf16.msra.mxu0 %v2823
        %3185 = vmatprep.subr.bf16.mxu0 %v2808
        %3186 = vmatpush2.bf16.msra.mxu0 %v2807
        %3187 = vmatprep.subr.bf16.mxu0 %v2792
        %3188 = vmatpush2.bf16.msra.mxu0 %v2791
        %3189 = vmatprep.subr.bf16.mxu0 %v2776
        %3190 = vmatpush2.bf16.msra.mxu0 %v2775
        %3191 = vmatprep.mubr.bf16.mxu0 %v1816
        %3192 = vmatmul.mubr.bf16.gmra.mxu0 %v1815
        %v3193 = vpop.f32.mrf.mxu0
        %v3194 = vadd.f32 %v1642, %v3193
        %v3195 = vpop.f32.mrf.mxu0
        %v3196 = vadd.f32 %v1646, %v3195
        %v3197 = vpop.f32.mrf.mxu0
        %v3198 = vadd.f32 %v1642, %v3197
        %v3199 = vpop.f32.mrf.mxu0
        %v3200 = vadd.f32 %v1646, %v3199
        %3201 = vmatprep.mubr.bf16.mxu0 %v1818
        %3202 = vmatmul.mubr.bf16.gmra.mxu0 %v1817
        %v3203 = vpop.f32.mrf.mxu0
        %v3204 = vadd.f32 %v1642, %v3203
        %v3205 = vpop.f32.mrf.mxu0
        %v3206 = vadd.f32 %v1646, %v3205
        %v3207 = vpop.f32.mrf.mxu0
        %v3208 = vadd.f32 %v1642, %v3207
        %v3209 = vpop.f32.mrf.mxu0
        %v3210 = vadd.f32 %v1646, %v3209
        %3211 = vmatprep.mubr.bf16.mxu0 %v1820
        %3212 = vmatmul.mubr.bf16.gmra.mxu0 %v1819
        %v3213 = vpop.f32.mrf.mxu0
        %v3214 = vadd.f32 %v1642, %v3213
        %v3215 = vpop.f32.mrf.mxu0
        %v3216 = vadd.f32 %v1646, %v3215
        %v3217 = vpop.f32.mrf.mxu0
        %v3218 = vadd.f32 %v1642, %v3217
        %v3219 = vpop.f32.mrf.mxu0
        %v3220 = vadd.f32 %v1646, %v3219
        %3221 = vmatprep.mubr.bf16.mxu0 %v1822
        %3222 = vmatmul.mubr.bf16.gmra.mxu0 %v1821
        %v3223 = vpop.f32.mrf.mxu0
        %v3224 = vadd.f32 %v1642, %v3223
        %v3225 = vpop.f32.mrf.mxu0
        %v3226 = vadd.f32 %v1646, %v3225
        %v3227 = vpop.f32.mrf.mxu0
        %v3228 = vadd.f32 %v1642, %v3227
        %v3229 = vpop.f32.mrf.mxu0
        %v3230 = vadd.f32 %v1646, %v3229
        %3231 = vmatprep.mubr.bf16.mxu0 %v1824
        %3232 = vmatmul.mubr.bf16.gmra.mxu0 %v1823
        %v3233 = vpop.f32.mrf.mxu0
        %v3234 = vadd.f32 %v1642, %v3233
        %v3235 = vpop.f32.mrf.mxu0
        %v3236 = vadd.f32 %v1646, %v3235
        %v3237 = vpop.f32.mrf.mxu0
        %v3238 = vadd.f32 %v1642, %v3237
        %v3239 = vpop.f32.mrf.mxu0
        %v3240 = vadd.f32 %v1646, %v3239
        %3241 = vmatprep.mubr.bf16.mxu0 %v1826
        %3242 = vmatmul.mubr.bf16.gmra.mxu0 %v1825
        %v3243 = vpop.f32.mrf.mxu0
        %v3244 = vadd.f32 %v1642, %v3243
        %v3245 = vpop.f32.mrf.mxu0
        %v3246 = vadd.f32 %v1646, %v3245
        %v3247 = vpop.f32.mrf.mxu0
        %v3248 = vadd.f32 %v1642, %v3247
        %v3249 = vpop.f32.mrf.mxu0
        %v3250 = vadd.f32 %v1646, %v3249
        %3251 = vmatprep.mubr.bf16.mxu0 %v1828
        %3252 = vmatmul.mubr.bf16.gmra.mxu0 %v1827
        %v3253 = vpop.f32.mrf.mxu0
        %v3254 = vadd.f32 %v1642, %v3253
        %v3255 = vpop.f32.mrf.mxu0
        %v3256 = vadd.f32 %v1646, %v3255
        %v3257 = vpop.f32.mrf.mxu0
        %v3258 = vadd.f32 %v1642, %v3257
        %v3259 = vpop.f32.mrf.mxu0
        %v3260 = vadd.f32 %v1646, %v3259
        %3261 = vmatprep.mubr.bf16.mxu0 %v1830
        %3262 = vmatmul.mubr.bf16.gmra.mxu0 %v1829
        %v3263 = vpop.f32.mrf.mxu0
        %v3264 = vadd.f32 %v1642, %v3263
        %v3265 = vpop.f32.mrf.mxu0
        %v3266 = vadd.f32 %v1646, %v3265
        %v3267 = vpop.f32.mrf.mxu0
        %v3268 = vadd.f32 %v1642, %v3267
        %v3269 = vpop.f32.mrf.mxu0
        %v3270 = vadd.f32 %v1646, %v3269
        %3271 = vmatprep.mubr.bf16.mxu0 %v1832
        %3272 = vmatmul.mubr.bf16.gmra.mxu0 %v1831
        %v3273 = vpop.f32.mrf.mxu0
        %v3274 = vadd.f32 %v1642, %v3273
        %v3275 = vpop.f32.mrf.mxu0
        %v3276 = vadd.f32 %v1646, %v3275
        %v3277 = vpop.f32.mrf.mxu0
        %v3278 = vadd.f32 %v1642, %v3277
        %v3279 = vpop.f32.mrf.mxu0
        %v3280 = vadd.f32 %v1646, %v3279
        %3281 = vmatprep.mubr.bf16.mxu0 %v1834
        %3282 = vmatmul.mubr.bf16.gmra.mxu0 %v1833
        %v3283 = vpop.f32.mrf.mxu0
        %v3284 = vadd.f32 %v1642, %v3283
        %v3285 = vpop.f32.mrf.mxu0
        %v3286 = vadd.f32 %v1646, %v3285
        %v3287 = vpop.f32.mrf.mxu0
        %v3288 = vadd.f32 %v1642, %v3287
        %v3289 = vpop.f32.mrf.mxu0
        %v3290 = vadd.f32 %v1646, %v3289
        %3291 = vmatprep.mubr.bf16.mxu0 %v1836
        %3292 = vmatmul.mubr.bf16.gmra.mxu0 %v1835
        %v3293 = vpop.f32.mrf.mxu0
        %v3294 = vadd.f32 %v1642, %v3293
        %v3295 = vpop.f32.mrf.mxu0
        %v3296 = vadd.f32 %v1646, %v3295
        %v3297 = vpop.f32.mrf.mxu0
        %v3298 = vadd.f32 %v1642, %v3297
        %v3299 = vpop.f32.mrf.mxu0
        %v3300 = vadd.f32 %v1646, %v3299
        %3301 = vmatprep.mubr.bf16.mxu0 %v1838
        %3302 = vmatmul.mubr.bf16.gmra.mxu0 %v1837
        %v3303 = vpop.f32.mrf.mxu0
        %v3304 = vadd.f32 %v1642, %v3303
        %v3305 = vpop.f32.mrf.mxu0
        %v3306 = vadd.f32 %v1646, %v3305
        %v3307 = vpop.f32.mrf.mxu0
        %v3308 = vadd.f32 %v1642, %v3307
        %v3309 = vpop.f32.mrf.mxu0
        %v3310 = vadd.f32 %v1646, %v3309
        %3311 = vmatprep.mubr.bf16.mxu0 %v1840
        %3312 = vmatmul.mubr.bf16.gmra.mxu0 %v1839
        %v3313 = vpop.f32.mrf.mxu0
        %v3314 = vadd.f32 %v1642, %v3313
        %v3315 = vpop.f32.mrf.mxu0
        %v3316 = vadd.f32 %v1646, %v3315
        %v3317 = vpop.f32.mrf.mxu0
        %v3318 = vadd.f32 %v1642, %v3317
        %v3319 = vpop.f32.mrf.mxu0
        %v3320 = vadd.f32 %v1646, %v3319
        %3321 = vmatprep.mubr.bf16.mxu0 %v1842
        %3322 = vmatmul.mubr.bf16.gmra.mxu0 %v1841
        %v3323 = vpop.f32.mrf.mxu0
        %v3324 = vadd.f32 %v1642, %v3323
        %v3325 = vpop.f32.mrf.mxu0
        %v3326 = vadd.f32 %v1646, %v3325
        %v3327 = vpop.f32.mrf.mxu0
        %v3328 = vadd.f32 %v1642, %v3327
        %v3329 = vpop.f32.mrf.mxu0
        %v3330 = vadd.f32 %v1646, %v3329
        %3331 = vmatprep.mubr.bf16.mxu0 %v1844
        %3332 = vmatmul.mubr.bf16.gmra.mxu0 %v1843
        %v3333 = vpop.f32.mrf.mxu0
        %v3334 = vadd.f32 %v1642, %v3333
        %v3335 = vpop.f32.mrf.mxu0
        %v3336 = vadd.f32 %v1646, %v3335
        %v3337 = vpop.f32.mrf.mxu0
        %v3338 = vadd.f32 %v1642, %v3337
        %v3339 = vpop.f32.mrf.mxu0
        %v3340 = vadd.f32 %v1646, %v3339
        %3341 = vmatprep.mubr.bf16.mxu0 %v1846
        %3342 = vmatmul.mubr.bf16.gmra.mxu0 %v1845
        %v3343 = vpop.f32.mrf.mxu0
        %v3344 = vadd.f32 %v1642, %v3343
        %v3345 = vpop.f32.mrf.mxu0
        %v3346 = vadd.f32 %v1646, %v3345
        %v3347 = vpop.f32.mrf.mxu0
        %v3348 = vadd.f32 %v1642, %v3347
        %v3349 = vpop.f32.mrf.mxu0
        %v3350 = vadd.f32 %v1646, %v3349
        %3351 = vdwg.mxu0
        %3352 = vmatprep.subr.bf16.mxu0 %v2762
        %3353 = vmatpush1.bf16.msra.mxu0 %v2761
        %3354 = vmatprep.subr.bf16.mxu0 %v2746
        %3355 = vmatpush1.bf16.msra.mxu0 %v2745
        %3356 = vmatprep.subr.bf16.mxu0 %v2730
        %3357 = vmatpush1.bf16.msra.mxu0 %v2729
        %3358 = vmatprep.subr.bf16.mxu0 %v2714
        %3359 = vmatpush1.bf16.msra.mxu0 %v2713
        %3360 = vmatprep.subr.bf16.mxu0 %v2698
        %3361 = vmatpush1.bf16.msra.mxu0 %v2697
        %3362 = vmatprep.subr.bf16.mxu0 %v2682
        %3363 = vmatpush1.bf16.msra.mxu0 %v2681
        %3364 = vmatprep.subr.bf16.mxu0 %v2666
        %3365 = vmatpush1.bf16.msra.mxu0 %v2665
        %3366 = vmatprep.subr.bf16.mxu0 %v2650
        %3367 = vmatpush1.bf16.msra.mxu0 %v2649
        %3368 = vmatprep.subr.bf16.mxu0 %v2890
        %3369 = vmatpush2.bf16.msra.mxu0 %v2889
        %3370 = vmatprep.subr.bf16.mxu0 %v2874
        %3371 = vmatpush2.bf16.msra.mxu0 %v2873
        %3372 = vmatprep.subr.bf16.mxu0 %v2858
        %3373 = vmatpush2.bf16.msra.mxu0 %v2857
        %3374 = vmatprep.subr.bf16.mxu0 %v2842
        %3375 = vmatpush2.bf16.msra.mxu0 %v2841
        %3376 = vmatprep.subr.bf16.mxu0 %v2826
        %3377 = vmatpush2.bf16.msra.mxu0 %v2825
        %3378 = vmatprep.subr.bf16.mxu0 %v2810
        %3379 = vmatpush2.bf16.msra.mxu0 %v2809
        %3380 = vmatprep.subr.bf16.mxu0 %v2794
        %3381 = vmatpush2.bf16.msra.mxu0 %v2793
        %3382 = vmatprep.subr.bf16.mxu0 %v2778
        %3383 = vmatpush2.bf16.msra.mxu0 %v2777
        %3384 = vmatprep.mubr.bf16.mxu0 %v1816
        %3385 = vmatmul.mubr.bf16.gmra.mxu0 %v1815
        %v3386 = vpop.f32.mrf.mxu0
        %v3387 = vadd.f32 %v1650, %v3386
        %v3388 = vpop.f32.mrf.mxu0
        %v3389 = vadd.f32 %v1654, %v3388
        %v3390 = vpop.f32.mrf.mxu0
        %v3391 = vadd.f32 %v1650, %v3390
        %v3392 = vpop.f32.mrf.mxu0
        %v3393 = vadd.f32 %v1654, %v3392
        %3394 = vmatprep.mubr.bf16.mxu0 %v1818
        %3395 = vmatmul.mubr.bf16.gmra.mxu0 %v1817
        %v3396 = vpop.f32.mrf.mxu0
        %v3397 = vadd.f32 %v1650, %v3396
        %v3398 = vpop.f32.mrf.mxu0
        %v3399 = vadd.f32 %v1654, %v3398
        %v3400 = vpop.f32.mrf.mxu0
        %v3401 = vadd.f32 %v1650, %v3400
        %v3402 = vpop.f32.mrf.mxu0
        %v3403 = vadd.f32 %v1654, %v3402
        %3404 = vmatprep.mubr.bf16.mxu0 %v1820
        %3405 = vmatmul.mubr.bf16.gmra.mxu0 %v1819
        %v3406 = vpop.f32.mrf.mxu0
        %v3407 = vadd.f32 %v1650, %v3406
        %v3408 = vpop.f32.mrf.mxu0
        %v3409 = vadd.f32 %v1654, %v3408
        %v3410 = vpop.f32.mrf.mxu0
        %v3411 = vadd.f32 %v1650, %v3410
        %v3412 = vpop.f32.mrf.mxu0
        %v3413 = vadd.f32 %v1654, %v3412
        %3414 = vmatprep.mubr.bf16.mxu0 %v1822
        %3415 = vmatmul.mubr.bf16.gmra.mxu0 %v1821
        %v3416 = vpop.f32.mrf.mxu0
        %v3417 = vadd.f32 %v1650, %v3416
        %v3418 = vpop.f32.mrf.mxu0
        %v3419 = vadd.f32 %v1654, %v3418
        %v3420 = vpop.f32.mrf.mxu0
        %v3421 = vadd.f32 %v1650, %v3420
        %v3422 = vpop.f32.mrf.mxu0
        %v3423 = vadd.f32 %v1654, %v3422
        %3424 = vmatprep.mubr.bf16.mxu0 %v1824
        %3425 = vmatmul.mubr.bf16.gmra.mxu0 %v1823
        %v3426 = vpop.f32.mrf.mxu0
        %v3427 = vadd.f32 %v1650, %v3426
        %v3428 = vpop.f32.mrf.mxu0
        %v3429 = vadd.f32 %v1654, %v3428
        %v3430 = vpop.f32.mrf.mxu0
        %v3431 = vadd.f32 %v1650, %v3430
        %v3432 = vpop.f32.mrf.mxu0
        %v3433 = vadd.f32 %v1654, %v3432
        %3434 = vmatprep.mubr.bf16.mxu0 %v1826
        %3435 = vmatmul.mubr.bf16.gmra.mxu0 %v1825
        %v3436 = vpop.f32.mrf.mxu0
        %v3437 = vadd.f32 %v1650, %v3436
        %v3438 = vpop.f32.mrf.mxu0
        %v3439 = vadd.f32 %v1654, %v3438
        %v3440 = vpop.f32.mrf.mxu0
        %v3441 = vadd.f32 %v1650, %v3440
        %v3442 = vpop.f32.mrf.mxu0
        %v3443 = vadd.f32 %v1654, %v3442
        %3444 = vmatprep.mubr.bf16.mxu0 %v1828
        %3445 = vmatmul.mubr.bf16.gmra.mxu0 %v1827
        %v3446 = vpop.f32.mrf.mxu0
        %v3447 = vadd.f32 %v1650, %v3446
        %v3448 = vpop.f32.mrf.mxu0
        %v3449 = vadd.f32 %v1654, %v3448
        %v3450 = vpop.f32.mrf.mxu0
        %v3451 = vadd.f32 %v1650, %v3450
        %v3452 = vpop.f32.mrf.mxu0
        %v3453 = vadd.f32 %v1654, %v3452
        %3454 = vmatprep.mubr.bf16.mxu0 %v1830
        %3455 = vmatmul.mubr.bf16.gmra.mxu0 %v1829
        %v3456 = vpop.f32.mrf.mxu0
        %v3457 = vadd.f32 %v1650, %v3456
        %v3458 = vpop.f32.mrf.mxu0
        %v3459 = vadd.f32 %v1654, %v3458
        %v3460 = vpop.f32.mrf.mxu0
        %v3461 = vadd.f32 %v1650, %v3460
        %v3462 = vpop.f32.mrf.mxu0
        %v3463 = vadd.f32 %v1654, %v3462
        %3464 = vmatprep.mubr.bf16.mxu0 %v1832
        %3465 = vmatmul.mubr.bf16.gmra.mxu0 %v1831
        %v3466 = vpop.f32.mrf.mxu0
        %v3467 = vadd.f32 %v1650, %v3466
        %v3468 = vpop.f32.mrf.mxu0
        %v3469 = vadd.f32 %v1654, %v3468
        %v3470 = vpop.f32.mrf.mxu0
        %v3471 = vadd.f32 %v1650, %v3470
        %v3472 = vpop.f32.mrf.mxu0
        %v3473 = vadd.f32 %v1654, %v3472
        %3474 = vmatprep.mubr.bf16.mxu0 %v1834
        %3475 = vmatmul.mubr.bf16.gmra.mxu0 %v1833
        %v3476 = vpop.f32.mrf.mxu0
        %v3477 = vadd.f32 %v1650, %v3476
        %v3478 = vpop.f32.mrf.mxu0
        %v3479 = vadd.f32 %v1654, %v3478
        %v3480 = vpop.f32.mrf.mxu0
        %v3481 = vadd.f32 %v1650, %v3480
        %v3482 = vpop.f32.mrf.mxu0
        %v3483 = vadd.f32 %v1654, %v3482
        %3484 = vmatprep.mubr.bf16.mxu0 %v1836
        %3485 = vmatmul.mubr.bf16.gmra.mxu0 %v1835
        %v3486 = vpop.f32.mrf.mxu0
        %v3487 = vadd.f32 %v1650, %v3486
        %v3488 = vpop.f32.mrf.mxu0
        %v3489 = vadd.f32 %v1654, %v3488
        %v3490 = vpop.f32.mrf.mxu0
        %v3491 = vadd.f32 %v1650, %v3490
        %v3492 = vpop.f32.mrf.mxu0
        %v3493 = vadd.f32 %v1654, %v3492
        %3494 = vmatprep.mubr.bf16.mxu0 %v1838
        %3495 = vmatmul.mubr.bf16.gmra.mxu0 %v1837
        %v3496 = vpop.f32.mrf.mxu0
        %v3497 = vadd.f32 %v1650, %v3496
        %v3498 = vpop.f32.mrf.mxu0
        %v3499 = vadd.f32 %v1654, %v3498
        %v3500 = vpop.f32.mrf.mxu0
        %v3501 = vadd.f32 %v1650, %v3500
        %v3502 = vpop.f32.mrf.mxu0
        %v3503 = vadd.f32 %v1654, %v3502
        %3504 = vmatprep.mubr.bf16.mxu0 %v1840
        %3505 = vmatmul.mubr.bf16.gmra.mxu0 %v1839
        %v3506 = vpop.f32.mrf.mxu0
        %v3507 = vadd.f32 %v1650, %v3506
        %v3508 = vpop.f32.mrf.mxu0
        %v3509 = vadd.f32 %v1654, %v3508
        %v3510 = vpop.f32.mrf.mxu0
        %v3511 = vadd.f32 %v1650, %v3510
        %v3512 = vpop.f32.mrf.mxu0
        %v3513 = vadd.f32 %v1654, %v3512
        %3514 = vmatprep.mubr.bf16.mxu0 %v1842
        %3515 = vmatmul.mubr.bf16.gmra.mxu0 %v1841
        %v3516 = vpop.f32.mrf.mxu0
        %v3517 = vadd.f32 %v1650, %v3516
        %v3518 = vpop.f32.mrf.mxu0
        %v3519 = vadd.f32 %v1654, %v3518
        %v3520 = vpop.f32.mrf.mxu0
        %v3521 = vadd.f32 %v1650, %v3520
        %v3522 = vpop.f32.mrf.mxu0
        %v3523 = vadd.f32 %v1654, %v3522
        %3524 = vmatprep.mubr.bf16.mxu0 %v1844
        %3525 = vmatmul.mubr.bf16.gmra.mxu0 %v1843
        %v3526 = vpop.f32.mrf.mxu0
        %v3527 = vadd.f32 %v1650, %v3526
        %v3528 = vpop.f32.mrf.mxu0
        %v3529 = vadd.f32 %v1654, %v3528
        %v3530 = vpop.f32.mrf.mxu0
        %v3531 = vadd.f32 %v1650, %v3530
        %v3532 = vpop.f32.mrf.mxu0
        %v3533 = vadd.f32 %v1654, %v3532
        %3534 = vmatprep.mubr.bf16.mxu0 %v1846
        %3535 = vmatmul.mubr.bf16.gmra.mxu0 %v1845
        %v3536 = vpop.f32.mrf.mxu0
        %v3537 = vadd.f32 %v1650, %v3536
        %v3538 = vpop.f32.mrf.mxu0
        %v3539 = vadd.f32 %v1654, %v3538
        %v3540 = vpop.f32.mrf.mxu0
        %v3541 = vadd.f32 %v1650, %v3540
        %v3542 = vpop.f32.mrf.mxu0
        %v3543 = vadd.f32 %v1654, %v3542
        %3544 = vdwg.mxu0
        %3545 = vmatprep.subr.bf16.mxu0 %v2764
        %3546 = vmatpush1.bf16.msra.mxu0 %v2763
        %3547 = vmatprep.subr.bf16.mxu0 %v2748
        %3548 = vmatpush1.bf16.msra.mxu0 %v2747
        %3549 = vmatprep.subr.bf16.mxu0 %v2732
        %3550 = vmatpush1.bf16.msra.mxu0 %v2731
        %3551 = vmatprep.subr.bf16.mxu0 %v2716
        %3552 = vmatpush1.bf16.msra.mxu0 %v2715
        %3553 = vmatprep.subr.bf16.mxu0 %v2700
        %3554 = vmatpush1.bf16.msra.mxu0 %v2699
        %3555 = vmatprep.subr.bf16.mxu0 %v2684
        %3556 = vmatpush1.bf16.msra.mxu0 %v2683
        %3557 = vmatprep.subr.bf16.mxu0 %v2668
        %3558 = vmatpush1.bf16.msra.mxu0 %v2667
        %3559 = vmatprep.subr.bf16.mxu0 %v2652
        %3560 = vmatpush1.bf16.msra.mxu0 %v2651
        %3561 = vmatprep.subr.bf16.mxu0 %v2892
        %3562 = vmatpush2.bf16.msra.mxu0 %v2891
        %3563 = vmatprep.subr.bf16.mxu0 %v2876
        %3564 = vmatpush2.bf16.msra.mxu0 %v2875
        %3565 = vmatprep.subr.bf16.mxu0 %v2860
        %3566 = vmatpush2.bf16.msra.mxu0 %v2859
        %3567 = vmatprep.subr.bf16.mxu0 %v2844
        %3568 = vmatpush2.bf16.msra.mxu0 %v2843
        %3569 = vmatprep.subr.bf16.mxu0 %v2828
        %3570 = vmatpush2.bf16.msra.mxu0 %v2827
        %3571 = vmatprep.subr.bf16.mxu0 %v2812
        %3572 = vmatpush2.bf16.msra.mxu0 %v2811
        %3573 = vmatprep.subr.bf16.mxu0 %v2796
        %3574 = vmatpush2.bf16.msra.mxu0 %v2795
        %3575 = vmatprep.subr.bf16.mxu0 %v2780
        %3576 = vmatpush2.bf16.msra.mxu0 %v2779
        %3577 = vmatprep.mubr.bf16.mxu0 %v1816
        %3578 = vmatmul.mubr.bf16.gmra.mxu0 %v1815
        %v3579 = vpop.f32.mrf.mxu0
        %v3580 = vadd.f32 %v1658, %v3579
        %v3581 = vpop.f32.mrf.mxu0
        %v3582 = vadd.f32 %v1662, %v3581
        %v3583 = vpop.f32.mrf.mxu0
        %v3584 = vadd.f32 %v1658, %v3583
        %v3585 = vpop.f32.mrf.mxu0
        %v3586 = vadd.f32 %v1662, %v3585
        %3587 = vmatprep.mubr.bf16.mxu0 %v1818
        %3588 = vmatmul.mubr.bf16.gmra.mxu0 %v1817
        %v3589 = vpop.f32.mrf.mxu0
        %v3590 = vadd.f32 %v1658, %v3589
        %v3591 = vpop.f32.mrf.mxu0
        %v3592 = vadd.f32 %v1662, %v3591
        %v3593 = vpop.f32.mrf.mxu0
        %v3594 = vadd.f32 %v1658, %v3593
        %v3595 = vpop.f32.mrf.mxu0
        %v3596 = vadd.f32 %v1662, %v3595
        %3597 = vmatprep.mubr.bf16.mxu0 %v1820
        %3598 = vmatmul.mubr.bf16.gmra.mxu0 %v1819
        %v3599 = vpop.f32.mrf.mxu0
        %v3600 = vadd.f32 %v1658, %v3599
        %v3601 = vpop.f32.mrf.mxu0
        %v3602 = vadd.f32 %v1662, %v3601
        %v3603 = vpop.f32.mrf.mxu0
        %v3604 = vadd.f32 %v1658, %v3603
        %v3605 = vpop.f32.mrf.mxu0
        %v3606 = vadd.f32 %v1662, %v3605
        %3607 = vmatprep.mubr.bf16.mxu0 %v1822
        %3608 = vmatmul.mubr.bf16.gmra.mxu0 %v1821
        %v3609 = vpop.f32.mrf.mxu0
        %v3610 = vadd.f32 %v1658, %v3609
        %v3611 = vpop.f32.mrf.mxu0
        %v3612 = vadd.f32 %v1662, %v3611
        %v3613 = vpop.f32.mrf.mxu0
        %v3614 = vadd.f32 %v1658, %v3613
        %v3615 = vpop.f32.mrf.mxu0
        %v3616 = vadd.f32 %v1662, %v3615
        %3617 = vmatprep.mubr.bf16.mxu0 %v1824
        %3618 = vmatmul.mubr.bf16.gmra.mxu0 %v1823
        %v3619 = vpop.f32.mrf.mxu0
        %v3620 = vadd.f32 %v1658, %v3619
        %v3621 = vpop.f32.mrf.mxu0
        %v3622 = vadd.f32 %v1662, %v3621
        %v3623 = vpop.f32.mrf.mxu0
        %v3624 = vadd.f32 %v1658, %v3623
        %v3625 = vpop.f32.mrf.mxu0
        %v3626 = vadd.f32 %v1662, %v3625
        %3627 = vmatprep.mubr.bf16.mxu0 %v1826
        %3628 = vmatmul.mubr.bf16.gmra.mxu0 %v1825
        %v3629 = vpop.f32.mrf.mxu0
        %v3630 = vadd.f32 %v1658, %v3629
        %v3631 = vpop.f32.mrf.mxu0
        %v3632 = vadd.f32 %v1662, %v3631
        %v3633 = vpop.f32.mrf.mxu0
        %v3634 = vadd.f32 %v1658, %v3633
        %v3635 = vpop.f32.mrf.mxu0
        %v3636 = vadd.f32 %v1662, %v3635
        %3637 = vmatprep.mubr.bf16.mxu0 %v1828
        %3638 = vmatmul.mubr.bf16.gmra.mxu0 %v1827
        %v3639 = vpop.f32.mrf.mxu0
        %v3640 = vadd.f32 %v1658, %v3639
        %v3641 = vpop.f32.mrf.mxu0
        %v3642 = vadd.f32 %v1662, %v3641
        %v3643 = vpop.f32.mrf.mxu0
        %v3644 = vadd.f32 %v1658, %v3643
        %v3645 = vpop.f32.mrf.mxu0
        %v3646 = vadd.f32 %v1662, %v3645
        %3647 = vmatprep.mubr.bf16.mxu0 %v1830
        %3648 = vmatmul.mubr.bf16.gmra.mxu0 %v1829
        %v3649 = vpop.f32.mrf.mxu0
        %v3650 = vadd.f32 %v1658, %v3649
        %v3651 = vpop.f32.mrf.mxu0
        %v3652 = vadd.f32 %v1662, %v3651
        %v3653 = vpop.f32.mrf.mxu0
        %v3654 = vadd.f32 %v1658, %v3653
        %v3655 = vpop.f32.mrf.mxu0
        %v3656 = vadd.f32 %v1662, %v3655
        %3657 = vmatprep.mubr.bf16.mxu0 %v1832
        %3658 = vmatmul.mubr.bf16.gmra.mxu0 %v1831
        %v3659 = vpop.f32.mrf.mxu0
        %v3660 = vadd.f32 %v1658, %v3659
        %v3661 = vpop.f32.mrf.mxu0
        %v3662 = vadd.f32 %v1662, %v3661
        %v3663 = vpop.f32.mrf.mxu0
        %v3664 = vadd.f32 %v1658, %v3663
        %v3665 = vpop.f32.mrf.mxu0
        %v3666 = vadd.f32 %v1662, %v3665
        %3667 = vmatprep.mubr.bf16.mxu0 %v1834
        %3668 = vmatmul.mubr.bf16.gmra.mxu0 %v1833
        %v3669 = vpop.f32.mrf.mxu0
        %v3670 = vadd.f32 %v1658, %v3669
        %v3671 = vpop.f32.mrf.mxu0
        %v3672 = vadd.f32 %v1662, %v3671
        %v3673 = vpop.f32.mrf.mxu0
        %v3674 = vadd.f32 %v1658, %v3673
        %v3675 = vpop.f32.mrf.mxu0
        %v3676 = vadd.f32 %v1662, %v3675
        %3677 = vmatprep.mubr.bf16.mxu0 %v1836
        %3678 = vmatmul.mubr.bf16.gmra.mxu0 %v1835
        %v3679 = vpop.f32.mrf.mxu0
        %v3680 = vadd.f32 %v1658, %v3679
        %v3681 = vpop.f32.mrf.mxu0
        %v3682 = vadd.f32 %v1662, %v3681
        %v3683 = vpop.f32.mrf.mxu0
        %v3684 = vadd.f32 %v1658, %v3683
        %v3685 = vpop.f32.mrf.mxu0
        %v3686 = vadd.f32 %v1662, %v3685
        %3687 = vmatprep.mubr.bf16.mxu0 %v1838
        %3688 = vmatmul.mubr.bf16.gmra.mxu0 %v1837
        %v3689 = vpop.f32.mrf.mxu0
        %v3690 = vadd.f32 %v1658, %v3689
        %v3691 = vpop.f32.mrf.mxu0
        %v3692 = vadd.f32 %v1662, %v3691
        %v3693 = vpop.f32.mrf.mxu0
        %v3694 = vadd.f32 %v1658, %v3693
        %v3695 = vpop.f32.mrf.mxu0
        %v3696 = vadd.f32 %v1662, %v3695
        %3697 = vmatprep.mubr.bf16.mxu0 %v1840
        %3698 = vmatmul.mubr.bf16.gmra.mxu0 %v1839
        %v3699 = vpop.f32.mrf.mxu0
        %v3700 = vadd.f32 %v1658, %v3699
        %v3701 = vpop.f32.mrf.mxu0
        %v3702 = vadd.f32 %v1662, %v3701
        %v3703 = vpop.f32.mrf.mxu0
        %v3704 = vadd.f32 %v1658, %v3703
        %v3705 = vpop.f32.mrf.mxu0
        %v3706 = vadd.f32 %v1662, %v3705
        %3707 = vmatprep.mubr.bf16.mxu0 %v1842
        %3708 = vmatmul.mubr.bf16.gmra.mxu0 %v1841
        %v3709 = vpop.f32.mrf.mxu0
        %v3710 = vadd.f32 %v1658, %v3709
        %v3711 = vpop.f32.mrf.mxu0
        %v3712 = vadd.f32 %v1662, %v3711
        %v3713 = vpop.f32.mrf.mxu0
        %v3714 = vadd.f32 %v1658, %v3713
        %v3715 = vpop.f32.mrf.mxu0
        %v3716 = vadd.f32 %v1662, %v3715
        %3717 = vmatprep.mubr.bf16.mxu0 %v1844
        %3718 = vmatmul.mubr.bf16.gmra.mxu0 %v1843
        %v3719 = vpop.f32.mrf.mxu0
        %v3720 = vadd.f32 %v1658, %v3719
        %v3721 = vpop.f32.mrf.mxu0
        %v3722 = vadd.f32 %v1662, %v3721
        %v3723 = vpop.f32.mrf.mxu0
        %v3724 = vadd.f32 %v1658, %v3723
        %v3725 = vpop.f32.mrf.mxu0
        %v3726 = vadd.f32 %v1662, %v3725
        %3727 = vmatprep.mubr.bf16.mxu0 %v1846
        %3728 = vmatmul.mubr.bf16.gmra.mxu0 %v1845
        %v3729 = vpop.f32.mrf.mxu0
        %v3730 = vadd.f32 %v1658, %v3729
        %v3731 = vpop.f32.mrf.mxu0
        %v3732 = vadd.f32 %v1662, %v3731
        %v3733 = vpop.f32.mrf.mxu0
        %v3734 = vadd.f32 %v1658, %v3733
        %v3735 = vpop.f32.mrf.mxu0
        %v3736 = vadd.f32 %v1662, %v3735
        %3737 = vdwg.mxu0
        %3738 = vmatprep.subr.bf16.mxu0 %v2766
        %3739 = vmatpush1.bf16.msra.mxu0 %v2765
        %3740 = vmatprep.subr.bf16.mxu0 %v2750
        %3741 = vmatpush1.bf16.msra.mxu0 %v2749
        %3742 = vmatprep.subr.bf16.mxu0 %v2734
        %3743 = vmatpush1.bf16.msra.mxu0 %v2733
        %3744 = vmatprep.subr.bf16.mxu0 %v2718
        %3745 = vmatpush1.bf16.msra.mxu0 %v2717
        %3746 = vmatprep.subr.bf16.mxu0 %v2702
        %3747 = vmatpush1.bf16.msra.mxu0 %v2701
        %3748 = vmatprep.subr.bf16.mxu0 %v2686
        %3749 = vmatpush1.bf16.msra.mxu0 %v2685
        %3750 = vmatprep.subr.bf16.mxu0 %v2670
        %3751 = vmatpush1.bf16.msra.mxu0 %v2669
        %3752 = vmatprep.subr.bf16.mxu0 %v2654
        %3753 = vmatpush1.bf16.msra.mxu0 %v2653
        %3754 = vmatprep.subr.bf16.mxu0 %v2894
        %3755 = vmatpush2.bf16.msra.mxu0 %v2893
        %3756 = vmatprep.subr.bf16.mxu0 %v2878
        %3757 = vmatpush2.bf16.msra.mxu0 %v2877
        %3758 = vmatprep.subr.bf16.mxu0 %v2862
        %3759 = vmatpush2.bf16.msra.mxu0 %v2861
        %3760 = vmatprep.subr.bf16.mxu0 %v2846
        %3761 = vmatpush2.bf16.msra.mxu0 %v2845
        %3762 = vmatprep.subr.bf16.mxu0 %v2830
        %3763 = vmatpush2.bf16.msra.mxu0 %v2829
        %3764 = vmatprep.subr.bf16.mxu0 %v2814
        %3765 = vmatpush2.bf16.msra.mxu0 %v2813
        %3766 = vmatprep.subr.bf16.mxu0 %v2798
        %3767 = vmatpush2.bf16.msra.mxu0 %v2797
        %3768 = vmatprep.subr.bf16.mxu0 %v2782
        %3769 = vmatpush2.bf16.msra.mxu0 %v2781
        %3770 = vmatprep.mubr.bf16.mxu0 %v1816
        %3771 = vmatmul.mubr.bf16.gmra.mxu0 %v1815
        %v3772 = vpop.f32.mrf.mxu0
        %v3773 = vadd.f32 %v1666, %v3772
        %v3774 = vpop.f32.mrf.mxu0
        %v3775 = vadd.f32 %v1670, %v3774
        %v3776 = vpop.f32.mrf.mxu0
        %v3777 = vadd.f32 %v1666, %v3776
        %v3778 = vpop.f32.mrf.mxu0
        %v3779 = vadd.f32 %v1670, %v3778
        %3780 = vmatprep.mubr.bf16.mxu0 %v1818
        %3781 = vmatmul.mubr.bf16.gmra.mxu0 %v1817
        %v3782 = vpop.f32.mrf.mxu0
        %v3783 = vadd.f32 %v1666, %v3782
        %v3784 = vpop.f32.mrf.mxu0
        %v3785 = vadd.f32 %v1670, %v3784
        %v3786 = vpop.f32.mrf.mxu0
        %v3787 = vadd.f32 %v1666, %v3786
        %v3788 = vpop.f32.mrf.mxu0
        %v3789 = vadd.f32 %v1670, %v3788
        %3790 = vmatprep.mubr.bf16.mxu0 %v1820
        %3791 = vmatmul.mubr.bf16.gmra.mxu0 %v1819
        %v3792 = vpop.f32.mrf.mxu0
        %v3793 = vadd.f32 %v1666, %v3792
        %v3794 = vpop.f32.mrf.mxu0
        %v3795 = vadd.f32 %v1670, %v3794
        %v3796 = vpop.f32.mrf.mxu0
        %v3797 = vadd.f32 %v1666, %v3796
        %v3798 = vpop.f32.mrf.mxu0
        %v3799 = vadd.f32 %v1670, %v3798
        %3800 = vmatprep.mubr.bf16.mxu0 %v1822
        %3801 = vmatmul.mubr.bf16.gmra.mxu0 %v1821
        %v3802 = vpop.f32.mrf.mxu0
        %v3803 = vadd.f32 %v1666, %v3802
        %v3804 = vpop.f32.mrf.mxu0
        %v3805 = vadd.f32 %v1670, %v3804
        %v3806 = vpop.f32.mrf.mxu0
        %v3807 = vadd.f32 %v1666, %v3806
        %v3808 = vpop.f32.mrf.mxu0
        %v3809 = vadd.f32 %v1670, %v3808
        %3810 = vmatprep.mubr.bf16.mxu0 %v1824
        %3811 = vmatmul.mubr.bf16.gmra.mxu0 %v1823
        %v3812 = vpop.f32.mrf.mxu0
        %v3813 = vadd.f32 %v1666, %v3812
        %v3814 = vpop.f32.mrf.mxu0
        %v3815 = vadd.f32 %v1670, %v3814
        %v3816 = vpop.f32.mrf.mxu0
        %v3817 = vadd.f32 %v1666, %v3816
        %v3818 = vpop.f32.mrf.mxu0
        %v3819 = vadd.f32 %v1670, %v3818
        %3820 = vmatprep.mubr.bf16.mxu0 %v1826
        %3821 = vmatmul.mubr.bf16.gmra.mxu0 %v1825
        %v3822 = vpop.f32.mrf.mxu0
        %v3823 = vadd.f32 %v1666, %v3822
        %v3824 = vpop.f32.mrf.mxu0
        %v3825 = vadd.f32 %v1670, %v3824
        %v3826 = vpop.f32.mrf.mxu0
        %v3827 = vadd.f32 %v1666, %v3826
        %v3828 = vpop.f32.mrf.mxu0
        %v3829 = vadd.f32 %v1670, %v3828
        %3830 = vmatprep.mubr.bf16.mxu0 %v1828
        %3831 = vmatmul.mubr.bf16.gmra.mxu0 %v1827
        %v3832 = vpop.f32.mrf.mxu0
        %v3833 = vadd.f32 %v1666, %v3832
        %v3834 = vpop.f32.mrf.mxu0
        %v3835 = vadd.f32 %v1670, %v3834
        %v3836 = vpop.f32.mrf.mxu0
        %v3837 = vadd.f32 %v1666, %v3836
        %v3838 = vpop.f32.mrf.mxu0
        %v3839 = vadd.f32 %v1670, %v3838
        %3840 = vmatprep.mubr.bf16.mxu0 %v1830
        %3841 = vmatmul.mubr.bf16.gmra.mxu0 %v1829
        %v3842 = vpop.f32.mrf.mxu0
        %v3843 = vadd.f32 %v1666, %v3842
        %v3844 = vpop.f32.mrf.mxu0
        %v3845 = vadd.f32 %v1670, %v3844
        %v3846 = vpop.f32.mrf.mxu0
        %v3847 = vadd.f32 %v1666, %v3846
        %v3848 = vpop.f32.mrf.mxu0
        %v3849 = vadd.f32 %v1670, %v3848
        %3850 = vmatprep.mubr.bf16.mxu0 %v1832
        %3851 = vmatmul.mubr.bf16.gmra.mxu0 %v1831
        %v3852 = vpop.f32.mrf.mxu0
        %v3853 = vadd.f32 %v1666, %v3852
        %v3854 = vpop.f32.mrf.mxu0
        %v3855 = vadd.f32 %v1670, %v3854
        %v3856 = vpop.f32.mrf.mxu0
        %v3857 = vadd.f32 %v1666, %v3856
        %v3858 = vpop.f32.mrf.mxu0
        %v3859 = vadd.f32 %v1670, %v3858
        %3860 = vmatprep.mubr.bf16.mxu0 %v1834
        %3861 = vmatmul.mubr.bf16.gmra.mxu0 %v1833
        %v3862 = vpop.f32.mrf.mxu0
        %v3863 = vadd.f32 %v1666, %v3862
        %v3864 = vpop.f32.mrf.mxu0
        %v3865 = vadd.f32 %v1670, %v3864
        %v3866 = vpop.f32.mrf.mxu0
        %v3867 = vadd.f32 %v1666, %v3866
        %v3868 = vpop.f32.mrf.mxu0
        %v3869 = vadd.f32 %v1670, %v3868
        %3870 = vmatprep.mubr.bf16.mxu0 %v1836
        %3871 = vmatmul.mubr.bf16.gmra.mxu0 %v1835
        %v3872 = vpop.f32.mrf.mxu0
        %v3873 = vadd.f32 %v1666, %v3872
        %v3874 = vpop.f32.mrf.mxu0
        %v3875 = vadd.f32 %v1670, %v3874
        %v3876 = vpop.f32.mrf.mxu0
        %v3877 = vadd.f32 %v1666, %v3876
        %v3878 = vpop.f32.mrf.mxu0
        %v3879 = vadd.f32 %v1670, %v3878
        %3880 = vmatprep.mubr.bf16.mxu0 %v1838
        %3881 = vmatmul.mubr.bf16.gmra.mxu0 %v1837
        %v3882 = vpop.f32.mrf.mxu0
        %v3883 = vadd.f32 %v1666, %v3882
        %v3884 = vpop.f32.mrf.mxu0
        %v3885 = vadd.f32 %v1670, %v3884
        %v3886 = vpop.f32.mrf.mxu0
        %v3887 = vadd.f32 %v1666, %v3886
        %v3888 = vpop.f32.mrf.mxu0
        %v3889 = vadd.f32 %v1670, %v3888
        %3890 = vmatprep.mubr.bf16.mxu0 %v1840
        %3891 = vmatmul.mubr.bf16.gmra.mxu0 %v1839
        %v3892 = vpop.f32.mrf.mxu0
        %v3893 = vadd.f32 %v1666, %v3892
        %v3894 = vpop.f32.mrf.mxu0
        %v3895 = vadd.f32 %v1670, %v3894
        %v3896 = vpop.f32.mrf.mxu0
        %v3897 = vadd.f32 %v1666, %v3896
        %v3898 = vpop.f32.mrf.mxu0
        %v3899 = vadd.f32 %v1670, %v3898
        %3900 = vmatprep.mubr.bf16.mxu0 %v1842
        %3901 = vmatmul.mubr.bf16.gmra.mxu0 %v1841
        %v3902 = vpop.f32.mrf.mxu0
        %v3903 = vadd.f32 %v1666, %v3902
        %v3904 = vpop.f32.mrf.mxu0
        %v3905 = vadd.f32 %v1670, %v3904
        %v3906 = vpop.f32.mrf.mxu0
        %v3907 = vadd.f32 %v1666, %v3906
        %v3908 = vpop.f32.mrf.mxu0
        %v3909 = vadd.f32 %v1670, %v3908
        %3910 = vmatprep.mubr.bf16.mxu0 %v1844
        %3911 = vmatmul.mubr.bf16.gmra.mxu0 %v1843
        %v3912 = vpop.f32.mrf.mxu0
        %v3913 = vadd.f32 %v1666, %v3912
        %v3914 = vpop.f32.mrf.mxu0
        %v3915 = vadd.f32 %v1670, %v3914
        %v3916 = vpop.f32.mrf.mxu0
        %v3917 = vadd.f32 %v1666, %v3916
        %v3918 = vpop.f32.mrf.mxu0
        %v3919 = vadd.f32 %v1670, %v3918
        %3920 = vmatprep.mubr.bf16.mxu0 %v1846
        %3921 = vmatmul.mubr.bf16.gmra.mxu0 %v1845
        %v3922 = vpop.f32.mrf.mxu0
        %v3923 = vadd.f32 %v1666, %v3922
        %v3924 = vpop.f32.mrf.mxu0
        %v3925 = vadd.f32 %v1670, %v3924
        %v3926 = vpop.f32.mrf.mxu0
        %v3927 = vadd.f32 %v1666, %v3926
        %v3928 = vpop.f32.mrf.mxu0
        %v3929 = vadd.f32 %v1670, %v3928
        %3930 = vdwg.mxu0
        %3931 = vmatprep.subr.bf16.mxu0 %v2768
        %3932 = vmatpush1.bf16.msra.mxu0 %v2767
        %3933 = vmatprep.subr.bf16.mxu0 %v2752
        %3934 = vmatpush1.bf16.msra.mxu0 %v2751
        %3935 = vmatprep.subr.bf16.mxu0 %v2736
        %3936 = vmatpush1.bf16.msra.mxu0 %v2735
        %3937 = vmatprep.subr.bf16.mxu0 %v2720
        %3938 = vmatpush1.bf16.msra.mxu0 %v2719
        %3939 = vmatprep.subr.bf16.mxu0 %v2704
        %3940 = vmatpush1.bf16.msra.mxu0 %v2703
        %3941 = vmatprep.subr.bf16.mxu0 %v2688
        %3942 = vmatpush1.bf16.msra.mxu0 %v2687
        %3943 = vmatprep.subr.bf16.mxu0 %v2672
        %3944 = vmatpush1.bf16.msra.mxu0 %v2671
        %3945 = vmatprep.subr.bf16.mxu0 %v2656
        %3946 = vmatpush1.bf16.msra.mxu0 %v2655
        %3947 = vmatprep.subr.bf16.mxu0 %v2896
        %3948 = vmatpush2.bf16.msra.mxu0 %v2895
        %3949 = vmatprep.subr.bf16.mxu0 %v2880
        %3950 = vmatpush2.bf16.msra.mxu0 %v2879
        %3951 = vmatprep.subr.bf16.mxu0 %v2864
        %3952 = vmatpush2.bf16.msra.mxu0 %v2863
        %3953 = vmatprep.subr.bf16.mxu0 %v2848
        %3954 = vmatpush2.bf16.msra.mxu0 %v2847
        %3955 = vmatprep.subr.bf16.mxu0 %v2832
        %3956 = vmatpush2.bf16.msra.mxu0 %v2831
        %3957 = vmatprep.subr.bf16.mxu0 %v2816
        %3958 = vmatpush2.bf16.msra.mxu0 %v2815
        %3959 = vmatprep.subr.bf16.mxu0 %v2800
        %3960 = vmatpush2.bf16.msra.mxu0 %v2799
        %3961 = vmatprep.subr.bf16.mxu0 %v2784
        %3962 = vmatpush2.bf16.msra.mxu0 %v2783
        %3963 = vmatprep.mubr.bf16.mxu0 %v1816
        %3964 = vmatmul.mubr.bf16.gmra.mxu0 %v1815
        %v3965 = vpop.f32.mrf.mxu0
        %v3966 = vadd.f32 %v1674, %v3965
        %v3967 = vpop.f32.mrf.mxu0
        %v3968 = vadd.f32 %v1678, %v3967
        %v3969 = vpop.f32.mrf.mxu0
        %v3970 = vadd.f32 %v1674, %v3969
        %v3971 = vpop.f32.mrf.mxu0
        %v3972 = vadd.f32 %v1678, %v3971
        %3973 = vmatprep.mubr.bf16.mxu0 %v1818
        %3974 = vmatmul.mubr.bf16.gmra.mxu0 %v1817
        %v3975 = vpop.f32.mrf.mxu0
        %v3976 = vadd.f32 %v1674, %v3975
        %v3977 = vpop.f32.mrf.mxu0
        %v3978 = vadd.f32 %v1678, %v3977
        %v3979 = vpop.f32.mrf.mxu0
        %v3980 = vadd.f32 %v1674, %v3979
        %v3981 = vpop.f32.mrf.mxu0
        %v3982 = vadd.f32 %v1678, %v3981
        %3983 = vmatprep.mubr.bf16.mxu0 %v1820
        %3984 = vmatmul.mubr.bf16.gmra.mxu0 %v1819
        %v3985 = vpop.f32.mrf.mxu0
        %v3986 = vadd.f32 %v1674, %v3985
        %v3987 = vpop.f32.mrf.mxu0
        %v3988 = vadd.f32 %v1678, %v3987
        %v3989 = vpop.f32.mrf.mxu0
        %v3990 = vadd.f32 %v1674, %v3989
        %v3991 = vpop.f32.mrf.mxu0
        %v3992 = vadd.f32 %v1678, %v3991
        %3993 = vmatprep.mubr.bf16.mxu0 %v1822
        %3994 = vmatmul.mubr.bf16.gmra.mxu0 %v1821
        %v3995 = vpop.f32.mrf.mxu0
        %v3996 = vadd.f32 %v1674, %v3995
        %v3997 = vpop.f32.mrf.mxu0
        %v3998 = vadd.f32 %v1678, %v3997
        %v3999 = vpop.f32.mrf.mxu0
        %v4000 = vadd.f32 %v1674, %v3999
        %v4001 = vpop.f32.mrf.mxu0
        %v4002 = vadd.f32 %v1678, %v4001
        %4003 = vmatprep.mubr.bf16.mxu0 %v1824
        %4004 = vmatmul.mubr.bf16.gmra.mxu0 %v1823
        %v4005 = vpop.f32.mrf.mxu0
        %v4006 = vadd.f32 %v1674, %v4005
        %v4007 = vpop.f32.mrf.mxu0
        %v4008 = vadd.f32 %v1678, %v4007
        %v4009 = vpop.f32.mrf.mxu0
        %v4010 = vadd.f32 %v1674, %v4009
        %v4011 = vpop.f32.mrf.mxu0
        %v4012 = vadd.f32 %v1678, %v4011
        %4013 = vmatprep.mubr.bf16.mxu0 %v1826
        %4014 = vmatmul.mubr.bf16.gmra.mxu0 %v1825
        %v4015 = vpop.f32.mrf.mxu0
        %v4016 = vadd.f32 %v1674, %v4015
        %v4017 = vpop.f32.mrf.mxu0
        %v4018 = vadd.f32 %v1678, %v4017
        %v4019 = vpop.f32.mrf.mxu0
        %v4020 = vadd.f32 %v1674, %v4019
        %v4021 = vpop.f32.mrf.mxu0
        %v4022 = vadd.f32 %v1678, %v4021
        %4023 = vmatprep.mubr.bf16.mxu0 %v1828
        %4024 = vmatmul.mubr.bf16.gmra.mxu0 %v1827
        %v4025 = vpop.f32.mrf.mxu0
        %v4026 = vadd.f32 %v1674, %v4025
        %v4027 = vpop.f32.mrf.mxu0
        %v4028 = vadd.f32 %v1678, %v4027
        %v4029 = vpop.f32.mrf.mxu0
        %v4030 = vadd.f32 %v1674, %v4029
        %v4031 = vpop.f32.mrf.mxu0
        %v4032 = vadd.f32 %v1678, %v4031
        %4033 = vmatprep.mubr.bf16.mxu0 %v1830
        %4034 = vmatmul.mubr.bf16.gmra.mxu0 %v1829
        %v4035 = vpop.f32.mrf.mxu0
        %v4036 = vadd.f32 %v1674, %v4035
        %v4037 = vpop.f32.mrf.mxu0
        %v4038 = vadd.f32 %v1678, %v4037
        %v4039 = vpop.f32.mrf.mxu0
        %v4040 = vadd.f32 %v1674, %v4039
        %v4041 = vpop.f32.mrf.mxu0
        %v4042 = vadd.f32 %v1678, %v4041
        %4043 = vmatprep.mubr.bf16.mxu0 %v1832
        %4044 = vmatmul.mubr.bf16.gmra.mxu0 %v1831
        %v4045 = vpop.f32.mrf.mxu0
        %v4046 = vadd.f32 %v1674, %v4045
        %v4047 = vpop.f32.mrf.mxu0
        %v4048 = vadd.f32 %v1678, %v4047
        %v4049 = vpop.f32.mrf.mxu0
        %v4050 = vadd.f32 %v1674, %v4049
        %v4051 = vpop.f32.mrf.mxu0
        %v4052 = vadd.f32 %v1678, %v4051
        %4053 = vmatprep.mubr.bf16.mxu0 %v1834
        %4054 = vmatmul.mubr.bf16.gmra.mxu0 %v1833
        %v4055 = vpop.f32.mrf.mxu0
        %v4056 = vadd.f32 %v1674, %v4055
        %v4057 = vpop.f32.mrf.mxu0
        %v4058 = vadd.f32 %v1678, %v4057
        %v4059 = vpop.f32.mrf.mxu0
        %v4060 = vadd.f32 %v1674, %v4059
        %v4061 = vpop.f32.mrf.mxu0
        %v4062 = vadd.f32 %v1678, %v4061
        %4063 = vmatprep.mubr.bf16.mxu0 %v1836
        %4064 = vmatmul.mubr.bf16.gmra.mxu0 %v1835
        %v4065 = vpop.f32.mrf.mxu0
        %v4066 = vadd.f32 %v1674, %v4065
        %v4067 = vpop.f32.mrf.mxu0
        %v4068 = vadd.f32 %v1678, %v4067
        %v4069 = vpop.f32.mrf.mxu0
        %v4070 = vadd.f32 %v1674, %v4069
        %v4071 = vpop.f32.mrf.mxu0
        %v4072 = vadd.f32 %v1678, %v4071
        %4073 = vmatprep.mubr.bf16.mxu0 %v1838
        %4074 = vmatmul.mubr.bf16.gmra.mxu0 %v1837
        %v4075 = vpop.f32.mrf.mxu0
        %v4076 = vadd.f32 %v1674, %v4075
        %v4077 = vpop.f32.mrf.mxu0
        %v4078 = vadd.f32 %v1678, %v4077
        %v4079 = vpop.f32.mrf.mxu0
        %v4080 = vadd.f32 %v1674, %v4079
        %v4081 = vpop.f32.mrf.mxu0
        %v4082 = vadd.f32 %v1678, %v4081
        %4083 = vmatprep.mubr.bf16.mxu0 %v1840
        %4084 = vmatmul.mubr.bf16.gmra.mxu0 %v1839
        %v4085 = vpop.f32.mrf.mxu0
        %v4086 = vadd.f32 %v1674, %v4085
        %v4087 = vpop.f32.mrf.mxu0
        %v4088 = vadd.f32 %v1678, %v4087
        %v4089 = vpop.f32.mrf.mxu0
        %v4090 = vadd.f32 %v1674, %v4089
        %v4091 = vpop.f32.mrf.mxu0
        %v4092 = vadd.f32 %v1678, %v4091
        %4093 = vmatprep.mubr.bf16.mxu0 %v1842
        %4094 = vmatmul.mubr.bf16.gmra.mxu0 %v1841
        %v4095 = vpop.f32.mrf.mxu0
        %v4096 = vadd.f32 %v1674, %v4095
        %v4097 = vpop.f32.mrf.mxu0
        %v4098 = vadd.f32 %v1678, %v4097
        %v4099 = vpop.f32.mrf.mxu0
        %v4100 = vadd.f32 %v1674, %v4099
        %v4101 = vpop.f32.mrf.mxu0
        %v4102 = vadd.f32 %v1678, %v4101
        %4103 = vmatprep.mubr.bf16.mxu0 %v1844
        %4104 = vmatmul.mubr.bf16.gmra.mxu0 %v1843
        %v4105 = vpop.f32.mrf.mxu0
        %v4106 = vadd.f32 %v1674, %v4105
        %v4107 = vpop.f32.mrf.mxu0
        %v4108 = vadd.f32 %v1678, %v4107
        %v4109 = vpop.f32.mrf.mxu0
        %v4110 = vadd.f32 %v1674, %v4109
        %v4111 = vpop.f32.mrf.mxu0
        %v4112 = vadd.f32 %v1678, %v4111
        %4113 = vmatprep.mubr.bf16.mxu0 %v1846
        %4114 = vmatmul.mubr.bf16.gmra.mxu0 %v1845
        %v4115 = vpop.f32.mrf.mxu0
        %v4116 = vadd.f32 %v1674, %v4115
        %v4117 = vpop.f32.mrf.mxu0
        %v4118 = vadd.f32 %v1678, %v4117
        %v4119 = vpop.f32.mrf.mxu0
        %v4120 = vadd.f32 %v1674, %v4119
        %v4121 = vpop.f32.mrf.mxu0
        %v4122 = vadd.f32 %v1678, %v4121
        %4123 = vdwg.mxu0
        %4124 = vmatprep.subr.bf16.mxu0 %v2770
        %4125 = vmatpush1.bf16.msra.mxu0 %v2769
        %4126 = vmatprep.subr.bf16.mxu0 %v2754
        %4127 = vmatpush1.bf16.msra.mxu0 %v2753
        %4128 = vmatprep.subr.bf16.mxu0 %v2738
        %4129 = vmatpush1.bf16.msra.mxu0 %v2737
        %4130 = vmatprep.subr.bf16.mxu0 %v2722
        %4131 = vmatpush1.bf16.msra.mxu0 %v2721
        %4132 = vmatprep.subr.bf16.mxu0 %v2706
        %4133 = vmatpush1.bf16.msra.mxu0 %v2705
        %4134 = vmatprep.subr.bf16.mxu0 %v2690
        %4135 = vmatpush1.bf16.msra.mxu0 %v2689
        %4136 = vmatprep.subr.bf16.mxu0 %v2674
        %4137 = vmatpush1.bf16.msra.mxu0 %v2673
        %4138 = vmatprep.subr.bf16.mxu0 %v2658
        %4139 = vmatpush1.bf16.msra.mxu0 %v2657
        %4140 = vmatprep.subr.bf16.mxu0 %v2898
        %4141 = vmatpush2.bf16.msra.mxu0 %v2897
        %4142 = vmatprep.subr.bf16.mxu0 %v2882
        %4143 = vmatpush2.bf16.msra.mxu0 %v2881
        %4144 = vmatprep.subr.bf16.mxu0 %v2866
        %4145 = vmatpush2.bf16.msra.mxu0 %v2865
        %4146 = vmatprep.subr.bf16.mxu0 %v2850
        %4147 = vmatpush2.bf16.msra.mxu0 %v2849
        %4148 = vmatprep.subr.bf16.mxu0 %v2834
        %4149 = vmatpush2.bf16.msra.mxu0 %v2833
        %4150 = vmatprep.subr.bf16.mxu0 %v2818
        %4151 = vmatpush2.bf16.msra.mxu0 %v2817
        %4152 = vmatprep.subr.bf16.mxu0 %v2802
        %4153 = vmatpush2.bf16.msra.mxu0 %v2801
        %4154 = vmatprep.subr.bf16.mxu0 %v2786
        %4155 = vmatpush2.bf16.msra.mxu0 %v2785
        %4156 = vmatprep.mubr.bf16.mxu0 %v1816
        %4157 = vmatmul.mubr.bf16.gmra.mxu0 %v1815
        %v4158 = vpop.f32.mrf.mxu0
        %v4159 = vadd.f32 %v1682, %v4158
        %v4160 = vpop.f32.mrf.mxu0
        %v4161 = vadd.f32 %v1686, %v4160
        %v4162 = vpop.f32.mrf.mxu0
        %v4163 = vadd.f32 %v1682, %v4162
        %v4164 = vpop.f32.mrf.mxu0
        %v4165 = vadd.f32 %v1686, %v4164
        %4166 = vmatprep.mubr.bf16.mxu0 %v1818
        %4167 = vmatmul.mubr.bf16.gmra.mxu0 %v1817
        %v4168 = vpop.f32.mrf.mxu0
        %v4169 = vadd.f32 %v1682, %v4168
        %v4170 = vpop.f32.mrf.mxu0
        %v4171 = vadd.f32 %v1686, %v4170
        %v4172 = vpop.f32.mrf.mxu0
        %v4173 = vadd.f32 %v1682, %v4172
        %v4174 = vpop.f32.mrf.mxu0
        %v4175 = vadd.f32 %v1686, %v4174
        %4176 = vmatprep.mubr.bf16.mxu0 %v1820
        %4177 = vmatmul.mubr.bf16.gmra.mxu0 %v1819
        %v4178 = vpop.f32.mrf.mxu0
        %v4179 = vadd.f32 %v1682, %v4178
        %v4180 = vpop.f32.mrf.mxu0
        %v4181 = vadd.f32 %v1686, %v4180
        %v4182 = vpop.f32.mrf.mxu0
        %v4183 = vadd.f32 %v1682, %v4182
        %v4184 = vpop.f32.mrf.mxu0
        %v4185 = vadd.f32 %v1686, %v4184
        %4186 = vmatprep.mubr.bf16.mxu0 %v1822
        %4187 = vmatmul.mubr.bf16.gmra.mxu0 %v1821
        %v4188 = vpop.f32.mrf.mxu0
        %v4189 = vadd.f32 %v1682, %v4188
        %v4190 = vpop.f32.mrf.mxu0
        %v4191 = vadd.f32 %v1686, %v4190
        %v4192 = vpop.f32.mrf.mxu0
        %v4193 = vadd.f32 %v1682, %v4192
        %v4194 = vpop.f32.mrf.mxu0
        %v4195 = vadd.f32 %v1686, %v4194
        %4196 = vmatprep.mubr.bf16.mxu0 %v1824
        %4197 = vmatmul.mubr.bf16.gmra.mxu0 %v1823
        %v4198 = vpop.f32.mrf.mxu0
        %v4199 = vadd.f32 %v1682, %v4198
        %v4200 = vpop.f32.mrf.mxu0
        %v4201 = vadd.f32 %v1686, %v4200
        %v4202 = vpop.f32.mrf.mxu0
        %v4203 = vadd.f32 %v1682, %v4202
        %v4204 = vpop.f32.mrf.mxu0
        %v4205 = vadd.f32 %v1686, %v4204
        %4206 = vmatprep.mubr.bf16.mxu0 %v1826
        %4207 = vmatmul.mubr.bf16.gmra.mxu0 %v1825
        %v4208 = vpop.f32.mrf.mxu0
        %v4209 = vadd.f32 %v1682, %v4208
        %v4210 = vpop.f32.mrf.mxu0
        %v4211 = vadd.f32 %v1686, %v4210
        %v4212 = vpop.f32.mrf.mxu0
        %v4213 = vadd.f32 %v1682, %v4212
        %v4214 = vpop.f32.mrf.mxu0
        %v4215 = vadd.f32 %v1686, %v4214
        %4216 = vmatprep.mubr.bf16.mxu0 %v1828
        %4217 = vmatmul.mubr.bf16.gmra.mxu0 %v1827
        %v4218 = vpop.f32.mrf.mxu0
        %v4219 = vadd.f32 %v1682, %v4218
        %v4220 = vpop.f32.mrf.mxu0
        %v4221 = vadd.f32 %v1686, %v4220
        %v4222 = vpop.f32.mrf.mxu0
        %v4223 = vadd.f32 %v1682, %v4222
        %v4224 = vpop.f32.mrf.mxu0
        %v4225 = vadd.f32 %v1686, %v4224
        %4226 = vmatprep.mubr.bf16.mxu0 %v1830
        %4227 = vmatmul.mubr.bf16.gmra.mxu0 %v1829
        %v4228 = vpop.f32.mrf.mxu0
        %v4229 = vadd.f32 %v1682, %v4228
        %v4230 = vpop.f32.mrf.mxu0
        %v4231 = vadd.f32 %v1686, %v4230
        %v4232 = vpop.f32.mrf.mxu0
        %v4233 = vadd.f32 %v1682, %v4232
        %v4234 = vpop.f32.mrf.mxu0
        %v4235 = vadd.f32 %v1686, %v4234
        %4236 = vmatprep.mubr.bf16.mxu0 %v1832
        %4237 = vmatmul.mubr.bf16.gmra.mxu0 %v1831
        %v4238 = vpop.f32.mrf.mxu0
        %v4239 = vadd.f32 %v1682, %v4238
        %v4240 = vpop.f32.mrf.mxu0
        %v4241 = vadd.f32 %v1686, %v4240
        %v4242 = vpop.f32.mrf.mxu0
        %v4243 = vadd.f32 %v1682, %v4242
        %v4244 = vpop.f32.mrf.mxu0
        %v4245 = vadd.f32 %v1686, %v4244
        %4246 = vmatprep.mubr.bf16.mxu0 %v1834
        %4247 = vmatmul.mubr.bf16.gmra.mxu0 %v1833
        %v4248 = vpop.f32.mrf.mxu0
        %v4249 = vadd.f32 %v1682, %v4248
        %v4250 = vpop.f32.mrf.mxu0
        %v4251 = vadd.f32 %v1686, %v4250
        %v4252 = vpop.f32.mrf.mxu0
        %v4253 = vadd.f32 %v1682, %v4252
        %v4254 = vpop.f32.mrf.mxu0
        %v4255 = vadd.f32 %v1686, %v4254
        %4256 = vmatprep.mubr.bf16.mxu0 %v1836
        %4257 = vmatmul.mubr.bf16.gmra.mxu0 %v1835
        %v4258 = vpop.f32.mrf.mxu0
        %v4259 = vadd.f32 %v1682, %v4258
        %v4260 = vpop.f32.mrf.mxu0
        %v4261 = vadd.f32 %v1686, %v4260
        %v4262 = vpop.f32.mrf.mxu0
        %v4263 = vadd.f32 %v1682, %v4262
        %v4264 = vpop.f32.mrf.mxu0
        %v4265 = vadd.f32 %v1686, %v4264
        %4266 = vmatprep.mubr.bf16.mxu0 %v1838
        %4267 = vmatmul.mubr.bf16.gmra.mxu0 %v1837
        %v4268 = vpop.f32.mrf.mxu0
        %v4269 = vadd.f32 %v1682, %v4268
        %v4270 = vpop.f32.mrf.mxu0
        %v4271 = vadd.f32 %v1686, %v4270
        %v4272 = vpop.f32.mrf.mxu0
        %v4273 = vadd.f32 %v1682, %v4272
        %v4274 = vpop.f32.mrf.mxu0
        %v4275 = vadd.f32 %v1686, %v4274
        %4276 = vmatprep.mubr.bf16.mxu0 %v1840
        %4277 = vmatmul.mubr.bf16.gmra.mxu0 %v1839
        %v4278 = vpop.f32.mrf.mxu0
        %v4279 = vadd.f32 %v1682, %v4278
        %v4280 = vpop.f32.mrf.mxu0
        %v4281 = vadd.f32 %v1686, %v4280
        %v4282 = vpop.f32.mrf.mxu0
        %v4283 = vadd.f32 %v1682, %v4282
        %v4284 = vpop.f32.mrf.mxu0
        %v4285 = vadd.f32 %v1686, %v4284
        %4286 = vmatprep.mubr.bf16.mxu0 %v1842
        %4287 = vmatmul.mubr.bf16.gmra.mxu0 %v1841
        %v4288 = vpop.f32.mrf.mxu0
        %v4289 = vadd.f32 %v1682, %v4288
        %v4290 = vpop.f32.mrf.mxu0
        %v4291 = vadd.f32 %v1686, %v4290
        %v4292 = vpop.f32.mrf.mxu0
        %v4293 = vadd.f32 %v1682, %v4292
        %v4294 = vpop.f32.mrf.mxu0
        %v4295 = vadd.f32 %v1686, %v4294
        %4296 = vmatprep.mubr.bf16.mxu0 %v1844
        %4297 = vmatmul.mubr.bf16.gmra.mxu0 %v1843
        %v4298 = vpop.f32.mrf.mxu0
        %v4299 = vadd.f32 %v1682, %v4298
        %v4300 = vpop.f32.mrf.mxu0
        %v4301 = vadd.f32 %v1686, %v4300
        %v4302 = vpop.f32.mrf.mxu0
        %v4303 = vadd.f32 %v1682, %v4302
        %v4304 = vpop.f32.mrf.mxu0
        %v4305 = vadd.f32 %v1686, %v4304
        %4306 = vmatprep.mubr.bf16.mxu0 %v1846
        %4307 = vmatmul.mubr.bf16.gmra.mxu0 %v1845
        %v4308 = vpop.f32.mrf.mxu0
        %v4309 = vadd.f32 %v1682, %v4308
        %v4310 = vpop.f32.mrf.mxu0
        %v4311 = vadd.f32 %v1686, %v4310
        %v4312 = vpop.f32.mrf.mxu0
        %v4313 = vadd.f32 %v1682, %v4312
        %v4314 = vpop.f32.mrf.mxu0
        %v4315 = vadd.f32 %v1686, %v4314
        %4316 = vdwg.mxu0
        %4317 = vmatprep.subr.bf16.mxu0 %v2772
        %4318 = vmatpush1.bf16.msra.mxu0 %v2771
        %4319 = vmatprep.subr.bf16.mxu0 %v2756
        %4320 = vmatpush1.bf16.msra.mxu0 %v2755
        %4321 = vmatprep.subr.bf16.mxu0 %v2740
        %4322 = vmatpush1.bf16.msra.mxu0 %v2739
        %4323 = vmatprep.subr.bf16.mxu0 %v2724
        %4324 = vmatpush1.bf16.msra.mxu0 %v2723
        %4325 = vmatprep.subr.bf16.mxu0 %v2708
        %4326 = vmatpush1.bf16.msra.mxu0 %v2707
        %4327 = vmatprep.subr.bf16.mxu0 %v2692
        %4328 = vmatpush1.bf16.msra.mxu0 %v2691
        %4329 = vmatprep.subr.bf16.mxu0 %v2676
        %4330 = vmatpush1.bf16.msra.mxu0 %v2675
        %4331 = vmatprep.subr.bf16.mxu0 %v2660
        %4332 = vmatpush1.bf16.msra.mxu0 %v2659
        %4333 = vmatprep.subr.bf16.mxu0 %v2900
        %4334 = vmatpush2.bf16.msra.mxu0 %v2899
        %4335 = vmatprep.subr.bf16.mxu0 %v2884
        %4336 = vmatpush2.bf16.msra.mxu0 %v2883
        %4337 = vmatprep.subr.bf16.mxu0 %v2868
        %4338 = vmatpush2.bf16.msra.mxu0 %v2867
        %4339 = vmatprep.subr.bf16.mxu0 %v2852
        %4340 = vmatpush2.bf16.msra.mxu0 %v2851
        %4341 = vmatprep.subr.bf16.mxu0 %v2836
        %4342 = vmatpush2.bf16.msra.mxu0 %v2835
        %4343 = vmatprep.subr.bf16.mxu0 %v2820
        %4344 = vmatpush2.bf16.msra.mxu0 %v2819
        %4345 = vmatprep.subr.bf16.mxu0 %v2804
        %4346 = vmatpush2.bf16.msra.mxu0 %v2803
        %4347 = vmatprep.subr.bf16.mxu0 %v2788
        %4348 = vmatpush2.bf16.msra.mxu0 %v2787
        %4349 = vmatprep.mubr.bf16.mxu0 %v1816
        %4350 = vmatmul.mubr.bf16.gmra.mxu0 %v1815
        %v4351 = vpop.f32.mrf.mxu0
        %v4352 = vadd.f32 %v1690, %v4351
        %v4353 = vpop.f32.mrf.mxu0
        %v4354 = vadd.f32 %v1694, %v4353
        %v4355 = vpop.f32.mrf.mxu0
        %v4356 = vadd.f32 %v1690, %v4355
        %v4357 = vpop.f32.mrf.mxu0
        %v4358 = vadd.f32 %v1694, %v4357
        %4359 = vmatprep.mubr.bf16.mxu0 %v1818
        %4360 = vmatmul.mubr.bf16.gmra.mxu0 %v1817
        %v4361 = vpop.f32.mrf.mxu0
        %v4362 = vadd.f32 %v1690, %v4361
        %v4363 = vpop.f32.mrf.mxu0
        %v4364 = vadd.f32 %v1694, %v4363
        %v4365 = vpop.f32.mrf.mxu0
        %v4366 = vadd.f32 %v1690, %v4365
        %v4367 = vpop.f32.mrf.mxu0
        %v4368 = vadd.f32 %v1694, %v4367
        %4369 = vmatprep.mubr.bf16.mxu0 %v1820
        %4370 = vmatmul.mubr.bf16.gmra.mxu0 %v1819
        %v4371 = vpop.f32.mrf.mxu0
        %v4372 = vadd.f32 %v1690, %v4371
        %v4373 = vpop.f32.mrf.mxu0
        %v4374 = vadd.f32 %v1694, %v4373
        %v4375 = vpop.f32.mrf.mxu0
        %v4376 = vadd.f32 %v1690, %v4375
        %v4377 = vpop.f32.mrf.mxu0
        %v4378 = vadd.f32 %v1694, %v4377
        %4379 = vmatprep.mubr.bf16.mxu0 %v1822
        %4380 = vmatmul.mubr.bf16.gmra.mxu0 %v1821
        %v4381 = vpop.f32.mrf.mxu0
        %v4382 = vadd.f32 %v1690, %v4381
        %v4383 = vpop.f32.mrf.mxu0
        %v4384 = vadd.f32 %v1694, %v4383
        %v4385 = vpop.f32.mrf.mxu0
        %v4386 = vadd.f32 %v1690, %v4385
        %v4387 = vpop.f32.mrf.mxu0
        %v4388 = vadd.f32 %v1694, %v4387
        %4389 = vmatprep.mubr.bf16.mxu0 %v1824
        %4390 = vmatmul.mubr.bf16.gmra.mxu0 %v1823
        %v4391 = vpop.f32.mrf.mxu0
        %v4392 = vadd.f32 %v1690, %v4391
        %v4393 = vpop.f32.mrf.mxu0
        %v4394 = vadd.f32 %v1694, %v4393
        %v4395 = vpop.f32.mrf.mxu0
        %v4396 = vadd.f32 %v1690, %v4395
        %v4397 = vpop.f32.mrf.mxu0
        %v4398 = vadd.f32 %v1694, %v4397
        %4399 = vmatprep.mubr.bf16.mxu0 %v1826
        %4400 = vmatmul.mubr.bf16.gmra.mxu0 %v1825
        %v4401 = vpop.f32.mrf.mxu0
        %v4402 = vadd.f32 %v1690, %v4401
        %v4403 = vpop.f32.mrf.mxu0
        %v4404 = vadd.f32 %v1694, %v4403
        %v4405 = vpop.f32.mrf.mxu0
        %v4406 = vadd.f32 %v1690, %v4405
        %v4407 = vpop.f32.mrf.mxu0
        %v4408 = vadd.f32 %v1694, %v4407
        %4409 = vmatprep.mubr.bf16.mxu0 %v1828
        %4410 = vmatmul.mubr.bf16.gmra.mxu0 %v1827
        %v4411 = vpop.f32.mrf.mxu0
        %v4412 = vadd.f32 %v1690, %v4411
        %v4413 = vpop.f32.mrf.mxu0
        %v4414 = vadd.f32 %v1694, %v4413
        %v4415 = vpop.f32.mrf.mxu0
        %v4416 = vadd.f32 %v1690, %v4415
        %v4417 = vpop.f32.mrf.mxu0
        %v4418 = vadd.f32 %v1694, %v4417
        %4419 = vmatprep.mubr.bf16.mxu0 %v1830
        %4420 = vmatmul.mubr.bf16.gmra.mxu0 %v1829
        %v4421 = vpop.f32.mrf.mxu0
        %v4422 = vadd.f32 %v1690, %v4421
        %v4423 = vpop.f32.mrf.mxu0
        %v4424 = vadd.f32 %v1694, %v4423
        %v4425 = vpop.f32.mrf.mxu0
        %v4426 = vadd.f32 %v1690, %v4425
        %v4427 = vpop.f32.mrf.mxu0
        %v4428 = vadd.f32 %v1694, %v4427
        %4429 = vmatprep.mubr.bf16.mxu0 %v1832
        %4430 = vmatmul.mubr.bf16.gmra.mxu0 %v1831
        %v4431 = vpop.f32.mrf.mxu0
        %v4432 = vadd.f32 %v1690, %v4431
        %v4433 = vpop.f32.mrf.mxu0
        %v4434 = vadd.f32 %v1694, %v4433
        %v4435 = vpop.f32.mrf.mxu0
        %v4436 = vadd.f32 %v1690, %v4435
        %v4437 = vpop.f32.mrf.mxu0
        %v4438 = vadd.f32 %v1694, %v4437
        %4439 = vmatprep.mubr.bf16.mxu0 %v1834
        %4440 = vmatmul.mubr.bf16.gmra.mxu0 %v1833
        %v4441 = vpop.f32.mrf.mxu0
        %v4442 = vadd.f32 %v1690, %v4441
        %v4443 = vpop.f32.mrf.mxu0
        %v4444 = vadd.f32 %v1694, %v4443
        %v4445 = vpop.f32.mrf.mxu0
        %v4446 = vadd.f32 %v1690, %v4445
        %v4447 = vpop.f32.mrf.mxu0
        %v4448 = vadd.f32 %v1694, %v4447
        %4449 = vmatprep.mubr.bf16.mxu0 %v1836
        %4450 = vmatmul.mubr.bf16.gmra.mxu0 %v1835
        %v4451 = vpop.f32.mrf.mxu0
        %v4452 = vadd.f32 %v1690, %v4451
        %v4453 = vpop.f32.mrf.mxu0
        %v4454 = vadd.f32 %v1694, %v4453
        %v4455 = vpop.f32.mrf.mxu0
        %v4456 = vadd.f32 %v1690, %v4455
        %v4457 = vpop.f32.mrf.mxu0
        %v4458 = vadd.f32 %v1694, %v4457
        %4459 = vmatprep.mubr.bf16.mxu0 %v1838
        %4460 = vmatmul.mubr.bf16.gmra.mxu0 %v1837
        %v4461 = vpop.f32.mrf.mxu0
        %v4462 = vadd.f32 %v1690, %v4461
        %v4463 = vpop.f32.mrf.mxu0
        %v4464 = vadd.f32 %v1694, %v4463
        %v4465 = vpop.f32.mrf.mxu0
        %v4466 = vadd.f32 %v1690, %v4465
        %v4467 = vpop.f32.mrf.mxu0
        %v4468 = vadd.f32 %v1694, %v4467
        %4469 = vmatprep.mubr.bf16.mxu0 %v1840
        %4470 = vmatmul.mubr.bf16.gmra.mxu0 %v1839
        %v4471 = vpop.f32.mrf.mxu0
        %v4472 = vadd.f32 %v1690, %v4471
        %v4473 = vpop.f32.mrf.mxu0
        %v4474 = vadd.f32 %v1694, %v4473
        %v4475 = vpop.f32.mrf.mxu0
        %v4476 = vadd.f32 %v1690, %v4475
        %v4477 = vpop.f32.mrf.mxu0
        %v4478 = vadd.f32 %v1694, %v4477
        %4479 = vmatprep.mubr.bf16.mxu0 %v1842
        %4480 = vmatmul.mubr.bf16.gmra.mxu0 %v1841
        %v4481 = vpop.f32.mrf.mxu0
        %v4482 = vadd.f32 %v1690, %v4481
        %v4483 = vpop.f32.mrf.mxu0
        %v4484 = vadd.f32 %v1694, %v4483
        %v4485 = vpop.f32.mrf.mxu0
        %v4486 = vadd.f32 %v1690, %v4485
        %v4487 = vpop.f32.mrf.mxu0
        %v4488 = vadd.f32 %v1694, %v4487
        %4489 = vmatprep.mubr.bf16.mxu0 %v1844
        %4490 = vmatmul.mubr.bf16.gmra.mxu0 %v1843
        %v4491 = vpop.f32.mrf.mxu0
        %v4492 = vadd.f32 %v1690, %v4491
        %v4493 = vpop.f32.mrf.mxu0
        %v4494 = vadd.f32 %v1694, %v4493
        %v4495 = vpop.f32.mrf.mxu0
        %v4496 = vadd.f32 %v1690, %v4495
        %v4497 = vpop.f32.mrf.mxu0
        %v4498 = vadd.f32 %v1694, %v4497
        %4499 = vmatprep.mubr.bf16.mxu0 %v1846
        %4500 = vmatmul.mubr.bf16.gmra.mxu0 %v1845
        %v4501 = vpop.f32.mrf.mxu0
        %v4502 = vadd.f32 %v1690, %v4501
        %v4503 = vpop.f32.mrf.mxu0
        %v4504 = vadd.f32 %v1694, %v4503
        %v4505 = vpop.f32.mrf.mxu0
        %v4506 = vadd.f32 %v1690, %v4505
        %v4507 = vpop.f32.mrf.mxu0
        %v4508 = vadd.f32 %v1694, %v4507
        %4509 = vdwg.mxu0
        %4510 = vmatprep.subr.bf16.mxu0 %v2774
        %4511 = vmatpush1.bf16.msra.mxu0 %v2773
        %4512 = vmatprep.subr.bf16.mxu0 %v2758
        %4513 = vmatpush1.bf16.msra.mxu0 %v2757
        %4514 = vmatprep.subr.bf16.mxu0 %v2742
        %4515 = vmatpush1.bf16.msra.mxu0 %v2741
        %4516 = vmatprep.subr.bf16.mxu0 %v2726
        %4517 = vmatpush1.bf16.msra.mxu0 %v2725
        %4518 = vmatprep.subr.bf16.mxu0 %v2710
        %4519 = vmatpush1.bf16.msra.mxu0 %v2709
        %4520 = vmatprep.subr.bf16.mxu0 %v2694
        %4521 = vmatpush1.bf16.msra.mxu0 %v2693
        %4522 = vmatprep.subr.bf16.mxu0 %v2678
        %4523 = vmatpush1.bf16.msra.mxu0 %v2677
        %4524 = vmatprep.subr.bf16.mxu0 %v2662
        %4525 = vmatpush1.bf16.msra.mxu0 %v2661
        %4526 = vmatprep.subr.bf16.mxu0 %v2902
        %4527 = vmatpush2.bf16.msra.mxu0 %v2901
        %4528 = vmatprep.subr.bf16.mxu0 %v2886
        %4529 = vmatpush2.bf16.msra.mxu0 %v2885
        %4530 = vmatprep.subr.bf16.mxu0 %v2870
        %4531 = vmatpush2.bf16.msra.mxu0 %v2869
        %4532 = vmatprep.subr.bf16.mxu0 %v2854
        %4533 = vmatpush2.bf16.msra.mxu0 %v2853
        %4534 = vmatprep.subr.bf16.mxu0 %v2838
        %4535 = vmatpush2.bf16.msra.mxu0 %v2837
        %4536 = vmatprep.subr.bf16.mxu0 %v2822
        %4537 = vmatpush2.bf16.msra.mxu0 %v2821
        %4538 = vmatprep.subr.bf16.mxu0 %v2806
        %4539 = vmatpush2.bf16.msra.mxu0 %v2805
        %4540 = vmatprep.subr.bf16.mxu0 %v2790
        %4541 = vmatpush2.bf16.msra.mxu0 %v2789
        %4542 = vmatprep.mubr.bf16.mxu0 %v1816
        %4543 = vmatmul.mubr.bf16.gmra.mxu0 %v1815
        %v4544 = vpop.f32.mrf.mxu0
        %v4545 = vadd.f32 %v1698, %v4544
        %v4546 = vpop.f32.mrf.mxu0
        %v4547 = vadd.f32 %v1702, %v4546
        %v4548 = vpop.f32.mrf.mxu0
        %v4549 = vadd.f32 %v1698, %v4548
        %v4550 = vpop.f32.mrf.mxu0
        %v4551 = vadd.f32 %v1702, %v4550
        %4552 = vmatprep.mubr.bf16.mxu0 %v1818
        %4553 = vmatmul.mubr.bf16.gmra.mxu0 %v1817
        %v4554 = vpop.f32.mrf.mxu0
        %v4555 = vadd.f32 %v1698, %v4554
        %v4556 = vpop.f32.mrf.mxu0
        %v4557 = vadd.f32 %v1702, %v4556
        %v4558 = vpop.f32.mrf.mxu0
        %v4559 = vadd.f32 %v1698, %v4558
        %v4560 = vpop.f32.mrf.mxu0
        %v4561 = vadd.f32 %v1702, %v4560
        %4562 = vmatprep.mubr.bf16.mxu0 %v1820
        %4563 = vmatmul.mubr.bf16.gmra.mxu0 %v1819
        %v4564 = vpop.f32.mrf.mxu0
        %v4565 = vadd.f32 %v1698, %v4564
        %v4566 = vpop.f32.mrf.mxu0
        %v4567 = vadd.f32 %v1702, %v4566
        %v4568 = vpop.f32.mrf.mxu0
        %v4569 = vadd.f32 %v1698, %v4568
        %v4570 = vpop.f32.mrf.mxu0
        %v4571 = vadd.f32 %v1702, %v4570
        %4572 = vmatprep.mubr.bf16.mxu0 %v1822
        %4573 = vmatmul.mubr.bf16.gmra.mxu0 %v1821
        %v4574 = vpop.f32.mrf.mxu0
        %v4575 = vadd.f32 %v1698, %v4574
        %v4576 = vpop.f32.mrf.mxu0
        %v4577 = vadd.f32 %v1702, %v4576
        %v4578 = vpop.f32.mrf.mxu0
        %v4579 = vadd.f32 %v1698, %v4578
        %v4580 = vpop.f32.mrf.mxu0
        %v4581 = vadd.f32 %v1702, %v4580
        %4582 = vmatprep.mubr.bf16.mxu0 %v1824
        %4583 = vmatmul.mubr.bf16.gmra.mxu0 %v1823
        %v4584 = vpop.f32.mrf.mxu0
        %v4585 = vadd.f32 %v1698, %v4584
        %v4586 = vpop.f32.mrf.mxu0
        %v4587 = vadd.f32 %v1702, %v4586
        %v4588 = vpop.f32.mrf.mxu0
        %v4589 = vadd.f32 %v1698, %v4588
        %v4590 = vpop.f32.mrf.mxu0
        %v4591 = vadd.f32 %v1702, %v4590
        %4592 = vmatprep.mubr.bf16.mxu0 %v1826
        %4593 = vmatmul.mubr.bf16.gmra.mxu0 %v1825
        %v4594 = vpop.f32.mrf.mxu0
        %v4595 = vadd.f32 %v1698, %v4594
        %v4596 = vpop.f32.mrf.mxu0
        %v4597 = vadd.f32 %v1702, %v4596
        %v4598 = vpop.f32.mrf.mxu0
        %v4599 = vadd.f32 %v1698, %v4598
        %v4600 = vpop.f32.mrf.mxu0
        %v4601 = vadd.f32 %v1702, %v4600
        %4602 = vmatprep.mubr.bf16.mxu0 %v1828
        %4603 = vmatmul.mubr.bf16.gmra.mxu0 %v1827
        %v4604 = vpop.f32.mrf.mxu0
        %v4605 = vadd.f32 %v1698, %v4604
        %v4606 = vpop.f32.mrf.mxu0
        %v4607 = vadd.f32 %v1702, %v4606
        %v4608 = vpop.f32.mrf.mxu0
        %v4609 = vadd.f32 %v1698, %v4608
        %v4610 = vpop.f32.mrf.mxu0
        %v4611 = vadd.f32 %v1702, %v4610
        %4612 = vmatprep.mubr.bf16.mxu0 %v1830
        %4613 = vmatmul.mubr.bf16.gmra.mxu0 %v1829
        %v4614 = vpop.f32.mrf.mxu0
        %v4615 = vadd.f32 %v1698, %v4614
        %v4616 = vpop.f32.mrf.mxu0
        %v4617 = vadd.f32 %v1702, %v4616
        %v4618 = vpop.f32.mrf.mxu0
        %v4619 = vadd.f32 %v1698, %v4618
        %v4620 = vpop.f32.mrf.mxu0
        %v4621 = vadd.f32 %v1702, %v4620
        %4622 = vmatprep.mubr.bf16.mxu0 %v1832
        %4623 = vmatmul.mubr.bf16.gmra.mxu0 %v1831
        %v4624 = vpop.f32.mrf.mxu0
        %v4625 = vadd.f32 %v1698, %v4624
        %v4626 = vpop.f32.mrf.mxu0
        %v4627 = vadd.f32 %v1702, %v4626
        %v4628 = vpop.f32.mrf.mxu0
        %v4629 = vadd.f32 %v1698, %v4628
        %v4630 = vpop.f32.mrf.mxu0
        %v4631 = vadd.f32 %v1702, %v4630
        %4632 = vmatprep.mubr.bf16.mxu0 %v1834
        %4633 = vmatmul.mubr.bf16.gmra.mxu0 %v1833
        %v4634 = vpop.f32.mrf.mxu0
        %v4635 = vadd.f32 %v1698, %v4634
        %v4636 = vpop.f32.mrf.mxu0
        %v4637 = vadd.f32 %v1702, %v4636
        %v4638 = vpop.f32.mrf.mxu0
        %v4639 = vadd.f32 %v1698, %v4638
        %v4640 = vpop.f32.mrf.mxu0
        %v4641 = vadd.f32 %v1702, %v4640
        %4642 = vmatprep.mubr.bf16.mxu0 %v1836
        %4643 = vmatmul.mubr.bf16.gmra.mxu0 %v1835
        %v4644 = vpop.f32.mrf.mxu0
        %v4645 = vadd.f32 %v1698, %v4644
        %v4646 = vpop.f32.mrf.mxu0
        %v4647 = vadd.f32 %v1702, %v4646
        %v4648 = vpop.f32.mrf.mxu0
        %v4649 = vadd.f32 %v1698, %v4648
        %v4650 = vpop.f32.mrf.mxu0
        %v4651 = vadd.f32 %v1702, %v4650
        %4652 = vmatprep.mubr.bf16.mxu0 %v1838
        %4653 = vmatmul.mubr.bf16.gmra.mxu0 %v1837
        %v4654 = vpop.f32.mrf.mxu0
        %v4655 = vadd.f32 %v1698, %v4654
        %v4656 = vpop.f32.mrf.mxu0
        %v4657 = vadd.f32 %v1702, %v4656
        %v4658 = vpop.f32.mrf.mxu0
        %v4659 = vadd.f32 %v1698, %v4658
        %v4660 = vpop.f32.mrf.mxu0
        %v4661 = vadd.f32 %v1702, %v4660
        %4662 = vmatprep.mubr.bf16.mxu0 %v1840
        %4663 = vmatmul.mubr.bf16.gmra.mxu0 %v1839
        %v4664 = vpop.f32.mrf.mxu0
        %v4665 = vadd.f32 %v1698, %v4664
        %v4666 = vpop.f32.mrf.mxu0
        %v4667 = vadd.f32 %v1702, %v4666
        %v4668 = vpop.f32.mrf.mxu0
        %v4669 = vadd.f32 %v1698, %v4668
        %v4670 = vpop.f32.mrf.mxu0
        %v4671 = vadd.f32 %v1702, %v4670
        %4672 = vmatprep.mubr.bf16.mxu0 %v1842
        %4673 = vmatmul.mubr.bf16.gmra.mxu0 %v1841
        %v4674 = vpop.f32.mrf.mxu0
        %v4675 = vadd.f32 %v1698, %v4674
        %v4676 = vpop.f32.mrf.mxu0
        %v4677 = vadd.f32 %v1702, %v4676
        %v4678 = vpop.f32.mrf.mxu0
        %v4679 = vadd.f32 %v1698, %v4678
        %v4680 = vpop.f32.mrf.mxu0
        %v4681 = vadd.f32 %v1702, %v4680
        %4682 = vmatprep.mubr.bf16.mxu0 %v1844
        %4683 = vmatmul.mubr.bf16.gmra.mxu0 %v1843
        %v4684 = vpop.f32.mrf.mxu0
        %v4685 = vadd.f32 %v1698, %v4684
        %v4686 = vpop.f32.mrf.mxu0
        %v4687 = vadd.f32 %v1702, %v4686
        %v4688 = vpop.f32.mrf.mxu0
        %v4689 = vadd.f32 %v1698, %v4688
        %v4690 = vpop.f32.mrf.mxu0
        %v4691 = vadd.f32 %v1702, %v4690
        %4692 = vmatprep.mubr.bf16.mxu0 %v1846
        %4693 = vmatmul.mubr.bf16.gmra.mxu0 %v1845
        %v4694 = vpop.f32.mrf.mxu0
        %v4695 = vadd.f32 %v1698, %v4694
        %v4696 = vpop.f32.mrf.mxu0
        %v4697 = vadd.f32 %v1702, %v4696
        %v4698 = vpop.f32.mrf.mxu0
        %v4699 = vadd.f32 %v1698, %v4698
        %v4700 = vpop.f32.mrf.mxu0
        %v4701 = vadd.f32 %v1702, %v4700
        %4702 = vdwg.mxu0
        %v4703 = vmax.f32 %v3194, 0.0
        %v4704 = vmax.f32 %v3196, 0.0
        %v4705 = vmax.f32 %v3387, 0.0
        %v4706 = vmax.f32 %v3389, 0.0
        %v4707 = vmax.f32 %v3580, 0.0
        %v4708 = vmax.f32 %v3582, 0.0
        %v4709 = vmax.f32 %v3773, 0.0
        %v4710 = vmax.f32 %v3775, 0.0
        %v4711 = vmax.f32 %v3966, 0.0
        %v4712 = vmax.f32 %v3968, 0.0
        %v4713 = vmax.f32 %v4159, 0.0
        %v4714 = vmax.f32 %v4161, 0.0
        %v4715 = vmax.f32 %v4352, 0.0
        %v4716 = vmax.f32 %v4354, 0.0
        %v4717 = vmax.f32 %v4545, 0.0
        %v4718 = vmax.f32 %v4547, 0.0
        %v4719 = vmax.f32 %v3198, 0.0
        %v4720 = vmax.f32 %v3200, 0.0
        %v4721 = vmax.f32 %v3391, 0.0
        %v4722 = vmax.f32 %v3393, 0.0
        %v4723 = vmax.f32 %v3584, 0.0
        %v4724 = vmax.f32 %v3586, 0.0
        %v4725 = vmax.f32 %v3777, 0.0
        %v4726 = vmax.f32 %v3779, 0.0
        %v4727 = vmax.f32 %v3970, 0.0
        %v4728 = vmax.f32 %v3972, 0.0
        %v4729 = vmax.f32 %v4163, 0.0
        %v4730 = vmax.f32 %v4165, 0.0
        %v4731 = vmax.f32 %v4356, 0.0
        %v4732 = vmax.f32 %v4358, 0.0
        %v4733 = vmax.f32 %v4549, 0.0
        %v4734 = vmax.f32 %v4551, 0.0
        %v4735 = vmax.f32 %v3204, 0.0
        %v4736 = vmax.f32 %v3206, 0.0
        %v4737 = vmax.f32 %v3397, 0.0
        %v4738 = vmax.f32 %v3399, 0.0
        %v4739 = vmax.f32 %v3590, 0.0
        %v4740 = vmax.f32 %v3592, 0.0
        %v4741 = vmax.f32 %v3783, 0.0
        %v4742 = vmax.f32 %v3785, 0.0
        %v4743 = vmax.f32 %v3976, 0.0
        %v4744 = vmax.f32 %v3978, 0.0
        %v4745 = vmax.f32 %v4169, 0.0
        %v4746 = vmax.f32 %v4171, 0.0
        %v4747 = vmax.f32 %v4362, 0.0
        %v4748 = vmax.f32 %v4364, 0.0
        %v4749 = vmax.f32 %v4555, 0.0
        %v4750 = vmax.f32 %v4557, 0.0
        %v4751 = vmax.f32 %v3208, 0.0
        %v4752 = vmax.f32 %v3210, 0.0
        %v4753 = vmax.f32 %v3401, 0.0
        %v4754 = vmax.f32 %v3403, 0.0
        %v4755 = vmax.f32 %v3594, 0.0
        %v4756 = vmax.f32 %v3596, 0.0
        %v4757 = vmax.f32 %v3787, 0.0
        %v4758 = vmax.f32 %v3789, 0.0
        %v4759 = vmax.f32 %v3980, 0.0
        %v4760 = vmax.f32 %v3982, 0.0
        %v4761 = vmax.f32 %v4173, 0.0
        %v4762 = vmax.f32 %v4175, 0.0
        %v4763 = vmax.f32 %v4366, 0.0
        %v4764 = vmax.f32 %v4368, 0.0
        %v4765 = vmax.f32 %v4559, 0.0
        %v4766 = vmax.f32 %v4561, 0.0
        %v4767 = vmax.f32 %v3214, 0.0
        %v4768 = vmax.f32 %v3216, 0.0
        %v4769 = vmax.f32 %v3407, 0.0
        %v4770 = vmax.f32 %v3409, 0.0
        %v4771 = vmax.f32 %v3600, 0.0
        %v4772 = vmax.f32 %v3602, 0.0
        %v4773 = vmax.f32 %v3793, 0.0
        %v4774 = vmax.f32 %v3795, 0.0
        %v4775 = vmax.f32 %v3986, 0.0
        %v4776 = vmax.f32 %v3988, 0.0
        %v4777 = vmax.f32 %v4179, 0.0
        %v4778 = vmax.f32 %v4181, 0.0
        %v4779 = vmax.f32 %v4372, 0.0
        %v4780 = vmax.f32 %v4374, 0.0
        %v4781 = vmax.f32 %v4565, 0.0
        %v4782 = vmax.f32 %v4567, 0.0
        %v4783 = vmax.f32 %v3218, 0.0
        %v4784 = vmax.f32 %v3220, 0.0
        %v4785 = vmax.f32 %v3411, 0.0
        %v4786 = vmax.f32 %v3413, 0.0
        %v4787 = vmax.f32 %v3604, 0.0
        %v4788 = vmax.f32 %v3606, 0.0
        %v4789 = vmax.f32 %v3797, 0.0
        %v4790 = vmax.f32 %v3799, 0.0
        %v4791 = vmax.f32 %v3990, 0.0
        %v4792 = vmax.f32 %v3992, 0.0
        %v4793 = vmax.f32 %v4183, 0.0
        %v4794 = vmax.f32 %v4185, 0.0
        %v4795 = vmax.f32 %v4376, 0.0
        %v4796 = vmax.f32 %v4378, 0.0
        %v4797 = vmax.f32 %v4569, 0.0
        %v4798 = vmax.f32 %v4571, 0.0
        %v4799 = vmax.f32 %v3224, 0.0
        %v4800 = vmax.f32 %v3226, 0.0
        %v4801 = vmax.f32 %v3417, 0.0
        %v4802 = vmax.f32 %v3419, 0.0
        %v4803 = vmax.f32 %v3610, 0.0
        %v4804 = vmax.f32 %v3612, 0.0
        %v4805 = vmax.f32 %v3803, 0.0
        %v4806 = vmax.f32 %v3805, 0.0
        %v4807 = vmax.f32 %v3996, 0.0
        %v4808 = vmax.f32 %v3998, 0.0
        %v4809 = vmax.f32 %v4189, 0.0
        %v4810 = vmax.f32 %v4191, 0.0
        %v4811 = vmax.f32 %v4382, 0.0
        %v4812 = vmax.f32 %v4384, 0.0
        %v4813 = vmax.f32 %v4575, 0.0
        %v4814 = vmax.f32 %v4577, 0.0
        %v4815 = vmax.f32 %v3228, 0.0
        %v4816 = vmax.f32 %v3230, 0.0
        %v4817 = vmax.f32 %v3421, 0.0
        %v4818 = vmax.f32 %v3423, 0.0
        %v4819 = vmax.f32 %v3614, 0.0
        %v4820 = vmax.f32 %v3616, 0.0
        %v4821 = vmax.f32 %v3807, 0.0
        %v4822 = vmax.f32 %v3809, 0.0
        %v4823 = vmax.f32 %v4000, 0.0
        %v4824 = vmax.f32 %v4002, 0.0
        %v4825 = vmax.f32 %v4193, 0.0
        %v4826 = vmax.f32 %v4195, 0.0
        %v4827 = vmax.f32 %v4386, 0.0
        %v4828 = vmax.f32 %v4388, 0.0
        %v4829 = vmax.f32 %v4579, 0.0
        %v4830 = vmax.f32 %v4581, 0.0
        %v4831 = vmax.f32 %v3234, 0.0
        %v4832 = vmax.f32 %v3236, 0.0
        %v4833 = vmax.f32 %v3427, 0.0
        %v4834 = vmax.f32 %v3429, 0.0
        %v4835 = vmax.f32 %v3620, 0.0
        %v4836 = vmax.f32 %v3622, 0.0
        %v4837 = vmax.f32 %v3813, 0.0
        %v4838 = vmax.f32 %v3815, 0.0
        %v4839 = vmax.f32 %v4006, 0.0
        %v4840 = vmax.f32 %v4008, 0.0
        %v4841 = vmax.f32 %v4199, 0.0
        %v4842 = vmax.f32 %v4201, 0.0
        %v4843 = vmax.f32 %v4392, 0.0
        %v4844 = vmax.f32 %v4394, 0.0
        %v4845 = vmax.f32 %v4585, 0.0
        %v4846 = vmax.f32 %v4587, 0.0
        %v4847 = vmax.f32 %v3238, 0.0
        %v4848 = vmax.f32 %v3240, 0.0
        %v4849 = vmax.f32 %v3431, 0.0
        %v4850 = vmax.f32 %v3433, 0.0
        %v4851 = vmax.f32 %v3624, 0.0
        %v4852 = vmax.f32 %v3626, 0.0
        %v4853 = vmax.f32 %v3817, 0.0
        %v4854 = vmax.f32 %v3819, 0.0
        %v4855 = vmax.f32 %v4010, 0.0
        %v4856 = vmax.f32 %v4012, 0.0
        %v4857 = vmax.f32 %v4203, 0.0
        %v4858 = vmax.f32 %v4205, 0.0
        %v4859 = vmax.f32 %v4396, 0.0
        %v4860 = vmax.f32 %v4398, 0.0
        %v4861 = vmax.f32 %v4589, 0.0
        %v4862 = vmax.f32 %v4591, 0.0
        %v4863 = vmax.f32 %v3244, 0.0
        %v4864 = vmax.f32 %v3246, 0.0
        %v4865 = vmax.f32 %v3437, 0.0
        %v4866 = vmax.f32 %v3439, 0.0
        %v4867 = vmax.f32 %v3630, 0.0
        %v4868 = vmax.f32 %v3632, 0.0
        %v4869 = vmax.f32 %v3823, 0.0
        %v4870 = vmax.f32 %v3825, 0.0
        %v4871 = vmax.f32 %v4016, 0.0
        %v4872 = vmax.f32 %v4018, 0.0
        %v4873 = vmax.f32 %v4209, 0.0
        %v4874 = vmax.f32 %v4211, 0.0
        %v4875 = vmax.f32 %v4402, 0.0
        %v4876 = vmax.f32 %v4404, 0.0
        %v4877 = vmax.f32 %v4595, 0.0
        %v4878 = vmax.f32 %v4597, 0.0
        %v4879 = vmax.f32 %v3248, 0.0
        %v4880 = vmax.f32 %v3250, 0.0
        %v4881 = vmax.f32 %v3441, 0.0
        %v4882 = vmax.f32 %v3443, 0.0
        %v4883 = vmax.f32 %v3634, 0.0
        %v4884 = vmax.f32 %v3636, 0.0
        %v4885 = vmax.f32 %v3827, 0.0
        %v4886 = vmax.f32 %v3829, 0.0
        %v4887 = vmax.f32 %v4020, 0.0
        %v4888 = vmax.f32 %v4022, 0.0
        %v4889 = vmax.f32 %v4213, 0.0
        %v4890 = vmax.f32 %v4215, 0.0
        %v4891 = vmax.f32 %v4406, 0.0
        %v4892 = vmax.f32 %v4408, 0.0
        %v4893 = vmax.f32 %v4599, 0.0
        %v4894 = vmax.f32 %v4601, 0.0
        %v4895 = vmax.f32 %v3254, 0.0
        %v4896 = vmax.f32 %v3256, 0.0
        %v4897 = vmax.f32 %v3447, 0.0
        %v4898 = vmax.f32 %v3449, 0.0
        %v4899 = vmax.f32 %v3640, 0.0
        %v4900 = vmax.f32 %v3642, 0.0
        %v4901 = vmax.f32 %v3833, 0.0
        %v4902 = vmax.f32 %v3835, 0.0
        %v4903 = vmax.f32 %v4026, 0.0
        %v4904 = vmax.f32 %v4028, 0.0
        %v4905 = vmax.f32 %v4219, 0.0
        %v4906 = vmax.f32 %v4221, 0.0
        %v4907 = vmax.f32 %v4412, 0.0
        %v4908 = vmax.f32 %v4414, 0.0
        %v4909 = vmax.f32 %v4605, 0.0
        %v4910 = vmax.f32 %v4607, 0.0
        %v4911 = vmax.f32 %v3258, 0.0
        %v4912 = vmax.f32 %v3260, 0.0
        %v4913 = vmax.f32 %v3451, 0.0
        %v4914 = vmax.f32 %v3453, 0.0
        %v4915 = vmax.f32 %v3644, 0.0
        %v4916 = vmax.f32 %v3646, 0.0
        %v4917 = vmax.f32 %v3837, 0.0
        %v4918 = vmax.f32 %v3839, 0.0
        %v4919 = vmax.f32 %v4030, 0.0
        %v4920 = vmax.f32 %v4032, 0.0
        %v4921 = vmax.f32 %v4223, 0.0
        %v4922 = vmax.f32 %v4225, 0.0
        %v4923 = vmax.f32 %v4416, 0.0
        %v4924 = vmax.f32 %v4418, 0.0
        %v4925 = vmax.f32 %v4609, 0.0
        %v4926 = vmax.f32 %v4611, 0.0
        %v4927 = vmax.f32 %v3264, 0.0
        %v4928 = vmax.f32 %v3266, 0.0
        %v4929 = vmax.f32 %v3457, 0.0
        %v4930 = vmax.f32 %v3459, 0.0
        %v4931 = vmax.f32 %v3650, 0.0
        %v4932 = vmax.f32 %v3652, 0.0
        %v4933 = vmax.f32 %v3843, 0.0
        %v4934 = vmax.f32 %v3845, 0.0
        %v4935 = vmax.f32 %v4036, 0.0
        %v4936 = vmax.f32 %v4038, 0.0
        %v4937 = vmax.f32 %v4229, 0.0
        %v4938 = vmax.f32 %v4231, 0.0
        %v4939 = vmax.f32 %v4422, 0.0
        %v4940 = vmax.f32 %v4424, 0.0
        %v4941 = vmax.f32 %v4615, 0.0
        %v4942 = vmax.f32 %v4617, 0.0
        %v4943 = vmax.f32 %v3268, 0.0
        %v4944 = vmax.f32 %v3270, 0.0
        %v4945 = vmax.f32 %v3461, 0.0
        %v4946 = vmax.f32 %v3463, 0.0
        %v4947 = vmax.f32 %v3654, 0.0
        %v4948 = vmax.f32 %v3656, 0.0
        %v4949 = vmax.f32 %v3847, 0.0
        %v4950 = vmax.f32 %v3849, 0.0
        %v4951 = vmax.f32 %v4040, 0.0
        %v4952 = vmax.f32 %v4042, 0.0
        %v4953 = vmax.f32 %v4233, 0.0
        %v4954 = vmax.f32 %v4235, 0.0
        %v4955 = vmax.f32 %v4426, 0.0
        %v4956 = vmax.f32 %v4428, 0.0
        %v4957 = vmax.f32 %v4619, 0.0
        %v4958 = vmax.f32 %v4621, 0.0
        %v4959 = vmax.f32 %v3274, 0.0
        %v4960 = vmax.f32 %v3276, 0.0
        %v4961 = vmax.f32 %v3467, 0.0
        %v4962 = vmax.f32 %v3469, 0.0
        %v4963 = vmax.f32 %v3660, 0.0
        %v4964 = vmax.f32 %v3662, 0.0
        %v4965 = vmax.f32 %v3853, 0.0
        %v4966 = vmax.f32 %v3855, 0.0
        %v4967 = vmax.f32 %v4046, 0.0
        %v4968 = vmax.f32 %v4048, 0.0
        %v4969 = vmax.f32 %v4239, 0.0
        %v4970 = vmax.f32 %v4241, 0.0
        %v4971 = vmax.f32 %v4432, 0.0
        %v4972 = vmax.f32 %v4434, 0.0
        %v4973 = vmax.f32 %v4625, 0.0
        %v4974 = vmax.f32 %v4627, 0.0
        %v4975 = vmax.f32 %v3278, 0.0
        %v4976 = vmax.f32 %v3280, 0.0
        %v4977 = vmax.f32 %v3471, 0.0
        %v4978 = vmax.f32 %v3473, 0.0
        %v4979 = vmax.f32 %v3664, 0.0
        %v4980 = vmax.f32 %v3666, 0.0
        %v4981 = vmax.f32 %v3857, 0.0
        %v4982 = vmax.f32 %v3859, 0.0
        %v4983 = vmax.f32 %v4050, 0.0
        %v4984 = vmax.f32 %v4052, 0.0
        %v4985 = vmax.f32 %v4243, 0.0
        %v4986 = vmax.f32 %v4245, 0.0
        %v4987 = vmax.f32 %v4436, 0.0
        %v4988 = vmax.f32 %v4438, 0.0
        %v4989 = vmax.f32 %v4629, 0.0
        %v4990 = vmax.f32 %v4631, 0.0
        %v4991 = vmax.f32 %v3284, 0.0
        %v4992 = vmax.f32 %v3286, 0.0
        %v4993 = vmax.f32 %v3477, 0.0
        %v4994 = vmax.f32 %v3479, 0.0
        %v4995 = vmax.f32 %v3670, 0.0
        %v4996 = vmax.f32 %v3672, 0.0
        %v4997 = vmax.f32 %v3863, 0.0
        %v4998 = vmax.f32 %v3865, 0.0
        %v4999 = vmax.f32 %v4056, 0.0
        %v5000 = vmax.f32 %v4058, 0.0
        %v5001 = vmax.f32 %v4249, 0.0
        %v5002 = vmax.f32 %v4251, 0.0
        %v5003 = vmax.f32 %v4442, 0.0
        %v5004 = vmax.f32 %v4444, 0.0
        %v5005 = vmax.f32 %v4635, 0.0
        %v5006 = vmax.f32 %v4637, 0.0
        %v5007 = vmax.f32 %v3288, 0.0
        %v5008 = vmax.f32 %v3290, 0.0
        %v5009 = vmax.f32 %v3481, 0.0
        %v5010 = vmax.f32 %v3483, 0.0
        %v5011 = vmax.f32 %v3674, 0.0
        %v5012 = vmax.f32 %v3676, 0.0
        %v5013 = vmax.f32 %v3867, 0.0
        %v5014 = vmax.f32 %v3869, 0.0
        %v5015 = vmax.f32 %v4060, 0.0
        %v5016 = vmax.f32 %v4062, 0.0
        %v5017 = vmax.f32 %v4253, 0.0
        %v5018 = vmax.f32 %v4255, 0.0
        %v5019 = vmax.f32 %v4446, 0.0
        %v5020 = vmax.f32 %v4448, 0.0
        %v5021 = vmax.f32 %v4639, 0.0
        %v5022 = vmax.f32 %v4641, 0.0
        %v5023 = vmax.f32 %v3294, 0.0
        %v5024 = vmax.f32 %v3296, 0.0
        %v5025 = vmax.f32 %v3487, 0.0
        %v5026 = vmax.f32 %v3489, 0.0
        %v5027 = vmax.f32 %v3680, 0.0
        %v5028 = vmax.f32 %v3682, 0.0
        %v5029 = vmax.f32 %v3873, 0.0
        %v5030 = vmax.f32 %v3875, 0.0
        %v5031 = vmax.f32 %v4066, 0.0
        %v5032 = vmax.f32 %v4068, 0.0
        %v5033 = vmax.f32 %v4259, 0.0
        %v5034 = vmax.f32 %v4261, 0.0
        %v5035 = vmax.f32 %v4452, 0.0
        %v5036 = vmax.f32 %v4454, 0.0
        %v5037 = vmax.f32 %v4645, 0.0
        %v5038 = vmax.f32 %v4647, 0.0
        %v5039 = vmax.f32 %v3298, 0.0
        %v5040 = vmax.f32 %v3300, 0.0
        %v5041 = vmax.f32 %v3491, 0.0
        %v5042 = vmax.f32 %v3493, 0.0
        %v5043 = vmax.f32 %v3684, 0.0
        %v5044 = vmax.f32 %v3686, 0.0
        %v5045 = vmax.f32 %v3877, 0.0
        %v5046 = vmax.f32 %v3879, 0.0
        %v5047 = vmax.f32 %v4070, 0.0
        %v5048 = vmax.f32 %v4072, 0.0
        %v5049 = vmax.f32 %v4263, 0.0
        %v5050 = vmax.f32 %v4265, 0.0
        %v5051 = vmax.f32 %v4456, 0.0
        %v5052 = vmax.f32 %v4458, 0.0
        %v5053 = vmax.f32 %v4649, 0.0
        %v5054 = vmax.f32 %v4651, 0.0
        %v5055 = vmax.f32 %v3304, 0.0
        %v5056 = vmax.f32 %v3306, 0.0
        %v5057 = vmax.f32 %v3497, 0.0
        %v5058 = vmax.f32 %v3499, 0.0
        %v5059 = vmax.f32 %v3690, 0.0
        %v5060 = vmax.f32 %v3692, 0.0
        %v5061 = vmax.f32 %v3883, 0.0
        %v5062 = vmax.f32 %v3885, 0.0
        %v5063 = vmax.f32 %v4076, 0.0
        %v5064 = vmax.f32 %v4078, 0.0
        %v5065 = vmax.f32 %v4269, 0.0
        %v5066 = vmax.f32 %v4271, 0.0
        %v5067 = vmax.f32 %v4462, 0.0
        %v5068 = vmax.f32 %v4464, 0.0
        %v5069 = vmax.f32 %v4655, 0.0
        %v5070 = vmax.f32 %v4657, 0.0
        %v5071 = vmax.f32 %v3308, 0.0
        %v5072 = vmax.f32 %v3310, 0.0
        %v5073 = vmax.f32 %v3501, 0.0
        %v5074 = vmax.f32 %v3503, 0.0
        %v5075 = vmax.f32 %v3694, 0.0
        %v5076 = vmax.f32 %v3696, 0.0
        %v5077 = vmax.f32 %v3887, 0.0
        %v5078 = vmax.f32 %v3889, 0.0
        %v5079 = vmax.f32 %v4080, 0.0
        %v5080 = vmax.f32 %v4082, 0.0
        %v5081 = vmax.f32 %v4273, 0.0
        %v5082 = vmax.f32 %v4275, 0.0
        %v5083 = vmax.f32 %v4466, 0.0
        %v5084 = vmax.f32 %v4468, 0.0
        %v5085 = vmax.f32 %v4659, 0.0
        %v5086 = vmax.f32 %v4661, 0.0
        %v5087 = vmax.f32 %v3314, 0.0
        %v5088 = vmax.f32 %v3316, 0.0
        %v5089 = vmax.f32 %v3507, 0.0
        %v5090 = vmax.f32 %v3509, 0.0
        %v5091 = vmax.f32 %v3700, 0.0
        %v5092 = vmax.f32 %v3702, 0.0
        %v5093 = vmax.f32 %v3893, 0.0
        %v5094 = vmax.f32 %v3895, 0.0
        %v5095 = vmax.f32 %v4086, 0.0
        %v5096 = vmax.f32 %v4088, 0.0
        %v5097 = vmax.f32 %v4279, 0.0
        %v5098 = vmax.f32 %v4281, 0.0
        %v5099 = vmax.f32 %v4472, 0.0
        %v5100 = vmax.f32 %v4474, 0.0
        %v5101 = vmax.f32 %v4665, 0.0
        %v5102 = vmax.f32 %v4667, 0.0
        %v5103 = vmax.f32 %v3318, 0.0
        %v5104 = vmax.f32 %v3320, 0.0
        %v5105 = vmax.f32 %v3511, 0.0
        %v5106 = vmax.f32 %v3513, 0.0
        %v5107 = vmax.f32 %v3704, 0.0
        %v5108 = vmax.f32 %v3706, 0.0
        %v5109 = vmax.f32 %v3897, 0.0
        %v5110 = vmax.f32 %v3899, 0.0
        %v5111 = vmax.f32 %v4090, 0.0
        %v5112 = vmax.f32 %v4092, 0.0
        %v5113 = vmax.f32 %v4283, 0.0
        %v5114 = vmax.f32 %v4285, 0.0
        %v5115 = vmax.f32 %v4476, 0.0
        %v5116 = vmax.f32 %v4478, 0.0
        %v5117 = vmax.f32 %v4669, 0.0
        %v5118 = vmax.f32 %v4671, 0.0
        %v5119 = vmax.f32 %v3324, 0.0
        %v5120 = vmax.f32 %v3326, 0.0
        %v5121 = vmax.f32 %v3517, 0.0
        %v5122 = vmax.f32 %v3519, 0.0
        %v5123 = vmax.f32 %v3710, 0.0
        %v5124 = vmax.f32 %v3712, 0.0
        %v5125 = vmax.f32 %v3903, 0.0
        %v5126 = vmax.f32 %v3905, 0.0
        %v5127 = vmax.f32 %v4096, 0.0
        %v5128 = vmax.f32 %v4098, 0.0
        %v5129 = vmax.f32 %v4289, 0.0
        %v5130 = vmax.f32 %v4291, 0.0
        %v5131 = vmax.f32 %v4482, 0.0
        %v5132 = vmax.f32 %v4484, 0.0
        %v5133 = vmax.f32 %v4675, 0.0
        %v5134 = vmax.f32 %v4677, 0.0
        %v5135 = vmax.f32 %v3328, 0.0
        %v5136 = vmax.f32 %v3330, 0.0
        %v5137 = vmax.f32 %v3521, 0.0
        %v5138 = vmax.f32 %v3523, 0.0
        %v5139 = vmax.f32 %v3714, 0.0
        %v5140 = vmax.f32 %v3716, 0.0
        %v5141 = vmax.f32 %v3907, 0.0
        %v5142 = vmax.f32 %v3909, 0.0
        %v5143 = vmax.f32 %v4100, 0.0
        %v5144 = vmax.f32 %v4102, 0.0
        %v5145 = vmax.f32 %v4293, 0.0
        %v5146 = vmax.f32 %v4295, 0.0
        %v5147 = vmax.f32 %v4486, 0.0
        %v5148 = vmax.f32 %v4488, 0.0
        %v5149 = vmax.f32 %v4679, 0.0
        %v5150 = vmax.f32 %v4681, 0.0
        %v5151 = vmax.f32 %v3334, 0.0
        %v5152 = vmax.f32 %v3336, 0.0
        %v5153 = vmax.f32 %v3527, 0.0
        %v5154 = vmax.f32 %v3529, 0.0
        %v5155 = vmax.f32 %v3720, 0.0
        %v5156 = vmax.f32 %v3722, 0.0
        %v5157 = vmax.f32 %v3913, 0.0
        %v5158 = vmax.f32 %v3915, 0.0
        %v5159 = vmax.f32 %v4106, 0.0
        %v5160 = vmax.f32 %v4108, 0.0
        %v5161 = vmax.f32 %v4299, 0.0
        %v5162 = vmax.f32 %v4301, 0.0
        %v5163 = vmax.f32 %v4492, 0.0
        %v5164 = vmax.f32 %v4494, 0.0
        %v5165 = vmax.f32 %v4685, 0.0
        %v5166 = vmax.f32 %v4687, 0.0
        %v5167 = vmax.f32 %v3338, 0.0
        %v5168 = vmax.f32 %v3340, 0.0
        %v5169 = vmax.f32 %v3531, 0.0
        %v5170 = vmax.f32 %v3533, 0.0
        %v5171 = vmax.f32 %v3724, 0.0
        %v5172 = vmax.f32 %v3726, 0.0
        %v5173 = vmax.f32 %v3917, 0.0
        %v5174 = vmax.f32 %v3919, 0.0
        %v5175 = vmax.f32 %v4110, 0.0
        %v5176 = vmax.f32 %v4112, 0.0
        %v5177 = vmax.f32 %v4303, 0.0
        %v5178 = vmax.f32 %v4305, 0.0
        %v5179 = vmax.f32 %v4496, 0.0
        %v5180 = vmax.f32 %v4498, 0.0
        %v5181 = vmax.f32 %v4689, 0.0
        %v5182 = vmax.f32 %v4691, 0.0
        %v5183 = vmax.f32 %v3344, 0.0
        %v5184 = vmax.f32 %v3346, 0.0
        %v5185 = vmax.f32 %v3537, 0.0
        %v5186 = vmax.f32 %v3539, 0.0
        %v5187 = vmax.f32 %v3730, 0.0
        %v5188 = vmax.f32 %v3732, 0.0
        %v5189 = vmax.f32 %v3923, 0.0
        %v5190 = vmax.f32 %v3925, 0.0
        %v5191 = vmax.f32 %v4116, 0.0
        %v5192 = vmax.f32 %v4118, 0.0
        %v5193 = vmax.f32 %v4309, 0.0
        %v5194 = vmax.f32 %v4311, 0.0
        %v5195 = vmax.f32 %v4502, 0.0
        %v5196 = vmax.f32 %v4504, 0.0
        %v5197 = vmax.f32 %v4695, 0.0
        %v5198 = vmax.f32 %v4697, 0.0
        %v5199 = vmax.f32 %v3348, 0.0
        %v5200 = vmax.f32 %v3350, 0.0
        %v5201 = vmax.f32 %v3541, 0.0
        %v5202 = vmax.f32 %v3543, 0.0
        %v5203 = vmax.f32 %v3734, 0.0
        %v5204 = vmax.f32 %v3736, 0.0
        %v5205 = vmax.f32 %v3927, 0.0
        %v5206 = vmax.f32 %v3929, 0.0
        %v5207 = vmax.f32 %v4120, 0.0
        %v5208 = vmax.f32 %v4122, 0.0
        %v5209 = vmax.f32 %v4313, 0.0
        %v5210 = vmax.f32 %v4315, 0.0
        %v5211 = vmax.f32 %v4506, 0.0
        %v5212 = vmax.f32 %v4508, 0.0
        %v5213 = vmax.f32 %v4699, 0.0
        %v5214 = vmax.f32 %v4701, 0.0
        %v5215 = vpack.c.bf16 %v4719, %v4703
        %v5216 = vpack.c.bf16 %v4720, %v4704
        %v5217 = vpack.c.bf16 %v4721, %v4705
        %v5218 = vpack.c.bf16 %v4722, %v4706
        %v5219 = vpack.c.bf16 %v4723, %v4707
        %v5220 = vpack.c.bf16 %v4724, %v4708
        %v5221 = vpack.c.bf16 %v4725, %v4709
        %v5222 = vpack.c.bf16 %v4726, %v4710
        %v5223 = vpack.c.bf16 %v4727, %v4711
        %v5224 = vpack.c.bf16 %v4728, %v4712
        %v5225 = vpack.c.bf16 %v4729, %v4713
        %v5226 = vpack.c.bf16 %v4730, %v4714
        %v5227 = vpack.c.bf16 %v4731, %v4715
        %v5228 = vpack.c.bf16 %v4732, %v4716
        %v5229 = vpack.c.bf16 %v4733, %v4717
        %v5230 = vpack.c.bf16 %v4734, %v4718
        %v5231 = vpack.c.bf16 %v4751, %v4735
        %v5232 = vpack.c.bf16 %v4752, %v4736
        %v5233 = vpack.c.bf16 %v4753, %v4737
        %v5234 = vpack.c.bf16 %v4754, %v4738
        %v5235 = vpack.c.bf16 %v4755, %v4739
        %v5236 = vpack.c.bf16 %v4756, %v4740
        %v5237 = vpack.c.bf16 %v4757, %v4741
        %v5238 = vpack.c.bf16 %v4758, %v4742
        %v5239 = vpack.c.bf16 %v4759, %v4743
        %v5240 = vpack.c.bf16 %v4760, %v4744
        %v5241 = vpack.c.bf16 %v4761, %v4745
        %v5242 = vpack.c.bf16 %v4762, %v4746
        %v5243 = vpack.c.bf16 %v4763, %v4747
        %v5244 = vpack.c.bf16 %v4764, %v4748
        %v5245 = vpack.c.bf16 %v4765, %v4749
        %v5246 = vpack.c.bf16 %v4766, %v4750
        %v5247 = vpack.c.bf16 %v4783, %v4767
        %v5248 = vpack.c.bf16 %v4784, %v4768
        %v5249 = vpack.c.bf16 %v4785, %v4769
        %v5250 = vpack.c.bf16 %v4786, %v4770
        %v5251 = vpack.c.bf16 %v4787, %v4771
        %v5252 = vpack.c.bf16 %v4788, %v4772
        %v5253 = vpack.c.bf16 %v4789, %v4773
        %v5254 = vpack.c.bf16 %v4790, %v4774
        %v5255 = vpack.c.bf16 %v4791, %v4775
        %v5256 = vpack.c.bf16 %v4792, %v4776
        %v5257 = vpack.c.bf16 %v4793, %v4777
        %v5258 = vpack.c.bf16 %v4794, %v4778
        %v5259 = vpack.c.bf16 %v4795, %v4779
        %v5260 = vpack.c.bf16 %v4796, %v4780
        %v5261 = vpack.c.bf16 %v4797, %v4781
        %v5262 = vpack.c.bf16 %v4798, %v4782
        %v5263 = vpack.c.bf16 %v4815, %v4799
        %v5264 = vpack.c.bf16 %v4816, %v4800
        %v5265 = vpack.c.bf16 %v4817, %v4801
        %v5266 = vpack.c.bf16 %v4818, %v4802
        %v5267 = vpack.c.bf16 %v4819, %v4803
        %v5268 = vpack.c.bf16 %v4820, %v4804
        %v5269 = vpack.c.bf16 %v4821, %v4805
        %v5270 = vpack.c.bf16 %v4822, %v4806
        %v5271 = vpack.c.bf16 %v4823, %v4807
        %v5272 = vpack.c.bf16 %v4824, %v4808
        %v5273 = vpack.c.bf16 %v4825, %v4809
        %v5274 = vpack.c.bf16 %v4826, %v4810
        %v5275 = vpack.c.bf16 %v4827, %v4811
        %v5276 = vpack.c.bf16 %v4828, %v4812
        %v5277 = vpack.c.bf16 %v4829, %v4813
        %v5278 = vpack.c.bf16 %v4830, %v4814
        %v5279 = vpack.c.bf16 %v4847, %v4831
        %v5280 = vpack.c.bf16 %v4848, %v4832
        %v5281 = vpack.c.bf16 %v4849, %v4833
        %v5282 = vpack.c.bf16 %v4850, %v4834
        %v5283 = vpack.c.bf16 %v4851, %v4835
        %v5284 = vpack.c.bf16 %v4852, %v4836
        %v5285 = vpack.c.bf16 %v4853, %v4837
        %v5286 = vpack.c.bf16 %v4854, %v4838
        %v5287 = vpack.c.bf16 %v4855, %v4839
        %v5288 = vpack.c.bf16 %v4856, %v4840
        %v5289 = vpack.c.bf16 %v4857, %v4841
        %v5290 = vpack.c.bf16 %v4858, %v4842
        %v5291 = vpack.c.bf16 %v4859, %v4843
        %v5292 = vpack.c.bf16 %v4860, %v4844
        %v5293 = vpack.c.bf16 %v4861, %v4845
        %v5294 = vpack.c.bf16 %v4862, %v4846
        %v5295 = vpack.c.bf16 %v4879, %v4863
        %v5296 = vpack.c.bf16 %v4880, %v4864
        %v5297 = vpack.c.bf16 %v4881, %v4865
        %v5298 = vpack.c.bf16 %v4882, %v4866
        %v5299 = vpack.c.bf16 %v4883, %v4867
        %v5300 = vpack.c.bf16 %v4884, %v4868
        %v5301 = vpack.c.bf16 %v4885, %v4869
        %v5302 = vpack.c.bf16 %v4886, %v4870
        %v5303 = vpack.c.bf16 %v4887, %v4871
        %v5304 = vpack.c.bf16 %v4888, %v4872
        %v5305 = vpack.c.bf16 %v4889, %v4873
        %v5306 = vpack.c.bf16 %v4890, %v4874
        %v5307 = vpack.c.bf16 %v4891, %v4875
        %v5308 = vpack.c.bf16 %v4892, %v4876
        %v5309 = vpack.c.bf16 %v4893, %v4877
        %v5310 = vpack.c.bf16 %v4894, %v4878
        %v5311 = vpack.c.bf16 %v4911, %v4895
        %v5312 = vpack.c.bf16 %v4912, %v4896
        %v5313 = vpack.c.bf16 %v4913, %v4897
        %v5314 = vpack.c.bf16 %v4914, %v4898
        %v5315 = vpack.c.bf16 %v4915, %v4899
        %v5316 = vpack.c.bf16 %v4916, %v4900
        %v5317 = vpack.c.bf16 %v4917, %v4901
        %v5318 = vpack.c.bf16 %v4918, %v4902
        %v5319 = vpack.c.bf16 %v4919, %v4903
        %v5320 = vpack.c.bf16 %v4920, %v4904
        %v5321 = vpack.c.bf16 %v4921, %v4905
        %v5322 = vpack.c.bf16 %v4922, %v4906
        %v5323 = vpack.c.bf16 %v4923, %v4907
        %v5324 = vpack.c.bf16 %v4924, %v4908
        %v5325 = vpack.c.bf16 %v4925, %v4909
        %v5326 = vpack.c.bf16 %v4926, %v4910
        %v5327 = vpack.c.bf16 %v4943, %v4927
        %v5328 = vpack.c.bf16 %v4944, %v4928
        %v5329 = vpack.c.bf16 %v4945, %v4929
        %v5330 = vpack.c.bf16 %v4946, %v4930
        %v5331 = vpack.c.bf16 %v4947, %v4931
        %v5332 = vpack.c.bf16 %v4948, %v4932
        %v5333 = vpack.c.bf16 %v4949, %v4933
        %v5334 = vpack.c.bf16 %v4950, %v4934
        %v5335 = vpack.c.bf16 %v4951, %v4935
        %v5336 = vpack.c.bf16 %v4952, %v4936
        %v5337 = vpack.c.bf16 %v4953, %v4937
        %v5338 = vpack.c.bf16 %v4954, %v4938
        %v5339 = vpack.c.bf16 %v4955, %v4939
        %v5340 = vpack.c.bf16 %v4956, %v4940
        %v5341 = vpack.c.bf16 %v4957, %v4941
        %v5342 = vpack.c.bf16 %v4958, %v4942
        %v5343 = vpack.c.bf16 %v4975, %v4959
        %v5344 = vpack.c.bf16 %v4976, %v4960
        %v5345 = vpack.c.bf16 %v4977, %v4961
        %v5346 = vpack.c.bf16 %v4978, %v4962
        %v5347 = vpack.c.bf16 %v4979, %v4963
        %v5348 = vpack.c.bf16 %v4980, %v4964
        %v5349 = vpack.c.bf16 %v4981, %v4965
        %v5350 = vpack.c.bf16 %v4982, %v4966
        %v5351 = vpack.c.bf16 %v4983, %v4967
        %v5352 = vpack.c.bf16 %v4984, %v4968
        %v5353 = vpack.c.bf16 %v4985, %v4969
        %v5354 = vpack.c.bf16 %v4986, %v4970
        %v5355 = vpack.c.bf16 %v4987, %v4971
        %v5356 = vpack.c.bf16 %v4988, %v4972
        %v5357 = vpack.c.bf16 %v4989, %v4973
        %v5358 = vpack.c.bf16 %v4990, %v4974
        %v5359 = vpack.c.bf16 %v5007, %v4991
        %v5360 = vpack.c.bf16 %v5008, %v4992
        %v5361 = vpack.c.bf16 %v5009, %v4993
        %v5362 = vpack.c.bf16 %v5010, %v4994
        %v5363 = vpack.c.bf16 %v5011, %v4995
        %v5364 = vpack.c.bf16 %v5012, %v4996
        %v5365 = vpack.c.bf16 %v5013, %v4997
        %v5366 = vpack.c.bf16 %v5014, %v4998
        %v5367 = vpack.c.bf16 %v5015, %v4999
        %v5368 = vpack.c.bf16 %v5016, %v5000
        %v5369 = vpack.c.bf16 %v5017, %v5001
        %v5370 = vpack.c.bf16 %v5018, %v5002
        %v5371 = vpack.c.bf16 %v5019, %v5003
        %v5372 = vpack.c.bf16 %v5020, %v5004
        %v5373 = vpack.c.bf16 %v5021, %v5005
        %v5374 = vpack.c.bf16 %v5022, %v5006
        %v5375 = vpack.c.bf16 %v5039, %v5023
        %v5376 = vpack.c.bf16 %v5040, %v5024
        %v5377 = vpack.c.bf16 %v5041, %v5025
        %v5378 = vpack.c.bf16 %v5042, %v5026
        %v5379 = vpack.c.bf16 %v5043, %v5027
        %v5380 = vpack.c.bf16 %v5044, %v5028
        %v5381 = vpack.c.bf16 %v5045, %v5029
        %v5382 = vpack.c.bf16 %v5046, %v5030
        %v5383 = vpack.c.bf16 %v5047, %v5031
        %v5384 = vpack.c.bf16 %v5048, %v5032
        %v5385 = vpack.c.bf16 %v5049, %v5033
        %v5386 = vpack.c.bf16 %v5050, %v5034
        %v5387 = vpack.c.bf16 %v5051, %v5035
        %v5388 = vpack.c.bf16 %v5052, %v5036
        %v5389 = vpack.c.bf16 %v5053, %v5037
        %v5390 = vpack.c.bf16 %v5054, %v5038
        %v5391 = vpack.c.bf16 %v5071, %v5055
        %v5392 = vpack.c.bf16 %v5072, %v5056
        %v5393 = vpack.c.bf16 %v5073, %v5057
        %v5394 = vpack.c.bf16 %v5074, %v5058
        %v5395 = vpack.c.bf16 %v5075, %v5059
        %v5396 = vpack.c.bf16 %v5076, %v5060
        %v5397 = vpack.c.bf16 %v5077, %v5061
        %v5398 = vpack.c.bf16 %v5078, %v5062
        %v5399 = vpack.c.bf16 %v5079, %v5063
        %v5400 = vpack.c.bf16 %v5080, %v5064
        %v5401 = vpack.c.bf16 %v5081, %v5065
        %v5402 = vpack.c.bf16 %v5082, %v5066
        %v5403 = vpack.c.bf16 %v5083, %v5067
        %v5404 = vpack.c.bf16 %v5084, %v5068
        %v5405 = vpack.c.bf16 %v5085, %v5069
        %v5406 = vpack.c.bf16 %v5086, %v5070
        %v5407 = vpack.c.bf16 %v5103, %v5087
        %v5408 = vpack.c.bf16 %v5104, %v5088
        %v5409 = vpack.c.bf16 %v5105, %v5089
        %v5410 = vpack.c.bf16 %v5106, %v5090
        %v5411 = vpack.c.bf16 %v5107, %v5091
        %v5412 = vpack.c.bf16 %v5108, %v5092
        %v5413 = vpack.c.bf16 %v5109, %v5093
        %v5414 = vpack.c.bf16 %v5110, %v5094
        %v5415 = vpack.c.bf16 %v5111, %v5095
        %v5416 = vpack.c.bf16 %v5112, %v5096
        %v5417 = vpack.c.bf16 %v5113, %v5097
        %v5418 = vpack.c.bf16 %v5114, %v5098
        %v5419 = vpack.c.bf16 %v5115, %v5099
        %v5420 = vpack.c.bf16 %v5116, %v5100
        %v5421 = vpack.c.bf16 %v5117, %v5101
        %v5422 = vpack.c.bf16 %v5118, %v5102
        %v5423 = vpack.c.bf16 %v5135, %v5119
        %v5424 = vpack.c.bf16 %v5136, %v5120
        %v5425 = vpack.c.bf16 %v5137, %v5121
        %v5426 = vpack.c.bf16 %v5138, %v5122
        %v5427 = vpack.c.bf16 %v5139, %v5123
        %v5428 = vpack.c.bf16 %v5140, %v5124
        %v5429 = vpack.c.bf16 %v5141, %v5125
        %v5430 = vpack.c.bf16 %v5142, %v5126
        %v5431 = vpack.c.bf16 %v5143, %v5127
        %v5432 = vpack.c.bf16 %v5144, %v5128
        %v5433 = vpack.c.bf16 %v5145, %v5129
        %v5434 = vpack.c.bf16 %v5146, %v5130
        %v5435 = vpack.c.bf16 %v5147, %v5131
        %v5436 = vpack.c.bf16 %v5148, %v5132
        %v5437 = vpack.c.bf16 %v5149, %v5133
        %v5438 = vpack.c.bf16 %v5150, %v5134
        %v5439 = vpack.c.bf16 %v5167, %v5151
        %v5440 = vpack.c.bf16 %v5168, %v5152
        %v5441 = vpack.c.bf16 %v5169, %v5153
        %v5442 = vpack.c.bf16 %v5170, %v5154
        %v5443 = vpack.c.bf16 %v5171, %v5155
        %v5444 = vpack.c.bf16 %v5172, %v5156
        %v5445 = vpack.c.bf16 %v5173, %v5157
        %v5446 = vpack.c.bf16 %v5174, %v5158
        %v5447 = vpack.c.bf16 %v5175, %v5159
        %v5448 = vpack.c.bf16 %v5176, %v5160
        %v5449 = vpack.c.bf16 %v5177, %v5161
        %v5450 = vpack.c.bf16 %v5178, %v5162
        %v5451 = vpack.c.bf16 %v5179, %v5163
        %v5452 = vpack.c.bf16 %v5180, %v5164
        %v5453 = vpack.c.bf16 %v5181, %v5165
        %v5454 = vpack.c.bf16 %v5182, %v5166
        %v5455 = vpack.c.bf16 %v5199, %v5183
        %v5456 = vpack.c.bf16 %v5200, %v5184
        %v5457 = vpack.c.bf16 %v5201, %v5185
        %v5458 = vpack.c.bf16 %v5202, %v5186
        %v5459 = vpack.c.bf16 %v5203, %v5187
        %v5460 = vpack.c.bf16 %v5204, %v5188
        %v5461 = vpack.c.bf16 %v5205, %v5189
        %v5462 = vpack.c.bf16 %v5206, %v5190
        %v5463 = vpack.c.bf16 %v5207, %v5191
        %v5464 = vpack.c.bf16 %v5208, %v5192
        %v5465 = vpack.c.bf16 %v5209, %v5193
        %v5466 = vpack.c.bf16 %v5210, %v5194
        %v5467 = vpack.c.bf16 %v5211, %v5195
        %v5468 = vpack.c.bf16 %v5212, %v5196
        %v5469 = vpack.c.bf16 %v5213, %v5197
        %v5470 = vpack.c.bf16 %v5214, %v5198
        %v5471 = vld [vmem:[#allocation3] sm:$0xff]
        %v5472 = vld [vmem:[#allocation3 + $0x8] sm:$0xff]
        %v5473 = vld [vmem:[#allocation3 + $0x10] sm:$0xff]
        %v5474 = vld [vmem:[#allocation3 + $0x18] sm:$0xff]
        %v5475 = vld [vmem:[#allocation3 + $0x20] sm:$0xff]
        %v5476 = vld [vmem:[#allocation3 + $0x28] sm:$0xff]
        %v5477 = vld [vmem:[#allocation3 + $0x30] sm:$0xff]
        %v5478 = vld [vmem:[#allocation3 + $0x38] sm:$0xff]
        %v5479 = vld [vmem:[#allocation3 + $0x40] sm:$0xff]
        %v5480 = vld [vmem:[#allocation3 + $0x48] sm:$0xff]
        %v5481 = vld [vmem:[#allocation3 + $0x50] sm:$0xff]
        %v5482 = vld [vmem:[#allocation3 + $0x58] sm:$0xff]
        %v5483 = vld [vmem:[#allocation3 + $0x60] sm:$0xff]
        %v5484 = vld [vmem:[#allocation3 + $0x68] sm:$0xff]
        %v5485 = vld [vmem:[#allocation3 + $0x70] sm:$0xff]
        %v5486 = vld [vmem:[#allocation3 + $0x78] sm:$0xff]
        %v5487 = vld [vmem:[#allocation3 + $0x80] sm:$0xff]
        %v5488 = vld [vmem:[#allocation3 + $0x88] sm:$0xff]
        %v5489 = vld [vmem:[#allocation3 + $0x90] sm:$0xff]
        %v5490 = vld [vmem:[#allocation3 + $0x98] sm:$0xff]
        %v5491 = vld [vmem:[#allocation3 + $0xa0] sm:$0xff]
        %v5492 = vld [vmem:[#allocation3 + $0xa8] sm:$0xff]
        %v5493 = vld [vmem:[#allocation3 + $0xb0] sm:$0xff]
        %v5494 = vld [vmem:[#allocation3 + $0xb8] sm:$0xff]
        %v5495 = vld [vmem:[#allocation3 + $0xc0] sm:$0xff]
        %v5496 = vld [vmem:[#allocation3 + $0xc8] sm:$0xff]
        %v5497 = vld [vmem:[#allocation3 + $0xd0] sm:$0xff]
        %v5498 = vld [vmem:[#allocation3 + $0xd8] sm:$0xff]
        %v5499 = vld [vmem:[#allocation3 + $0xe0] sm:$0xff]
        %v5500 = vld [vmem:[#allocation3 + $0xe8] sm:$0xff]
        %v5501 = vld [vmem:[#allocation3 + $0xf0] sm:$0xff]
        %v5502 = vld [vmem:[#allocation3 + $0xf8] sm:$0xff]
        %v5503 = vld [vmem:[%s425] sm:$0xf]
        %v5504 = vld [vmem:[%s425 + $0x4] sm:$0xf]
        %v5505 = vld [vmem:[%s425 + $0x8] sm:$0xf]
        %v5506 = vld [vmem:[%s425 + $0xc] sm:$0xf]
        %v5507 = vld [vmem:[%s425 + $0x10] sm:$0xf]
        %v5508 = vld [vmem:[%s425 + $0x14] sm:$0xf]
        %v5509 = vld [vmem:[%s425 + $0x18] sm:$0xf]
        %v5510 = vld [vmem:[%s425 + $0x1c] sm:$0xf]
        %v5511 = vld [vmem:[%s425 + $0x20] sm:$0xf]
        %v5512 = vld [vmem:[%s425 + $0x24] sm:$0xf]
        %v5513 = vld [vmem:[%s425 + $0x28] sm:$0xf]
        %v5514 = vld [vmem:[%s425 + $0x2c] sm:$0xf]
        %v5515 = vld [vmem:[%s425 + $0x30] sm:$0xf]
        %v5516 = vld [vmem:[%s425 + $0x34] sm:$0xf]
        %v5517 = vld [vmem:[%s425 + $0x38] sm:$0xf]
        %v5518 = vld [vmem:[%s425 + $0x3c] sm:$0xf]
        %v5519 = vld [vmem:[%s425 + $0x40] sm:$0xf]
        %v5520 = vld [vmem:[%s425 + $0x44] sm:$0xf]
        %v5521 = vld [vmem:[%s425 + $0x48] sm:$0xf]
        %v5522 = vld [vmem:[%s425 + $0x4c] sm:$0xf]
        %v5523 = vld [vmem:[%s425 + $0x50] sm:$0xf]
        %v5524 = vld [vmem:[%s425 + $0x54] sm:$0xf]
        %v5525 = vld [vmem:[%s425 + $0x58] sm:$0xf]
        %v5526 = vld [vmem:[%s425 + $0x5c] sm:$0xf]
        %v5527 = vld [vmem:[%s425 + $0x60] sm:$0xf]
        %v5528 = vld [vmem:[%s425 + $0x64] sm:$0xf]
        %v5529 = vld [vmem:[%s425 + $0x68] sm:$0xf]
        %v5530 = vld [vmem:[%s425 + $0x6c] sm:$0xf]
        %v5531 = vld [vmem:[%s425 + $0x70] sm:$0xf]
        %v5532 = vld [vmem:[%s425 + $0x74] sm:$0xf]
        %v5533 = vld [vmem:[%s425 + $0x78] sm:$0xf]
        %v5534 = vld [vmem:[%s425 + $0x7c] sm:$0xf]
        %v5535 = vld [vmem:[%s425 + $0x80] sm:$0xf]
        %v5536 = vld [vmem:[%s425 + $0x84] sm:$0xf]
        %v5537 = vld [vmem:[%s425 + $0x88] sm:$0xf]
        %v5538 = vld [vmem:[%s425 + $0x8c] sm:$0xf]
        %v5539 = vld [vmem:[%s425 + $0x90] sm:$0xf]
        %v5540 = vld [vmem:[%s425 + $0x94] sm:$0xf]
        %v5541 = vld [vmem:[%s425 + $0x98] sm:$0xf]
        %v5542 = vld [vmem:[%s425 + $0x9c] sm:$0xf]
        %v5543 = vld [vmem:[%s425 + $0xa0] sm:$0xf]
        %v5544 = vld [vmem:[%s425 + $0xa4] sm:$0xf]
        %v5545 = vld [vmem:[%s425 + $0xa8] sm:$0xf]
        %v5546 = vld [vmem:[%s425 + $0xac] sm:$0xf]
        %v5547 = vld [vmem:[%s425 + $0xb0] sm:$0xf]
        %v5548 = vld [vmem:[%s425 + $0xb4] sm:$0xf]
        %v5549 = vld [vmem:[%s425 + $0xb8] sm:$0xf]
        %v5550 = vld [vmem:[%s425 + $0xbc] sm:$0xf]
        %v5551 = vld [vmem:[%s425 + $0xc0] sm:$0xf]
        %v5552 = vld [vmem:[%s425 + $0xc4] sm:$0xf]
        %v5553 = vld [vmem:[%s425 + $0xc8] sm:$0xf]
        %v5554 = vld [vmem:[%s425 + $0xcc] sm:$0xf]
        %v5555 = vld [vmem:[%s425 + $0xd0] sm:$0xf]
        %v5556 = vld [vmem:[%s425 + $0xd4] sm:$0xf]
        %v5557 = vld [vmem:[%s425 + $0xd8] sm:$0xf]
        %v5558 = vld [vmem:[%s425 + $0xdc] sm:$0xf]
        %v5559 = vld [vmem:[%s425 + $0xe0] sm:$0xf]
        %v5560 = vld [vmem:[%s425 + $0xe4] sm:$0xf]
        %v5561 = vld [vmem:[%s425 + $0xe8] sm:$0xf]
        %v5562 = vld [vmem:[%s425 + $0xec] sm:$0xf]
        %v5563 = vld [vmem:[%s425 + $0xf0] sm:$0xf]
        %v5564 = vld [vmem:[%s425 + $0xf4] sm:$0xf]
        %v5565 = vld [vmem:[%s425 + $0xf8] sm:$0xf]
        %v5566 = vld [vmem:[%s425 + $0xfc] sm:$0xf]
        %v5567 = vld [vmem:[%s425 + $0x100] sm:$0xf]
        %v5568 = vld [vmem:[%s425 + $0x104] sm:$0xf]
        %v5569 = vld [vmem:[%s425 + $0x108] sm:$0xf]
        %v5570 = vld [vmem:[%s425 + $0x10c] sm:$0xf]
        %v5571 = vld [vmem:[%s425 + $0x110] sm:$0xf]
        %v5572 = vld [vmem:[%s425 + $0x114] sm:$0xf]
        %v5573 = vld [vmem:[%s425 + $0x118] sm:$0xf]
        %v5574 = vld [vmem:[%s425 + $0x11c] sm:$0xf]
        %v5575 = vld [vmem:[%s425 + $0x120] sm:$0xf]
        %v5576 = vld [vmem:[%s425 + $0x124] sm:$0xf]
        %v5577 = vld [vmem:[%s425 + $0x128] sm:$0xf]
        %v5578 = vld [vmem:[%s425 + $0x12c] sm:$0xf]
        %v5579 = vld [vmem:[%s425 + $0x130] sm:$0xf]
        %v5580 = vld [vmem:[%s425 + $0x134] sm:$0xf]
        %v5581 = vld [vmem:[%s425 + $0x138] sm:$0xf]
        %v5582 = vld [vmem:[%s425 + $0x13c] sm:$0xf]
        %v5583 = vld [vmem:[%s425 + $0x140] sm:$0xf]
        %v5584 = vld [vmem:[%s425 + $0x144] sm:$0xf]
        %v5585 = vld [vmem:[%s425 + $0x148] sm:$0xf]
        %v5586 = vld [vmem:[%s425 + $0x14c] sm:$0xf]
        %v5587 = vld [vmem:[%s425 + $0x150] sm:$0xf]
        %v5588 = vld [vmem:[%s425 + $0x154] sm:$0xf]
        %v5589 = vld [vmem:[%s425 + $0x158] sm:$0xf]
        %v5590 = vld [vmem:[%s425 + $0x15c] sm:$0xf]
        %v5591 = vld [vmem:[%s425 + $0x160] sm:$0xf]
        %v5592 = vld [vmem:[%s425 + $0x164] sm:$0xf]
        %v5593 = vld [vmem:[%s425 + $0x168] sm:$0xf]
        %v5594 = vld [vmem:[%s425 + $0x16c] sm:$0xf]
        %v5595 = vld [vmem:[%s425 + $0x170] sm:$0xf]
        %v5596 = vld [vmem:[%s425 + $0x174] sm:$0xf]
        %v5597 = vld [vmem:[%s425 + $0x178] sm:$0xf]
        %v5598 = vld [vmem:[%s425 + $0x17c] sm:$0xf]
        %v5599 = vld [vmem:[%s425 + $0x180] sm:$0xf]
        %v5600 = vld [vmem:[%s425 + $0x184] sm:$0xf]
        %v5601 = vld [vmem:[%s425 + $0x188] sm:$0xf]
        %v5602 = vld [vmem:[%s425 + $0x18c] sm:$0xf]
        %v5603 = vld [vmem:[%s425 + $0x190] sm:$0xf]
        %v5604 = vld [vmem:[%s425 + $0x194] sm:$0xf]
        %v5605 = vld [vmem:[%s425 + $0x198] sm:$0xf]
        %v5606 = vld [vmem:[%s425 + $0x19c] sm:$0xf]
        %v5607 = vld [vmem:[%s425 + $0x1a0] sm:$0xf]
        %v5608 = vld [vmem:[%s425 + $0x1a4] sm:$0xf]
        %v5609 = vld [vmem:[%s425 + $0x1a8] sm:$0xf]
        %v5610 = vld [vmem:[%s425 + $0x1ac] sm:$0xf]
        %v5611 = vld [vmem:[%s425 + $0x1b0] sm:$0xf]
        %v5612 = vld [vmem:[%s425 + $0x1b4] sm:$0xf]
        %v5613 = vld [vmem:[%s425 + $0x1b8] sm:$0xf]
        %v5614 = vld [vmem:[%s425 + $0x1bc] sm:$0xf]
        %v5615 = vld [vmem:[%s425 + $0x1c0] sm:$0xf]
        %v5616 = vld [vmem:[%s425 + $0x1c4] sm:$0xf]
        %v5617 = vld [vmem:[%s425 + $0x1c8] sm:$0xf]
        %v5618 = vld [vmem:[%s425 + $0x1cc] sm:$0xf]
        %v5619 = vld [vmem:[%s425 + $0x1d0] sm:$0xf]
        %v5620 = vld [vmem:[%s425 + $0x1d4] sm:$0xf]
        %v5621 = vld [vmem:[%s425 + $0x1d8] sm:$0xf]
        %v5622 = vld [vmem:[%s425 + $0x1dc] sm:$0xf]
        %v5623 = vld [vmem:[%s425 + $0x1e0] sm:$0xf]
        %v5624 = vld [vmem:[%s425 + $0x1e4] sm:$0xf]
        %v5625 = vld [vmem:[%s425 + $0x1e8] sm:$0xf]
        %v5626 = vld [vmem:[%s425 + $0x1ec] sm:$0xf]
        %v5627 = vld [vmem:[%s425 + $0x1f0] sm:$0xf]
        %v5628 = vld [vmem:[%s425 + $0x1f4] sm:$0xf]
        %v5629 = vld [vmem:[%s425 + $0x1f8] sm:$0xf]
        %v5630 = vld [vmem:[%s425 + $0x1fc] sm:$0xf]
        %v5631 = vld [vmem:[%s425 + $0x200] sm:$0xf]
        %v5632 = vld [vmem:[%s425 + $0x204] sm:$0xf]
        %v5633 = vld [vmem:[%s425 + $0x208] sm:$0xf]
        %v5634 = vld [vmem:[%s425 + $0x20c] sm:$0xf]
        %v5635 = vld [vmem:[%s425 + $0x210] sm:$0xf]
        %v5636 = vld [vmem:[%s425 + $0x214] sm:$0xf]
        %v5637 = vld [vmem:[%s425 + $0x218] sm:$0xf]
        %v5638 = vld [vmem:[%s425 + $0x21c] sm:$0xf]
        %v5639 = vld [vmem:[%s425 + $0x220] sm:$0xf]
        %v5640 = vld [vmem:[%s425 + $0x224] sm:$0xf]
        %v5641 = vld [vmem:[%s425 + $0x228] sm:$0xf]
        %v5642 = vld [vmem:[%s425 + $0x22c] sm:$0xf]
        %v5643 = vld [vmem:[%s425 + $0x230] sm:$0xf]
        %v5644 = vld [vmem:[%s425 + $0x234] sm:$0xf]
        %v5645 = vld [vmem:[%s425 + $0x238] sm:$0xf]
        %v5646 = vld [vmem:[%s425 + $0x23c] sm:$0xf]
        %v5647 = vld [vmem:[%s425 + $0x240] sm:$0xf]
        %v5648 = vld [vmem:[%s425 + $0x244] sm:$0xf]
        %v5649 = vld [vmem:[%s425 + $0x248] sm:$0xf]
        %v5650 = vld [vmem:[%s425 + $0x24c] sm:$0xf]
        %v5651 = vld [vmem:[%s425 + $0x250] sm:$0xf]
        %v5652 = vld [vmem:[%s425 + $0x254] sm:$0xf]
        %v5653 = vld [vmem:[%s425 + $0x258] sm:$0xf]
        %v5654 = vld [vmem:[%s425 + $0x25c] sm:$0xf]
        %v5655 = vld [vmem:[%s425 + $0x260] sm:$0xf]
        %v5656 = vld [vmem:[%s425 + $0x264] sm:$0xf]
        %v5657 = vld [vmem:[%s425 + $0x268] sm:$0xf]
        %v5658 = vld [vmem:[%s425 + $0x26c] sm:$0xf]
        %v5659 = vld [vmem:[%s425 + $0x270] sm:$0xf]
        %v5660 = vld [vmem:[%s425 + $0x274] sm:$0xf]
        %v5661 = vld [vmem:[%s425 + $0x278] sm:$0xf]
        %v5662 = vld [vmem:[%s425 + $0x27c] sm:$0xf]
        %v5663 = vld [vmem:[%s425 + $0x280] sm:$0xf]
        %v5664 = vld [vmem:[%s425 + $0x284] sm:$0xf]
        %v5665 = vld [vmem:[%s425 + $0x288] sm:$0xf]
        %v5666 = vld [vmem:[%s425 + $0x28c] sm:$0xf]
        %v5667 = vld [vmem:[%s425 + $0x290] sm:$0xf]
        %v5668 = vld [vmem:[%s425 + $0x294] sm:$0xf]
        %v5669 = vld [vmem:[%s425 + $0x298] sm:$0xf]
        %v5670 = vld [vmem:[%s425 + $0x29c] sm:$0xf]
        %v5671 = vld [vmem:[%s425 + $0x2a0] sm:$0xf]
        %v5672 = vld [vmem:[%s425 + $0x2a4] sm:$0xf]
        %v5673 = vld [vmem:[%s425 + $0x2a8] sm:$0xf]
        %v5674 = vld [vmem:[%s425 + $0x2ac] sm:$0xf]
        %v5675 = vld [vmem:[%s425 + $0x2b0] sm:$0xf]
        %v5676 = vld [vmem:[%s425 + $0x2b4] sm:$0xf]
        %v5677 = vld [vmem:[%s425 + $0x2b8] sm:$0xf]
        %v5678 = vld [vmem:[%s425 + $0x2bc] sm:$0xf]
        %v5679 = vld [vmem:[%s425 + $0x2c0] sm:$0xf]
        %v5680 = vld [vmem:[%s425 + $0x2c4] sm:$0xf]
        %v5681 = vld [vmem:[%s425 + $0x2c8] sm:$0xf]
        %v5682 = vld [vmem:[%s425 + $0x2cc] sm:$0xf]
        %v5683 = vld [vmem:[%s425 + $0x2d0] sm:$0xf]
        %v5684 = vld [vmem:[%s425 + $0x2d4] sm:$0xf]
        %v5685 = vld [vmem:[%s425 + $0x2d8] sm:$0xf]
        %v5686 = vld [vmem:[%s425 + $0x2dc] sm:$0xf]
        %v5687 = vld [vmem:[%s425 + $0x2e0] sm:$0xf]
        %v5688 = vld [vmem:[%s425 + $0x2e4] sm:$0xf]
        %v5689 = vld [vmem:[%s425 + $0x2e8] sm:$0xf]
        %v5690 = vld [vmem:[%s425 + $0x2ec] sm:$0xf]
        %v5691 = vld [vmem:[%s425 + $0x2f0] sm:$0xf]
        %v5692 = vld [vmem:[%s425 + $0x2f4] sm:$0xf]
        %v5693 = vld [vmem:[%s425 + $0x2f8] sm:$0xf]
        %v5694 = vld [vmem:[%s425 + $0x2fc] sm:$0xf]
        %v5695 = vld [vmem:[%s425 + $0x300] sm:$0xf]
        %v5696 = vld [vmem:[%s425 + $0x304] sm:$0xf]
        %v5697 = vld [vmem:[%s425 + $0x308] sm:$0xf]
        %v5698 = vld [vmem:[%s425 + $0x30c] sm:$0xf]
        %v5699 = vld [vmem:[%s425 + $0x310] sm:$0xf]
        %v5700 = vld [vmem:[%s425 + $0x314] sm:$0xf]
        %v5701 = vld [vmem:[%s425 + $0x318] sm:$0xf]
        %v5702 = vld [vmem:[%s425 + $0x31c] sm:$0xf]
        %v5703 = vld [vmem:[%s425 + $0x320] sm:$0xf]
        %v5704 = vld [vmem:[%s425 + $0x324] sm:$0xf]
        %v5705 = vld [vmem:[%s425 + $0x328] sm:$0xf]
        %v5706 = vld [vmem:[%s425 + $0x32c] sm:$0xf]
        %v5707 = vld [vmem:[%s425 + $0x330] sm:$0xf]
        %v5708 = vld [vmem:[%s425 + $0x334] sm:$0xf]
        %v5709 = vld [vmem:[%s425 + $0x338] sm:$0xf]
        %v5710 = vld [vmem:[%s425 + $0x33c] sm:$0xf]
        %v5711 = vld [vmem:[%s425 + $0x340] sm:$0xf]
        %v5712 = vld [vmem:[%s425 + $0x344] sm:$0xf]
        %v5713 = vld [vmem:[%s425 + $0x348] sm:$0xf]
        %v5714 = vld [vmem:[%s425 + $0x34c] sm:$0xf]
        %v5715 = vld [vmem:[%s425 + $0x350] sm:$0xf]
        %v5716 = vld [vmem:[%s425 + $0x354] sm:$0xf]
        %v5717 = vld [vmem:[%s425 + $0x358] sm:$0xf]
        %v5718 = vld [vmem:[%s425 + $0x35c] sm:$0xf]
        %v5719 = vld [vmem:[%s425 + $0x360] sm:$0xf]
        %v5720 = vld [vmem:[%s425 + $0x364] sm:$0xf]
        %v5721 = vld [vmem:[%s425 + $0x368] sm:$0xf]
        %v5722 = vld [vmem:[%s425 + $0x36c] sm:$0xf]
        %v5723 = vld [vmem:[%s425 + $0x370] sm:$0xf]
        %v5724 = vld [vmem:[%s425 + $0x374] sm:$0xf]
        %v5725 = vld [vmem:[%s425 + $0x378] sm:$0xf]
        %v5726 = vld [vmem:[%s425 + $0x37c] sm:$0xf]
        %v5727 = vld [vmem:[%s425 + $0x380] sm:$0xf]
        %v5728 = vld [vmem:[%s425 + $0x384] sm:$0xf]
        %v5729 = vld [vmem:[%s425 + $0x388] sm:$0xf]
        %v5730 = vld [vmem:[%s425 + $0x38c] sm:$0xf]
        %v5731 = vld [vmem:[%s425 + $0x390] sm:$0xf]
        %v5732 = vld [vmem:[%s425 + $0x394] sm:$0xf]
        %v5733 = vld [vmem:[%s425 + $0x398] sm:$0xf]
        %v5734 = vld [vmem:[%s425 + $0x39c] sm:$0xf]
        %v5735 = vld [vmem:[%s425 + $0x3a0] sm:$0xf]
        %v5736 = vld [vmem:[%s425 + $0x3a4] sm:$0xf]
        %v5737 = vld [vmem:[%s425 + $0x3a8] sm:$0xf]
        %v5738 = vld [vmem:[%s425 + $0x3ac] sm:$0xf]
        %v5739 = vld [vmem:[%s425 + $0x3b0] sm:$0xf]
        %v5740 = vld [vmem:[%s425 + $0x3b4] sm:$0xf]
        %v5741 = vld [vmem:[%s425 + $0x3b8] sm:$0xf]
        %v5742 = vld [vmem:[%s425 + $0x3bc] sm:$0xf]
        %v5743 = vld [vmem:[%s425 + $0x3c0] sm:$0xf]
        %v5744 = vld [vmem:[%s425 + $0x3c4] sm:$0xf]
        %v5745 = vld [vmem:[%s425 + $0x3c8] sm:$0xf]
        %v5746 = vld [vmem:[%s425 + $0x3cc] sm:$0xf]
        %v5747 = vld [vmem:[%s425 + $0x3d0] sm:$0xf]
        %v5748 = vld [vmem:[%s425 + $0x3d4] sm:$0xf]
        %v5749 = vld [vmem:[%s425 + $0x3d8] sm:$0xf]
        %v5750 = vld [vmem:[%s425 + $0x3dc] sm:$0xf]
        %v5751 = vld [vmem:[%s425 + $0x3e0] sm:$0xf]
        %v5752 = vld [vmem:[%s425 + $0x3e4] sm:$0xf]
        %v5753 = vld [vmem:[%s425 + $0x3e8] sm:$0xf]
        %v5754 = vld [vmem:[%s425 + $0x3ec] sm:$0xf]
        %v5755 = vld [vmem:[%s425 + $0x3f0] sm:$0xf]
        %v5756 = vld [vmem:[%s425 + $0x3f4] sm:$0xf]
        %v5757 = vld [vmem:[%s425 + $0x3f8] sm:$0xf]
        %v5758 = vld [vmem:[%s425 + $0x3fc] sm:$0xf]
        %v6015 = vunpack.c.l.b16 %v5503
        %v6016 = vunpack.c.l.b16 %v5504
        %v6017 = vunpack.c.l.b16 %v5505
        %v6018 = vunpack.c.l.b16 %v5506
        %v6019 = vunpack.c.l.b16 %v5507
        %v6020 = vunpack.c.l.b16 %v5508
        %v6021 = vunpack.c.l.b16 %v5509
        %v6022 = vunpack.c.l.b16 %v5510
        %v6023 = vunpack.c.l.b16 %v5511
        %v6024 = vunpack.c.l.b16 %v5512
        %v6025 = vunpack.c.l.b16 %v5513
        %v6026 = vunpack.c.l.b16 %v5514
        %v6027 = vunpack.c.l.b16 %v5515
        %v6028 = vunpack.c.l.b16 %v5516
        %v6029 = vunpack.c.l.b16 %v5517
        %v6030 = vunpack.c.l.b16 %v5518
        %v6031 = vunpack.c.l.b16 %v5519
        %v6032 = vunpack.c.l.b16 %v5520
        %v6033 = vunpack.c.l.b16 %v5521
        %v6034 = vunpack.c.l.b16 %v5522
        %v6035 = vunpack.c.l.b16 %v5523
        %v6036 = vunpack.c.l.b16 %v5524
        %v6037 = vunpack.c.l.b16 %v5525
        %v6038 = vunpack.c.l.b16 %v5526
        %v6039 = vunpack.c.l.b16 %v5527
        %v6040 = vunpack.c.l.b16 %v5528
        %v6041 = vunpack.c.l.b16 %v5529
        %v6042 = vunpack.c.l.b16 %v5530
        %v6043 = vunpack.c.l.b16 %v5531
        %v6044 = vunpack.c.l.b16 %v5532
        %v6045 = vunpack.c.l.b16 %v5533
        %v6046 = vunpack.c.l.b16 %v5534
        %v6047 = vunpack.c.l.b16 %v5535
        %v6048 = vunpack.c.l.b16 %v5536
        %v6049 = vunpack.c.l.b16 %v5537
        %v6050 = vunpack.c.l.b16 %v5538
        %v6051 = vunpack.c.l.b16 %v5539
        %v6052 = vunpack.c.l.b16 %v5540
        %v6053 = vunpack.c.l.b16 %v5541
        %v6054 = vunpack.c.l.b16 %v5542
        %v6055 = vunpack.c.l.b16 %v5543
        %v6056 = vunpack.c.l.b16 %v5544
        %v6057 = vunpack.c.l.b16 %v5545
        %v6058 = vunpack.c.l.b16 %v5546
        %v6059 = vunpack.c.l.b16 %v5547
        %v6060 = vunpack.c.l.b16 %v5548
        %v6061 = vunpack.c.l.b16 %v5549
        %v6062 = vunpack.c.l.b16 %v5550
        %v6063 = vunpack.c.l.b16 %v5551
        %v6064 = vunpack.c.l.b16 %v5552
        %v6065 = vunpack.c.l.b16 %v5553
        %v6066 = vunpack.c.l.b16 %v5554
        %v6067 = vunpack.c.l.b16 %v5555
        %v6068 = vunpack.c.l.b16 %v5556
        %v6069 = vunpack.c.l.b16 %v5557
        %v6070 = vunpack.c.l.b16 %v5558
        %v6071 = vunpack.c.l.b16 %v5559
        %v6072 = vunpack.c.l.b16 %v5560
        %v6073 = vunpack.c.l.b16 %v5561
        %v6074 = vunpack.c.l.b16 %v5562
        %v6075 = vunpack.c.l.b16 %v5563
        %v6076 = vunpack.c.l.b16 %v5564
        %v6077 = vunpack.c.l.b16 %v5565
        %v6078 = vunpack.c.l.b16 %v5566
        %v6079 = vunpack.c.l.b16 %v5567
        %v6080 = vunpack.c.l.b16 %v5568
        %v6081 = vunpack.c.l.b16 %v5569
        %v6082 = vunpack.c.l.b16 %v5570
        %v6083 = vunpack.c.l.b16 %v5571
        %v6084 = vunpack.c.l.b16 %v5572
        %v6085 = vunpack.c.l.b16 %v5573
        %v6086 = vunpack.c.l.b16 %v5574
        %v6087 = vunpack.c.l.b16 %v5575
        %v6088 = vunpack.c.l.b16 %v5576
        %v6089 = vunpack.c.l.b16 %v5577
        %v6090 = vunpack.c.l.b16 %v5578
        %v6091 = vunpack.c.l.b16 %v5579
        %v6092 = vunpack.c.l.b16 %v5580
        %v6093 = vunpack.c.l.b16 %v5581
        %v6094 = vunpack.c.l.b16 %v5582
        %v6095 = vunpack.c.l.b16 %v5583
        %v6096 = vunpack.c.l.b16 %v5584
        %v6097 = vunpack.c.l.b16 %v5585
        %v6098 = vunpack.c.l.b16 %v5586
        %v6099 = vunpack.c.l.b16 %v5587
        %v6100 = vunpack.c.l.b16 %v5588
        %v6101 = vunpack.c.l.b16 %v5589
        %v6102 = vunpack.c.l.b16 %v5590
        %v6103 = vunpack.c.l.b16 %v5591
        %v6104 = vunpack.c.l.b16 %v5592
        %v6105 = vunpack.c.l.b16 %v5593
        %v6106 = vunpack.c.l.b16 %v5594
        %v6107 = vunpack.c.l.b16 %v5595
        %v6108 = vunpack.c.l.b16 %v5596
        %v6109 = vunpack.c.l.b16 %v5597
        %v6110 = vunpack.c.l.b16 %v5598
        %v6111 = vunpack.c.l.b16 %v5599
        %v6112 = vunpack.c.l.b16 %v5600
        %v6113 = vunpack.c.l.b16 %v5601
        %v6114 = vunpack.c.l.b16 %v5602
        %v6115 = vunpack.c.l.b16 %v5603
        %v6116 = vunpack.c.l.b16 %v5604
        %v6117 = vunpack.c.l.b16 %v5605
        %v6118 = vunpack.c.l.b16 %v5606
        %v6119 = vunpack.c.l.b16 %v5607
        %v6120 = vunpack.c.l.b16 %v5608
        %v6121 = vunpack.c.l.b16 %v5609
        %v6122 = vunpack.c.l.b16 %v5610
        %v6123 = vunpack.c.l.b16 %v5611
        %v6124 = vunpack.c.l.b16 %v5612
        %v6125 = vunpack.c.l.b16 %v5613
        %v6126 = vunpack.c.l.b16 %v5614
        %v6127 = vunpack.c.l.b16 %v5615
        %v6128 = vunpack.c.l.b16 %v5616
        %v6129 = vunpack.c.l.b16 %v5617
        %v6130 = vunpack.c.l.b16 %v5618
        %v6131 = vunpack.c.l.b16 %v5619
        %v6132 = vunpack.c.l.b16 %v5620
        %v6133 = vunpack.c.l.b16 %v5621
        %v6134 = vunpack.c.l.b16 %v5622
        %v6135 = vunpack.c.l.b16 %v5623
        %v6136 = vunpack.c.l.b16 %v5624
        %v6137 = vunpack.c.l.b16 %v5625
        %v6138 = vunpack.c.l.b16 %v5626
        %v6139 = vunpack.c.l.b16 %v5627
        %v6140 = vunpack.c.l.b16 %v5628
        %v6141 = vunpack.c.l.b16 %v5629
        %v6142 = vunpack.c.l.b16 %v5630
        %v6143 = vunpack.c.l.b16 %v5631
        %v6144 = vunpack.c.l.b16 %v5632
        %v6145 = vunpack.c.l.b16 %v5633
        %v6146 = vunpack.c.l.b16 %v5634
        %v6147 = vunpack.c.l.b16 %v5635
        %v6148 = vunpack.c.l.b16 %v5636
        %v6149 = vunpack.c.l.b16 %v5637
        %v6150 = vunpack.c.l.b16 %v5638
        %v6151 = vunpack.c.l.b16 %v5639
        %v6152 = vunpack.c.l.b16 %v5640
        %v6153 = vunpack.c.l.b16 %v5641
        %v6154 = vunpack.c.l.b16 %v5642
        %v6155 = vunpack.c.l.b16 %v5643
        %v6156 = vunpack.c.l.b16 %v5644
        %v6157 = vunpack.c.l.b16 %v5645
        %v6158 = vunpack.c.l.b16 %v5646
        %v6159 = vunpack.c.l.b16 %v5647
        %v6160 = vunpack.c.l.b16 %v5648
        %v6161 = vunpack.c.l.b16 %v5649
        %v6162 = vunpack.c.l.b16 %v5650
        %v6163 = vunpack.c.l.b16 %v5651
        %v6164 = vunpack.c.l.b16 %v5652
        %v6165 = vunpack.c.l.b16 %v5653
        %v6166 = vunpack.c.l.b16 %v5654
        %v6167 = vunpack.c.l.b16 %v5655
        %v6168 = vunpack.c.l.b16 %v5656
        %v6169 = vunpack.c.l.b16 %v5657
        %v6170 = vunpack.c.l.b16 %v5658
        %v6171 = vunpack.c.l.b16 %v5659
        %v6172 = vunpack.c.l.b16 %v5660
        %v6173 = vunpack.c.l.b16 %v5661
        %v6174 = vunpack.c.l.b16 %v5662
        %v6175 = vunpack.c.l.b16 %v5663
        %v6176 = vunpack.c.l.b16 %v5664
        %v6177 = vunpack.c.l.b16 %v5665
        %v6178 = vunpack.c.l.b16 %v5666
        %v6179 = vunpack.c.l.b16 %v5667
        %v6180 = vunpack.c.l.b16 %v5668
        %v6181 = vunpack.c.l.b16 %v5669
        %v6182 = vunpack.c.l.b16 %v5670
        %v6183 = vunpack.c.l.b16 %v5671
        %v6184 = vunpack.c.l.b16 %v5672
        %v6185 = vunpack.c.l.b16 %v5673
        %v6186 = vunpack.c.l.b16 %v5674
        %v6187 = vunpack.c.l.b16 %v5675
        %v6188 = vunpack.c.l.b16 %v5676
        %v6189 = vunpack.c.l.b16 %v5677
        %v6190 = vunpack.c.l.b16 %v5678
        %v6191 = vunpack.c.l.b16 %v5679
        %v6192 = vunpack.c.l.b16 %v5680
        %v6193 = vunpack.c.l.b16 %v5681
        %v6194 = vunpack.c.l.b16 %v5682
        %v6195 = vunpack.c.l.b16 %v5683
        %v6196 = vunpack.c.l.b16 %v5684
        %v6197 = vunpack.c.l.b16 %v5685
        %v6198 = vunpack.c.l.b16 %v5686
        %v6199 = vunpack.c.l.b16 %v5687
        %v6200 = vunpack.c.l.b16 %v5688
        %v6201 = vunpack.c.l.b16 %v5689
        %v6202 = vunpack.c.l.b16 %v5690
        %v6203 = vunpack.c.l.b16 %v5691
        %v6204 = vunpack.c.l.b16 %v5692
        %v6205 = vunpack.c.l.b16 %v5693
        %v6206 = vunpack.c.l.b16 %v5694
        %v6207 = vunpack.c.l.b16 %v5695
        %v6208 = vunpack.c.l.b16 %v5696
        %v6209 = vunpack.c.l.b16 %v5697
        %v6210 = vunpack.c.l.b16 %v5698
        %v6211 = vunpack.c.l.b16 %v5699
        %v6212 = vunpack.c.l.b16 %v5700
        %v6213 = vunpack.c.l.b16 %v5701
        %v6214 = vunpack.c.l.b16 %v5702
        %v6215 = vunpack.c.l.b16 %v5703
        %v6216 = vunpack.c.l.b16 %v5704
        %v6217 = vunpack.c.l.b16 %v5705
        %v6218 = vunpack.c.l.b16 %v5706
        %v6219 = vunpack.c.l.b16 %v5707
        %v6220 = vunpack.c.l.b16 %v5708
        %v6221 = vunpack.c.l.b16 %v5709
        %v6222 = vunpack.c.l.b16 %v5710
        %v6223 = vunpack.c.l.b16 %v5711
        %v6224 = vunpack.c.l.b16 %v5712
        %v6225 = vunpack.c.l.b16 %v5713
        %v6226 = vunpack.c.l.b16 %v5714
        %v6227 = vunpack.c.l.b16 %v5715
        %v6228 = vunpack.c.l.b16 %v5716
        %v6229 = vunpack.c.l.b16 %v5717
        %v6230 = vunpack.c.l.b16 %v5718
        %v6231 = vunpack.c.l.b16 %v5719
        %v6232 = vunpack.c.l.b16 %v5720
        %v6233 = vunpack.c.l.b16 %v5721
        %v6234 = vunpack.c.l.b16 %v5722
        %v6235 = vunpack.c.l.b16 %v5723
        %v6236 = vunpack.c.l.b16 %v5724
        %v6237 = vunpack.c.l.b16 %v5725
        %v6238 = vunpack.c.l.b16 %v5726
        %v6239 = vunpack.c.l.b16 %v5727
        %v6240 = vunpack.c.l.b16 %v5728
        %v6241 = vunpack.c.l.b16 %v5729
        %v6242 = vunpack.c.l.b16 %v5730
        %v6243 = vunpack.c.l.b16 %v5731
        %v6244 = vunpack.c.l.b16 %v5732
        %v6245 = vunpack.c.l.b16 %v5733
        %v6246 = vunpack.c.l.b16 %v5734
        %v6247 = vunpack.c.l.b16 %v5735
        %v6248 = vunpack.c.l.b16 %v5736
        %v6249 = vunpack.c.l.b16 %v5737
        %v6250 = vunpack.c.l.b16 %v5738
        %v6251 = vunpack.c.l.b16 %v5739
        %v6252 = vunpack.c.l.b16 %v5740
        %v6253 = vunpack.c.l.b16 %v5741
        %v6254 = vunpack.c.l.b16 %v5742
        %v6255 = vunpack.c.l.b16 %v5743
        %v6256 = vunpack.c.l.b16 %v5744
        %v6257 = vunpack.c.l.b16 %v5745
        %v6258 = vunpack.c.l.b16 %v5746
        %v6259 = vunpack.c.l.b16 %v5747
        %v6260 = vunpack.c.l.b16 %v5748
        %v6261 = vunpack.c.l.b16 %v5749
        %v6262 = vunpack.c.l.b16 %v5750
        %v6263 = vunpack.c.l.b16 %v5751
        %v6264 = vunpack.c.l.b16 %v5752
        %v6265 = vunpack.c.l.b16 %v5753
        %v6266 = vunpack.c.l.b16 %v5754
        %v6267 = vunpack.c.l.b16 %v5755
        %v6268 = vunpack.c.l.b16 %v5756
        %v6269 = vunpack.c.l.b16 %v5757
        %v6270 = vunpack.c.l.b16 %v5758
        %v6271 = vpack.c.b16 %v6016, %v6015
        %v6272 = vpack.c.b16 %v6018, %v6017
        %v6273 = vpack.c.b16 %v6020, %v6019
        %v6274 = vpack.c.b16 %v6022, %v6021
        %v6275 = vpack.c.b16 %v6024, %v6023
        %v6276 = vpack.c.b16 %v6026, %v6025
        %v6277 = vpack.c.b16 %v6028, %v6027
        %v6278 = vpack.c.b16 %v6030, %v6029
        %v6279 = vpack.c.b16 %v6032, %v6031
        %v6280 = vpack.c.b16 %v6034, %v6033
        %v6281 = vpack.c.b16 %v6036, %v6035
        %v6282 = vpack.c.b16 %v6038, %v6037
        %v6283 = vpack.c.b16 %v6040, %v6039
        %v6284 = vpack.c.b16 %v6042, %v6041
        %v6285 = vpack.c.b16 %v6044, %v6043
        %v6286 = vpack.c.b16 %v6046, %v6045
        %v6287 = vpack.c.b16 %v6048, %v6047
        %v6288 = vpack.c.b16 %v6050, %v6049
        %v6289 = vpack.c.b16 %v6052, %v6051
        %v6290 = vpack.c.b16 %v6054, %v6053
        %v6291 = vpack.c.b16 %v6056, %v6055
        %v6292 = vpack.c.b16 %v6058, %v6057
        %v6293 = vpack.c.b16 %v6060, %v6059
        %v6294 = vpack.c.b16 %v6062, %v6061
        %v6295 = vpack.c.b16 %v6064, %v6063
        %v6296 = vpack.c.b16 %v6066, %v6065
        %v6297 = vpack.c.b16 %v6068, %v6067
        %v6298 = vpack.c.b16 %v6070, %v6069
        %v6299 = vpack.c.b16 %v6072, %v6071
        %v6300 = vpack.c.b16 %v6074, %v6073
        %v6301 = vpack.c.b16 %v6076, %v6075
        %v6302 = vpack.c.b16 %v6078, %v6077
        %v6303 = vpack.c.b16 %v6080, %v6079
        %v6304 = vpack.c.b16 %v6082, %v6081
        %v6305 = vpack.c.b16 %v6084, %v6083
        %v6306 = vpack.c.b16 %v6086, %v6085
        %v6307 = vpack.c.b16 %v6088, %v6087
        %v6308 = vpack.c.b16 %v6090, %v6089
        %v6309 = vpack.c.b16 %v6092, %v6091
        %v6310 = vpack.c.b16 %v6094, %v6093
        %v6311 = vpack.c.b16 %v6096, %v6095
        %v6312 = vpack.c.b16 %v6098, %v6097
        %v6313 = vpack.c.b16 %v6100, %v6099
        %v6314 = vpack.c.b16 %v6102, %v6101
        %v6315 = vpack.c.b16 %v6104, %v6103
        %v6316 = vpack.c.b16 %v6106, %v6105
        %v6317 = vpack.c.b16 %v6108, %v6107
        %v6318 = vpack.c.b16 %v6110, %v6109
        %v6319 = vpack.c.b16 %v6112, %v6111
        %v6320 = vpack.c.b16 %v6114, %v6113
        %v6321 = vpack.c.b16 %v6116, %v6115
        %v6322 = vpack.c.b16 %v6118, %v6117
        %v6323 = vpack.c.b16 %v6120, %v6119
        %v6324 = vpack.c.b16 %v6122, %v6121
        %v6325 = vpack.c.b16 %v6124, %v6123
        %v6326 = vpack.c.b16 %v6126, %v6125
        %v6327 = vpack.c.b16 %v6128, %v6127
        %v6328 = vpack.c.b16 %v6130, %v6129
        %v6329 = vpack.c.b16 %v6132, %v6131
        %v6330 = vpack.c.b16 %v6134, %v6133
        %v6331 = vpack.c.b16 %v6136, %v6135
        %v6332 = vpack.c.b16 %v6138, %v6137
        %v6333 = vpack.c.b16 %v6140, %v6139
        %v6334 = vpack.c.b16 %v6142, %v6141
        %v6335 = vpack.c.b16 %v6144, %v6143
        %v6336 = vpack.c.b16 %v6146, %v6145
        %v6337 = vpack.c.b16 %v6148, %v6147
        %v6338 = vpack.c.b16 %v6150, %v6149
        %v6339 = vpack.c.b16 %v6152, %v6151
        %v6340 = vpack.c.b16 %v6154, %v6153
        %v6341 = vpack.c.b16 %v6156, %v6155
        %v6342 = vpack.c.b16 %v6158, %v6157
        %v6343 = vpack.c.b16 %v6160, %v6159
        %v6344 = vpack.c.b16 %v6162, %v6161
        %v6345 = vpack.c.b16 %v6164, %v6163
        %v6346 = vpack.c.b16 %v6166, %v6165
        %v6347 = vpack.c.b16 %v6168, %v6167
        %v6348 = vpack.c.b16 %v6170, %v6169
        %v6349 = vpack.c.b16 %v6172, %v6171
        %v6350 = vpack.c.b16 %v6174, %v6173
        %v6351 = vpack.c.b16 %v6176, %v6175
        %v6352 = vpack.c.b16 %v6178, %v6177
        %v6353 = vpack.c.b16 %v6180, %v6179
        %v6354 = vpack.c.b16 %v6182, %v6181
        %v6355 = vpack.c.b16 %v6184, %v6183
        %v6356 = vpack.c.b16 %v6186, %v6185
        %v6357 = vpack.c.b16 %v6188, %v6187
        %v6358 = vpack.c.b16 %v6190, %v6189
        %v6359 = vpack.c.b16 %v6192, %v6191
        %v6360 = vpack.c.b16 %v6194, %v6193
        %v6361 = vpack.c.b16 %v6196, %v6195
        %v6362 = vpack.c.b16 %v6198, %v6197
        %v6363 = vpack.c.b16 %v6200, %v6199
        %v6364 = vpack.c.b16 %v6202, %v6201
        %v6365 = vpack.c.b16 %v6204, %v6203
        %v6366 = vpack.c.b16 %v6206, %v6205
        %v6367 = vpack.c.b16 %v6208, %v6207
        %v6368 = vpack.c.b16 %v6210, %v6209
        %v6369 = vpack.c.b16 %v6212, %v6211
        %v6370 = vpack.c.b16 %v6214, %v6213
        %v6371 = vpack.c.b16 %v6216, %v6215
        %v6372 = vpack.c.b16 %v6218, %v6217
        %v6373 = vpack.c.b16 %v6220, %v6219
        %v6374 = vpack.c.b16 %v6222, %v6221
        %v6375 = vpack.c.b16 %v6224, %v6223
        %v6376 = vpack.c.b16 %v6226, %v6225
        %v6377 = vpack.c.b16 %v6228, %v6227
        %v6378 = vpack.c.b16 %v6230, %v6229
        %v6379 = vpack.c.b16 %v6232, %v6231
        %v6380 = vpack.c.b16 %v6234, %v6233
        %v6381 = vpack.c.b16 %v6236, %v6235
        %v6382 = vpack.c.b16 %v6238, %v6237
        %v6383 = vpack.c.b16 %v6240, %v6239
        %v6384 = vpack.c.b16 %v6242, %v6241
        %v6385 = vpack.c.b16 %v6244, %v6243
        %v6386 = vpack.c.b16 %v6246, %v6245
        %v6387 = vpack.c.b16 %v6248, %v6247
        %v6388 = vpack.c.b16 %v6250, %v6249
        %v6389 = vpack.c.b16 %v6252, %v6251
        %v6390 = vpack.c.b16 %v6254, %v6253
        %v6391 = vpack.c.b16 %v6256, %v6255
        %v6392 = vpack.c.b16 %v6258, %v6257
        %v6393 = vpack.c.b16 %v6260, %v6259
        %v6394 = vpack.c.b16 %v6262, %v6261
        %v6395 = vpack.c.b16 %v6264, %v6263
        %v6396 = vpack.c.b16 %v6266, %v6265
        %v6397 = vpack.c.b16 %v6268, %v6267
        %v6398 = vpack.c.b16 %v6270, %v6269
        %6527 = vmatprep.subr.bf16.mxu0 0
        %6528 = vmatpush1.bf16.msra.mxu0 %v6278
        %6529 = vmatprep.subr.bf16.mxu0 0
        %6530 = vmatpush1.bf16.msra.mxu0 %v6277
        %6531 = vmatprep.subr.bf16.mxu0 0
        %6532 = vmatpush1.bf16.msra.mxu0 %v6276
        %6533 = vmatprep.subr.bf16.mxu0 0
        %6534 = vmatpush1.bf16.msra.mxu0 %v6275
        %6535 = vmatprep.subr.bf16.mxu0 0
        %6536 = vmatpush1.bf16.msra.mxu0 %v6274
        %6537 = vmatprep.subr.bf16.mxu0 0
        %6538 = vmatpush1.bf16.msra.mxu0 %v6273
        %6539 = vmatprep.subr.bf16.mxu0 0
        %6540 = vmatpush1.bf16.msra.mxu0 %v6272
        %6541 = vmatprep.subr.bf16.mxu0 0
        %6542 = vmatpush1.bf16.msra.mxu0 %v6271
        %6543 = vmatprep.subr.bf16.mxu0 0
        %6544 = vmatpush2.bf16.msra.mxu0 %v6286
        %6545 = vmatprep.subr.bf16.mxu0 0
        %6546 = vmatpush2.bf16.msra.mxu0 %v6285
        %6547 = vmatprep.subr.bf16.mxu0 0
        %6548 = vmatpush2.bf16.msra.mxu0 %v6284
        %6549 = vmatprep.subr.bf16.mxu0 0
        %6550 = vmatpush2.bf16.msra.mxu0 %v6283
        %6551 = vmatprep.subr.bf16.mxu0 0
        %6552 = vmatpush2.bf16.msra.mxu0 %v6282
        %6553 = vmatprep.subr.bf16.mxu0 0
        %6554 = vmatpush2.bf16.msra.mxu0 %v6281
        %6555 = vmatprep.subr.bf16.mxu0 0
        %6556 = vmatpush2.bf16.msra.mxu0 %v6280
        %6557 = vmatprep.subr.bf16.mxu0 0
        %6558 = vmatpush2.bf16.msra.mxu0 %v6279
        %6559 = vmatprep.mubr.bf16.mxu0 %v5216
        %6560 = vmatmul.mubr.bf16.gmra.mxu0 %v5215
        %v6561 = vpop.f32.mrf.mxu0
        %v6562 = vadd.f32 0.0, %v6561
        %v6563 = vpop.f32.mrf.mxu0
        %v6564 = vpop.f32.mrf.mxu0
        %v6565 = vadd.f32 0.0, %v6564
        %v6566 = vpop.f32.mrf.mxu0
        %6567 = vmatprep.mubr.bf16.mxu0 %v5232
        %6568 = vmatmul.mubr.bf16.gmra.mxu0 %v5231
        %v6569 = vpop.f32.mrf.mxu0
        %v6570 = vadd.f32 0.0, %v6569
        %v6571 = vpop.f32.mrf.mxu0
        %v6572 = vpop.f32.mrf.mxu0
        %v6573 = vadd.f32 0.0, %v6572
        %v6574 = vpop.f32.mrf.mxu0
        %6575 = vmatprep.mubr.bf16.mxu0 %v5248
        %6576 = vmatmul.mubr.bf16.gmra.mxu0 %v5247
        %v6577 = vpop.f32.mrf.mxu0
        %v6578 = vadd.f32 0.0, %v6577
        %v6579 = vpop.f32.mrf.mxu0
        %v6580 = vpop.f32.mrf.mxu0
        %v6581 = vadd.f32 0.0, %v6580
        %v6582 = vpop.f32.mrf.mxu0
        %6583 = vmatprep.mubr.bf16.mxu0 %v5264
        %6584 = vmatmul.mubr.bf16.gmra.mxu0 %v5263
        %v6585 = vpop.f32.mrf.mxu0
        %v6586 = vadd.f32 0.0, %v6585
        %v6587 = vpop.f32.mrf.mxu0
        %v6588 = vpop.f32.mrf.mxu0
        %v6589 = vadd.f32 0.0, %v6588
        %v6590 = vpop.f32.mrf.mxu0
        %6591 = vmatprep.mubr.bf16.mxu0 %v5280
        %6592 = vmatmul.mubr.bf16.gmra.mxu0 %v5279
        %v6593 = vpop.f32.mrf.mxu0
        %v6594 = vadd.f32 0.0, %v6593
        %v6595 = vpop.f32.mrf.mxu0
        %v6596 = vpop.f32.mrf.mxu0
        %v6597 = vadd.f32 0.0, %v6596
        %v6598 = vpop.f32.mrf.mxu0
        %6599 = vmatprep.mubr.bf16.mxu0 %v5296
        %6600 = vmatmul.mubr.bf16.gmra.mxu0 %v5295
        %v6601 = vpop.f32.mrf.mxu0
        %v6602 = vadd.f32 0.0, %v6601
        %v6603 = vpop.f32.mrf.mxu0
        %v6604 = vpop.f32.mrf.mxu0
        %v6605 = vadd.f32 0.0, %v6604
        %v6606 = vpop.f32.mrf.mxu0
        %6607 = vmatprep.mubr.bf16.mxu0 %v5312
        %6608 = vmatmul.mubr.bf16.gmra.mxu0 %v5311
        %v6609 = vpop.f32.mrf.mxu0
        %v6610 = vadd.f32 0.0, %v6609
        %v6611 = vpop.f32.mrf.mxu0
        %v6612 = vpop.f32.mrf.mxu0
        %v6613 = vadd.f32 0.0, %v6612
        %v6614 = vpop.f32.mrf.mxu0
        %6615 = vmatprep.mubr.bf16.mxu0 %v5328
        %6616 = vmatmul.mubr.bf16.gmra.mxu0 %v5327
        %v6617 = vpop.f32.mrf.mxu0
        %v6618 = vadd.f32 0.0, %v6617
        %v6619 = vpop.f32.mrf.mxu0
        %v6620 = vpop.f32.mrf.mxu0
        %v6621 = vadd.f32 0.0, %v6620
        %v6622 = vpop.f32.mrf.mxu0
        %6623 = vmatprep.mubr.bf16.mxu0 %v5344
        %6624 = vmatmul.mubr.bf16.gmra.mxu0 %v5343
        %v6625 = vpop.f32.mrf.mxu0
        %v6626 = vadd.f32 0.0, %v6625
        %v6627 = vpop.f32.mrf.mxu0
        %v6628 = vpop.f32.mrf.mxu0
        %v6629 = vadd.f32 0.0, %v6628
        %v6630 = vpop.f32.mrf.mxu0
        %6631 = vmatprep.mubr.bf16.mxu0 %v5360
        %6632 = vmatmul.mubr.bf16.gmra.mxu0 %v5359
        %v6633 = vpop.f32.mrf.mxu0
        %v6634 = vadd.f32 0.0, %v6633
        %v6635 = vpop.f32.mrf.mxu0
        %v6636 = vpop.f32.mrf.mxu0
        %v6637 = vadd.f32 0.0, %v6636
        %v6638 = vpop.f32.mrf.mxu0
        %6639 = vmatprep.mubr.bf16.mxu0 %v5376
        %6640 = vmatmul.mubr.bf16.gmra.mxu0 %v5375
        %v6641 = vpop.f32.mrf.mxu0
        %v6642 = vadd.f32 0.0, %v6641
        %v6643 = vpop.f32.mrf.mxu0
        %v6644 = vpop.f32.mrf.mxu0
        %v6645 = vadd.f32 0.0, %v6644
        %v6646 = vpop.f32.mrf.mxu0
        %6647 = vmatprep.mubr.bf16.mxu0 %v5392
        %6648 = vmatmul.mubr.bf16.gmra.mxu0 %v5391
        %v6649 = vpop.f32.mrf.mxu0
        %v6650 = vadd.f32 0.0, %v6649
        %v6651 = vpop.f32.mrf.mxu0
        %v6652 = vpop.f32.mrf.mxu0
        %v6653 = vadd.f32 0.0, %v6652
        %v6654 = vpop.f32.mrf.mxu0
        %6655 = vmatprep.mubr.bf16.mxu0 %v5408
        %6656 = vmatmul.mubr.bf16.gmra.mxu0 %v5407
        %v6657 = vpop.f32.mrf.mxu0
        %v6658 = vadd.f32 0.0, %v6657
        %v6659 = vpop.f32.mrf.mxu0
        %v6660 = vpop.f32.mrf.mxu0
        %v6661 = vadd.f32 0.0, %v6660
        %v6662 = vpop.f32.mrf.mxu0
        %6663 = vmatprep.mubr.bf16.mxu0 %v5424
        %6664 = vmatmul.mubr.bf16.gmra.mxu0 %v5423
        %v6665 = vpop.f32.mrf.mxu0
        %v6666 = vadd.f32 0.0, %v6665
        %v6667 = vpop.f32.mrf.mxu0
        %v6668 = vpop.f32.mrf.mxu0
        %v6669 = vadd.f32 0.0, %v6668
        %v6670 = vpop.f32.mrf.mxu0
        %6671 = vmatprep.mubr.bf16.mxu0 %v5440
        %6672 = vmatmul.mubr.bf16.gmra.mxu0 %v5439
        %v6673 = vpop.f32.mrf.mxu0
        %v6674 = vadd.f32 0.0, %v6673
        %v6675 = vpop.f32.mrf.mxu0
        %v6676 = vpop.f32.mrf.mxu0
        %v6677 = vadd.f32 0.0, %v6676
        %v6678 = vpop.f32.mrf.mxu0
        %6679 = vmatprep.mubr.bf16.mxu0 %v5456
        %6680 = vmatmul.mubr.bf16.gmra.mxu0 %v5455
        %v6681 = vpop.f32.mrf.mxu0
        %v6682 = vadd.f32 0.0, %v6681
        %v6683 = vpop.f32.mrf.mxu0
        %v6684 = vpop.f32.mrf.mxu0
        %v6685 = vadd.f32 0.0, %v6684
        %v6686 = vpop.f32.mrf.mxu0
        %6687 = vdwg.mxu0
        %6688 = vmatprep.subr.bf16.mxu0 0
        %6689 = vmatpush1.bf16.msra.mxu0 %v6294
        %6690 = vmatprep.subr.bf16.mxu0 0
        %6691 = vmatpush1.bf16.msra.mxu0 %v6293
        %6692 = vmatprep.subr.bf16.mxu0 0
        %6693 = vmatpush1.bf16.msra.mxu0 %v6292
        %6694 = vmatprep.subr.bf16.mxu0 0
        %6695 = vmatpush1.bf16.msra.mxu0 %v6291
        %6696 = vmatprep.subr.bf16.mxu0 0
        %6697 = vmatpush1.bf16.msra.mxu0 %v6290
        %6698 = vmatprep.subr.bf16.mxu0 0
        %6699 = vmatpush1.bf16.msra.mxu0 %v6289
        %6700 = vmatprep.subr.bf16.mxu0 0
        %6701 = vmatpush1.bf16.msra.mxu0 %v6288
        %6702 = vmatprep.subr.bf16.mxu0 0
        %6703 = vmatpush1.bf16.msra.mxu0 %v6287
        %6704 = vmatprep.subr.bf16.mxu0 0
        %6705 = vmatpush2.bf16.msra.mxu0 %v6302
        %6706 = vmatprep.subr.bf16.mxu0 0
        %6707 = vmatpush2.bf16.msra.mxu0 %v6301
        %6708 = vmatprep.subr.bf16.mxu0 0
        %6709 = vmatpush2.bf16.msra.mxu0 %v6300
        %6710 = vmatprep.subr.bf16.mxu0 0
        %6711 = vmatpush2.bf16.msra.mxu0 %v6299
        %6712 = vmatprep.subr.bf16.mxu0 0
        %6713 = vmatpush2.bf16.msra.mxu0 %v6298
        %6714 = vmatprep.subr.bf16.mxu0 0
        %6715 = vmatpush2.bf16.msra.mxu0 %v6297
        %6716 = vmatprep.subr.bf16.mxu0 0
        %6717 = vmatpush2.bf16.msra.mxu0 %v6296
        %6718 = vmatprep.subr.bf16.mxu0 0
        %6719 = vmatpush2.bf16.msra.mxu0 %v6295
        %6720 = vmatprep.mubr.bf16.mxu0 %v5218
        %6721 = vmatmul.mubr.bf16.gmra.mxu0 %v5217
        %v6722 = vpop.f32.mrf.mxu0
        %v6723 = vadd.f32 %v6562, %v6722
        %v6724 = vpop.f32.mrf.mxu0
        %v6725 = vpop.f32.mrf.mxu0
        %v6726 = vadd.f32 %v6565, %v6725
        %v6727 = vpop.f32.mrf.mxu0
        %6728 = vmatprep.mubr.bf16.mxu0 %v5234
        %6729 = vmatmul.mubr.bf16.gmra.mxu0 %v5233
        %v6730 = vpop.f32.mrf.mxu0
        %v6731 = vadd.f32 %v6570, %v6730
        %v6732 = vpop.f32.mrf.mxu0
        %v6733 = vpop.f32.mrf.mxu0
        %v6734 = vadd.f32 %v6573, %v6733
        %v6735 = vpop.f32.mrf.mxu0
        %6736 = vmatprep.mubr.bf16.mxu0 %v5250
        %6737 = vmatmul.mubr.bf16.gmra.mxu0 %v5249
        %v6738 = vpop.f32.mrf.mxu0
        %v6739 = vadd.f32 %v6578, %v6738
        %v6740 = vpop.f32.mrf.mxu0
        %v6741 = vpop.f32.mrf.mxu0
        %v6742 = vadd.f32 %v6581, %v6741
        %v6743 = vpop.f32.mrf.mxu0
        %6744 = vmatprep.mubr.bf16.mxu0 %v5266
        %6745 = vmatmul.mubr.bf16.gmra.mxu0 %v5265
        %v6746 = vpop.f32.mrf.mxu0
        %v6747 = vadd.f32 %v6586, %v6746
        %v6748 = vpop.f32.mrf.mxu0
        %v6749 = vpop.f32.mrf.mxu0
        %v6750 = vadd.f32 %v6589, %v6749
        %v6751 = vpop.f32.mrf.mxu0
        %6752 = vmatprep.mubr.bf16.mxu0 %v5282
        %6753 = vmatmul.mubr.bf16.gmra.mxu0 %v5281
        %v6754 = vpop.f32.mrf.mxu0
        %v6755 = vadd.f32 %v6594, %v6754
        %v6756 = vpop.f32.mrf.mxu0
        %v6757 = vpop.f32.mrf.mxu0
        %v6758 = vadd.f32 %v6597, %v6757
        %v6759 = vpop.f32.mrf.mxu0
        %6760 = vmatprep.mubr.bf16.mxu0 %v5298
        %6761 = vmatmul.mubr.bf16.gmra.mxu0 %v5297
        %v6762 = vpop.f32.mrf.mxu0
        %v6763 = vadd.f32 %v6602, %v6762
        %v6764 = vpop.f32.mrf.mxu0
        %v6765 = vpop.f32.mrf.mxu0
        %v6766 = vadd.f32 %v6605, %v6765
        %v6767 = vpop.f32.mrf.mxu0
        %6768 = vmatprep.mubr.bf16.mxu0 %v5314
        %6769 = vmatmul.mubr.bf16.gmra.mxu0 %v5313
        %v6770 = vpop.f32.mrf.mxu0
        %v6771 = vadd.f32 %v6610, %v6770
        %v6772 = vpop.f32.mrf.mxu0
        %v6773 = vpop.f32.mrf.mxu0
        %v6774 = vadd.f32 %v6613, %v6773
        %v6775 = vpop.f32.mrf.mxu0
        %6776 = vmatprep.mubr.bf16.mxu0 %v5330
        %6777 = vmatmul.mubr.bf16.gmra.mxu0 %v5329
        %v6778 = vpop.f32.mrf.mxu0
        %v6779 = vadd.f32 %v6618, %v6778
        %v6780 = vpop.f32.mrf.mxu0
        %v6781 = vpop.f32.mrf.mxu0
        %v6782 = vadd.f32 %v6621, %v6781
        %v6783 = vpop.f32.mrf.mxu0
        %6784 = vmatprep.mubr.bf16.mxu0 %v5346
        %6785 = vmatmul.mubr.bf16.gmra.mxu0 %v5345
        %v6786 = vpop.f32.mrf.mxu0
        %v6787 = vadd.f32 %v6626, %v6786
        %v6788 = vpop.f32.mrf.mxu0
        %v6789 = vpop.f32.mrf.mxu0
        %v6790 = vadd.f32 %v6629, %v6789
        %v6791 = vpop.f32.mrf.mxu0
        %6792 = vmatprep.mubr.bf16.mxu0 %v5362
        %6793 = vmatmul.mubr.bf16.gmra.mxu0 %v5361
        %v6794 = vpop.f32.mrf.mxu0
        %v6795 = vadd.f32 %v6634, %v6794
        %v6796 = vpop.f32.mrf.mxu0
        %v6797 = vpop.f32.mrf.mxu0
        %v6798 = vadd.f32 %v6637, %v6797
        %v6799 = vpop.f32.mrf.mxu0
        %6800 = vmatprep.mubr.bf16.mxu0 %v5378
        %6801 = vmatmul.mubr.bf16.gmra.mxu0 %v5377
        %v6802 = vpop.f32.mrf.mxu0
        %v6803 = vadd.f32 %v6642, %v6802
        %v6804 = vpop.f32.mrf.mxu0
        %v6805 = vpop.f32.mrf.mxu0
        %v6806 = vadd.f32 %v6645, %v6805
        %v6807 = vpop.f32.mrf.mxu0
        %6808 = vmatprep.mubr.bf16.mxu0 %v5394
        %6809 = vmatmul.mubr.bf16.gmra.mxu0 %v5393
        %v6810 = vpop.f32.mrf.mxu0
        %v6811 = vadd.f32 %v6650, %v6810
        %v6812 = vpop.f32.mrf.mxu0
        %v6813 = vpop.f32.mrf.mxu0
        %v6814 = vadd.f32 %v6653, %v6813
        %v6815 = vpop.f32.mrf.mxu0
        %6816 = vmatprep.mubr.bf16.mxu0 %v5410
        %6817 = vmatmul.mubr.bf16.gmra.mxu0 %v5409
        %v6818 = vpop.f32.mrf.mxu0
        %v6819 = vadd.f32 %v6658, %v6818
        %v6820 = vpop.f32.mrf.mxu0
        %v6821 = vpop.f32.mrf.mxu0
        %v6822 = vadd.f32 %v6661, %v6821
        %v6823 = vpop.f32.mrf.mxu0
        %6824 = vmatprep.mubr.bf16.mxu0 %v5426
        %6825 = vmatmul.mubr.bf16.gmra.mxu0 %v5425
        %v6826 = vpop.f32.mrf.mxu0
        %v6827 = vadd.f32 %v6666, %v6826
        %v6828 = vpop.f32.mrf.mxu0
        %v6829 = vpop.f32.mrf.mxu0
        %v6830 = vadd.f32 %v6669, %v6829
        %v6831 = vpop.f32.mrf.mxu0
        %6832 = vmatprep.mubr.bf16.mxu0 %v5442
        %6833 = vmatmul.mubr.bf16.gmra.mxu0 %v5441
        %v6834 = vpop.f32.mrf.mxu0
        %v6835 = vadd.f32 %v6674, %v6834
        %v6836 = vpop.f32.mrf.mxu0
        %v6837 = vpop.f32.mrf.mxu0
        %v6838 = vadd.f32 %v6677, %v6837
        %v6839 = vpop.f32.mrf.mxu0
        %6840 = vmatprep.mubr.bf16.mxu0 %v5458
        %6841 = vmatmul.mubr.bf16.gmra.mxu0 %v5457
        %v6842 = vpop.f32.mrf.mxu0
        %v6843 = vadd.f32 %v6682, %v6842
        %v6844 = vpop.f32.mrf.mxu0
        %v6845 = vpop.f32.mrf.mxu0
        %v6846 = vadd.f32 %v6685, %v6845
        %v6847 = vpop.f32.mrf.mxu0
        %6848 = vdwg.mxu0
        %6849 = vmatprep.subr.bf16.mxu0 0
        %6850 = vmatpush1.bf16.msra.mxu0 %v6310
        %6851 = vmatprep.subr.bf16.mxu0 0
        %6852 = vmatpush1.bf16.msra.mxu0 %v6309
        %6853 = vmatprep.subr.bf16.mxu0 0
        %6854 = vmatpush1.bf16.msra.mxu0 %v6308
        %6855 = vmatprep.subr.bf16.mxu0 0
        %6856 = vmatpush1.bf16.msra.mxu0 %v6307
        %6857 = vmatprep.subr.bf16.mxu0 0
        %6858 = vmatpush1.bf16.msra.mxu0 %v6306
        %6859 = vmatprep.subr.bf16.mxu0 0
        %6860 = vmatpush1.bf16.msra.mxu0 %v6305
        %6861 = vmatprep.subr.bf16.mxu0 0
        %6862 = vmatpush1.bf16.msra.mxu0 %v6304
        %6863 = vmatprep.subr.bf16.mxu0 0
        %6864 = vmatpush1.bf16.msra.mxu0 %v6303
        %6865 = vmatprep.subr.bf16.mxu0 0
        %6866 = vmatpush2.bf16.msra.mxu0 %v6318
        %6867 = vmatprep.subr.bf16.mxu0 0
        %6868 = vmatpush2.bf16.msra.mxu0 %v6317
        %6869 = vmatprep.subr.bf16.mxu0 0
        %6870 = vmatpush2.bf16.msra.mxu0 %v6316
        %6871 = vmatprep.subr.bf16.mxu0 0
        %6872 = vmatpush2.bf16.msra.mxu0 %v6315
        %6873 = vmatprep.subr.bf16.mxu0 0
        %6874 = vmatpush2.bf16.msra.mxu0 %v6314
        %6875 = vmatprep.subr.bf16.mxu0 0
        %6876 = vmatpush2.bf16.msra.mxu0 %v6313
        %6877 = vmatprep.subr.bf16.mxu0 0
        %6878 = vmatpush2.bf16.msra.mxu0 %v6312
        %6879 = vmatprep.subr.bf16.mxu0 0
        %6880 = vmatpush2.bf16.msra.mxu0 %v6311
        %6881 = vmatprep.mubr.bf16.mxu0 %v5220
        %6882 = vmatmul.mubr.bf16.gmra.mxu0 %v5219
        %v6883 = vpop.f32.mrf.mxu0
        %v6884 = vadd.f32 %v6723, %v6883
        %v6885 = vpop.f32.mrf.mxu0
        %v6886 = vpop.f32.mrf.mxu0
        %v6887 = vadd.f32 %v6726, %v6886
        %v6888 = vpop.f32.mrf.mxu0
        %6889 = vmatprep.mubr.bf16.mxu0 %v5236
        %6890 = vmatmul.mubr.bf16.gmra.mxu0 %v5235
        %v6891 = vpop.f32.mrf.mxu0
        %v6892 = vadd.f32 %v6731, %v6891
        %v6893 = vpop.f32.mrf.mxu0
        %v6894 = vpop.f32.mrf.mxu0
        %v6895 = vadd.f32 %v6734, %v6894
        %v6896 = vpop.f32.mrf.mxu0
        %6897 = vmatprep.mubr.bf16.mxu0 %v5252
        %6898 = vmatmul.mubr.bf16.gmra.mxu0 %v5251
        %v6899 = vpop.f32.mrf.mxu0
        %v6900 = vadd.f32 %v6739, %v6899
        %v6901 = vpop.f32.mrf.mxu0
        %v6902 = vpop.f32.mrf.mxu0
        %v6903 = vadd.f32 %v6742, %v6902
        %v6904 = vpop.f32.mrf.mxu0
        %6905 = vmatprep.mubr.bf16.mxu0 %v5268
        %6906 = vmatmul.mubr.bf16.gmra.mxu0 %v5267
        %v6907 = vpop.f32.mrf.mxu0
        %v6908 = vadd.f32 %v6747, %v6907
        %v6909 = vpop.f32.mrf.mxu0
        %v6910 = vpop.f32.mrf.mxu0
        %v6911 = vadd.f32 %v6750, %v6910
        %v6912 = vpop.f32.mrf.mxu0
        %6913 = vmatprep.mubr.bf16.mxu0 %v5284
        %6914 = vmatmul.mubr.bf16.gmra.mxu0 %v5283
        %v6915 = vpop.f32.mrf.mxu0
        %v6916 = vadd.f32 %v6755, %v6915
        %v6917 = vpop.f32.mrf.mxu0
        %v6918 = vpop.f32.mrf.mxu0
        %v6919 = vadd.f32 %v6758, %v6918
        %v6920 = vpop.f32.mrf.mxu0
        %6921 = vmatprep.mubr.bf16.mxu0 %v5300
        %6922 = vmatmul.mubr.bf16.gmra.mxu0 %v5299
        %v6923 = vpop.f32.mrf.mxu0
        %v6924 = vadd.f32 %v6763, %v6923
        %v6925 = vpop.f32.mrf.mxu0
        %v6926 = vpop.f32.mrf.mxu0
        %v6927 = vadd.f32 %v6766, %v6926
        %v6928 = vpop.f32.mrf.mxu0
        %6929 = vmatprep.mubr.bf16.mxu0 %v5316
        %6930 = vmatmul.mubr.bf16.gmra.mxu0 %v5315
        %v6931 = vpop.f32.mrf.mxu0
        %v6932 = vadd.f32 %v6771, %v6931
        %v6933 = vpop.f32.mrf.mxu0
        %v6934 = vpop.f32.mrf.mxu0
        %v6935 = vadd.f32 %v6774, %v6934
        %v6936 = vpop.f32.mrf.mxu0
        %6937 = vmatprep.mubr.bf16.mxu0 %v5332
        %6938 = vmatmul.mubr.bf16.gmra.mxu0 %v5331
        %v6939 = vpop.f32.mrf.mxu0
        %v6940 = vadd.f32 %v6779, %v6939
        %v6941 = vpop.f32.mrf.mxu0
        %v6942 = vpop.f32.mrf.mxu0
        %v6943 = vadd.f32 %v6782, %v6942
        %v6944 = vpop.f32.mrf.mxu0
        %6945 = vmatprep.mubr.bf16.mxu0 %v5348
        %6946 = vmatmul.mubr.bf16.gmra.mxu0 %v5347
        %v6947 = vpop.f32.mrf.mxu0
        %v6948 = vadd.f32 %v6787, %v6947
        %v6949 = vpop.f32.mrf.mxu0
        %v6950 = vpop.f32.mrf.mxu0
        %v6951 = vadd.f32 %v6790, %v6950
        %v6952 = vpop.f32.mrf.mxu0
        %6953 = vmatprep.mubr.bf16.mxu0 %v5364
        %6954 = vmatmul.mubr.bf16.gmra.mxu0 %v5363
        %v6955 = vpop.f32.mrf.mxu0
        %v6956 = vadd.f32 %v6795, %v6955
        %v6957 = vpop.f32.mrf.mxu0
        %v6958 = vpop.f32.mrf.mxu0
        %v6959 = vadd.f32 %v6798, %v6958
        %v6960 = vpop.f32.mrf.mxu0
        %6961 = vmatprep.mubr.bf16.mxu0 %v5380
        %6962 = vmatmul.mubr.bf16.gmra.mxu0 %v5379
        %v6963 = vpop.f32.mrf.mxu0
        %v6964 = vadd.f32 %v6803, %v6963
        %v6965 = vpop.f32.mrf.mxu0
        %v6966 = vpop.f32.mrf.mxu0
        %v6967 = vadd.f32 %v6806, %v6966
        %v6968 = vpop.f32.mrf.mxu0
        %6969 = vmatprep.mubr.bf16.mxu0 %v5396
        %6970 = vmatmul.mubr.bf16.gmra.mxu0 %v5395
        %v6971 = vpop.f32.mrf.mxu0
        %v6972 = vadd.f32 %v6811, %v6971
        %v6973 = vpop.f32.mrf.mxu0
        %v6974 = vpop.f32.mrf.mxu0
        %v6975 = vadd.f32 %v6814, %v6974
        %v6976 = vpop.f32.mrf.mxu0
        %6977 = vmatprep.mubr.bf16.mxu0 %v5412
        %6978 = vmatmul.mubr.bf16.gmra.mxu0 %v5411
        %v6979 = vpop.f32.mrf.mxu0
        %v6980 = vadd.f32 %v6819, %v6979
        %v6981 = vpop.f32.mrf.mxu0
        %v6982 = vpop.f32.mrf.mxu0
        %v6983 = vadd.f32 %v6822, %v6982
        %v6984 = vpop.f32.mrf.mxu0
        %6985 = vmatprep.mubr.bf16.mxu0 %v5428
        %6986 = vmatmul.mubr.bf16.gmra.mxu0 %v5427
        %v6987 = vpop.f32.mrf.mxu0
        %v6988 = vadd.f32 %v6827, %v6987
        %v6989 = vpop.f32.mrf.mxu0
        %v6990 = vpop.f32.mrf.mxu0
        %v6991 = vadd.f32 %v6830, %v6990
        %v6992 = vpop.f32.mrf.mxu0
        %6993 = vmatprep.mubr.bf16.mxu0 %v5444
        %6994 = vmatmul.mubr.bf16.gmra.mxu0 %v5443
        %v6995 = vpop.f32.mrf.mxu0
        %v6996 = vadd.f32 %v6835, %v6995
        %v6997 = vpop.f32.mrf.mxu0
        %v6998 = vpop.f32.mrf.mxu0
        %v6999 = vadd.f32 %v6838, %v6998
        %v7000 = vpop.f32.mrf.mxu0
        %7001 = vmatprep.mubr.bf16.mxu0 %v5460
        %7002 = vmatmul.mubr.bf16.gmra.mxu0 %v5459
        %v7003 = vpop.f32.mrf.mxu0
        %v7004 = vadd.f32 %v6843, %v7003
        %v7005 = vpop.f32.mrf.mxu0
        %v7006 = vpop.f32.mrf.mxu0
        %v7007 = vadd.f32 %v6846, %v7006
        %v7008 = vpop.f32.mrf.mxu0
        %7009 = vdwg.mxu0
        %7010 = vmatprep.subr.bf16.mxu0 0
        %7011 = vmatpush1.bf16.msra.mxu0 %v6326
        %7012 = vmatprep.subr.bf16.mxu0 0
        %7013 = vmatpush1.bf16.msra.mxu0 %v6325
        %7014 = vmatprep.subr.bf16.mxu0 0
        %7015 = vmatpush1.bf16.msra.mxu0 %v6324
        %7016 = vmatprep.subr.bf16.mxu0 0
        %7017 = vmatpush1.bf16.msra.mxu0 %v6323
        %7018 = vmatprep.subr.bf16.mxu0 0
        %7019 = vmatpush1.bf16.msra.mxu0 %v6322
        %7020 = vmatprep.subr.bf16.mxu0 0
        %7021 = vmatpush1.bf16.msra.mxu0 %v6321
        %7022 = vmatprep.subr.bf16.mxu0 0
        %7023 = vmatpush1.bf16.msra.mxu0 %v6320
        %7024 = vmatprep.subr.bf16.mxu0 0
        %7025 = vmatpush1.bf16.msra.mxu0 %v6319
        %7026 = vmatprep.subr.bf16.mxu0 0
        %7027 = vmatpush2.bf16.msra.mxu0 %v6334
        %7028 = vmatprep.subr.bf16.mxu0 0
        %7029 = vmatpush2.bf16.msra.mxu0 %v6333
        %7030 = vmatprep.subr.bf16.mxu0 0
        %7031 = vmatpush2.bf16.msra.mxu0 %v6332
        %7032 = vmatprep.subr.bf16.mxu0 0
        %7033 = vmatpush2.bf16.msra.mxu0 %v6331
        %7034 = vmatprep.subr.bf16.mxu0 0
        %7035 = vmatpush2.bf16.msra.mxu0 %v6330
        %7036 = vmatprep.subr.bf16.mxu0 0
        %7037 = vmatpush2.bf16.msra.mxu0 %v6329
        %7038 = vmatprep.subr.bf16.mxu0 0
        %7039 = vmatpush2.bf16.msra.mxu0 %v6328
        %7040 = vmatprep.subr.bf16.mxu0 0
        %7041 = vmatpush2.bf16.msra.mxu0 %v6327
        %7042 = vmatprep.mubr.bf16.mxu0 %v5222
        %7043 = vmatmul.mubr.bf16.gmra.mxu0 %v5221
        %v7044 = vpop.f32.mrf.mxu0
        %v7045 = vadd.f32 %v6884, %v7044
        %v7046 = vpop.f32.mrf.mxu0
        %v7047 = vpop.f32.mrf.mxu0
        %v7048 = vadd.f32 %v6887, %v7047
        %v7049 = vpop.f32.mrf.mxu0
        %7050 = vmatprep.mubr.bf16.mxu0 %v5238
        %7051 = vmatmul.mubr.bf16.gmra.mxu0 %v5237
        %v7052 = vpop.f32.mrf.mxu0
        %v7053 = vadd.f32 %v6892, %v7052
        %v7054 = vpop.f32.mrf.mxu0
        %v7055 = vpop.f32.mrf.mxu0
        %v7056 = vadd.f32 %v6895, %v7055
        %v7057 = vpop.f32.mrf.mxu0
        %7058 = vmatprep.mubr.bf16.mxu0 %v5254
        %7059 = vmatmul.mubr.bf16.gmra.mxu0 %v5253
        %v7060 = vpop.f32.mrf.mxu0
        %v7061 = vadd.f32 %v6900, %v7060
        %v7062 = vpop.f32.mrf.mxu0
        %v7063 = vpop.f32.mrf.mxu0
        %v7064 = vadd.f32 %v6903, %v7063
        %v7065 = vpop.f32.mrf.mxu0
        %7066 = vmatprep.mubr.bf16.mxu0 %v5270
        %7067 = vmatmul.mubr.bf16.gmra.mxu0 %v5269
        %v7068 = vpop.f32.mrf.mxu0
        %v7069 = vadd.f32 %v6908, %v7068
        %v7070 = vpop.f32.mrf.mxu0
        %v7071 = vpop.f32.mrf.mxu0
        %v7072 = vadd.f32 %v6911, %v7071
        %v7073 = vpop.f32.mrf.mxu0
        %7074 = vmatprep.mubr.bf16.mxu0 %v5286
        %7075 = vmatmul.mubr.bf16.gmra.mxu0 %v5285
        %v7076 = vpop.f32.mrf.mxu0
        %v7077 = vadd.f32 %v6916, %v7076
        %v7078 = vpop.f32.mrf.mxu0
        %v7079 = vpop.f32.mrf.mxu0
        %v7080 = vadd.f32 %v6919, %v7079
        %v7081 = vpop.f32.mrf.mxu0
        %7082 = vmatprep.mubr.bf16.mxu0 %v5302
        %7083 = vmatmul.mubr.bf16.gmra.mxu0 %v5301
        %v7084 = vpop.f32.mrf.mxu0
        %v7085 = vadd.f32 %v6924, %v7084
        %v7086 = vpop.f32.mrf.mxu0
        %v7087 = vpop.f32.mrf.mxu0
        %v7088 = vadd.f32 %v6927, %v7087
        %v7089 = vpop.f32.mrf.mxu0
        %7090 = vmatprep.mubr.bf16.mxu0 %v5318
        %7091 = vmatmul.mubr.bf16.gmra.mxu0 %v5317
        %v7092 = vpop.f32.mrf.mxu0
        %v7093 = vadd.f32 %v6932, %v7092
        %v7094 = vpop.f32.mrf.mxu0
        %v7095 = vpop.f32.mrf.mxu0
        %v7096 = vadd.f32 %v6935, %v7095
        %v7097 = vpop.f32.mrf.mxu0
        %7098 = vmatprep.mubr.bf16.mxu0 %v5334
        %7099 = vmatmul.mubr.bf16.gmra.mxu0 %v5333
        %v7100 = vpop.f32.mrf.mxu0
        %v7101 = vadd.f32 %v6940, %v7100
        %v7102 = vpop.f32.mrf.mxu0
        %v7103 = vpop.f32.mrf.mxu0
        %v7104 = vadd.f32 %v6943, %v7103
        %v7105 = vpop.f32.mrf.mxu0
        %7106 = vmatprep.mubr.bf16.mxu0 %v5350
        %7107 = vmatmul.mubr.bf16.gmra.mxu0 %v5349
        %v7108 = vpop.f32.mrf.mxu0
        %v7109 = vadd.f32 %v6948, %v7108
        %v7110 = vpop.f32.mrf.mxu0
        %v7111 = vpop.f32.mrf.mxu0
        %v7112 = vadd.f32 %v6951, %v7111
        %v7113 = vpop.f32.mrf.mxu0
        %7114 = vmatprep.mubr.bf16.mxu0 %v5366
        %7115 = vmatmul.mubr.bf16.gmra.mxu0 %v5365
        %v7116 = vpop.f32.mrf.mxu0
        %v7117 = vadd.f32 %v6956, %v7116
        %v7118 = vpop.f32.mrf.mxu0
        %v7119 = vpop.f32.mrf.mxu0
        %v7120 = vadd.f32 %v6959, %v7119
        %v7121 = vpop.f32.mrf.mxu0
        %7122 = vmatprep.mubr.bf16.mxu0 %v5382
        %7123 = vmatmul.mubr.bf16.gmra.mxu0 %v5381
        %v7124 = vpop.f32.mrf.mxu0
        %v7125 = vadd.f32 %v6964, %v7124
        %v7126 = vpop.f32.mrf.mxu0
        %v7127 = vpop.f32.mrf.mxu0
        %v7128 = vadd.f32 %v6967, %v7127
        %v7129 = vpop.f32.mrf.mxu0
        %7130 = vmatprep.mubr.bf16.mxu0 %v5398
        %7131 = vmatmul.mubr.bf16.gmra.mxu0 %v5397
        %v7132 = vpop.f32.mrf.mxu0
        %v7133 = vadd.f32 %v6972, %v7132
        %v7134 = vpop.f32.mrf.mxu0
        %v7135 = vpop.f32.mrf.mxu0
        %v7136 = vadd.f32 %v6975, %v7135
        %v7137 = vpop.f32.mrf.mxu0
        %7138 = vmatprep.mubr.bf16.mxu0 %v5414
        %7139 = vmatmul.mubr.bf16.gmra.mxu0 %v5413
        %v7140 = vpop.f32.mrf.mxu0
        %v7141 = vadd.f32 %v6980, %v7140
        %v7142 = vpop.f32.mrf.mxu0
        %v7143 = vpop.f32.mrf.mxu0
        %v7144 = vadd.f32 %v6983, %v7143
        %v7145 = vpop.f32.mrf.mxu0
        %7146 = vmatprep.mubr.bf16.mxu0 %v5430
        %7147 = vmatmul.mubr.bf16.gmra.mxu0 %v5429
        %v7148 = vpop.f32.mrf.mxu0
        %v7149 = vadd.f32 %v6988, %v7148
        %v7150 = vpop.f32.mrf.mxu0
        %v7151 = vpop.f32.mrf.mxu0
        %v7152 = vadd.f32 %v6991, %v7151
        %v7153 = vpop.f32.mrf.mxu0
        %7154 = vmatprep.mubr.bf16.mxu0 %v5446
        %7155 = vmatmul.mubr.bf16.gmra.mxu0 %v5445
        %v7156 = vpop.f32.mrf.mxu0
        %v7157 = vadd.f32 %v6996, %v7156
        %v7158 = vpop.f32.mrf.mxu0
        %v7159 = vpop.f32.mrf.mxu0
        %v7160 = vadd.f32 %v6999, %v7159
        %v7161 = vpop.f32.mrf.mxu0
        %7162 = vmatprep.mubr.bf16.mxu0 %v5462
        %7163 = vmatmul.mubr.bf16.gmra.mxu0 %v5461
        %v7164 = vpop.f32.mrf.mxu0
        %v7165 = vadd.f32 %v7004, %v7164
        %v7166 = vpop.f32.mrf.mxu0
        %v7167 = vpop.f32.mrf.mxu0
        %v7168 = vadd.f32 %v7007, %v7167
        %v7169 = vpop.f32.mrf.mxu0
        %7170 = vdwg.mxu0
        %7171 = vmatprep.subr.bf16.mxu0 0
        %7172 = vmatpush1.bf16.msra.mxu0 %v6342
        %7173 = vmatprep.subr.bf16.mxu0 0
        %7174 = vmatpush1.bf16.msra.mxu0 %v6341
        %7175 = vmatprep.subr.bf16.mxu0 0
        %7176 = vmatpush1.bf16.msra.mxu0 %v6340
        %7177 = vmatprep.subr.bf16.mxu0 0
        %7178 = vmatpush1.bf16.msra.mxu0 %v6339
        %7179 = vmatprep.subr.bf16.mxu0 0
        %7180 = vmatpush1.bf16.msra.mxu0 %v6338
        %7181 = vmatprep.subr.bf16.mxu0 0
        %7182 = vmatpush1.bf16.msra.mxu0 %v6337
        %7183 = vmatprep.subr.bf16.mxu0 0
        %7184 = vmatpush1.bf16.msra.mxu0 %v6336
        %7185 = vmatprep.subr.bf16.mxu0 0
        %7186 = vmatpush1.bf16.msra.mxu0 %v6335
        %7187 = vmatprep.subr.bf16.mxu0 0
        %7188 = vmatpush2.bf16.msra.mxu0 %v6350
        %7189 = vmatprep.subr.bf16.mxu0 0
        %7190 = vmatpush2.bf16.msra.mxu0 %v6349
        %7191 = vmatprep.subr.bf16.mxu0 0
        %7192 = vmatpush2.bf16.msra.mxu0 %v6348
        %7193 = vmatprep.subr.bf16.mxu0 0
        %7194 = vmatpush2.bf16.msra.mxu0 %v6347
        %7195 = vmatprep.subr.bf16.mxu0 0
        %7196 = vmatpush2.bf16.msra.mxu0 %v6346
        %7197 = vmatprep.subr.bf16.mxu0 0
        %7198 = vmatpush2.bf16.msra.mxu0 %v6345
        %7199 = vmatprep.subr.bf16.mxu0 0
        %7200 = vmatpush2.bf16.msra.mxu0 %v6344
        %7201 = vmatprep.subr.bf16.mxu0 0
        %7202 = vmatpush2.bf16.msra.mxu0 %v6343
        %7203 = vmatprep.mubr.bf16.mxu0 %v5224
        %7204 = vmatmul.mubr.bf16.gmra.mxu0 %v5223
        %v7205 = vpop.f32.mrf.mxu0
        %v7206 = vadd.f32 %v7045, %v7205
        %v7207 = vpop.f32.mrf.mxu0
        %v7208 = vpop.f32.mrf.mxu0
        %v7209 = vadd.f32 %v7048, %v7208
        %v7210 = vpop.f32.mrf.mxu0
        %7211 = vmatprep.mubr.bf16.mxu0 %v5240
        %7212 = vmatmul.mubr.bf16.gmra.mxu0 %v5239
        %v7213 = vpop.f32.mrf.mxu0
        %v7214 = vadd.f32 %v7053, %v7213
        %v7215 = vpop.f32.mrf.mxu0
        %v7216 = vpop.f32.mrf.mxu0
        %v7217 = vadd.f32 %v7056, %v7216
        %v7218 = vpop.f32.mrf.mxu0
        %7219 = vmatprep.mubr.bf16.mxu0 %v5256
        %7220 = vmatmul.mubr.bf16.gmra.mxu0 %v5255
        %v7221 = vpop.f32.mrf.mxu0
        %v7222 = vadd.f32 %v7061, %v7221
        %v7223 = vpop.f32.mrf.mxu0
        %v7224 = vpop.f32.mrf.mxu0
        %v7225 = vadd.f32 %v7064, %v7224
        %v7226 = vpop.f32.mrf.mxu0
        %7227 = vmatprep.mubr.bf16.mxu0 %v5272
        %7228 = vmatmul.mubr.bf16.gmra.mxu0 %v5271
        %v7229 = vpop.f32.mrf.mxu0
        %v7230 = vadd.f32 %v7069, %v7229
        %v7231 = vpop.f32.mrf.mxu0
        %v7232 = vpop.f32.mrf.mxu0
        %v7233 = vadd.f32 %v7072, %v7232
        %v7234 = vpop.f32.mrf.mxu0
        %7235 = vmatprep.mubr.bf16.mxu0 %v5288
        %7236 = vmatmul.mubr.bf16.gmra.mxu0 %v5287
        %v7237 = vpop.f32.mrf.mxu0
        %v7238 = vadd.f32 %v7077, %v7237
        %v7239 = vpop.f32.mrf.mxu0
        %v7240 = vpop.f32.mrf.mxu0
        %v7241 = vadd.f32 %v7080, %v7240
        %v7242 = vpop.f32.mrf.mxu0
        %7243 = vmatprep.mubr.bf16.mxu0 %v5304
        %7244 = vmatmul.mubr.bf16.gmra.mxu0 %v5303
        %v7245 = vpop.f32.mrf.mxu0
        %v7246 = vadd.f32 %v7085, %v7245
        %v7247 = vpop.f32.mrf.mxu0
        %v7248 = vpop.f32.mrf.mxu0
        %v7249 = vadd.f32 %v7088, %v7248
        %v7250 = vpop.f32.mrf.mxu0
        %7251 = vmatprep.mubr.bf16.mxu0 %v5320
        %7252 = vmatmul.mubr.bf16.gmra.mxu0 %v5319
        %v7253 = vpop.f32.mrf.mxu0
        %v7254 = vadd.f32 %v7093, %v7253
        %v7255 = vpop.f32.mrf.mxu0
        %v7256 = vpop.f32.mrf.mxu0
        %v7257 = vadd.f32 %v7096, %v7256
        %v7258 = vpop.f32.mrf.mxu0
        %7259 = vmatprep.mubr.bf16.mxu0 %v5336
        %7260 = vmatmul.mubr.bf16.gmra.mxu0 %v5335
        %v7261 = vpop.f32.mrf.mxu0
        %v7262 = vadd.f32 %v7101, %v7261
        %v7263 = vpop.f32.mrf.mxu0
        %v7264 = vpop.f32.mrf.mxu0
        %v7265 = vadd.f32 %v7104, %v7264
        %v7266 = vpop.f32.mrf.mxu0
        %7267 = vmatprep.mubr.bf16.mxu0 %v5352
        %7268 = vmatmul.mubr.bf16.gmra.mxu0 %v5351
        %v7269 = vpop.f32.mrf.mxu0
        %v7270 = vadd.f32 %v7109, %v7269
        %v7271 = vpop.f32.mrf.mxu0
        %v7272 = vpop.f32.mrf.mxu0
        %v7273 = vadd.f32 %v7112, %v7272
        %v7274 = vpop.f32.mrf.mxu0
        %7275 = vmatprep.mubr.bf16.mxu0 %v5368
        %7276 = vmatmul.mubr.bf16.gmra.mxu0 %v5367
        %v7277 = vpop.f32.mrf.mxu0
        %v7278 = vadd.f32 %v7117, %v7277
        %v7279 = vpop.f32.mrf.mxu0
        %v7280 = vpop.f32.mrf.mxu0
        %v7281 = vadd.f32 %v7120, %v7280
        %v7282 = vpop.f32.mrf.mxu0
        %7283 = vmatprep.mubr.bf16.mxu0 %v5384
        %7284 = vmatmul.mubr.bf16.gmra.mxu0 %v5383
        %v7285 = vpop.f32.mrf.mxu0
        %v7286 = vadd.f32 %v7125, %v7285
        %v7287 = vpop.f32.mrf.mxu0
        %v7288 = vpop.f32.mrf.mxu0
        %v7289 = vadd.f32 %v7128, %v7288
        %v7290 = vpop.f32.mrf.mxu0
        %7291 = vmatprep.mubr.bf16.mxu0 %v5400
        %7292 = vmatmul.mubr.bf16.gmra.mxu0 %v5399
        %v7293 = vpop.f32.mrf.mxu0
        %v7294 = vadd.f32 %v7133, %v7293
        %v7295 = vpop.f32.mrf.mxu0
        %v7296 = vpop.f32.mrf.mxu0
        %v7297 = vadd.f32 %v7136, %v7296
        %v7298 = vpop.f32.mrf.mxu0
        %7299 = vmatprep.mubr.bf16.mxu0 %v5416
        %7300 = vmatmul.mubr.bf16.gmra.mxu0 %v5415
        %v7301 = vpop.f32.mrf.mxu0
        %v7302 = vadd.f32 %v7141, %v7301
        %v7303 = vpop.f32.mrf.mxu0
        %v7304 = vpop.f32.mrf.mxu0
        %v7305 = vadd.f32 %v7144, %v7304
        %v7306 = vpop.f32.mrf.mxu0
        %7307 = vmatprep.mubr.bf16.mxu0 %v5432
        %7308 = vmatmul.mubr.bf16.gmra.mxu0 %v5431
        %v7309 = vpop.f32.mrf.mxu0
        %v7310 = vadd.f32 %v7149, %v7309
        %v7311 = vpop.f32.mrf.mxu0
        %v7312 = vpop.f32.mrf.mxu0
        %v7313 = vadd.f32 %v7152, %v7312
        %v7314 = vpop.f32.mrf.mxu0
        %7315 = vmatprep.mubr.bf16.mxu0 %v5448
        %7316 = vmatmul.mubr.bf16.gmra.mxu0 %v5447
        %v7317 = vpop.f32.mrf.mxu0
        %v7318 = vadd.f32 %v7157, %v7317
        %v7319 = vpop.f32.mrf.mxu0
        %v7320 = vpop.f32.mrf.mxu0
        %v7321 = vadd.f32 %v7160, %v7320
        %v7322 = vpop.f32.mrf.mxu0
        %7323 = vmatprep.mubr.bf16.mxu0 %v5464
        %7324 = vmatmul.mubr.bf16.gmra.mxu0 %v5463
        %v7325 = vpop.f32.mrf.mxu0
        %v7326 = vadd.f32 %v7165, %v7325
        %v7327 = vpop.f32.mrf.mxu0
        %v7328 = vpop.f32.mrf.mxu0
        %v7329 = vadd.f32 %v7168, %v7328
        %v7330 = vpop.f32.mrf.mxu0
        %7331 = vdwg.mxu0
        %7332 = vmatprep.subr.bf16.mxu0 0
        %7333 = vmatpush1.bf16.msra.mxu0 %v6358
        %7334 = vmatprep.subr.bf16.mxu0 0
        %7335 = vmatpush1.bf16.msra.mxu0 %v6357
        %7336 = vmatprep.subr.bf16.mxu0 0
        %7337 = vmatpush1.bf16.msra.mxu0 %v6356
        %7338 = vmatprep.subr.bf16.mxu0 0
        %7339 = vmatpush1.bf16.msra.mxu0 %v6355
        %7340 = vmatprep.subr.bf16.mxu0 0
        %7341 = vmatpush1.bf16.msra.mxu0 %v6354
        %7342 = vmatprep.subr.bf16.mxu0 0
        %7343 = vmatpush1.bf16.msra.mxu0 %v6353
        %7344 = vmatprep.subr.bf16.mxu0 0
        %7345 = vmatpush1.bf16.msra.mxu0 %v6352
        %7346 = vmatprep.subr.bf16.mxu0 0
        %7347 = vmatpush1.bf16.msra.mxu0 %v6351
        %7348 = vmatprep.subr.bf16.mxu0 0
        %7349 = vmatpush2.bf16.msra.mxu0 %v6366
        %7350 = vmatprep.subr.bf16.mxu0 0
        %7351 = vmatpush2.bf16.msra.mxu0 %v6365
        %7352 = vmatprep.subr.bf16.mxu0 0
        %7353 = vmatpush2.bf16.msra.mxu0 %v6364
        %7354 = vmatprep.subr.bf16.mxu0 0
        %7355 = vmatpush2.bf16.msra.mxu0 %v6363
        %7356 = vmatprep.subr.bf16.mxu0 0
        %7357 = vmatpush2.bf16.msra.mxu0 %v6362
        %7358 = vmatprep.subr.bf16.mxu0 0
        %7359 = vmatpush2.bf16.msra.mxu0 %v6361
        %7360 = vmatprep.subr.bf16.mxu0 0
        %7361 = vmatpush2.bf16.msra.mxu0 %v6360
        %7362 = vmatprep.subr.bf16.mxu0 0
        %7363 = vmatpush2.bf16.msra.mxu0 %v6359
        %7364 = vmatprep.mubr.bf16.mxu0 %v5226
        %7365 = vmatmul.mubr.bf16.gmra.mxu0 %v5225
        %v7366 = vpop.f32.mrf.mxu0
        %v7367 = vadd.f32 %v7206, %v7366
        %v7368 = vpop.f32.mrf.mxu0
        %v7369 = vpop.f32.mrf.mxu0
        %v7370 = vadd.f32 %v7209, %v7369
        %v7371 = vpop.f32.mrf.mxu0
        %7372 = vmatprep.mubr.bf16.mxu0 %v5242
        %7373 = vmatmul.mubr.bf16.gmra.mxu0 %v5241
        %v7374 = vpop.f32.mrf.mxu0
        %v7375 = vadd.f32 %v7214, %v7374
        %v7376 = vpop.f32.mrf.mxu0
        %v7377 = vpop.f32.mrf.mxu0
        %v7378 = vadd.f32 %v7217, %v7377
        %v7379 = vpop.f32.mrf.mxu0
        %7380 = vmatprep.mubr.bf16.mxu0 %v5258
        %7381 = vmatmul.mubr.bf16.gmra.mxu0 %v5257
        %v7382 = vpop.f32.mrf.mxu0
        %v7383 = vadd.f32 %v7222, %v7382
        %v7384 = vpop.f32.mrf.mxu0
        %v7385 = vpop.f32.mrf.mxu0
        %v7386 = vadd.f32 %v7225, %v7385
        %v7387 = vpop.f32.mrf.mxu0
        %7388 = vmatprep.mubr.bf16.mxu0 %v5274
        %7389 = vmatmul.mubr.bf16.gmra.mxu0 %v5273
        %v7390 = vpop.f32.mrf.mxu0
        %v7391 = vadd.f32 %v7230, %v7390
        %v7392 = vpop.f32.mrf.mxu0
        %v7393 = vpop.f32.mrf.mxu0
        %v7394 = vadd.f32 %v7233, %v7393
        %v7395 = vpop.f32.mrf.mxu0
        %7396 = vmatprep.mubr.bf16.mxu0 %v5290
        %7397 = vmatmul.mubr.bf16.gmra.mxu0 %v5289
        %v7398 = vpop.f32.mrf.mxu0
        %v7399 = vadd.f32 %v7238, %v7398
        %v7400 = vpop.f32.mrf.mxu0
        %v7401 = vpop.f32.mrf.mxu0
        %v7402 = vadd.f32 %v7241, %v7401
        %v7403 = vpop.f32.mrf.mxu0
        %7404 = vmatprep.mubr.bf16.mxu0 %v5306
        %7405 = vmatmul.mubr.bf16.gmra.mxu0 %v5305
        %v7406 = vpop.f32.mrf.mxu0
        %v7407 = vadd.f32 %v7246, %v7406
        %v7408 = vpop.f32.mrf.mxu0
        %v7409 = vpop.f32.mrf.mxu0
        %v7410 = vadd.f32 %v7249, %v7409
        %v7411 = vpop.f32.mrf.mxu0
        %7412 = vmatprep.mubr.bf16.mxu0 %v5322
        %7413 = vmatmul.mubr.bf16.gmra.mxu0 %v5321
        %v7414 = vpop.f32.mrf.mxu0
        %v7415 = vadd.f32 %v7254, %v7414
        %v7416 = vpop.f32.mrf.mxu0
        %v7417 = vpop.f32.mrf.mxu0
        %v7418 = vadd.f32 %v7257, %v7417
        %v7419 = vpop.f32.mrf.mxu0
        %7420 = vmatprep.mubr.bf16.mxu0 %v5338
        %7421 = vmatmul.mubr.bf16.gmra.mxu0 %v5337
        %v7422 = vpop.f32.mrf.mxu0
        %v7423 = vadd.f32 %v7262, %v7422
        %v7424 = vpop.f32.mrf.mxu0
        %v7425 = vpop.f32.mrf.mxu0
        %v7426 = vadd.f32 %v7265, %v7425
        %v7427 = vpop.f32.mrf.mxu0
        %7428 = vmatprep.mubr.bf16.mxu0 %v5354
        %7429 = vmatmul.mubr.bf16.gmra.mxu0 %v5353
        %v7430 = vpop.f32.mrf.mxu0
        %v7431 = vadd.f32 %v7270, %v7430
        %v7432 = vpop.f32.mrf.mxu0
        %v7433 = vpop.f32.mrf.mxu0
        %v7434 = vadd.f32 %v7273, %v7433
        %v7435 = vpop.f32.mrf.mxu0
        %7436 = vmatprep.mubr.bf16.mxu0 %v5370
        %7437 = vmatmul.mubr.bf16.gmra.mxu0 %v5369
        %v7438 = vpop.f32.mrf.mxu0
        %v7439 = vadd.f32 %v7278, %v7438
        %v7440 = vpop.f32.mrf.mxu0
        %v7441 = vpop.f32.mrf.mxu0
        %v7442 = vadd.f32 %v7281, %v7441
        %v7443 = vpop.f32.mrf.mxu0
        %7444 = vmatprep.mubr.bf16.mxu0 %v5386
        %7445 = vmatmul.mubr.bf16.gmra.mxu0 %v5385
        %v7446 = vpop.f32.mrf.mxu0
        %v7447 = vadd.f32 %v7286, %v7446
        %v7448 = vpop.f32.mrf.mxu0
        %v7449 = vpop.f32.mrf.mxu0
        %v7450 = vadd.f32 %v7289, %v7449
        %v7451 = vpop.f32.mrf.mxu0
        %7452 = vmatprep.mubr.bf16.mxu0 %v5402
        %7453 = vmatmul.mubr.bf16.gmra.mxu0 %v5401
        %v7454 = vpop.f32.mrf.mxu0
        %v7455 = vadd.f32 %v7294, %v7454
        %v7456 = vpop.f32.mrf.mxu0
        %v7457 = vpop.f32.mrf.mxu0
        %v7458 = vadd.f32 %v7297, %v7457
        %v7459 = vpop.f32.mrf.mxu0
        %7460 = vmatprep.mubr.bf16.mxu0 %v5418
        %7461 = vmatmul.mubr.bf16.gmra.mxu0 %v5417
        %v7462 = vpop.f32.mrf.mxu0
        %v7463 = vadd.f32 %v7302, %v7462
        %v7464 = vpop.f32.mrf.mxu0
        %v7465 = vpop.f32.mrf.mxu0
        %v7466 = vadd.f32 %v7305, %v7465
        %v7467 = vpop.f32.mrf.mxu0
        %7468 = vmatprep.mubr.bf16.mxu0 %v5434
        %7469 = vmatmul.mubr.bf16.gmra.mxu0 %v5433
        %v7470 = vpop.f32.mrf.mxu0
        %v7471 = vadd.f32 %v7310, %v7470
        %v7472 = vpop.f32.mrf.mxu0
        %v7473 = vpop.f32.mrf.mxu0
        %v7474 = vadd.f32 %v7313, %v7473
        %v7475 = vpop.f32.mrf.mxu0
        %7476 = vmatprep.mubr.bf16.mxu0 %v5450
        %7477 = vmatmul.mubr.bf16.gmra.mxu0 %v5449
        %v7478 = vpop.f32.mrf.mxu0
        %v7479 = vadd.f32 %v7318, %v7478
        %v7480 = vpop.f32.mrf.mxu0
        %v7481 = vpop.f32.mrf.mxu0
        %v7482 = vadd.f32 %v7321, %v7481
        %v7483 = vpop.f32.mrf.mxu0
        %7484 = vmatprep.mubr.bf16.mxu0 %v5466
        %7485 = vmatmul.mubr.bf16.gmra.mxu0 %v5465
        %v7486 = vpop.f32.mrf.mxu0
        %v7487 = vadd.f32 %v7326, %v7486
        %v7488 = vpop.f32.mrf.mxu0
        %v7489 = vpop.f32.mrf.mxu0
        %v7490 = vadd.f32 %v7329, %v7489
        %v7491 = vpop.f32.mrf.mxu0
        %7492 = vdwg.mxu0
        %7493 = vmatprep.subr.bf16.mxu0 0
        %7494 = vmatpush1.bf16.msra.mxu0 %v6374
        %7495 = vmatprep.subr.bf16.mxu0 0
        %7496 = vmatpush1.bf16.msra.mxu0 %v6373
        %7497 = vmatprep.subr.bf16.mxu0 0
        %7498 = vmatpush1.bf16.msra.mxu0 %v6372
        %7499 = vmatprep.subr.bf16.mxu0 0
        %7500 = vmatpush1.bf16.msra.mxu0 %v6371
        %7501 = vmatprep.subr.bf16.mxu0 0
        %7502 = vmatpush1.bf16.msra.mxu0 %v6370
        %7503 = vmatprep.subr.bf16.mxu0 0
        %7504 = vmatpush1.bf16.msra.mxu0 %v6369
        %7505 = vmatprep.subr.bf16.mxu0 0
        %7506 = vmatpush1.bf16.msra.mxu0 %v6368
        %7507 = vmatprep.subr.bf16.mxu0 0
        %7508 = vmatpush1.bf16.msra.mxu0 %v6367
        %7509 = vmatprep.subr.bf16.mxu0 0
        %7510 = vmatpush2.bf16.msra.mxu0 %v6382
        %7511 = vmatprep.subr.bf16.mxu0 0
        %7512 = vmatpush2.bf16.msra.mxu0 %v6381
        %7513 = vmatprep.subr.bf16.mxu0 0
        %7514 = vmatpush2.bf16.msra.mxu0 %v6380
        %7515 = vmatprep.subr.bf16.mxu0 0
        %7516 = vmatpush2.bf16.msra.mxu0 %v6379
        %7517 = vmatprep.subr.bf16.mxu0 0
        %7518 = vmatpush2.bf16.msra.mxu0 %v6378
        %7519 = vmatprep.subr.bf16.mxu0 0
        %7520 = vmatpush2.bf16.msra.mxu0 %v6377
        %7521 = vmatprep.subr.bf16.mxu0 0
        %7522 = vmatpush2.bf16.msra.mxu0 %v6376
        %7523 = vmatprep.subr.bf16.mxu0 0
        %7524 = vmatpush2.bf16.msra.mxu0 %v6375
        %7525 = vmatprep.mubr.bf16.mxu0 %v5228
        %7526 = vmatmul.mubr.bf16.gmra.mxu0 %v5227
        %v7527 = vpop.f32.mrf.mxu0
        %v7528 = vadd.f32 %v7367, %v7527
        %v7529 = vpop.f32.mrf.mxu0
        %v7530 = vpop.f32.mrf.mxu0
        %v7531 = vadd.f32 %v7370, %v7530
        %v7532 = vpop.f32.mrf.mxu0
        %7533 = vmatprep.mubr.bf16.mxu0 %v5244
        %7534 = vmatmul.mubr.bf16.gmra.mxu0 %v5243
        %v7535 = vpop.f32.mrf.mxu0
        %v7536 = vadd.f32 %v7375, %v7535
        %v7537 = vpop.f32.mrf.mxu0
        %v7538 = vpop.f32.mrf.mxu0
        %v7539 = vadd.f32 %v7378, %v7538
        %v7540 = vpop.f32.mrf.mxu0
        %7541 = vmatprep.mubr.bf16.mxu0 %v5260
        %7542 = vmatmul.mubr.bf16.gmra.mxu0 %v5259
        %v7543 = vpop.f32.mrf.mxu0
        %v7544 = vadd.f32 %v7383, %v7543
        %v7545 = vpop.f32.mrf.mxu0
        %v7546 = vpop.f32.mrf.mxu0
        %v7547 = vadd.f32 %v7386, %v7546
        %v7548 = vpop.f32.mrf.mxu0
        %7549 = vmatprep.mubr.bf16.mxu0 %v5276
        %7550 = vmatmul.mubr.bf16.gmra.mxu0 %v5275
        %v7551 = vpop.f32.mrf.mxu0
        %v7552 = vadd.f32 %v7391, %v7551
        %v7553 = vpop.f32.mrf.mxu0
        %v7554 = vpop.f32.mrf.mxu0
        %v7555 = vadd.f32 %v7394, %v7554
        %v7556 = vpop.f32.mrf.mxu0
        %7557 = vmatprep.mubr.bf16.mxu0 %v5292
        %7558 = vmatmul.mubr.bf16.gmra.mxu0 %v5291
        %v7559 = vpop.f32.mrf.mxu0
        %v7560 = vadd.f32 %v7399, %v7559
        %v7561 = vpop.f32.mrf.mxu0
        %v7562 = vpop.f32.mrf.mxu0
        %v7563 = vadd.f32 %v7402, %v7562
        %v7564 = vpop.f32.mrf.mxu0
        %7565 = vmatprep.mubr.bf16.mxu0 %v5308
        %7566 = vmatmul.mubr.bf16.gmra.mxu0 %v5307
        %v7567 = vpop.f32.mrf.mxu0
        %v7568 = vadd.f32 %v7407, %v7567
        %v7569 = vpop.f32.mrf.mxu0
        %v7570 = vpop.f32.mrf.mxu0
        %v7571 = vadd.f32 %v7410, %v7570
        %v7572 = vpop.f32.mrf.mxu0
        %7573 = vmatprep.mubr.bf16.mxu0 %v5324
        %7574 = vmatmul.mubr.bf16.gmra.mxu0 %v5323
        %v7575 = vpop.f32.mrf.mxu0
        %v7576 = vadd.f32 %v7415, %v7575
        %v7577 = vpop.f32.mrf.mxu0
        %v7578 = vpop.f32.mrf.mxu0
        %v7579 = vadd.f32 %v7418, %v7578
        %v7580 = vpop.f32.mrf.mxu0
        %7581 = vmatprep.mubr.bf16.mxu0 %v5340
        %7582 = vmatmul.mubr.bf16.gmra.mxu0 %v5339
        %v7583 = vpop.f32.mrf.mxu0
        %v7584 = vadd.f32 %v7423, %v7583
        %v7585 = vpop.f32.mrf.mxu0
        %v7586 = vpop.f32.mrf.mxu0
        %v7587 = vadd.f32 %v7426, %v7586
        %v7588 = vpop.f32.mrf.mxu0
        %7589 = vmatprep.mubr.bf16.mxu0 %v5356
        %7590 = vmatmul.mubr.bf16.gmra.mxu0 %v5355
        %v7591 = vpop.f32.mrf.mxu0
        %v7592 = vadd.f32 %v7431, %v7591
        %v7593 = vpop.f32.mrf.mxu0
        %v7594 = vpop.f32.mrf.mxu0
        %v7595 = vadd.f32 %v7434, %v7594
        %v7596 = vpop.f32.mrf.mxu0
        %7597 = vmatprep.mubr.bf16.mxu0 %v5372
        %7598 = vmatmul.mubr.bf16.gmra.mxu0 %v5371
        %v7599 = vpop.f32.mrf.mxu0
        %v7600 = vadd.f32 %v7439, %v7599
        %v7601 = vpop.f32.mrf.mxu0
        %v7602 = vpop.f32.mrf.mxu0
        %v7603 = vadd.f32 %v7442, %v7602
        %v7604 = vpop.f32.mrf.mxu0
        %7605 = vmatprep.mubr.bf16.mxu0 %v5388
        %7606 = vmatmul.mubr.bf16.gmra.mxu0 %v5387
        %v7607 = vpop.f32.mrf.mxu0
        %v7608 = vadd.f32 %v7447, %v7607
        %v7609 = vpop.f32.mrf.mxu0
        %v7610 = vpop.f32.mrf.mxu0
        %v7611 = vadd.f32 %v7450, %v7610
        %v7612 = vpop.f32.mrf.mxu0
        %7613 = vmatprep.mubr.bf16.mxu0 %v5404
        %7614 = vmatmul.mubr.bf16.gmra.mxu0 %v5403
        %v7615 = vpop.f32.mrf.mxu0
        %v7616 = vadd.f32 %v7455, %v7615
        %v7617 = vpop.f32.mrf.mxu0
        %v7618 = vpop.f32.mrf.mxu0
        %v7619 = vadd.f32 %v7458, %v7618
        %v7620 = vpop.f32.mrf.mxu0
        %7621 = vmatprep.mubr.bf16.mxu0 %v5420
        %7622 = vmatmul.mubr.bf16.gmra.mxu0 %v5419
        %v7623 = vpop.f32.mrf.mxu0
        %v7624 = vadd.f32 %v7463, %v7623
        %v7625 = vpop.f32.mrf.mxu0
        %v7626 = vpop.f32.mrf.mxu0
        %v7627 = vadd.f32 %v7466, %v7626
        %v7628 = vpop.f32.mrf.mxu0
        %7629 = vmatprep.mubr.bf16.mxu0 %v5436
        %7630 = vmatmul.mubr.bf16.gmra.mxu0 %v5435
        %v7631 = vpop.f32.mrf.mxu0
        %v7632 = vadd.f32 %v7471, %v7631
        %v7633 = vpop.f32.mrf.mxu0
        %v7634 = vpop.f32.mrf.mxu0
        %v7635 = vadd.f32 %v7474, %v7634
        %v7636 = vpop.f32.mrf.mxu0
        %7637 = vmatprep.mubr.bf16.mxu0 %v5452
        %7638 = vmatmul.mubr.bf16.gmra.mxu0 %v5451
        %v7639 = vpop.f32.mrf.mxu0
        %v7640 = vadd.f32 %v7479, %v7639
        %v7641 = vpop.f32.mrf.mxu0
        %v7642 = vpop.f32.mrf.mxu0
        %v7643 = vadd.f32 %v7482, %v7642
        %v7644 = vpop.f32.mrf.mxu0
        %7645 = vmatprep.mubr.bf16.mxu0 %v5468
        %7646 = vmatmul.mubr.bf16.gmra.mxu0 %v5467
        %v7647 = vpop.f32.mrf.mxu0
        %v7648 = vadd.f32 %v7487, %v7647
        %v7649 = vpop.f32.mrf.mxu0
        %v7650 = vpop.f32.mrf.mxu0
        %v7651 = vadd.f32 %v7490, %v7650
        %v7652 = vpop.f32.mrf.mxu0
        %7653 = vdwg.mxu0
        %7654 = vmatprep.subr.bf16.mxu0 0
        %7655 = vmatpush1.bf16.msra.mxu0 %v6390
        %7656 = vmatprep.subr.bf16.mxu0 0
        %7657 = vmatpush1.bf16.msra.mxu0 %v6389
        %7658 = vmatprep.subr.bf16.mxu0 0
        %7659 = vmatpush1.bf16.msra.mxu0 %v6388
        %7660 = vmatprep.subr.bf16.mxu0 0
        %7661 = vmatpush1.bf16.msra.mxu0 %v6387
        %7662 = vmatprep.subr.bf16.mxu0 0
        %7663 = vmatpush1.bf16.msra.mxu0 %v6386
        %7664 = vmatprep.subr.bf16.mxu0 0
        %7665 = vmatpush1.bf16.msra.mxu0 %v6385
        %7666 = vmatprep.subr.bf16.mxu0 0
        %7667 = vmatpush1.bf16.msra.mxu0 %v6384
        %7668 = vmatprep.subr.bf16.mxu0 0
        %7669 = vmatpush1.bf16.msra.mxu0 %v6383
        %7670 = vmatprep.subr.bf16.mxu0 0
        %7671 = vmatpush2.bf16.msra.mxu0 %v6398
        %7672 = vmatprep.subr.bf16.mxu0 0
        %7673 = vmatpush2.bf16.msra.mxu0 %v6397
        %7674 = vmatprep.subr.bf16.mxu0 0
        %7675 = vmatpush2.bf16.msra.mxu0 %v6396
        %7676 = vmatprep.subr.bf16.mxu0 0
        %7677 = vmatpush2.bf16.msra.mxu0 %v6395
        %7678 = vmatprep.subr.bf16.mxu0 0
        %7679 = vmatpush2.bf16.msra.mxu0 %v6394
        %7680 = vmatprep.subr.bf16.mxu0 0
        %7681 = vmatpush2.bf16.msra.mxu0 %v6393
        %7682 = vmatprep.subr.bf16.mxu0 0
        %7683 = vmatpush2.bf16.msra.mxu0 %v6392
        %7684 = vmatprep.subr.bf16.mxu0 0
        %7685 = vmatpush2.bf16.msra.mxu0 %v6391
        %7686 = vmatprep.mubr.bf16.mxu0 %v5230
        %7687 = vmatmul.mubr.bf16.gmra.mxu0 %v5229
        %v7688 = vpop.f32.mrf.mxu0
        %v7689 = vadd.f32 %v7528, %v7688
        %v7690 = vpop.f32.mrf.mxu0
        %v7691 = vpop.f32.mrf.mxu0
        %v7692 = vadd.f32 %v7531, %v7691
        %v7693 = vpop.f32.mrf.mxu0
        %7694 = vmatprep.mubr.bf16.mxu0 %v5246
        %7695 = vmatmul.mubr.bf16.gmra.mxu0 %v5245
        %v7696 = vpop.f32.mrf.mxu0
        %v7697 = vadd.f32 %v7536, %v7696
        %v7698 = vpop.f32.mrf.mxu0
        %v7699 = vpop.f32.mrf.mxu0
        %v7700 = vadd.f32 %v7539, %v7699
        %v7701 = vpop.f32.mrf.mxu0
        %7702 = vmatprep.mubr.bf16.mxu0 %v5262
        %7703 = vmatmul.mubr.bf16.gmra.mxu0 %v5261
        %v7704 = vpop.f32.mrf.mxu0
        %v7705 = vadd.f32 %v7544, %v7704
        %v7706 = vpop.f32.mrf.mxu0
        %v7707 = vpop.f32.mrf.mxu0
        %v7708 = vadd.f32 %v7547, %v7707
        %v7709 = vpop.f32.mrf.mxu0
        %7710 = vmatprep.mubr.bf16.mxu0 %v5278
        %7711 = vmatmul.mubr.bf16.gmra.mxu0 %v5277
        %v7712 = vpop.f32.mrf.mxu0
        %v7713 = vadd.f32 %v7552, %v7712
        %v7714 = vpop.f32.mrf.mxu0
        %v7715 = vpop.f32.mrf.mxu0
        %v7716 = vadd.f32 %v7555, %v7715
        %v7717 = vpop.f32.mrf.mxu0
        %7718 = vmatprep.mubr.bf16.mxu0 %v5294
        %7719 = vmatmul.mubr.bf16.gmra.mxu0 %v5293
        %v7720 = vpop.f32.mrf.mxu0
        %v7721 = vadd.f32 %v7560, %v7720
        %v7722 = vpop.f32.mrf.mxu0
        %v7723 = vpop.f32.mrf.mxu0
        %v7724 = vadd.f32 %v7563, %v7723
        %v7725 = vpop.f32.mrf.mxu0
        %7726 = vmatprep.mubr.bf16.mxu0 %v5310
        %7727 = vmatmul.mubr.bf16.gmra.mxu0 %v5309
        %v7728 = vpop.f32.mrf.mxu0
        %v7729 = vadd.f32 %v7568, %v7728
        %v7730 = vpop.f32.mrf.mxu0
        %v7731 = vpop.f32.mrf.mxu0
        %v7732 = vadd.f32 %v7571, %v7731
        %v7733 = vpop.f32.mrf.mxu0
        %7734 = vmatprep.mubr.bf16.mxu0 %v5326
        %7735 = vmatmul.mubr.bf16.gmra.mxu0 %v5325
        %v7736 = vpop.f32.mrf.mxu0
        %v7737 = vadd.f32 %v7576, %v7736
        %v7738 = vpop.f32.mrf.mxu0
        %v7739 = vpop.f32.mrf.mxu0
        %v7740 = vadd.f32 %v7579, %v7739
        %v7741 = vpop.f32.mrf.mxu0
        %7742 = vmatprep.mubr.bf16.mxu0 %v5342
        %7743 = vmatmul.mubr.bf16.gmra.mxu0 %v5341
        %v7744 = vpop.f32.mrf.mxu0
        %v7745 = vadd.f32 %v7584, %v7744
        %v7746 = vpop.f32.mrf.mxu0
        %v7747 = vpop.f32.mrf.mxu0
        %v7748 = vadd.f32 %v7587, %v7747
        %v7749 = vpop.f32.mrf.mxu0
        %7750 = vmatprep.mubr.bf16.mxu0 %v5358
        %7751 = vmatmul.mubr.bf16.gmra.mxu0 %v5357
        %v7752 = vpop.f32.mrf.mxu0
        %v7753 = vadd.f32 %v7592, %v7752
        %v7754 = vpop.f32.mrf.mxu0
        %v7755 = vpop.f32.mrf.mxu0
        %v7756 = vadd.f32 %v7595, %v7755
        %v7757 = vpop.f32.mrf.mxu0
        %7758 = vmatprep.mubr.bf16.mxu0 %v5374
        %7759 = vmatmul.mubr.bf16.gmra.mxu0 %v5373
        %v7760 = vpop.f32.mrf.mxu0
        %v7761 = vadd.f32 %v7600, %v7760
        %v7762 = vpop.f32.mrf.mxu0
        %v7763 = vpop.f32.mrf.mxu0
        %v7764 = vadd.f32 %v7603, %v7763
        %v7765 = vpop.f32.mrf.mxu0
        %7766 = vmatprep.mubr.bf16.mxu0 %v5390
        %7767 = vmatmul.mubr.bf16.gmra.mxu0 %v5389
        %v7768 = vpop.f32.mrf.mxu0
        %v7769 = vadd.f32 %v7608, %v7768
        %v7770 = vpop.f32.mrf.mxu0
        %v7771 = vpop.f32.mrf.mxu0
        %v7772 = vadd.f32 %v7611, %v7771
        %v7773 = vpop.f32.mrf.mxu0
        %7774 = vmatprep.mubr.bf16.mxu0 %v5406
        %7775 = vmatmul.mubr.bf16.gmra.mxu0 %v5405
        %v7776 = vpop.f32.mrf.mxu0
        %v7777 = vadd.f32 %v7616, %v7776
        %v7778 = vpop.f32.mrf.mxu0
        %v7779 = vpop.f32.mrf.mxu0
        %v7780 = vadd.f32 %v7619, %v7779
        %v7781 = vpop.f32.mrf.mxu0
        %7782 = vmatprep.mubr.bf16.mxu0 %v5422
        %7783 = vmatmul.mubr.bf16.gmra.mxu0 %v5421
        %v7784 = vpop.f32.mrf.mxu0
        %v7785 = vadd.f32 %v7624, %v7784
        %v7786 = vpop.f32.mrf.mxu0
        %v7787 = vpop.f32.mrf.mxu0
        %v7788 = vadd.f32 %v7627, %v7787
        %v7789 = vpop.f32.mrf.mxu0
        %7790 = vmatprep.mubr.bf16.mxu0 %v5438
        %7791 = vmatmul.mubr.bf16.gmra.mxu0 %v5437
        %v7792 = vpop.f32.mrf.mxu0
        %v7793 = vadd.f32 %v7632, %v7792
        %v7794 = vpop.f32.mrf.mxu0
        %v7795 = vpop.f32.mrf.mxu0
        %v7796 = vadd.f32 %v7635, %v7795
        %v7797 = vpop.f32.mrf.mxu0
        %7798 = vmatprep.mubr.bf16.mxu0 %v5454
        %7799 = vmatmul.mubr.bf16.gmra.mxu0 %v5453
        %v7800 = vpop.f32.mrf.mxu0
        %v7801 = vadd.f32 %v7640, %v7800
        %v7802 = vpop.f32.mrf.mxu0
        %v7803 = vpop.f32.mrf.mxu0
        %v7804 = vadd.f32 %v7643, %v7803
        %v7805 = vpop.f32.mrf.mxu0
        %7806 = vmatprep.mubr.bf16.mxu0 %v5470
        %7807 = vmatmul.mubr.bf16.gmra.mxu0 %v5469
        %v7808 = vpop.f32.mrf.mxu0
        %v7809 = vadd.f32 %v7648, %v7808
        %v7810 = vpop.f32.mrf.mxu0
        %v7811 = vpop.f32.mrf.mxu0
        %v7812 = vadd.f32 %v7651, %v7811
        %v7813 = vpop.f32.mrf.mxu0
        %7814 = vdwg.mxu0
        %v7815 = vadd.f32 %v5471, %v7689
        %v7816 = vadd.f32 %v5472, %v7692
        %v7817 = vadd.f32 %v5473, %v7697
        %v7818 = vadd.f32 %v5474, %v7700
        %v7819 = vadd.f32 %v5475, %v7705
        %v7820 = vadd.f32 %v5476, %v7708
        %v7821 = vadd.f32 %v5477, %v7713
        %v7822 = vadd.f32 %v5478, %v7716
        %v7823 = vadd.f32 %v5479, %v7721
        %v7824 = vadd.f32 %v5480, %v7724
        %v7825 = vadd.f32 %v5481, %v7729
        %v7826 = vadd.f32 %v5482, %v7732
        %v7827 = vadd.f32 %v5483, %v7737
        %v7828 = vadd.f32 %v5484, %v7740
        %v7829 = vadd.f32 %v5485, %v7745
        %v7830 = vadd.f32 %v5486, %v7748
        %v7831 = vadd.f32 %v5487, %v7753
        %v7832 = vadd.f32 %v5488, %v7756
        %v7833 = vadd.f32 %v5489, %v7761
        %v7834 = vadd.f32 %v5490, %v7764
        %v7835 = vadd.f32 %v5491, %v7769
        %v7836 = vadd.f32 %v5492, %v7772
        %v7837 = vadd.f32 %v5493, %v7777
        %v7838 = vadd.f32 %v5494, %v7780
        %v7839 = vadd.f32 %v5495, %v7785
        %v7840 = vadd.f32 %v5496, %v7788
        %v7841 = vadd.f32 %v5497, %v7793
        %v7842 = vadd.f32 %v5498, %v7796
        %v7843 = vadd.f32 %v5499, %v7801
        %v7844 = vadd.f32 %v5500, %v7804
        %v7845 = vadd.f32 %v5501, %v7809
        %v7846 = vadd.f32 %v5502, %v7812
        %7847 = vst [vmem:[#allocation3] sm:$0xff] %v7815
        %7848 = vst [vmem:[#allocation3 + $0x8] sm:$0xff] %v7816
        %7849 = vst [vmem:[#allocation3 + $0x10] sm:$0xff] %v7817
        %7850 = vst [vmem:[#allocation3 + $0x18] sm:$0xff] %v7818
        %7851 = vst [vmem:[#allocation3 + $0x20] sm:$0xff] %v7819
        %7852 = vst [vmem:[#allocation3 + $0x28] sm:$0xff] %v7820
        %7853 = vst [vmem:[#allocation3 + $0x30] sm:$0xff] %v7821
        %7854 = vst [vmem:[#allocation3 + $0x38] sm:$0xff] %v7822
        %7855 = vst [vmem:[#allocation3 + $0x40] sm:$0xff] %v7823
        %7856 = vst [vmem:[#allocation3 + $0x48] sm:$0xff] %v7824
        %7857 = vst [vmem:[#allocation3 + $0x50] sm:$0xff] %v7825
        %7858 = vst [vmem:[#allocation3 + $0x58] sm:$0xff] %v7826
        %7859 = vst [vmem:[#allocation3 + $0x60] sm:$0xff] %v7827
        %7860 = vst [vmem:[#allocation3 + $0x68] sm:$0xff] %v7828
        %7861 = vst [vmem:[#allocation3 + $0x70] sm:$0xff] %v7829
        %7862 = vst [vmem:[#allocation3 + $0x78] sm:$0xff] %v7830
        %7863 = vst [vmem:[#allocation3 + $0x80] sm:$0xff] %v7831
        %7864 = vst [vmem:[#allocation3 + $0x88] sm:$0xff] %v7832
        %7865 = vst [vmem:[#allocation3 + $0x90] sm:$0xff] %v7833
        %7866 = vst [vmem:[#allocation3 + $0x98] sm:$0xff] %v7834
        %7867 = vst [vmem:[#allocation3 + $0xa0] sm:$0xff] %v7835
        %7868 = vst [vmem:[#allocation3 + $0xa8] sm:$0xff] %v7836
        %7869 = vst [vmem:[#allocation3 + $0xb0] sm:$0xff] %v7837
        %7870 = vst [vmem:[#allocation3 + $0xb8] sm:$0xff] %v7838
        %7871 = vst [vmem:[#allocation3 + $0xc0] sm:$0xff] %v7839
        %7872 = vst [vmem:[#allocation3 + $0xc8] sm:$0xff] %v7840
        %7873 = vst [vmem:[#allocation3 + $0xd0] sm:$0xff] %v7841
        %7874 = vst [vmem:[#allocation3 + $0xd8] sm:$0xff] %v7842
        %7875 = vst [vmem:[#allocation3 + $0xe0] sm:$0xff] %v7843
        %7876 = vst [vmem:[#allocation3 + $0xe8] sm:$0xff] %v7844
        %7877 = vst [vmem:[#allocation3 + $0xf0] sm:$0xff] %v7845
        %7878 = vst [vmem:[#allocation3 + $0xf8] sm:$0xff] %v7846
        %p7879 = scmp.eq.s32.totalorder %s25, 1
        // Predicated region
        $region73: #{_roi_head_call.1} parent=47 // pred_check
          %p7880 = pneg %p7879
        $region74: #{_roi_head_call.1} parent=47 // pred_check_branch
          %7882 = sbr.rel (%p7880) target = $region76
        $region75: #{_roi_head_call.1} parent=47 // pred_region
          %v7883 = vld [vmem:[#allocation3] sm:$0xff]
          %v7884 = vld [vmem:[#allocation3 + $0x8] sm:$0xff]
          %v7885 = vld [vmem:[#allocation3 + $0x10] sm:$0xff]
          %v7886 = vld [vmem:[#allocation3 + $0x18] sm:$0xff]
          %v7887 = vld [vmem:[#allocation3 + $0x20] sm:$0xff]
          %v7888 = vld [vmem:[#allocation3 + $0x28] sm:$0xff]
          %v7889 = vld [vmem:[#allocation3 + $0x30] sm:$0xff]
          %v7890 = vld [vmem:[#allocation3 + $0x38] sm:$0xff]
          %v7891 = vld [vmem:[#allocation3 + $0x40] sm:$0xff]
          %v7892 = vld [vmem:[#allocation3 + $0x48] sm:$0xff]
          %v7893 = vld [vmem:[#allocation3 + $0x50] sm:$0xff]
          %v7894 = vld [vmem:[#allocation3 + $0x58] sm:$0xff]
          %v7895 = vld [vmem:[#allocation3 + $0x60] sm:$0xff]
          %v7896 = vld [vmem:[#allocation3 + $0x68] sm:$0xff]
          %v7897 = vld [vmem:[#allocation3 + $0x70] sm:$0xff]
          %v7898 = vld [vmem:[#allocation3 + $0x78] sm:$0xff]
          %v7899 = vld [vmem:[#allocation3 + $0x80] sm:$0xff]
          %v7900 = vld [vmem:[#allocation3 + $0x88] sm:$0xff]
          %v7901 = vld [vmem:[#allocation3 + $0x90] sm:$0xff]
          %v7902 = vld [vmem:[#allocation3 + $0x98] sm:$0xff]
          %v7903 = vld [vmem:[#allocation3 + $0xa0] sm:$0xff]
          %v7904 = vld [vmem:[#allocation3 + $0xa8] sm:$0xff]
          %v7905 = vld [vmem:[#allocation3 + $0xb0] sm:$0xff]
          %v7906 = vld [vmem:[#allocation3 + $0xb8] sm:$0xff]
          %v7907 = vld [vmem:[#allocation3 + $0xc0] sm:$0xff]
          %v7908 = vld [vmem:[#allocation3 + $0xc8] sm:$0xff]
          %v7909 = vld [vmem:[#allocation3 + $0xd0] sm:$0xff]
          %v7910 = vld [vmem:[#allocation3 + $0xd8] sm:$0xff]
          %v7911 = vld [vmem:[#allocation3 + $0xe0] sm:$0xff]
          %v7912 = vld [vmem:[#allocation3 + $0xe8] sm:$0xff]
          %v7913 = vld [vmem:[#allocation3 + $0xf0] sm:$0xff]
          %v7914 = vld [vmem:[#allocation3 + $0xf8] sm:$0xff]
          %v7915 = vld [vmem:[#allocation10] sm:$0x1]
          %v7917 = vlaneseq
          %v7918 = vshrl.u32 %v7917, 7
          %v7919 = vsub.s32 0, %v7918
          %v7920 = vrot.slane %v7915, %v7919
          %v7922 = vadd.f32 %v7883, %v7920
          %v7923 = vadd.f32 %v7884, %v7920
          %v7924 = vadd.f32 %v7885, %v7920
          %v7925 = vadd.f32 %v7886, %v7920
          %v7926 = vadd.f32 %v7887, %v7920
          %v7927 = vadd.f32 %v7888, %v7920
          %v7928 = vadd.f32 %v7889, %v7920
          %v7929 = vadd.f32 %v7890, %v7920
          %v7930 = vadd.f32 %v7891, %v7920
          %v7931 = vadd.f32 %v7892, %v7920
          %v7932 = vadd.f32 %v7893, %v7920
          %v7933 = vadd.f32 %v7894, %v7920
          %v7934 = vadd.f32 %v7895, %v7920
          %v7935 = vadd.f32 %v7896, %v7920
          %v7936 = vadd.f32 %v7897, %v7920
          %v7937 = vadd.f32 %v7898, %v7920
          %v7938 = vadd.f32 %v7899, %v7920
          %v7939 = vadd.f32 %v7900, %v7920
          %v7940 = vadd.f32 %v7901, %v7920
          %v7941 = vadd.f32 %v7902, %v7920
          %v7942 = vadd.f32 %v7903, %v7920
          %v7943 = vadd.f32 %v7904, %v7920
          %v7944 = vadd.f32 %v7905, %v7920
          %v7945 = vadd.f32 %v7906, %v7920
          %v7946 = vadd.f32 %v7907, %v7920
          %v7947 = vadd.f32 %v7908, %v7920
          %v7948 = vadd.f32 %v7909, %v7920
          %v7949 = vadd.f32 %v7910, %v7920
          %v7950 = vadd.f32 %v7911, %v7920
          %v7951 = vadd.f32 %v7912, %v7920
          %v7952 = vadd.f32 %v7913, %v7920
          %v7953 = vadd.f32 %v7914, %v7920
          %v7954 = vpack.c.bf16 %v7923, %v7922
          %v7955 = vpack.c.bf16 %v7925, %v7924
          %v7956 = vpack.c.bf16 %v7927, %v7926
          %v7957 = vpack.c.bf16 %v7929, %v7928
          %v7958 = vpack.c.bf16 %v7931, %v7930
          %v7959 = vpack.c.bf16 %v7933, %v7932
          %v7960 = vpack.c.bf16 %v7935, %v7934
          %v7961 = vpack.c.bf16 %v7937, %v7936
          %v7962 = vpack.c.bf16 %v7939, %v7938
          %v7963 = vpack.c.bf16 %v7941, %v7940
          %v7964 = vpack.c.bf16 %v7943, %v7942
          %v7965 = vpack.c.bf16 %v7945, %v7944
          %v7966 = vpack.c.bf16 %v7947, %v7946
          %v7967 = vpack.c.bf16 %v7949, %v7948
          %v7968 = vpack.c.bf16 %v7951, %v7950
          %v7969 = vpack.c.bf16 %v7953, %v7952
          %v7986 = vunpack.c.l.b16 %v7954
          %v7987 = vunpack.c.h.b16 %v7954
          %v7988 = vunpack.c.l.b16 %v7955
          %v7989 = vunpack.c.h.b16 %v7955
          %v7990 = vunpack.c.l.b16 %v7956
          %v7991 = vunpack.c.h.b16 %v7956
          %v7992 = vunpack.c.l.b16 %v7957
          %v7993 = vunpack.c.h.b16 %v7957
          %v7994 = vunpack.c.l.b16 %v7958
          %v7995 = vunpack.c.h.b16 %v7958
          %v7996 = vunpack.c.l.b16 %v7959
          %v7997 = vunpack.c.h.b16 %v7959
          %v7998 = vunpack.c.l.b16 %v7960
          %v7999 = vunpack.c.h.b16 %v7960
          %v8000 = vunpack.c.l.b16 %v7961
          %v8001 = vunpack.c.h.b16 %v7961
          %v8002 = vunpack.c.l.b16 %v7962
          %v8003 = vunpack.c.h.b16 %v7962
          %v8004 = vunpack.c.l.b16 %v7963
          %v8005 = vunpack.c.h.b16 %v7963
          %v8006 = vunpack.c.l.b16 %v7964
          %v8007 = vunpack.c.h.b16 %v7964
          %v8008 = vunpack.c.l.b16 %v7965
          %v8009 = vunpack.c.h.b16 %v7965
          %v8010 = vunpack.c.l.b16 %v7966
          %v8011 = vunpack.c.h.b16 %v7966
          %v8012 = vunpack.c.l.b16 %v7967
          %v8013 = vunpack.c.h.b16 %v7967
          %v8014 = vunpack.c.l.b16 %v7968
          %v8015 = vunpack.c.h.b16 %v7968
          %v8016 = vunpack.c.l.b16 %v7969
          %v8017 = vunpack.c.h.b16 %v7969
          %v8018 = vpack.c.b16 %v7986, %v7986
          %v8019 = vpack.c.b16 %v7987, %v7987
          %v8020 = vpack.c.b16 %v7988, %v7988
          %v8021 = vpack.c.b16 %v7989, %v7989
          %v8022 = vpack.c.b16 %v7990, %v7990
          %v8023 = vpack.c.b16 %v7991, %v7991
          %v8024 = vpack.c.b16 %v7992, %v7992
          %v8025 = vpack.c.b16 %v7993, %v7993
          %v8026 = vpack.c.b16 %v7994, %v7994
          %v8027 = vpack.c.b16 %v7995, %v7995
          %v8028 = vpack.c.b16 %v7996, %v7996
          %v8029 = vpack.c.b16 %v7997, %v7997
          %v8030 = vpack.c.b16 %v7998, %v7998
          %v8031 = vpack.c.b16 %v7999, %v7999
          %v8032 = vpack.c.b16 %v8000, %v8000
          %v8033 = vpack.c.b16 %v8001, %v8001
          %v8034 = vpack.c.b16 %v8002, %v8002
          %v8035 = vpack.c.b16 %v8003, %v8003
          %v8036 = vpack.c.b16 %v8004, %v8004
          %v8037 = vpack.c.b16 %v8005, %v8005
          %v8038 = vpack.c.b16 %v8006, %v8006
          %v8039 = vpack.c.b16 %v8007, %v8007
          %v8040 = vpack.c.b16 %v8008, %v8008
          %v8041 = vpack.c.b16 %v8009, %v8009
          %v8042 = vpack.c.b16 %v8010, %v8010
          %v8043 = vpack.c.b16 %v8011, %v8011
          %v8044 = vpack.c.b16 %v8012, %v8012
          %v8045 = vpack.c.b16 %v8013, %v8013
          %v8046 = vpack.c.b16 %v8014, %v8014
          %v8047 = vpack.c.b16 %v8015, %v8015
          %v8048 = vpack.c.b16 %v8016, %v8016
          %v8049 = vpack.c.b16 %v8017, %v8017
          %8082 = vst [vmem:[%s431] sm:$0xf] %v8018
          %8083 = vst [vmem:[%s431 + $0x4] sm:$0xf] %v8019
          %8084 = vst [vmem:[%s431 + $0x8] sm:$0xf] %v8020
          %8085 = vst [vmem:[%s431 + $0xc] sm:$0xf] %v8021
          %8086 = vst [vmem:[%s431 + $0x10] sm:$0xf] %v8022
          %8087 = vst [vmem:[%s431 + $0x14] sm:$0xf] %v8023
          %8088 = vst [vmem:[%s431 + $0x18] sm:$0xf] %v8024
          %8089 = vst [vmem:[%s431 + $0x1c] sm:$0xf] %v8025
          %8090 = vst [vmem:[%s431 + $0x20] sm:$0xf] %v8026
          %8091 = vst [vmem:[%s431 + $0x24] sm:$0xf] %v8027
          %8092 = vst [vmem:[%s431 + $0x28] sm:$0xf] %v8028
          %8093 = vst [vmem:[%s431 + $0x2c] sm:$0xf] %v8029
          %8094 = vst [vmem:[%s431 + $0x30] sm:$0xf] %v8030
          %8095 = vst [vmem:[%s431 + $0x34] sm:$0xf] %v8031
          %8096 = vst [vmem:[%s431 + $0x38] sm:$0xf] %v8032
          %8097 = vst [vmem:[%s431 + $0x3c] sm:$0xf] %v8033
          %8098 = vst [vmem:[%s431 + $0x40] sm:$0xf] %v8034
          %8099 = vst [vmem:[%s431 + $0x44] sm:$0xf] %v8035
          %8100 = vst [vmem:[%s431 + $0x48] sm:$0xf] %v8036
          %8101 = vst [vmem:[%s431 + $0x4c] sm:$0xf] %v8037
          %8102 = vst [vmem:[%s431 + $0x50] sm:$0xf] %v8038
          %8103 = vst [vmem:[%s431 + $0x54] sm:$0xf] %v8039
          %8104 = vst [vmem:[%s431 + $0x58] sm:$0xf] %v8040
          %8105 = vst [vmem:[%s431 + $0x5c] sm:$0xf] %v8041
          %8106 = vst [vmem:[%s431 + $0x60] sm:$0xf] %v8042
          %8107 = vst [vmem:[%s431 + $0x64] sm:$0xf] %v8043
          %8108 = vst [vmem:[%s431 + $0x68] sm:$0xf] %v8044
          %8109 = vst [vmem:[%s431 + $0x6c] sm:$0xf] %v8045
          %8110 = vst [vmem:[%s431 + $0x70] sm:$0xf] %v8046
          %8111 = vst [vmem:[%s431 + $0x74] sm:$0xf] %v8047
          %8112 = vst [vmem:[%s431 + $0x78] sm:$0xf] %v8048
          %8113 = vst [vmem:[%s431 + $0x7c] sm:$0xf] %v8049
        $region76: #{_roi_head_call.1} parent=47 // pred_fallthru
          _
        %s8114 = smul.u32 32, %s24
        %p8115 = scmp.lt.s32.totalorder %s8114, 31
        %s8116 = scalar_select %p8115, %s8114, 31
        %s8117 = smul.addr %s8116, 4
        %s8118 = scalar_lea.vmem %s7, %s8117
        // Predicated region
        $region77: #{_roi_head_call.1} parent=47 // pred_check
          %p8119 = pneg %p217
        $region78: #{_roi_head_call.1} parent=47 // pred_check_branch
          %8121 = sbr.rel (%p8119) target = $region80
        $region79: #{_roi_head_call.1} parent=47 // pred_region
          %s8122 = smul.u32 32, %s24
        $region80: #{_roi_head_call.1} parent=47 // pred_fallthru
          _
        // Predicated region
        $region81: #{_roi_head_call.1} parent=47 // pred_check
          %p8123 = pneg %p217
        $region82: #{_roi_head_call.1} parent=47 // pred_check_branch
          %8125 = sbr.rel (%p8123) target = $region84
        $region83: #{_roi_head_call.1} parent=47 // pred_region
          %s8126 = smul.u32 32, %s24
          %p8127 = scmp.lt.s32.totalorder %s8126, 31
          %s8128 = scalar_select %p8127, %s8126, 31
          %s8129 = smul.addr %s8128, 4
          %s8130 = scalar_lea.vmem %s7, %s8129
        $region84: #{_roi_head_call.1} parent=47 // pred_fallthru
          _
      $region48: #{_roi_head_call.1} parent=5 // pred_fallthru
        _
      %p8131 = scmp.le.s32.totalorder 2, %s15
      // Predicated region
      $region85: #{_roi_head_call.1} parent=5 // pred_check
        %p8132 = pneg %p8131
      $region86: #{_roi_head_call.1} parent=5 // pred_check_branch
        %8134 = sbr.rel (%p8132) target = $region88
      $region87: #{_roi_head_call.1} parent=5 // pred_region
        %s8135 = ssub.s32 %s15, 2
      $region88: #{_roi_head_call.1} parent=5 // pred_fallthru
        _
    $region6: #{_roi_head_call.1} parent=1 // loop_footer
      %s19 = sadd.s32 1, %s15
    $region7: #{_roi_head_call.1} parent=1 // loop_footer_branch
      %14 = sbr.rel target = $region3
    $region8: #{_roi_head_call.1} parent=1 // loop_exit
      _
    %8136 = vsyncpa [#allocation5], 1
    %s8137 = scalar_lea.sflag [#allocation5], 1
    %8138 = vsyncpa %s8137, 1
    %8139 = vsyncpa [#allocation7], 1

</llo_original>
